<compile_context>
chip_gen: v7x
topology: tpu7x:2x2x1
jax: 0.10.0
libtpu: 0.0.40
codegen_flags: <defaults>
</compile_context>

<pallas_src>
import numpy as np
import jax
import jax.numpy as jnp
from jax import lax
from jax.experimental import pallas as pl
from jax.experimental.pallas import tpu as pltpu


_BB = 16      # batch elements per grid step (multiple of 16 keeps bf16 tiles
              # aligned; ~8-16 suits v5e's 128-row MXU, 16-24 suits v6e/v7x).
_LANES = 384  # padded lane width of every conv activation (12*32 = 3*128).


# ---------------------------------------------------------------------------
# Offline weight packing (pure numpy, runs once at init — zero runtime cost)
# ---------------------------------------------------------------------------

def _band_weight(w_oihw, w_in, stride):
    """Fold a 2x2 conv's W-direction taps into banded matmul weights.

    Returns m of shape (2, w_in*cin, w_out*cout) such that, with activations
    laid out as rows = H and lanes = w*cin + ci, conv output row h equals
    sum_di  x[input_row(h, di), :] @ m[di].
    """
    cout, cin, kh, kw = w_oihw.shape
    w_out = (w_in - kw) // stride + 1
    m = np.zeros((kh, w_in * cin, w_out * cout), np.float32)
    for di in range(kh):
        for dj in range(kw):
            blk = np.asarray(w_oihw[:, :, di, dj], np.float32).T  # (cin, cout)
            for j in range(w_out):
                jin = j * stride + dj
                m[di, jin * cin:(jin + 1) * cin, j * cout:(j + 1) * cout] = blk
    return m


def _pad_kn(m, k_to, n_to):
    """Zero-pad the (K, N) trailing dims of a (taps, K, N) banded weight."""
    taps, k, n = m.shape
    out = np.zeros((taps, k_to, n_to), np.float32)
    out[:, :k, :n] = m
    return out


def init_raw_params(obs_channels, key):
    """Synthetic PyTorch-layout parameters (fan-in scaled normal; small bias)."""
    keys = jax.random.split(key, 10)
    raw = {}
    conv_shapes = [(32, obs_channels, 2, 2), (32, 32, 2, 2),
                   (32, 32, 2, 2), (32, 32, 2, 2)]
    for i, s in enumerate(conv_shapes):
        fan_in = s[1] * s[2] * s[3]
        raw[f"conv{i + 1}_w"] = (jax.random.normal(keys[2 * i], s, jnp.float32)
                                 / np.sqrt(fan_in))
        raw[f"conv{i + 1}_b"] = 0.01 * jax.random.normal(
            keys[2 * i + 1], (s[0],), jnp.float32)
    out_dim, repr_dim = 32 * 9 * 9, 256
    raw["fc_w"] = (jax.random.normal(keys[8], (repr_dim, out_dim), jnp.float32)
                   / np.sqrt(out_dim))          # torch Linear layout: (out, in)
    raw["fc_b"] = 0.01 * jax.random.normal(keys[9], (repr_dim,), jnp.float32)
    return raw


def pack_params(raw):
    """Repack PyTorch-layout weights into the fused kernel's bf16 band format."""
    p = {}
    # conv1: fold /255 - 0.5 into weight + bias; merge both H-taps into K.
    w1 = np.asarray(raw["conv1_w"], np.float32)           # (32, C, 2, 2)
    b1 = np.asarray(raw["conv1_b"], np.float32)
    b1_eff = b1 - 0.5 * w1.sum(axis=(1, 2, 3))
    m1 = _band_weight(w1 / 255.0, w_in=24, stride=2)      # (2, 24C, 384)
    p["w1"] = jnp.asarray(np.concatenate([m1[0], m1[1]], axis=0), jnp.bfloat16)
    p["b1"] = jnp.asarray(np.tile(b1_eff, 12)[None, :], jnp.float32)   # (1, 384)

    # conv2..conv4 (stride 1): band + zero-pad K/N (and bias) to 384 lanes.
    for idx, (w_in, w_out) in zip((2, 3, 4), ((12, 11), (11, 10), (10, 9))):
        w = np.asarray(raw[f"conv{idx}_w"], np.float32)
        b = np.asarray(raw[f"conv{idx}_b"], np.float32)
        m = _pad_kn(_band_weight(w, w_in=w_in, stride=1), _LANES, _LANES)
        p[f"w{idx}"] = jnp.asarray(m, jnp.bfloat16)        # (2, 384, 384)
        bt = np.zeros((_LANES,), np.float32)
        bt[:w_out * 32] = np.tile(b, w_out)                # padded lanes -> 0
        p[f"b{idx}"] = jnp.asarray(bt[None, :], jnp.float32)

    # fc: permute rows from torch's NCHW view(B,-1) order (c*81 + h*9 + w) to
    # the kernel's slab order (h*384 + w*32 + c); zero rows for padding lanes.
    fc_w = np.asarray(raw["fc_w"], np.float32).reshape(256, 32, 9, 9)
    fc_w = np.transpose(fc_w, (2, 3, 1, 0)).reshape(9, 9 * 32, 256)  # (h, w*32+c, n)
    fcw = np.zeros((9, _LANES, 256), np.float32)
    fcw[:, :9 * 32, :] = fc_w
    p["fcw"] = jnp.asarray(fcw.reshape(9 * _LANES, 256), jnp.bfloat16)
    p["fcb"] = jnp.asarray(np.asarray(raw["fc_b"], np.float32)[None, :], jnp.float32)
    return p


# ---------------------------------------------------------------------------
# Fused Pallas kernel: conv1..conv4 + FC for BB batch elements per grid step.
# ---------------------------------------------------------------------------

def _encoder_kernel(x_ref, w1_ref, b1_ref, w2_ref, b2_ref, w3_ref, b3_ref,
                    w4_ref, b4_ref, fcw_ref, fcb_ref,
                    o_ref,
                    h1_s, h2_s, h3_s, slab_s):
    f32, bf16 = jnp.float32, jnp.bfloat16
    bb = o_ref.shape[0]                       # batch elements in this block

    # conv1 (2x2, stride 2) + ReLU.  Both H-taps and both W-taps are folded into
    # the lane/K dim (each input row already carries obs rows 2h and 2h+1), so
    # this is ONE matmul with M = 12*bb rows.  /255-0.5 is folded into w1/b1.
    a1 = jnp.dot(x_ref[0], w1_ref[...], preferred_element_type=f32)
    h1_s[...] = jnp.maximum(a1 + b1_ref[...], 0.0).astype(bf16)     # (12*bb, 384)

    # stride-1 2x2 convs.  Activations are stacked h-major (row = h*bb + b), so
    # the second H-tap is a bb-row, bf16-tile-aligned offset of the same scratch
    # and valid rows never mix across batch elements.
    def conv_s1(src_ref, rows_out, w_ref, b_ref):
        x0 = src_ref[0:rows_out * bb, :]
        x1 = src_ref[bb:(rows_out + 1) * bb, :]
        acc = (jnp.dot(x0, w_ref[0], preferred_element_type=f32) +
               jnp.dot(x1, w_ref[1], preferred_element_type=f32))
        return jnp.maximum(acc + b_ref[...], 0.0).astype(bf16)

    h2_s[...] = conv_s1(h1_s, 11, w2_ref, b2_ref)        # (11*bb, 384)
    h3_s[...] = conv_s1(h2_s, 10, w3_ref, b3_ref)        # (10*bb, 384)
    h4 = conv_s1(h3_s, 9, w4_ref, b4_ref)                # (9*bb, 384) value

    # Scatter conv4's h-major rows into a lane-dense (bb, 9*384) slab so the FC
    # is a single (bb, 3456) @ (3456, 256) MXU matmul.  Padding lanes of h4 are
    # exactly zero (zero-padded weights/bias), as are the matching fcw rows.
    for h in range(9):
        slab_s[:, h * _LANES:(h + 1) * _LANES] = h4[h * bb:(h + 1) * bb, :]

    o_ref[...] = (jnp.dot(slab_s[...], fcw_ref[...], preferred_element_type=f32)
                  + fcb_ref[...])


def _full_block(shape):
    nd = len(shape)
    return pl.BlockSpec(shape, lambda b: (0,) * nd)


@jax.jit
def encoder_forward(params, obs_nchw):
    """obs_nchw: (B, C, 24, 24) float, same axis convention as PyTorch."""
    B, C, H, W = obs_nchw.shape
    assert (H, W) == (24, 24), "Encoder expects 24x24 spatial input (out_dim=32*9*9)"

    bb = _BB
    nblk = -(-B // bb)            # grid steps (pad batch up to a multiple of bb)
    Bp = nblk * bb

    # Input formatting only (cheap XLA ops on the raw observation), in bf16:
    # NCHW -> (B, 12, 48C) where each row carries obs rows (2h, 2h+1) with W,C
    # merged into lanes; then batch-block and h-major-stack rows so each grid
    # step sees one (12*bb, 48C) slab = one input DMA per step.
    x = jnp.transpose(obs_nchw, (0, 2, 3, 1)).astype(jnp.bfloat16)   # (B,24,24,C)
    x = x.reshape(B, 12, 48 * C)
    x = jnp.pad(x, ((0, Bp - B), (0, 0), (0, 0)))
    x = x.reshape(nblk, bb, 12, 48 * C).transpose(0, 2, 1, 3)
    x = x.reshape(nblk, 12 * bb, 48 * C)

    w_args = (params["w1"], params["b1"], params["w2"], params["b2"],
              params["w3"], params["b3"], params["w4"], params["b4"],
              params["fcw"], params["fcb"])

    # Weight index_maps are grid-invariant -> the pipeline keeps them resident
    # in VMEM and does not re-DMA them on later grid steps.
    in_specs = ([pl.BlockSpec((1, 12 * bb, 48 * C), lambda b: (b, 0, 0))]
                + [_full_block(w.shape) for w in w_args])

    weight_bytes = sum(int(np.prod(w.shape)) * w.dtype.itemsize for w in w_args)
    cost = pl.CostEstimate(flops=21_000_000 * Bp, transcendentals=0,
                           bytes_accessed=weight_bytes + Bp * (12 * 48 * C * 2 + 1024))

    out = pl.pallas_call(
        _encoder_kernel,
        out_shape=jax.ShapeDtypeStruct((Bp, 256), jnp.float32),
        grid=(nblk,),
        in_specs=in_specs,
        out_specs=pl.BlockSpec((bb, 256), lambda b: (b, 0)),
        scratch_shapes=[
            pltpu.VMEM((12 * bb, _LANES), jnp.bfloat16),     # conv1 out
            pltpu.VMEM((11 * bb, _LANES), jnp.bfloat16),     # conv2 out
            pltpu.VMEM((10 * bb, _LANES), jnp.bfloat16),     # conv3 out
            pltpu.VMEM((bb, 9 * _LANES), jnp.bfloat16),      # lane-dense FC slab
        ],
        compiler_params=pltpu.CompilerParams(
            # batch blocks split across TCs on v7x megacore; keep nblk even
            # there for balanced work when batch sizes allow.
            dimension_semantics=("parallel",),
            vmem_limit_bytes=32 * 1024 * 1024,
        ),
        cost_estimate=cost,
    )(x, *w_args)
    return out[:B]


# ---------------------------------------------------------------------------
# Pure-JAX f32 reference (mirrors the PyTorch module) for a correctness check.
# ---------------------------------------------------------------------------

def encoder_reference(raw, obs_nchw):
    x = obs_nchw.astype(jnp.float32) / 255.0 - 0.5
    for i in range(1, 5):
        w = raw[f"conv{i}_w"]
        b = raw[f"conv{i}_b"]
        stride = 2 if i == 1 else 1
        x = lax.conv_general_dilated(
            x, w, window_strides=(stride, stride), padding="VALID",
            dimension_numbers=("NCHW", "OIHW", "NCHW"),
            precision=lax.Precision.HIGHEST)
        x = jnp.maximum(x + b[None, :, None, None], 0.0)
    flat = x.reshape(x.shape[0], -1)                 # NCHW flatten, like torch
    return jnp.dot(flat, raw["fc_w"].T, precision=lax.Precision.HIGHEST) + raw["fc_b"]


if __name__ == "__main__":
    key = jax.random.PRNGKey(0)
    kp, kx = jax.random.split(key)
    B, obs_shape = 2, (4, 24, 24)   # 24x24 spatial is implied by out_dim = 32*9*9
    raw = init_raw_params(obs_shape[0], kp)
    params = pack_params(raw)
    obs = jax.random.uniform(kx, (B,) + obs_shape, minval=0.0, maxval=255.0,
                             dtype=jnp.float32)
    h = encoder_forward(params, obs)
    jax.block_until_ready(h)
    assert h.shape == (B, 256) and h.dtype == jnp.float32
    # Numerical check vs the f32 reference (kernel matmuls run in bf16).
    ref = encoder_reference(raw, obs)
    max_err = float(jnp.max(jnp.abs(h - ref)))
    assert max_err < 0.1, f"kernel/reference mismatch: max abs err {max_err}"
    print("KERNEL_OK")
</pallas_src>

<mosaic_0001>
module attributes {stable_mosaic.version = 11 : i64} {
  func.func @_encoder_kernel(%arg0: i32, %arg1: memref<1x192x192xbf16, #tpu.memory_space<vmem>>, %arg2: memref<192x384xbf16, #tpu.memory_space<vmem>>, %arg3: memref<1x384xf32, #tpu.memory_space<vmem>>, %arg4: memref<2x384x384xbf16, #tpu.memory_space<vmem>>, %arg5: memref<1x384xf32, #tpu.memory_space<vmem>>, %arg6: memref<2x384x384xbf16, #tpu.memory_space<vmem>>, %arg7: memref<1x384xf32, #tpu.memory_space<vmem>>, %arg8: memref<2x384x384xbf16, #tpu.memory_space<vmem>>, %arg9: memref<1x384xf32, #tpu.memory_space<vmem>>, %arg10: memref<3456x256xbf16, #tpu.memory_space<vmem>>, %arg11: memref<1x256xf32, #tpu.memory_space<vmem>>, %arg12: memref<16x256xf32, #tpu.memory_space<vmem>>, %arg13: memref<192x384xbf16, #tpu.memory_space<vmem>>, %arg14: memref<176x384xbf16, #tpu.memory_space<vmem>>, %arg15: memref<160x384xbf16, #tpu.memory_space<vmem>>, %arg16: memref<16x3456xbf16, #tpu.memory_space<vmem>>) attributes {dimension_semantics = [#tpu.dimension_semantics<parallel>], iteration_bounds = array<i64: 1>, scalar_prefetch = 0 : i64, scratch_operands = 4 : i64, tpu.core_type = #tpu.core_type<tc>, window_params = [{transform_indices = @transform_0, window_bounds = array<i64: 1, 192, 192>}, {pipeline_mode = #tpu.pipeline_mode<synchronous>, transform_indices = @transform_1, window_bounds = array<i64: 192, 384>}, {pipeline_mode = #tpu.pipeline_mode<synchronous>, transform_indices = @transform_2, window_bounds = array<i64: 1, 384>}, {pipeline_mode = #tpu.pipeline_mode<synchronous>, transform_indices = @transform_3, window_bounds = array<i64: 2, 384, 384>}, {pipeline_mode = #tpu.pipeline_mode<synchronous>, transform_indices = @transform_4, window_bounds = array<i64: 1, 384>}, {pipeline_mode = #tpu.pipeline_mode<synchronous>, transform_indices = @transform_5, window_bounds = array<i64: 2, 384, 384>}, {pipeline_mode = #tpu.pipeline_mode<synchronous>, transform_indices = @transform_6, window_bounds = array<i64: 1, 384>}, {pipeline_mode = #tpu.pipeline_mode<synchronous>, transform_indices = @transform_7, window_bounds = array<i64: 2, 384, 384>}, {pipeline_mode = #tpu.pipeline_mode<synchronous>, transform_indices = @transform_8, window_bounds = array<i64: 1, 384>}, {pipeline_mode = #tpu.pipeline_mode<synchronous>, transform_indices = @transform_9, window_bounds = array<i64: 3456, 256>}, {pipeline_mode = #tpu.pipeline_mode<synchronous>, transform_indices = @transform_10, window_bounds = array<i64: 1, 256>}, {transform_indices = @transform_11, window_bounds = array<i64: 16, 256>}]} {
    %c0 = arith.constant 0 : index
    %c0_0 = arith.constant 0 : index
    %c0_1 = arith.constant 0 : index
    %0 = vector.load %arg1[%c0, %c0_0, %c0_1] : memref<1x192x192xbf16, #tpu.memory_space<vmem>>, vector<1x192x192xbf16>
    %1 = vector.shape_cast %0 : vector<1x192x192xbf16> to vector<192x192xbf16>
    %c0_2 = arith.constant 0 : index
    %c0_3 = arith.constant 0 : index
    %2 = vector.load %arg2[%c0_2, %c0_3] : memref<192x384xbf16, #tpu.memory_space<vmem>>, vector<192x384xbf16>
    %cst = arith.constant dense<0.000000e+00> : vector<192x384xf32>
    %3 = tpu.matmul %1, %2, %cst {dimension_numbers = #tpu.dot_dimension_numbers<[1], [0], [0], [1], [0, 0, 1, 1], [], []>} : vector<192x192xbf16>, vector<192x384xbf16>, vector<192x384xf32> -> vector<192x384xf32>
    %c0_4 = arith.constant 0 : index
    %c0_5 = arith.constant 0 : index
    %4 = vector.load %arg3[%c0_4, %c0_5] : memref<1x384xf32, #tpu.memory_space<vmem>>, vector<1x384xf32>
    %5 = vector.broadcast %4 : vector<1x384xf32> to vector<192x384xf32>
    %6 = arith.addf %3, %5 : vector<192x384xf32>
    %cst_6 = arith.constant 0.000000e+00 : f32
    %7 = vector.broadcast %cst_6 : f32 to vector<192x384xf32>
    %8 = arith.maximumf %6, %7 : vector<192x384xf32>
    %9 = arith.truncf %8 : vector<192x384xf32> to vector<192x384xbf16>
    %c0_7 = arith.constant 0 : index
    %c0_8 = arith.constant 0 : index
    %10 = vector.load %arg13[%c0_7, %c0_8] : memref<192x384xbf16, #tpu.memory_space<vmem>>, vector<192x384xbf16>
    tpu.vector_store %arg13[%c0_7, %c0_8], %9 {strides = array<i32>} : memref<192x384xbf16, #tpu.memory_space<vmem>>, vector<192x384xbf16>,
    %c0_9 = arith.constant 0 : index
    %c0_10 = arith.constant 0 : index
    %11 = vector.load %arg13[%c0_9, %c0_10] : memref<192x384xbf16, #tpu.memory_space<vmem>>, vector<176x384xbf16>
    %c16 = arith.constant 16 : index
    %c0_11 = arith.constant 0 : index
    %12 = vector.load %arg13[%c16, %c0_11] : memref<192x384xbf16, #tpu.memory_space<vmem>>, vector<176x384xbf16>
    %c0_12 = arith.constant 0 : index
    %c0_13 = arith.constant 0 : index
    %c0_14 = arith.constant 0 : index
    %13 = vector.load %arg4[%c0_12, %c0_13, %c0_14] : memref<2x384x384xbf16, #tpu.memory_space<vmem>>, vector<1x384x384xbf16>
    %14 = vector.shape_cast %13 : vector<1x384x384xbf16> to vector<384x384xbf16>
    %cst_15 = arith.constant dense<0.000000e+00> : vector<176x384xf32>
    %15 = tpu.matmul %11, %14, %cst_15 {dimension_numbers = #tpu.dot_dimension_numbers<[1], [0], [0], [1], [0, 0, 1, 1], [], []>} : vector<176x384xbf16>, vector<384x384xbf16>, vector<176x384xf32> -> vector<176x384xf32>
    %c1 = arith.constant 1 : index
    %c0_16 = arith.constant 0 : index
    %c0_17 = arith.constant 0 : index
    %16 = vector.load %arg4[%c1, %c0_16, %c0_17] : memref<2x384x384xbf16, #tpu.memory_space<vmem>>, vector<1x384x384xbf16>
    %17 = vector.shape_cast %16 : vector<1x384x384xbf16> to vector<384x384xbf16>
    %cst_18 = arith.constant dense<0.000000e+00> : vector<176x384xf32>
    %18 = tpu.matmul %12, %17, %cst_18 {dimension_numbers = #tpu.dot_dimension_numbers<[1], [0], [0], [1], [0, 0, 1, 1], [], []>} : vector<176x384xbf16>, vector<384x384xbf16>, vector<176x384xf32> -> vector<176x384xf32>
    %19 = arith.addf %15, %18 : vector<176x384xf32>
    %c0_19 = arith.constant 0 : index
    %c0_20 = arith.constant 0 : index
    %20 = vector.load %arg5[%c0_19, %c0_20] : memref<1x384xf32, #tpu.memory_space<vmem>>, vector<1x384xf32>
    %21 = vector.broadcast %20 : vector<1x384xf32> to vector<176x384xf32>
    %22 = arith.addf %19, %21 : vector<176x384xf32>
    %cst_21 = arith.constant 0.000000e+00 : f32
    %23 = vector.broadcast %cst_21 : f32 to vector<176x384xf32>
    %24 = arith.maximumf %22, %23 : vector<176x384xf32>
    %25 = arith.truncf %24 : vector<176x384xf32> to vector<176x384xbf16>
    %c0_22 = arith.constant 0 : index
    %c0_23 = arith.constant 0 : index
    %26 = vector.load %arg14[%c0_22, %c0_23] : memref<176x384xbf16, #tpu.memory_space<vmem>>, vector<176x384xbf16>
    tpu.vector_store %arg14[%c0_22, %c0_23], %25 {strides = array<i32>} : memref<176x384xbf16, #tpu.memory_space<vmem>>, vector<176x384xbf16>,
    %c0_24 = arith.constant 0 : index
    %c0_25 = arith.constant 0 : index
    %27 = vector.load %arg14[%c0_24, %c0_25] : memref<176x384xbf16, #tpu.memory_space<vmem>>, vector<160x384xbf16>
    %c16_26 = arith.constant 16 : index
    %c0_27 = arith.constant 0 : index
    %28 = vector.load %arg14[%c16_26, %c0_27] : memref<176x384xbf16, #tpu.memory_space<vmem>>, vector<160x384xbf16>
    %c0_28 = arith.constant 0 : index
    %c0_29 = arith.constant 0 : index
    %c0_30 = arith.constant 0 : index
    %29 = vector.load %arg6[%c0_28, %c0_29, %c0_30] : memref<2x384x384xbf16, #tpu.memory_space<vmem>>, vector<1x384x384xbf16>
    %30 = vector.shape_cast %29 : vector<1x384x384xbf16> to vector<384x384xbf16>
    %cst_31 = arith.constant dense<0.000000e+00> : vector<160x384xf32>
    %31 = tpu.matmul %27, %30, %cst_31 {dimension_numbers = #tpu.dot_dimension_numbers<[1], [0], [0], [1], [0, 0, 1, 1], [], []>} : vector<160x384xbf16>, vector<384x384xbf16>, vector<160x384xf32> -> vector<160x384xf32>
    %c1_32 = arith.constant 1 : index
    %c0_33 = arith.constant 0 : index
    %c0_34 = arith.constant 0 : index
    %32 = vector.load %arg6[%c1_32, %c0_33, %c0_34] : memref<2x384x384xbf16, #tpu.memory_space<vmem>>, vector<1x384x384xbf16>
    %33 = vector.shape_cast %32 : vector<1x384x384xbf16> to vector<384x384xbf16>
    %cst_35 = arith.constant dense<0.000000e+00> : vector<160x384xf32>
    %34 = tpu.matmul %28, %33, %cst_35 {dimension_numbers = #tpu.dot_dimension_numbers<[1], [0], [0], [1], [0, 0, 1, 1], [], []>} : vector<160x384xbf16>, vector<384x384xbf16>, vector<160x384xf32> -> vector<160x384xf32>
    %35 = arith.addf %31, %34 : vector<160x384xf32>
    %c0_36 = arith.constant 0 : index
    %c0_37 = arith.constant 0 : index
    %36 = vector.load %arg7[%c0_36, %c0_37] : memref<1x384xf32, #tpu.memory_space<vmem>>, vector<1x384xf32>
    %37 = vector.broadcast %36 : vector<1x384xf32> to vector<160x384xf32>
    %38 = arith.addf %35, %37 : vector<160x384xf32>
    %cst_38 = arith.constant 0.000000e+00 : f32
    %39 = vector.broadcast %cst_38 : f32 to vector<160x384xf32>
    %40 = arith.maximumf %38, %39 : vector<160x384xf32>
    %41 = arith.truncf %40 : vector<160x384xf32> to vector<160x384xbf16>
    %c0_39 = arith.constant 0 : index
    %c0_40 = arith.constant 0 : index
    %42 = vector.load %arg15[%c0_39, %c0_40] : memref<160x384xbf16, #tpu.memory_space<vmem>>, vector<160x384xbf16>
    tpu.vector_store %arg15[%c0_39, %c0_40], %41 {strides = array<i32>} : memref<160x384xbf16, #tpu.memory_space<vmem>>, vector<160x384xbf16>,
    %c0_41 = arith.constant 0 : index
    %c0_42 = arith.constant 0 : index
    %43 = vector.load %arg15[%c0_41, %c0_42] : memref<160x384xbf16, #tpu.memory_space<vmem>>, vector<144x384xbf16>
    %c16_43 = arith.constant 16 : index
    %c0_44 = arith.constant 0 : index
    %44 = vector.load %arg15[%c16_43, %c0_44] : memref<160x384xbf16, #tpu.memory_space<vmem>>, vector<144x384xbf16>
    %c0_45 = arith.constant 0 : index
    %c0_46 = arith.constant 0 : index
    %c0_47 = arith.constant 0 : index
    %45 = vector.load %arg8[%c0_45, %c0_46, %c0_47] : memref<2x384x384xbf16, #tpu.memory_space<vmem>>, vector<1x384x384xbf16>
    %46 = vector.shape_cast %45 : vector<1x384x384xbf16> to vector<384x384xbf16>
    %cst_48 = arith.constant dense<0.000000e+00> : vector<144x384xf32>
    %47 = tpu.matmul %43, %46, %cst_48 {dimension_numbers = #tpu.dot_dimension_numbers<[1], [0], [0], [1], [0, 0, 1, 1], [], []>} : vector<144x384xbf16>, vector<384x384xbf16>, vector<144x384xf32> -> vector<144x384xf32>
    %c1_49 = arith.constant 1 : index
    %c0_50 = arith.constant 0 : index
    %c0_51 = arith.constant 0 : index
    %48 = vector.load %arg8[%c1_49, %c0_50, %c0_51] : memref<2x384x384xbf16, #tpu.memory_space<vmem>>, vector<1x384x384xbf16>
    %49 = vector.shape_cast %48 : vector<1x384x384xbf16> to vector<384x384xbf16>
    %cst_52 = arith.constant dense<0.000000e+00> : vector<144x384xf32>
    %50 = tpu.matmul %44, %49, %cst_52 {dimension_numbers = #tpu.dot_dimension_numbers<[1], [0], [0], [1], [0, 0, 1, 1], [], []>} : vector<144x384xbf16>, vector<384x384xbf16>, vector<144x384xf32> -> vector<144x384xf32>
    %51 = arith.addf %47, %50 : vector<144x384xf32>
    %c0_53 = arith.constant 0 : index
    %c0_54 = arith.constant 0 : index
    %52 = vector.load %arg9[%c0_53, %c0_54] : memref<1x384xf32, #tpu.memory_space<vmem>>, vector<1x384xf32>
    %53 = vector.broadcast %52 : vector<1x384xf32> to vector<144x384xf32>
    %54 = arith.addf %51, %53 : vector<144x384xf32>
    %cst_55 = arith.constant 0.000000e+00 : f32
    %55 = vector.broadcast %cst_55 : f32 to vector<144x384xf32>
    %56 = arith.maximumf %54, %55 : vector<144x384xf32>
    %57 = arith.truncf %56 : vector<144x384xf32> to vector<144x384xbf16>
    %58 = vector.extract_strided_slice %57 {offsets = [0, 0], sizes = [16, 384], strides = [1, 1]} : vector<144x384xbf16> to vector<16x384xbf16>
    %c0_56 = arith.constant 0 : index
    %c0_57 = arith.constant 0 : index
    %59 = vector.load %arg16[%c0_56, %c0_57] : memref<16x3456xbf16, #tpu.memory_space<vmem>>, vector<16x384xbf16>
    tpu.vector_store %arg16[%c0_56, %c0_57], %58 {strides = array<i32>} : memref<16x3456xbf16, #tpu.memory_space<vmem>>, vector<16x384xbf16>,
    %60 = vector.extract_strided_slice %57 {offsets = [16, 0], sizes = [16, 384], strides = [1, 1]} : vector<144x384xbf16> to vector<16x384xbf16>
    %c0_58 = arith.constant 0 : index
    %c384 = arith.constant 384 : index
    %61 = vector.load %arg16[%c0_58, %c384] : memref<16x3456xbf16, #tpu.memory_space<vmem>>, vector<16x384xbf16>
    tpu.vector_store %arg16[%c0_58, %c384], %60 {strides = array<i32>} : memref<16x3456xbf16, #tpu.memory_space<vmem>>, vector<16x384xbf16>,
    %62 = vector.extract_strided_slice %57 {offsets = [32, 0], sizes = [16, 384], strides = [1, 1]} : vector<144x384xbf16> to vector<16x384xbf16>
    %c0_59 = arith.constant 0 : index
    %c768 = arith.constant 768 : index
    %63 = vector.load %arg16[%c0_59, %c768] : memref<16x3456xbf16, #tpu.memory_space<vmem>>, vector<16x384xbf16>
    tpu.vector_store %arg16[%c0_59, %c768], %62 {strides = array<i32>} : memref<16x3456xbf16, #tpu.memory_space<vmem>>, vector<16x384xbf16>,
    %64 = vector.extract_strided_slice %57 {offsets = [48, 0], sizes = [16, 384], strides = [1, 1]} : vector<144x384xbf16> to vector<16x384xbf16>
    %c0_60 = arith.constant 0 : index
    %c1152 = arith.constant 1152 : index
    %65 = vector.load %arg16[%c0_60, %c1152] : memref<16x3456xbf16, #tpu.memory_space<vmem>>, vector<16x384xbf16>
    tpu.vector_store %arg16[%c0_60, %c1152], %64 {strides = array<i32>} : memref<16x3456xbf16, #tpu.memory_space<vmem>>, vector<16x384xbf16>,
    %66 = vector.extract_strided_slice %57 {offsets = [64, 0], sizes = [16, 384], strides = [1, 1]} : vector<144x384xbf16> to vector<16x384xbf16>
    %c0_61 = arith.constant 0 : index
    %c1536 = arith.constant 1536 : index
    %67 = vector.load %arg16[%c0_61, %c1536] : memref<16x3456xbf16, #tpu.memory_space<vmem>>, vector<16x384xbf16>
    tpu.vector_store %arg16[%c0_61, %c1536], %66 {strides = array<i32>} : memref<16x3456xbf16, #tpu.memory_space<vmem>>, vector<16x384xbf16>,
    %68 = vector.extract_strided_slice %57 {offsets = [80, 0], sizes = [16, 384], strides = [1, 1]} : vector<144x384xbf16> to vector<16x384xbf16>
    %c0_62 = arith.constant 0 : index
    %c1920 = arith.constant 1920 : index
    %69 = vector.load %arg16[%c0_62, %c1920] : memref<16x3456xbf16, #tpu.memory_space<vmem>>, vector<16x384xbf16>
    tpu.vector_store %arg16[%c0_62, %c1920], %68 {strides = array<i32>} : memref<16x3456xbf16, #tpu.memory_space<vmem>>, vector<16x384xbf16>,
    %70 = vector.extract_strided_slice %57 {offsets = [96, 0], sizes = [16, 384], strides = [1, 1]} : vector<144x384xbf16> to vector<16x384xbf16>
    %c0_63 = arith.constant 0 : index
    %c2304 = arith.constant 2304 : index
    %71 = vector.load %arg16[%c0_63, %c2304] : memref<16x3456xbf16, #tpu.memory_space<vmem>>, vector<16x384xbf16>
    tpu.vector_store %arg16[%c0_63, %c2304], %70 {strides = array<i32>} : memref<16x3456xbf16, #tpu.memory_space<vmem>>, vector<16x384xbf16>,
    %72 = vector.extract_strided_slice %57 {offsets = [112, 0], sizes = [16, 384], strides = [1, 1]} : vector<144x384xbf16> to vector<16x384xbf16>
    %c0_64 = arith.constant 0 : index
    %c2688 = arith.constant 2688 : index
    %73 = vector.load %arg16[%c0_64, %c2688] : memref<16x3456xbf16, #tpu.memory_space<vmem>>, vector<16x384xbf16>
    tpu.vector_store %arg16[%c0_64, %c2688], %72 {strides = array<i32>} : memref<16x3456xbf16, #tpu.memory_space<vmem>>, vector<16x384xbf16>,
    %74 = vector.extract_strided_slice %57 {offsets = [128, 0], sizes = [16, 384], strides = [1, 1]} : vector<144x384xbf16> to vector<16x384xbf16>
    %c0_65 = arith.constant 0 : index
    %c3072 = arith.constant 3072 : index
    %75 = vector.load %arg16[%c0_65, %c3072] : memref<16x3456xbf16, #tpu.memory_space<vmem>>, vector<16x384xbf16>
    tpu.vector_store %arg16[%c0_65, %c3072], %74 {strides = array<i32>} : memref<16x3456xbf16, #tpu.memory_space<vmem>>, vector<16x384xbf16>,
    %c0_66 = arith.constant 0 : index
    %c0_67 = arith.constant 0 : index
    %76 = vector.load %arg16[%c0_66, %c0_67] : memref<16x3456xbf16, #tpu.memory_space<vmem>>, vector<16x3456xbf16>
    %c0_68 = arith.constant 0 : index
    %c0_69 = arith.constant 0 : index
    %77 = vector.load %arg10[%c0_68, %c0_69] : memref<3456x256xbf16, #tpu.memory_space<vmem>>, vector<3456x256xbf16>
    %cst_70 = arith.constant dense<0.000000e+00> : vector<16x256xf32>
    %78 = tpu.matmul %76, %77, %cst_70 {dimension_numbers = #tpu.dot_dimension_numbers<[1], [0], [0], [1], [0, 0, 1, 1], [], []>} : vector<16x3456xbf16>, vector<3456x256xbf16>, vector<16x256xf32> -> vector<16x256xf32>
    %c0_71 = arith.constant 0 : index
    %c0_72 = arith.constant 0 : index
    %79 = vector.load %arg11[%c0_71, %c0_72] : memref<1x256xf32, #tpu.memory_space<vmem>>, vector<1x256xf32>
    %80 = vector.broadcast %79 : vector<1x256xf32> to vector<16x256xf32>
    %81 = arith.addf %78, %80 : vector<16x256xf32>
    %c0_73 = arith.constant 0 : index
    %c0_74 = arith.constant 0 : index
    %82 = vector.load %arg12[%c0_73, %c0_74] : memref<16x256xf32, #tpu.memory_space<vmem>>, vector<16x256xf32>
    tpu.vector_store %arg12[%c0_73, %c0_74], %81 {strides = array<i32>} : memref<16x256xf32, #tpu.memory_space<vmem>>, vector<16x256xf32>,
    return
  }
  func.func @transform_0(%arg0: i32) -> (i32, i32, i32) {
    %c0_i32 = arith.constant 0 : i32
    %c0_i32_0 = arith.constant 0 : i32
    %c0_i32_1 = arith.constant 0 : i32
    return %arg0, %c0_i32, %c0_i32_0 : i32, i32, i32
  }
  func.func @transform_1(%arg0: i32) -> (i32, i32) {
    %c0_i32 = arith.constant 0 : i32
    %c0_i32_0 = arith.constant 0 : i32
    %c0_i32_1 = arith.constant 0 : i32
    return %c0_i32, %c0_i32_0 : i32, i32
  }
  func.func @transform_2(%arg0: i32) -> (i32, i32) {
    %c0_i32 = arith.constant 0 : i32
    %c0_i32_0 = arith.constant 0 : i32
    %c0_i32_1 = arith.constant 0 : i32
    return %c0_i32, %c0_i32_0 : i32, i32
  }
  func.func @transform_3(%arg0: i32) -> (i32, i32, i32) {
    %c0_i32 = arith.constant 0 : i32
    %c0_i32_0 = arith.constant 0 : i32
    %c0_i32_1 = arith.constant 0 : i32
    %c0_i32_2 = arith.constant 0 : i32
    return %c0_i32, %c0_i32_0, %c0_i32_1 : i32, i32, i32
  }
  func.func @transform_4(%arg0: i32) -> (i32, i32) {
    %c0_i32 = arith.constant 0 : i32
    %c0_i32_0 = arith.constant 0 : i32
    %c0_i32_1 = arith.constant 0 : i32
    return %c0_i32, %c0_i32_0 : i32, i32
  }
  func.func @transform_5(%arg0: i32) -> (i32, i32, i32) {
    %c0_i32 = arith.constant 0 : i32
    %c0_i32_0 = arith.constant 0 : i32
    %c0_i32_1 = arith.constant 0 : i32
    %c0_i32_2 = arith.constant 0 : i32
    return %c0_i32, %c0_i32_0, %c0_i32_1 : i32, i32, i32
  }
  func.func @transform_6(%arg0: i32) -> (i32, i32) {
    %c0_i32 = arith.constant 0 : i32
    %c0_i32_0 = arith.constant 0 : i32
    %c0_i32_1 = arith.constant 0 : i32
    return %c0_i32, %c0_i32_0 : i32, i32
  }
  func.func @transform_7(%arg0: i32) -> (i32, i32, i32) {
    %c0_i32 = arith.constant 0 : i32
    %c0_i32_0 = arith.constant 0 : i32
    %c0_i32_1 = arith.constant 0 : i32
    %c0_i32_2 = arith.constant 0 : i32
    return %c0_i32, %c0_i32_0, %c0_i32_1 : i32, i32, i32
  }
  func.func @transform_8(%arg0: i32) -> (i32, i32) {
    %c0_i32 = arith.constant 0 : i32
    %c0_i32_0 = arith.constant 0 : i32
    %c0_i32_1 = arith.constant 0 : i32
    return %c0_i32, %c0_i32_0 : i32, i32
  }
  func.func @transform_9(%arg0: i32) -> (i32, i32) {
    %c0_i32 = arith.constant 0 : i32
    %c0_i32_0 = arith.constant 0 : i32
    %c0_i32_1 = arith.constant 0 : i32
    return %c0_i32, %c0_i32_0 : i32, i32
  }
  func.func @transform_10(%arg0: i32) -> (i32, i32) {
    %c0_i32 = arith.constant 0 : i32
    %c0_i32_0 = arith.constant 0 : i32
    %c0_i32_1 = arith.constant 0 : i32
    return %c0_i32, %c0_i32_0 : i32, i32
  }
  func.func @transform_11(%arg0: i32) -> (i32, i32) {
    %c0_i32 = arith.constant 0 : i32
    %c0_i32_0 = arith.constant 0 : i32
    return %arg0, %c0_i32 : i32, i32
  }
}

</mosaic_0001>

<llo_original>
// kernel: encoder_forward.1
$region0: #{encoder_forward.1}
  #allocation0 [shape = 'u32[]', space=smem, size = 0x4, offset = 0x4, fixed_abs, tag = 'smem constant byte address 0x4 - core index']
  #allocation1 [shape = 'u32[144,128]{1,0:T(1,128)}', space=vmem, size = 0x12000, scoped, tag = 'internal scratch']
  #allocation2 [shape = 'bf16[192,384]{1,0:T(16,128)(2,1)}', space=vmem, size = 0x24000, scoped, tag = 'scratch operand']
  #allocation3 [shape = 'bf16[176,384]{1,0:T(16,128)(2,1)}', space=vmem, size = 0x21000, scoped, tag = 'scratch operand']
  #allocation4 [shape = 'bf16[160,384]{1,0:T(16,128)(2,1)}', space=vmem, size = 0x1e000, scoped, tag = 'scratch operand']
  #allocation5 [shape = 'bf16[16,3456]{1,0:T(16,128)(2,1)}', space=vmem, size = 0x1b000, scoped, tag = 'scratch operand']
  %s0 = inlined_call_operand.vmem [shape: bf16[1,192,192], index: 0, kind: input, shape index: {}]
  %s1 = inlined_call_operand.hbm [shape: bf16[192,384], index: 1, kind: input, shape index: {}]
  %s2 = inlined_call_operand.hbm [shape: f32[1,384], index: 2, kind: input, shape index: {}]
  %s3 = inlined_call_operand.hbm [shape: bf16[2,384,384], index: 3, kind: input, shape index: {}]
  %s4 = inlined_call_operand.hbm [shape: f32[1,384], index: 4, kind: input, shape index: {}]
  %s5 = inlined_call_operand.hbm [shape: bf16[2,384,384], index: 5, kind: input, shape index: {}]
  %s6 = inlined_call_operand.hbm [shape: f32[1,384], index: 6, kind: input, shape index: {}]
  %s7 = inlined_call_operand.hbm [shape: bf16[2,384,384], index: 7, kind: input, shape index: {}]
  %s8 = inlined_call_operand.hbm [shape: f32[1,384], index: 8, kind: input, shape index: {}]
  %s9 = inlined_call_operand.hbm [shape: bf16[3456,256], index: 9, kind: input, shape index: {}]
  %s10 = inlined_call_operand.hbm [shape: f32[1,256], index: 10, kind: input, shape index: {}]
  %s11 = inlined_call_operand.vmem [shape: f32[16,256], index: 11, kind: output, shape index: {}]
  %s12 = sld [smem:[#allocation0]]
  $region94: #{encoder_forward.1} parent=0
    _
  %s14 = ssub.s32 1, %s12
  %s15 = scalar_select 0, %s14, %s12
  $region1: #{encoder_forward.1} parent=0
    #allocation6 [shape = 'u8[147456]{0}', space=vmem, size = 0x24000, scoped, tag = 'input window, operand 1, single buffered']
    #allocation7 [shape = 's32[1]{0}', space=sflag, size = 0x4, scoped, tag = 'scoped memory for encoder_forward.1']
    #allocation8 [shape = 'u8[1536]{0}', space=vmem, size = 0x800, scoped, tag = 'input window, operand 2, single buffered']
    #allocation9 [shape = 's32[1]{0}', space=sflag, size = 0x4, scoped, tag = 'scoped memory for encoder_forward.1']
    #allocation10 [shape = 'u8[589824]{0}', space=vmem, size = 0x90000, scoped, tag = 'input window, operand 3, single buffered']
    #allocation11 [shape = 'u8[1536]{0}', space=vmem, size = 0x800, scoped, tag = 'input window, operand 4, single buffered']
    #allocation12 [shape = 's32[1]{0}', space=sflag, size = 0x4, scoped, tag = 'scoped memory for encoder_forward.1']
    #allocation13 [shape = 'u8[589824]{0}', space=vmem, size = 0x90000, scoped, tag = 'input window, operand 5, single buffered']
    #allocation14 [shape = 'u8[1536]{0}', space=vmem, size = 0x800, scoped, tag = 'input window, operand 6, single buffered']
    #allocation15 [shape = 's32[1]{0}', space=sflag, size = 0x4, scoped, tag = 'scoped memory for encoder_forward.1']
    #allocation16 [shape = 'u8[589824]{0}', space=vmem, size = 0x90000, scoped, tag = 'input window, operand 7, single buffered']
    #allocation17 [shape = 'u8[1536]{0}', space=vmem, size = 0x800, scoped, tag = 'input window, operand 8, single buffered']
    #allocation18 [shape = 's32[1]{0}', space=sflag, size = 0x4, scoped, tag = 'scoped memory for encoder_forward.1']
    #allocation19 [shape = 'u8[1769472]{0}', space=vmem, size = 0x1b0000, scoped, tag = 'input window, operand 9, single buffered']
    #allocation20 [shape = 'u8[1024]{0}', space=vmem, size = 0x400, scoped, tag = 'input window, operand 10, single buffered']
    #allocation21 [shape = 's32[1]{0}', space=sflag, size = 0x4, scoped, tag = 'scoped memory for encoder_forward.1']
    %16 = vsyncpa [#allocation7], 0
    %17 = vsyncpa [#allocation9], 0
    %18 = vsyncpa [#allocation12], 0
    %19 = vsyncpa [#allocation15], 0
    %20 = vsyncpa [#allocation18], 0
    %21 = vsyncpa [#allocation21], 0
    // Predicated region
    $region2: #{encoder_forward.1} parent=1 // pred_check
      _
    $region3: #{encoder_forward.1} parent=1 // pred_check_branch
      %23 = sbr.rel (0) target = $region5
    $region4: #{encoder_forward.1} parent=1 // pred_region
      _
    $region5: #{encoder_forward.1} parent=1 // pred_fallthru
      _
    // Predicated region
    $region6: #{encoder_forward.1} parent=1 // pred_check
      _
    $region7: #{encoder_forward.1} parent=1 // pred_check_branch
      %25 = sbr.rel (0) target = $region9
    $region8: #{encoder_forward.1} parent=1 // pred_region
      %s27 = ssub.s32 4608, 4608
      %28 = vsyncadd [#allocation7], %s27
      %s29 = sshll.u32 [#allocation6], 4
      %s30 = int_to_ptr.vmem [resolvable:$true] %s29
      %35 = dma.hbm_to_vmem [thread:$0]  %s1, 4608, %s30, [#allocation7], 192, 192, 12
    $region9: #{encoder_forward.1} parent=1 // pred_fallthru
      _
    // Predicated region
    $region10: #{encoder_forward.1} parent=1 // pred_check
      _
    $region11: #{encoder_forward.1} parent=1 // pred_check_branch
      %37 = sbr.rel (0) target = $region13
    $region12: #{encoder_forward.1} parent=1 // pred_region
      %s39 = ssub.s32 48, 48
      %40 = vsyncadd [#allocation9], %s39
      %s42 = sshll.u32 [#allocation8], 4
      %s43 = int_to_ptr.vmem [resolvable:$true] %s42
      %45 = dma.hbm_to_vmem [thread:$0]  %s2, 48, %s43, [#allocation9]
    $region13: #{encoder_forward.1} parent=1 // pred_fallthru
      _
    // Predicated region
    $region14: #{encoder_forward.1} parent=1 // pred_check
      _
    $region15: #{encoder_forward.1} parent=1 // pred_check_branch
      %47 = sbr.rel (0) target = $region17
    $region16: #{encoder_forward.1} parent=1 // pred_region
      %s49 = ssub.s32 18432, 18432
      %50 = vsyncadd [#allocation9], %s49
      %s51 = sshll.u32 [#allocation10], 4
      %s52 = int_to_ptr.vmem [resolvable:$true] %s51
      %57 = dma.hbm_to_vmem [thread:$0]  %s3, 18432, %s52, [#allocation9], 192, 192, 12
    $region17: #{encoder_forward.1} parent=1 // pred_fallthru
      _
    // Predicated region
    $region18: #{encoder_forward.1} parent=1 // pred_check
      _
    $region19: #{encoder_forward.1} parent=1 // pred_check_branch
      %59 = sbr.rel (0) target = $region21
    $region20: #{encoder_forward.1} parent=1 // pred_region
      %s61 = ssub.s32 48, 48
      %62 = vsyncadd [#allocation12], %s61
      %s64 = sshll.u32 [#allocation11], 4
      %s65 = int_to_ptr.vmem [resolvable:$true] %s64
      %67 = dma.hbm_to_vmem [thread:$0]  %s4, 48, %s65, [#allocation12]
    $region21: #{encoder_forward.1} parent=1 // pred_fallthru
      _
    // Predicated region
    $region22: #{encoder_forward.1} parent=1 // pred_check
      _
    $region23: #{encoder_forward.1} parent=1 // pred_check_branch
      %69 = sbr.rel (0) target = $region25
    $region24: #{encoder_forward.1} parent=1 // pred_region
      %s71 = ssub.s32 18432, 18432
      %72 = vsyncadd [#allocation12], %s71
      %s73 = sshll.u32 [#allocation13], 4
      %s74 = int_to_ptr.vmem [resolvable:$true] %s73
      %79 = dma.hbm_to_vmem [thread:$0]  %s5, 18432, %s74, [#allocation12], 192, 192, 12
    $region25: #{encoder_forward.1} parent=1 // pred_fallthru
      _
    // Predicated region
    $region26: #{encoder_forward.1} parent=1 // pred_check
      _
    $region27: #{encoder_forward.1} parent=1 // pred_check_branch
      %81 = sbr.rel (0) target = $region29
    $region28: #{encoder_forward.1} parent=1 // pred_region
      %s83 = ssub.s32 48, 48
      %84 = vsyncadd [#allocation15], %s83
      %s86 = sshll.u32 [#allocation14], 4
      %s87 = int_to_ptr.vmem [resolvable:$true] %s86
      %89 = dma.hbm_to_vmem [thread:$0]  %s6, 48, %s87, [#allocation15]
    $region29: #{encoder_forward.1} parent=1 // pred_fallthru
      _
    // Predicated region
    $region30: #{encoder_forward.1} parent=1 // pred_check
      _
    $region31: #{encoder_forward.1} parent=1 // pred_check_branch
      %91 = sbr.rel (0) target = $region33
    $region32: #{encoder_forward.1} parent=1 // pred_region
      %s93 = ssub.s32 18432, 18432
      %94 = vsyncadd [#allocation15], %s93
      %s95 = sshll.u32 [#allocation16], 4
      %s96 = int_to_ptr.vmem [resolvable:$true] %s95
      %101 = dma.hbm_to_vmem [thread:$0]  %s7, 18432, %s96, [#allocation15], 192, 192, 12
    $region33: #{encoder_forward.1} parent=1 // pred_fallthru
      _
    // Predicated region
    $region34: #{encoder_forward.1} parent=1 // pred_check
      _
    $region35: #{encoder_forward.1} parent=1 // pred_check_branch
      %103 = sbr.rel (0) target = $region37
    $region36: #{encoder_forward.1} parent=1 // pred_region
      %s105 = ssub.s32 48, 48
      %106 = vsyncadd [#allocation18], %s105
      %s108 = sshll.u32 [#allocation17], 4
      %s109 = int_to_ptr.vmem [resolvable:$true] %s108
      %111 = dma.hbm_to_vmem [thread:$0]  %s8, 48, %s109, [#allocation18]
    $region37: #{encoder_forward.1} parent=1 // pred_fallthru
      _
    // Predicated region
    $region38: #{encoder_forward.1} parent=1 // pred_check
      _
    $region39: #{encoder_forward.1} parent=1 // pred_check_branch
      %113 = sbr.rel (0) target = $region41
    $region40: #{encoder_forward.1} parent=1 // pred_region
      %s115 = ssub.s32 55296, 55296
      %116 = vsyncadd [#allocation18], %s115
      %s117 = sshll.u32 [#allocation19], 4
      %s118 = int_to_ptr.vmem [resolvable:$true] %s117
      %123 = dma.hbm_to_vmem [thread:$0]  %s9, 55296, %s118, [#allocation18], 128, 128, 8
    $region41: #{encoder_forward.1} parent=1 // pred_fallthru
      _
    // Predicated region
    $region42: #{encoder_forward.1} parent=1 // pred_check
      _
    $region43: #{encoder_forward.1} parent=1 // pred_check_branch
      %125 = sbr.rel (0) target = $region45
    $region44: #{encoder_forward.1} parent=1 // pred_region
      %s127 = ssub.s32 32, 32
      %128 = vsyncadd [#allocation21], %s127
      %s130 = sshll.u32 [#allocation20], 4
      %s131 = int_to_ptr.vmem [resolvable:$true] %s130
      %133 = dma.hbm_to_vmem [thread:$0]  %s10, 32, %s131, [#allocation21]
    $region45: #{encoder_forward.1} parent=1 // pred_fallthru
      _
    // Predicated region
    $region46: #{encoder_forward.1} parent=1 // pred_check
      _
    $region47: #{encoder_forward.1} parent=1 // pred_check_branch
      %135 = sbr.rel (0) target = $region49
    $region48: #{encoder_forward.1} parent=1 // pred_region
      %136 = dma.done [#allocation7], 4608
    $region49: #{encoder_forward.1} parent=1 // pred_fallthru
      _
    // Predicated region
    $region50: #{encoder_forward.1} parent=1 // pred_check
      _
    $region51: #{encoder_forward.1} parent=1 // pred_check_branch
      %138 = sbr.rel (0) target = $region53
    $region52: #{encoder_forward.1} parent=1 // pred_region
      %139 = dma.done [#allocation9], 48
    $region53: #{encoder_forward.1} parent=1 // pred_fallthru
      _
    // Predicated region
    $region54: #{encoder_forward.1} parent=1 // pred_check
      _
    $region55: #{encoder_forward.1} parent=1 // pred_check_branch
      %141 = sbr.rel (0) target = $region57
    $region56: #{encoder_forward.1} parent=1 // pred_region
      %142 = dma.done [#allocation9], 18432
    $region57: #{encoder_forward.1} parent=1 // pred_fallthru
      _
    // Predicated region
    $region58: #{encoder_forward.1} parent=1 // pred_check
      _
    $region59: #{encoder_forward.1} parent=1 // pred_check_branch
      %144 = sbr.rel (0) target = $region61
    $region60: #{encoder_forward.1} parent=1 // pred_region
      %145 = dma.done [#allocation12], 48
    $region61: #{encoder_forward.1} parent=1 // pred_fallthru
      _
    // Predicated region
    $region62: #{encoder_forward.1} parent=1 // pred_check
      _
    $region63: #{encoder_forward.1} parent=1 // pred_check_branch
      %147 = sbr.rel (0) target = $region65
    $region64: #{encoder_forward.1} parent=1 // pred_region
      %148 = dma.done [#allocation12], 18432
    $region65: #{encoder_forward.1} parent=1 // pred_fallthru
      _
    // Predicated region
    $region66: #{encoder_forward.1} parent=1 // pred_check
      _
    $region67: #{encoder_forward.1} parent=1 // pred_check_branch
      %150 = sbr.rel (0) target = $region69
    $region68: #{encoder_forward.1} parent=1 // pred_region
      %151 = dma.done [#allocation15], 48
    $region69: #{encoder_forward.1} parent=1 // pred_fallthru
      _
    // Predicated region
    $region70: #{encoder_forward.1} parent=1 // pred_check
      _
    $region71: #{encoder_forward.1} parent=1 // pred_check_branch
      %153 = sbr.rel (0) target = $region73
    $region72: #{encoder_forward.1} parent=1 // pred_region
      %154 = dma.done [#allocation15], 18432
    $region73: #{encoder_forward.1} parent=1 // pred_fallthru
      _
    // Predicated region
    $region74: #{encoder_forward.1} parent=1 // pred_check
      _
    $region75: #{encoder_forward.1} parent=1 // pred_check_branch
      %156 = sbr.rel (0) target = $region77
    $region76: #{encoder_forward.1} parent=1 // pred_region
      %157 = dma.done [#allocation18], 48
    $region77: #{encoder_forward.1} parent=1 // pred_fallthru
      _
    // Predicated region
    $region78: #{encoder_forward.1} parent=1 // pred_check
      _
    $region79: #{encoder_forward.1} parent=1 // pred_check_branch
      %159 = sbr.rel (0) target = $region81
    $region80: #{encoder_forward.1} parent=1 // pred_region
      %160 = dma.done [#allocation18], 55296
    $region81: #{encoder_forward.1} parent=1 // pred_fallthru
      _
    // Predicated region
    $region82: #{encoder_forward.1} parent=1 // pred_check
      _
    $region83: #{encoder_forward.1} parent=1 // pred_check_branch
      %162 = sbr.rel (0) target = $region85
    $region84: #{encoder_forward.1} parent=1 // pred_region
      %163 = dma.done [#allocation21], 32
    $region85: #{encoder_forward.1} parent=1 // pred_fallthru
      _
    %v165 = vld [vmem:[%s0] sm:$0xff]
    %v166 = vld [vmem:[%s0 + $0x8] sm:$0xff]
    %v167 = vld [vmem:[%s0 + $0x10] sm:$0xff]
    %v168 = vld [vmem:[%s0 + $0x18] sm:$0xff]
    %v169 = vld [vmem:[%s0 + $0x20] sm:$0xff]
    %v170 = vld [vmem:[%s0 + $0x28] sm:$0xff]
    %v171 = vld [vmem:[%s0 + $0x30] sm:$0xff]
    %v172 = vld [vmem:[%s0 + $0x38] sm:$0xff]
    %v173 = vld [vmem:[%s0 + $0x40] sm:$0xff]
    %v174 = vld [vmem:[%s0 + $0x48] sm:$0xff]
    %v175 = vld [vmem:[%s0 + $0x50] sm:$0xff]
    %v176 = vld [vmem:[%s0 + $0x58] sm:$0xff]
    %v177 = vld [vmem:[%s0 + $0x60] sm:$0xff]
    %v178 = vld [vmem:[%s0 + $0x68] sm:$0xff]
    %v179 = vld [vmem:[%s0 + $0x70] sm:$0xff]
    %v180 = vld [vmem:[%s0 + $0x78] sm:$0xff]
    %v181 = vld [vmem:[%s0 + $0x80] sm:$0xff]
    %v182 = vld [vmem:[%s0 + $0x88] sm:$0xff]
    %v183 = vld [vmem:[%s0 + $0x90] sm:$0xff]
    %v184 = vld [vmem:[%s0 + $0x98] sm:$0xff]
    %v185 = vld [vmem:[%s0 + $0xa0] sm:$0xff]
    %v186 = vld [vmem:[%s0 + $0xa8] sm:$0xff]
    %v187 = vld [vmem:[%s0 + $0xb0] sm:$0xff]
    %v188 = vld [vmem:[%s0 + $0xb8] sm:$0xff]
    %v189 = vld [vmem:[#allocation6] sm:$0xff]
    %v190 = vld [vmem:[#allocation6 + $0x8] sm:$0xf]
    %v191 = vld [vmem:[#allocation6 + $0xc] sm:$0xff]
    %v192 = vld [vmem:[#allocation6 + $0x14] sm:$0xf]
    %v193 = vld [vmem:[#allocation6 + $0x18] sm:$0xff]
    %v194 = vld [vmem:[#allocation6 + $0x20] sm:$0xf]
    %v195 = vld [vmem:[#allocation6 + $0x24] sm:$0xff]
    %v196 = vld [vmem:[#allocation6 + $0x2c] sm:$0xf]
    %v197 = vld [vmem:[#allocation6 + $0x30] sm:$0xff]
    %v198 = vld [vmem:[#allocation6 + $0x38] sm:$0xf]
    %v199 = vld [vmem:[#allocation6 + $0x3c] sm:$0xff]
    %v200 = vld [vmem:[#allocation6 + $0x44] sm:$0xf]
    %v201 = vld [vmem:[#allocation6 + $0x48] sm:$0xff]
    %v202 = vld [vmem:[#allocation6 + $0x50] sm:$0xf]
    %v203 = vld [vmem:[#allocation6 + $0x54] sm:$0xff]
    %v204 = vld [vmem:[#allocation6 + $0x5c] sm:$0xf]
    %v205 = vld [vmem:[#allocation6 + $0x60] sm:$0xff]
    %v206 = vld [vmem:[#allocation6 + $0x68] sm:$0xf]
    %v207 = vld [vmem:[#allocation6 + $0x6c] sm:$0xff]
    %v208 = vld [vmem:[#allocation6 + $0x74] sm:$0xf]
    %v209 = vld [vmem:[#allocation6 + $0x78] sm:$0xff]
    %v210 = vld [vmem:[#allocation6 + $0x80] sm:$0xf]
    %v211 = vld [vmem:[#allocation6 + $0x84] sm:$0xff]
    %v212 = vld [vmem:[#allocation6 + $0x8c] sm:$0xf]
    %v213 = vld [vmem:[#allocation6 + $0x90] sm:$0xff]
    %v214 = vld [vmem:[#allocation6 + $0x98] sm:$0xf]
    %v215 = vld [vmem:[#allocation6 + $0x9c] sm:$0xff]
    %v216 = vld [vmem:[#allocation6 + $0xa4] sm:$0xf]
    %v217 = vld [vmem:[#allocation6 + $0xa8] sm:$0xff]
    %v218 = vld [vmem:[#allocation6 + $0xb0] sm:$0xf]
    %v219 = vld [vmem:[#allocation6 + $0xb4] sm:$0xff]
    %v220 = vld [vmem:[#allocation6 + $0xbc] sm:$0xf]
    %v221 = vld [vmem:[#allocation6 + $0xc0] sm:$0xff]
    %v222 = vld [vmem:[#allocation6 + $0xc8] sm:$0xf]
    %v223 = vld [vmem:[#allocation6 + $0xcc] sm:$0xff]
    %v224 = vld [vmem:[#allocation6 + $0xd4] sm:$0xf]
    %v225 = vld [vmem:[#allocation6 + $0xd8] sm:$0xff]
    %v226 = vld [vmem:[#allocation6 + $0xe0] sm:$0xf]
    %v227 = vld [vmem:[#allocation6 + $0xe4] sm:$0xff]
    %v228 = vld [vmem:[#allocation6 + $0xec] sm:$0xf]
    %v229 = vld [vmem:[#allocation6 + $0xf0] sm:$0xff]
    %v230 = vld [vmem:[#allocation6 + $0xf8] sm:$0xf]
    %v231 = vld [vmem:[#allocation6 + $0xfc] sm:$0xff]
    %v232 = vld [vmem:[#allocation6 + $0x104] sm:$0xf]
    %v233 = vld [vmem:[#allocation6 + $0x108] sm:$0xff]
    %v234 = vld [vmem:[#allocation6 + $0x110] sm:$0xf]
    %v235 = vld [vmem:[#allocation6 + $0x114] sm:$0xff]
    %v236 = vld [vmem:[#allocation6 + $0x11c] sm:$0xf]
    %v237 = vld [vmem:[#allocation8] sm:$0x7]
    %v239 = vlaneseq
    %v240 = vshrl.u32 %v239, 7
    %v241 = vsub.s32 0, %v240
    %v242 = vrot.slane %v237, %v241
    %v243 = vlaneseq
    %v244 = vshrl.u32 %v243, 7
    %v245 = vsub.s32 1, %v244
    %v246 = vrot.slane %v237, %v245
    %v247 = vlaneseq
    %v248 = vshrl.u32 %v247, 7
    %v249 = vsub.s32 2, %v248
    %v250 = vrot.slane %v237, %v249
    %v278 = vunpack.c.l.b16 %v165
    %v279 = vunpack.c.h.b16 %v165
    %v280 = vunpack.c.l.b16 %v166
    %v281 = vunpack.c.h.b16 %v166
    %v282 = vunpack.c.l.b16 %v167
    %v283 = vunpack.c.h.b16 %v167
    %v284 = vunpack.c.l.b16 %v168
    %v285 = vunpack.c.h.b16 %v168
    %v286 = vunpack.c.l.b16 %v169
    %v287 = vunpack.c.h.b16 %v169
    %v288 = vunpack.c.l.b16 %v170
    %v289 = vunpack.c.h.b16 %v170
    %v290 = vunpack.c.l.b16 %v171
    %v291 = vunpack.c.h.b16 %v171
    %v292 = vunpack.c.l.b16 %v172
    %v293 = vunpack.c.h.b16 %v172
    %v294 = vunpack.c.l.b16 %v173
    %v295 = vunpack.c.h.b16 %v173
    %v296 = vunpack.c.l.b16 %v174
    %v297 = vunpack.c.h.b16 %v174
    %v298 = vunpack.c.l.b16 %v175
    %v299 = vunpack.c.h.b16 %v175
    %v300 = vunpack.c.l.b16 %v176
    %v301 = vunpack.c.h.b16 %v176
    %v302 = vunpack.c.l.b16 %v177
    %v303 = vunpack.c.h.b16 %v177
    %v304 = vunpack.c.l.b16 %v178
    %v305 = vunpack.c.h.b16 %v178
    %v306 = vunpack.c.l.b16 %v179
    %v307 = vunpack.c.h.b16 %v179
    %v308 = vunpack.c.l.b16 %v180
    %v309 = vunpack.c.h.b16 %v180
    %v310 = vunpack.c.l.b16 %v181
    %v311 = vunpack.c.h.b16 %v181
    %v312 = vunpack.c.l.b16 %v182
    %v313 = vunpack.c.h.b16 %v182
    %v314 = vunpack.c.l.b16 %v183
    %v315 = vunpack.c.h.b16 %v183
    %v316 = vunpack.c.l.b16 %v184
    %v317 = vunpack.c.h.b16 %v184
    %v318 = vunpack.c.l.b16 %v185
    %v319 = vunpack.c.h.b16 %v185
    %v320 = vunpack.c.l.b16 %v186
    %v321 = vunpack.c.h.b16 %v186
    %v322 = vunpack.c.l.b16 %v187
    %v323 = vunpack.c.h.b16 %v187
    %v324 = vunpack.c.l.b16 %v188
    %v325 = vunpack.c.h.b16 %v188
    %v326 = vpack.c.b16 %v280, %v278
    %v327 = vpack.c.b16 %v281, %v279
    %v328 = vpack.c.b16 %v284, %v282
    %v329 = vpack.c.b16 %v285, %v283
    %v330 = vpack.c.b16 %v288, %v286
    %v331 = vpack.c.b16 %v289, %v287
    %v332 = vpack.c.b16 %v292, %v290
    %v333 = vpack.c.b16 %v293, %v291
    %v334 = vpack.c.b16 %v296, %v294
    %v335 = vpack.c.b16 %v297, %v295
    %v336 = vpack.c.b16 %v300, %v298
    %v337 = vpack.c.b16 %v301, %v299
    %v338 = vpack.c.b16 %v304, %v302
    %v339 = vpack.c.b16 %v305, %v303
    %v340 = vpack.c.b16 %v308, %v306
    %v341 = vpack.c.b16 %v309, %v307
    %v342 = vpack.c.b16 %v312, %v310
    %v343 = vpack.c.b16 %v313, %v311
    %v344 = vpack.c.b16 %v316, %v314
    %v345 = vpack.c.b16 %v317, %v315
    %v346 = vpack.c.b16 %v320, %v318
    %v347 = vpack.c.b16 %v321, %v319
    %v348 = vpack.c.b16 %v324, %v322
    %v349 = vpack.c.b16 %v325, %v323
    %v410 = vunpack.c.l.b16 %v189
    %v411 = vunpack.c.h.b16 %v189
    %v412 = vunpack.c.l.b16 %v190
    %v413 = vunpack.c.l.b16 %v191
    %v414 = vunpack.c.h.b16 %v191
    %v415 = vunpack.c.l.b16 %v192
    %v416 = vunpack.c.l.b16 %v193
    %v417 = vunpack.c.h.b16 %v193
    %v418 = vunpack.c.l.b16 %v194
    %v419 = vunpack.c.l.b16 %v195
    %v420 = vunpack.c.h.b16 %v195
    %v421 = vunpack.c.l.b16 %v196
    %v422 = vunpack.c.l.b16 %v197
    %v423 = vunpack.c.h.b16 %v197
    %v424 = vunpack.c.l.b16 %v198
    %v425 = vunpack.c.l.b16 %v199
    %v426 = vunpack.c.h.b16 %v199
    %v427 = vunpack.c.l.b16 %v200
    %v428 = vunpack.c.l.b16 %v201
    %v429 = vunpack.c.h.b16 %v201
    %v430 = vunpack.c.l.b16 %v202
    %v431 = vunpack.c.l.b16 %v203
    %v432 = vunpack.c.h.b16 %v203
    %v433 = vunpack.c.l.b16 %v204
    %v434 = vunpack.c.l.b16 %v205
    %v435 = vunpack.c.h.b16 %v205
    %v436 = vunpack.c.l.b16 %v206
    %v437 = vunpack.c.l.b16 %v207
    %v438 = vunpack.c.h.b16 %v207
    %v439 = vunpack.c.l.b16 %v208
    %v440 = vunpack.c.l.b16 %v209
    %v441 = vunpack.c.h.b16 %v209
    %v442 = vunpack.c.l.b16 %v210
    %v443 = vunpack.c.l.b16 %v211
    %v444 = vunpack.c.h.b16 %v211
    %v445 = vunpack.c.l.b16 %v212
    %v446 = vunpack.c.l.b16 %v213
    %v447 = vunpack.c.h.b16 %v213
    %v448 = vunpack.c.l.b16 %v214
    %v449 = vunpack.c.l.b16 %v215
    %v450 = vunpack.c.h.b16 %v215
    %v451 = vunpack.c.l.b16 %v216
    %v452 = vunpack.c.l.b16 %v217
    %v453 = vunpack.c.h.b16 %v217
    %v454 = vunpack.c.l.b16 %v218
    %v455 = vunpack.c.l.b16 %v219
    %v456 = vunpack.c.h.b16 %v219
    %v457 = vunpack.c.l.b16 %v220
    %v458 = vunpack.c.l.b16 %v221
    %v459 = vunpack.c.h.b16 %v221
    %v460 = vunpack.c.l.b16 %v222
    %v461 = vunpack.c.l.b16 %v223
    %v462 = vunpack.c.h.b16 %v223
    %v463 = vunpack.c.l.b16 %v224
    %v464 = vunpack.c.l.b16 %v225
    %v465 = vunpack.c.h.b16 %v225
    %v466 = vunpack.c.l.b16 %v226
    %v467 = vunpack.c.l.b16 %v227
    %v468 = vunpack.c.h.b16 %v227
    %v469 = vunpack.c.l.b16 %v228
    %v470 = vunpack.c.l.b16 %v229
    %v471 = vunpack.c.h.b16 %v229
    %v472 = vunpack.c.l.b16 %v230
    %v473 = vunpack.c.l.b16 %v231
    %v474 = vunpack.c.h.b16 %v231
    %v475 = vunpack.c.l.b16 %v232
    %v476 = vunpack.c.l.b16 %v233
    %v477 = vunpack.c.h.b16 %v233
    %v478 = vunpack.c.l.b16 %v234
    %v479 = vunpack.c.l.b16 %v235
    %v480 = vunpack.c.h.b16 %v235
    %v481 = vunpack.c.l.b16 %v236
    %v482 = vpack.c.b16 %v413, %v410
    %v483 = vpack.c.b16 %v414, %v411
    %v484 = vpack.c.b16 %v415, %v412
    %v485 = vpack.c.b16 %v419, %v416
    %v486 = vpack.c.b16 %v420, %v417
    %v487 = vpack.c.b16 %v421, %v418
    %v488 = vpack.c.b16 %v425, %v422
    %v489 = vpack.c.b16 %v426, %v423
    %v490 = vpack.c.b16 %v427, %v424
    %v491 = vpack.c.b16 %v431, %v428
    %v492 = vpack.c.b16 %v432, %v429
    %v493 = vpack.c.b16 %v433, %v430
    %v494 = vpack.c.b16 %v437, %v434
    %v495 = vpack.c.b16 %v438, %v435
    %v496 = vpack.c.b16 %v439, %v436
    %v497 = vpack.c.b16 %v443, %v440
    %v498 = vpack.c.b16 %v444, %v441
    %v499 = vpack.c.b16 %v445, %v442
    %v500 = vpack.c.b16 %v449, %v446
    %v501 = vpack.c.b16 %v450, %v447
    %v502 = vpack.c.b16 %v451, %v448
    %v503 = vpack.c.b16 %v455, %v452
    %v504 = vpack.c.b16 %v456, %v453
    %v505 = vpack.c.b16 %v457, %v454
    %v506 = vpack.c.b16 %v461, %v458
    %v507 = vpack.c.b16 %v462, %v459
    %v508 = vpack.c.b16 %v463, %v460
    %v509 = vpack.c.b16 %v467, %v464
    %v510 = vpack.c.b16 %v468, %v465
    %v511 = vpack.c.b16 %v469, %v466
    %v512 = vpack.c.b16 %v473, %v470
    %v513 = vpack.c.b16 %v474, %v471
    %v514 = vpack.c.b16 %v475, %v472
    %v515 = vpack.c.b16 %v479, %v476
    %v516 = vpack.c.b16 %v480, %v477
    %v517 = vpack.c.b16 %v481, %v478
    %vm554 = vcmask 523264
    %v556 = vsel %vm554, %v327, 0
    %v559 = vsel %vm554, %v329, 0
    %v562 = vsel %vm554, %v331, 0
    %v565 = vsel %vm554, %v333, 0
    %v568 = vsel %vm554, %v335, 0
    %v571 = vsel %vm554, %v337, 0
    %v574 = vsel %vm554, %v339, 0
    %v577 = vsel %vm554, %v341, 0
    %v580 = vsel %vm554, %v343, 0
    %v583 = vsel %vm554, %v345, 0
    %v586 = vsel %vm554, %v347, 0
    %v589 = vsel %vm554, %v349, 0
    %591 = vmatprep.subr.bf16.mxu0 %v483
    %592 = vmatpush1.bf16.msra.mxu0 %v482
    %593 = vmatprep.subr.bf16.mxu0 %v486
    %594 = vmatpush1.bf16.msra.mxu0 %v485
    %595 = vmatprep.subr.bf16.mxu0 %v489
    %596 = vmatpush1.bf16.msra.mxu0 %v488
    %597 = vmatprep.subr.bf16.mxu0 %v492
    %598 = vmatpush1.bf16.msra.mxu0 %v491
    %599 = vmatprep.subr.bf16.mxu0 %v495
    %600 = vmatpush1.bf16.msra.mxu0 %v494
    %601 = vmatprep.subr.bf16.mxu0 %v498
    %602 = vmatpush1.bf16.msra.mxu0 %v497
    %603 = vmatprep.subr.bf16.mxu0 %v501
    %604 = vmatpush1.bf16.msra.mxu0 %v500
    %605 = vmatprep.subr.bf16.mxu0 %v504
    %606 = vmatpush1.bf16.msra.mxu0 %v503
    %607 = vmatprep.subr.bf16.mxu0 %v507
    %608 = vmatpush1.bf16.msra.mxu0 %v506
    %609 = vmatprep.subr.bf16.mxu0 %v510
    %610 = vmatpush1.bf16.msra.mxu0 %v509
    %611 = vmatprep.subr.bf16.mxu0 %v513
    %612 = vmatpush1.bf16.msra.mxu0 %v512
    %613 = vmatprep.subr.bf16.mxu0 %v516
    %614 = vmatpush1.bf16.msra.mxu0 %v515
    %615 = vmatprep.subr.bf16.mxu0 0
    %616 = vmatpush1.bf16.msra.mxu0 0
    %617 = vmatprep.subr.bf16.mxu0 0
    %618 = vmatpush1.bf16.msra.mxu0 0
    %619 = vmatprep.subr.bf16.mxu0 0
    %620 = vmatpush1.bf16.msra.mxu0 0
    %621 = vmatprep.subr.bf16.mxu0 0
    %622 = vmatpush1.bf16.msra.mxu0 0
    %623 = vmatprep.mubr.bf16.mxu0 %v556
    %624 = vmatmul.mubr.bf16.gmra.mrb[0].mxu0 %v326
    %v625 = vpop.f32.mrb[0].mxu0
    %v626 = vadd.f32 %v242, %v625
    %v627 = vpop.f32.mrb[0].mxu0
    %v628 = vadd.f32 %v246, %v627
    %v629 = vpop.f32.mrb[0].mxu0
    %v630 = vadd.f32 %v242, %v629
    %v631 = vpop.f32.mrb[0].mxu0
    %v632 = vadd.f32 %v246, %v631
    %633 = vmatprep.mubr.bf16.mxu0 %v559
    %634 = vmatmul.mubr.bf16.gmra.mrb[0].mxu0 %v328
    %v635 = vpop.f32.mrb[0].mxu0
    %v636 = vadd.f32 %v242, %v635
    %v637 = vpop.f32.mrb[0].mxu0
    %v638 = vadd.f32 %v246, %v637
    %v639 = vpop.f32.mrb[0].mxu0
    %v640 = vadd.f32 %v242, %v639
    %v641 = vpop.f32.mrb[0].mxu0
    %v642 = vadd.f32 %v246, %v641
    %643 = vmatprep.mubr.bf16.mxu0 %v562
    %644 = vmatmul.mubr.bf16.gmra.mrb[0].mxu0 %v330
    %v645 = vpop.f32.mrb[0].mxu0
    %v646 = vadd.f32 %v242, %v645
    %v647 = vpop.f32.mrb[0].mxu0
    %v648 = vadd.f32 %v246, %v647
    %v649 = vpop.f32.mrb[0].mxu0
    %v650 = vadd.f32 %v242, %v649
    %v651 = vpop.f32.mrb[0].mxu0
    %v652 = vadd.f32 %v246, %v651
    %653 = vmatprep.mubr.bf16.mxu0 %v565
    %654 = vmatmul.mubr.bf16.gmra.mrb[0].mxu0 %v332
    %v655 = vpop.f32.mrb[0].mxu0
    %v656 = vadd.f32 %v242, %v655
    %v657 = vpop.f32.mrb[0].mxu0
    %v658 = vadd.f32 %v246, %v657
    %v659 = vpop.f32.mrb[0].mxu0
    %v660 = vadd.f32 %v242, %v659
    %v661 = vpop.f32.mrb[0].mxu0
    %v662 = vadd.f32 %v246, %v661
    %663 = vmatprep.mubr.bf16.mxu0 %v568
    %664 = vmatmul.mubr.bf16.gmra.mrb[0].mxu0 %v334
    %v665 = vpop.f32.mrb[0].mxu0
    %v666 = vadd.f32 %v242, %v665
    %v667 = vpop.f32.mrb[0].mxu0
    %v668 = vadd.f32 %v246, %v667
    %v669 = vpop.f32.mrb[0].mxu0
    %v670 = vadd.f32 %v242, %v669
    %v671 = vpop.f32.mrb[0].mxu0
    %v672 = vadd.f32 %v246, %v671
    %673 = vmatprep.mubr.bf16.mxu0 %v571
    %674 = vmatmul.mubr.bf16.gmra.mrb[0].mxu0 %v336
    %v675 = vpop.f32.mrb[0].mxu0
    %v676 = vadd.f32 %v242, %v675
    %v677 = vpop.f32.mrb[0].mxu0
    %v678 = vadd.f32 %v246, %v677
    %v679 = vpop.f32.mrb[0].mxu0
    %v680 = vadd.f32 %v242, %v679
    %v681 = vpop.f32.mrb[0].mxu0
    %v682 = vadd.f32 %v246, %v681
    %683 = vmatprep.mubr.bf16.mxu0 %v574
    %684 = vmatmul.mubr.bf16.gmra.mrb[0].mxu0 %v338
    %v685 = vpop.f32.mrb[0].mxu0
    %v686 = vadd.f32 %v242, %v685
    %v687 = vpop.f32.mrb[0].mxu0
    %v688 = vadd.f32 %v246, %v687
    %v689 = vpop.f32.mrb[0].mxu0
    %v690 = vadd.f32 %v242, %v689
    %v691 = vpop.f32.mrb[0].mxu0
    %v692 = vadd.f32 %v246, %v691
    %693 = vmatprep.mubr.bf16.mxu0 %v577
    %694 = vmatmul.mubr.bf16.gmra.mrb[0].mxu0 %v340
    %v695 = vpop.f32.mrb[0].mxu0
    %v696 = vadd.f32 %v242, %v695
    %v697 = vpop.f32.mrb[0].mxu0
    %v698 = vadd.f32 %v246, %v697
    %v699 = vpop.f32.mrb[0].mxu0
    %v700 = vadd.f32 %v242, %v699
    %v701 = vpop.f32.mrb[0].mxu0
    %v702 = vadd.f32 %v246, %v701
    %703 = vmatprep.mubr.bf16.mxu0 %v580
    %704 = vmatmul.mubr.bf16.gmra.mrb[0].mxu0 %v342
    %v705 = vpop.f32.mrb[0].mxu0
    %v706 = vadd.f32 %v242, %v705
    %v707 = vpop.f32.mrb[0].mxu0
    %v708 = vadd.f32 %v246, %v707
    %v709 = vpop.f32.mrb[0].mxu0
    %v710 = vadd.f32 %v242, %v709
    %v711 = vpop.f32.mrb[0].mxu0
    %v712 = vadd.f32 %v246, %v711
    %713 = vmatprep.mubr.bf16.mxu0 %v583
    %714 = vmatmul.mubr.bf16.gmra.mrb[0].mxu0 %v344
    %v715 = vpop.f32.mrb[0].mxu0
    %v716 = vadd.f32 %v242, %v715
    %v717 = vpop.f32.mrb[0].mxu0
    %v718 = vadd.f32 %v246, %v717
    %v719 = vpop.f32.mrb[0].mxu0
    %v720 = vadd.f32 %v242, %v719
    %v721 = vpop.f32.mrb[0].mxu0
    %v722 = vadd.f32 %v246, %v721
    %723 = vmatprep.mubr.bf16.mxu0 %v586
    %724 = vmatmul.mubr.bf16.gmra.mrb[0].mxu0 %v346
    %v725 = vpop.f32.mrb[0].mxu0
    %v726 = vadd.f32 %v242, %v725
    %v727 = vpop.f32.mrb[0].mxu0
    %v728 = vadd.f32 %v246, %v727
    %v729 = vpop.f32.mrb[0].mxu0
    %v730 = vadd.f32 %v242, %v729
    %v731 = vpop.f32.mrb[0].mxu0
    %v732 = vadd.f32 %v246, %v731
    %733 = vmatprep.mubr.bf16.mxu0 %v589
    %734 = vmatmul.mubr.bf16.gmra.mrb[0].mxu0 %v348
    %v735 = vpop.f32.mrb[0].mxu0
    %v736 = vadd.f32 %v242, %v735
    %v737 = vpop.f32.mrb[0].mxu0
    %v738 = vadd.f32 %v246, %v737
    %v739 = vpop.f32.mrb[0].mxu0
    %v740 = vadd.f32 %v242, %v739
    %v741 = vpop.f32.mrb[0].mxu0
    %v742 = vadd.f32 %v246, %v741
    %743 = vdwg.mxu0
    %744 = vmatprep.subr.bf16.mxu0 0
    %745 = vmatpush1.bf16.msra.mxu0 %v484
    %746 = vmatprep.subr.bf16.mxu0 0
    %747 = vmatpush1.bf16.msra.mxu0 %v487
    %748 = vmatprep.subr.bf16.mxu0 0
    %749 = vmatpush1.bf16.msra.mxu0 %v490
    %750 = vmatprep.subr.bf16.mxu0 0
    %751 = vmatpush1.bf16.msra.mxu0 %v493
    %752 = vmatprep.subr.bf16.mxu0 0
    %753 = vmatpush1.bf16.msra.mxu0 %v496
    %754 = vmatprep.subr.bf16.mxu0 0
    %755 = vmatpush1.bf16.msra.mxu0 %v499
    %756 = vmatprep.subr.bf16.mxu0 0
    %757 = vmatpush1.bf16.msra.mxu0 %v502
    %758 = vmatprep.subr.bf16.mxu0 0
    %759 = vmatpush1.bf16.msra.mxu0 %v505
    %760 = vmatprep.subr.bf16.mxu0 0
    %761 = vmatpush1.bf16.msra.mxu0 %v508
    %762 = vmatprep.subr.bf16.mxu0 0
    %763 = vmatpush1.bf16.msra.mxu0 %v511
    %764 = vmatprep.subr.bf16.mxu0 0
    %765 = vmatpush1.bf16.msra.mxu0 %v514
    %766 = vmatprep.subr.bf16.mxu0 0
    %767 = vmatpush1.bf16.msra.mxu0 %v517
    %768 = vmatprep.subr.bf16.mxu0 0
    %769 = vmatpush1.bf16.msra.mxu0 0
    %770 = vmatprep.subr.bf16.mxu0 0
    %771 = vmatpush1.bf16.msra.mxu0 0
    %772 = vmatprep.subr.bf16.mxu0 0
    %773 = vmatpush1.bf16.msra.mxu0 0
    %774 = vmatprep.subr.bf16.mxu0 0
    %775 = vmatpush1.bf16.msra.mxu0 0
    %776 = vmatprep.mubr.bf16.mxu0 %v556
    %777 = vmatmul.mubr.bf16.gmra.mrb[0].mxu0 %v326
    %v778 = vpop.f32.mrb[0].mxu0
    %v779 = vadd.f32 %v250, %v778
    %v780 = vpop.f32.mrb[0].mxu0
    %v781 = vpop.f32.mrb[0].mxu0
    %v782 = vadd.f32 %v250, %v781
    %v783 = vpop.f32.mrb[0].mxu0
    %784 = vmatprep.mubr.bf16.mxu0 %v559
    %785 = vmatmul.mubr.bf16.gmra.mrb[0].mxu0 %v328
    %v786 = vpop.f32.mrb[0].mxu0
    %v787 = vadd.f32 %v250, %v786
    %v788 = vpop.f32.mrb[0].mxu0
    %v789 = vpop.f32.mrb[0].mxu0
    %v790 = vadd.f32 %v250, %v789
    %v791 = vpop.f32.mrb[0].mxu0
    %792 = vmatprep.mubr.bf16.mxu0 %v562
    %793 = vmatmul.mubr.bf16.gmra.mrb[0].mxu0 %v330
    %v794 = vpop.f32.mrb[0].mxu0
    %v795 = vadd.f32 %v250, %v794
    %v796 = vpop.f32.mrb[0].mxu0
    %v797 = vpop.f32.mrb[0].mxu0
    %v798 = vadd.f32 %v250, %v797
    %v799 = vpop.f32.mrb[0].mxu0
    %800 = vmatprep.mubr.bf16.mxu0 %v565
    %801 = vmatmul.mubr.bf16.gmra.mrb[0].mxu0 %v332
    %v802 = vpop.f32.mrb[0].mxu0
    %v803 = vadd.f32 %v250, %v802
    %v804 = vpop.f32.mrb[0].mxu0
    %v805 = vpop.f32.mrb[0].mxu0
    %v806 = vadd.f32 %v250, %v805
    %v807 = vpop.f32.mrb[0].mxu0
    %808 = vmatprep.mubr.bf16.mxu0 %v568
    %809 = vmatmul.mubr.bf16.gmra.mrb[0].mxu0 %v334
    %v810 = vpop.f32.mrb[0].mxu0
    %v811 = vadd.f32 %v250, %v810
    %v812 = vpop.f32.mrb[0].mxu0
    %v813 = vpop.f32.mrb[0].mxu0
    %v814 = vadd.f32 %v250, %v813
    %v815 = vpop.f32.mrb[0].mxu0
    %816 = vmatprep.mubr.bf16.mxu0 %v571
    %817 = vmatmul.mubr.bf16.gmra.mrb[0].mxu0 %v336
    %v818 = vpop.f32.mrb[0].mxu0
    %v819 = vadd.f32 %v250, %v818
    %v820 = vpop.f32.mrb[0].mxu0
    %v821 = vpop.f32.mrb[0].mxu0
    %v822 = vadd.f32 %v250, %v821
    %v823 = vpop.f32.mrb[0].mxu0
    %824 = vmatprep.mubr.bf16.mxu0 %v574
    %825 = vmatmul.mubr.bf16.gmra.mrb[0].mxu0 %v338
    %v826 = vpop.f32.mrb[0].mxu0
    %v827 = vadd.f32 %v250, %v826
    %v828 = vpop.f32.mrb[0].mxu0
    %v829 = vpop.f32.mrb[0].mxu0
    %v830 = vadd.f32 %v250, %v829
    %v831 = vpop.f32.mrb[0].mxu0
    %832 = vmatprep.mubr.bf16.mxu0 %v577
    %833 = vmatmul.mubr.bf16.gmra.mrb[0].mxu0 %v340
    %v834 = vpop.f32.mrb[0].mxu0
    %v835 = vadd.f32 %v250, %v834
    %v836 = vpop.f32.mrb[0].mxu0
    %v837 = vpop.f32.mrb[0].mxu0
    %v838 = vadd.f32 %v250, %v837
    %v839 = vpop.f32.mrb[0].mxu0
    %840 = vmatprep.mubr.bf16.mxu0 %v580
    %841 = vmatmul.mubr.bf16.gmra.mrb[0].mxu0 %v342
    %v842 = vpop.f32.mrb[0].mxu0
    %v843 = vadd.f32 %v250, %v842
    %v844 = vpop.f32.mrb[0].mxu0
    %v845 = vpop.f32.mrb[0].mxu0
    %v846 = vadd.f32 %v250, %v845
    %v847 = vpop.f32.mrb[0].mxu0
    %848 = vmatprep.mubr.bf16.mxu0 %v583
    %849 = vmatmul.mubr.bf16.gmra.mrb[0].mxu0 %v344
    %v850 = vpop.f32.mrb[0].mxu0
    %v851 = vadd.f32 %v250, %v850
    %v852 = vpop.f32.mrb[0].mxu0
    %v853 = vpop.f32.mrb[0].mxu0
    %v854 = vadd.f32 %v250, %v853
    %v855 = vpop.f32.mrb[0].mxu0
    %856 = vmatprep.mubr.bf16.mxu0 %v586
    %857 = vmatmul.mubr.bf16.gmra.mrb[0].mxu0 %v346
    %v858 = vpop.f32.mrb[0].mxu0
    %v859 = vadd.f32 %v250, %v858
    %v860 = vpop.f32.mrb[0].mxu0
    %v861 = vpop.f32.mrb[0].mxu0
    %v862 = vadd.f32 %v250, %v861
    %v863 = vpop.f32.mrb[0].mxu0
    %864 = vmatprep.mubr.bf16.mxu0 %v589
    %865 = vmatmul.mubr.bf16.gmra.mrb[0].mxu0 %v348
    %v866 = vpop.f32.mrb[0].mxu0
    %v867 = vadd.f32 %v250, %v866
    %v868 = vpop.f32.mrb[0].mxu0
    %v869 = vpop.f32.mrb[0].mxu0
    %v870 = vadd.f32 %v250, %v869
    %v871 = vpop.f32.mrb[0].mxu0
    %872 = vdwg.mxu0
    %v873 = vmax.f32 %v626, 0.0
    %v874 = vmax.f32 %v628, 0.0
    %v875 = vmax.f32 %v779, 0.0
    %v876 = vmax.f32 %v630, 0.0
    %v877 = vmax.f32 %v632, 0.0
    %v878 = vmax.f32 %v782, 0.0
    %v879 = vmax.f32 %v636, 0.0
    %v880 = vmax.f32 %v638, 0.0
    %v881 = vmax.f32 %v787, 0.0
    %v882 = vmax.f32 %v640, 0.0
    %v883 = vmax.f32 %v642, 0.0
    %v884 = vmax.f32 %v790, 0.0
    %v885 = vmax.f32 %v646, 0.0
    %v886 = vmax.f32 %v648, 0.0
    %v887 = vmax.f32 %v795, 0.0
    %v888 = vmax.f32 %v650, 0.0
    %v889 = vmax.f32 %v652, 0.0
    %v890 = vmax.f32 %v798, 0.0
    %v891 = vmax.f32 %v656, 0.0
    %v892 = vmax.f32 %v658, 0.0
    %v893 = vmax.f32 %v803, 0.0
    %v894 = vmax.f32 %v660, 0.0
    %v895 = vmax.f32 %v662, 0.0
    %v896 = vmax.f32 %v806, 0.0
    %v897 = vmax.f32 %v666, 0.0
    %v898 = vmax.f32 %v668, 0.0
    %v899 = vmax.f32 %v811, 0.0
    %v900 = vmax.f32 %v670, 0.0
    %v901 = vmax.f32 %v672, 0.0
    %v902 = vmax.f32 %v814, 0.0
    %v903 = vmax.f32 %v676, 0.0
    %v904 = vmax.f32 %v678, 0.0
    %v905 = vmax.f32 %v819, 0.0
    %v906 = vmax.f32 %v680, 0.0
    %v907 = vmax.f32 %v682, 0.0
    %v908 = vmax.f32 %v822, 0.0
    %v909 = vmax.f32 %v686, 0.0
    %v910 = vmax.f32 %v688, 0.0
    %v911 = vmax.f32 %v827, 0.0
    %v912 = vmax.f32 %v690, 0.0
    %v913 = vmax.f32 %v692, 0.0
    %v914 = vmax.f32 %v830, 0.0
    %v915 = vmax.f32 %v696, 0.0
    %v916 = vmax.f32 %v698, 0.0
    %v917 = vmax.f32 %v835, 0.0
    %v918 = vmax.f32 %v700, 0.0
    %v919 = vmax.f32 %v702, 0.0
    %v920 = vmax.f32 %v838, 0.0
    %v921 = vmax.f32 %v706, 0.0
    %v922 = vmax.f32 %v708, 0.0
    %v923 = vmax.f32 %v843, 0.0
    %v924 = vmax.f32 %v710, 0.0
    %v925 = vmax.f32 %v712, 0.0
    %v926 = vmax.f32 %v846, 0.0
    %v927 = vmax.f32 %v716, 0.0
    %v928 = vmax.f32 %v718, 0.0
    %v929 = vmax.f32 %v851, 0.0
    %v930 = vmax.f32 %v720, 0.0
    %v931 = vmax.f32 %v722, 0.0
    %v932 = vmax.f32 %v854, 0.0
    %v933 = vmax.f32 %v726, 0.0
    %v934 = vmax.f32 %v728, 0.0
    %v935 = vmax.f32 %v859, 0.0
    %v936 = vmax.f32 %v730, 0.0
    %v937 = vmax.f32 %v732, 0.0
    %v938 = vmax.f32 %v862, 0.0
    %v939 = vmax.f32 %v736, 0.0
    %v940 = vmax.f32 %v738, 0.0
    %v941 = vmax.f32 %v867, 0.0
    %v942 = vmax.f32 %v740, 0.0
    %v943 = vmax.f32 %v742, 0.0
    %v944 = vmax.f32 %v870, 0.0
    %v945 = vpack.c.bf16 %v876, %v873
    %v946 = vpack.c.bf16 %v877, %v874
    %v947 = vpack.c.bf16 %v878, %v875
    %v948 = vpack.c.bf16 %v882, %v879
    %v949 = vpack.c.bf16 %v883, %v880
    %v950 = vpack.c.bf16 %v884, %v881
    %v951 = vpack.c.bf16 %v888, %v885
    %v952 = vpack.c.bf16 %v889, %v886
    %v953 = vpack.c.bf16 %v890, %v887
    %v954 = vpack.c.bf16 %v894, %v891
    %v955 = vpack.c.bf16 %v895, %v892
    %v956 = vpack.c.bf16 %v896, %v893
    %v957 = vpack.c.bf16 %v900, %v897
    %v958 = vpack.c.bf16 %v901, %v898
    %v959 = vpack.c.bf16 %v902, %v899
    %v960 = vpack.c.bf16 %v906, %v903
    %v961 = vpack.c.bf16 %v907, %v904
    %v962 = vpack.c.bf16 %v908, %v905
    %v963 = vpack.c.bf16 %v912, %v909
    %v964 = vpack.c.bf16 %v913, %v910
    %v965 = vpack.c.bf16 %v914, %v911
    %v966 = vpack.c.bf16 %v918, %v915
    %v967 = vpack.c.bf16 %v919, %v916
    %v968 = vpack.c.bf16 %v920, %v917
    %v969 = vpack.c.bf16 %v924, %v921
    %v970 = vpack.c.bf16 %v925, %v922
    %v971 = vpack.c.bf16 %v926, %v923
    %v972 = vpack.c.bf16 %v930, %v927
    %v973 = vpack.c.bf16 %v931, %v928
    %v974 = vpack.c.bf16 %v932, %v929
    %v975 = vpack.c.bf16 %v936, %v933
    %v976 = vpack.c.bf16 %v937, %v934
    %v977 = vpack.c.bf16 %v938, %v935
    %v978 = vpack.c.bf16 %v942, %v939
    %v979 = vpack.c.bf16 %v943, %v940
    %v980 = vpack.c.bf16 %v944, %v941
    %981 = vst [vmem:[#allocation2] sm:$0xff] %v945
    %982 = vst [vmem:[#allocation2 + $0x8] sm:$0xff] %v946
    %983 = vst [vmem:[#allocation2 + $0x10] sm:$0xff] %v947
    %984 = vst [vmem:[#allocation2 + $0x18] sm:$0xff] %v948
    %985 = vst [vmem:[#allocation2 + $0x20] sm:$0xff] %v949
    %986 = vst [vmem:[#allocation2 + $0x28] sm:$0xff] %v950
    %987 = vst [vmem:[#allocation2 + $0x30] sm:$0xff] %v951
    %988 = vst [vmem:[#allocation2 + $0x38] sm:$0xff] %v952
    %989 = vst [vmem:[#allocation2 + $0x40] sm:$0xff] %v953
    %990 = vst [vmem:[#allocation2 + $0x48] sm:$0xff] %v954
    %991 = vst [vmem:[#allocation2 + $0x50] sm:$0xff] %v955
    %992 = vst [vmem:[#allocation2 + $0x58] sm:$0xff] %v956
    %993 = vst [vmem:[#allocation2 + $0x60] sm:$0xff] %v957
    %994 = vst [vmem:[#allocation2 + $0x68] sm:$0xff] %v958
    %995 = vst [vmem:[#allocation2 + $0x70] sm:$0xff] %v959
    %996 = vst [vmem:[#allocation2 + $0x78] sm:$0xff] %v960
    %997 = vst [vmem:[#allocation2 + $0x80] sm:$0xff] %v961
    %998 = vst [vmem:[#allocation2 + $0x88] sm:$0xff] %v962
    %999 = vst [vmem:[#allocation2 + $0x90] sm:$0xff] %v963
    %1000 = vst [vmem:[#allocation2 + $0x98] sm:$0xff] %v964
    %1001 = vst [vmem:[#allocation2 + $0xa0] sm:$0xff] %v965
    %1002 = vst [vmem:[#allocation2 + $0xa8] sm:$0xff] %v966
    %1003 = vst [vmem:[#allocation2 + $0xb0] sm:$0xff] %v967
    %1004 = vst [vmem:[#allocation2 + $0xb8] sm:$0xff] %v968
    %1005 = vst [vmem:[#allocation2 + $0xc0] sm:$0xff] %v969
    %1006 = vst [vmem:[#allocation2 + $0xc8] sm:$0xff] %v970
    %1007 = vst [vmem:[#allocation2 + $0xd0] sm:$0xff] %v971
    %1008 = vst [vmem:[#allocation2 + $0xd8] sm:$0xff] %v972
    %1009 = vst [vmem:[#allocation2 + $0xe0] sm:$0xff] %v973
    %1010 = vst [vmem:[#allocation2 + $0xe8] sm:$0xff] %v974
    %1011 = vst [vmem:[#allocation2 + $0xf0] sm:$0xff] %v975
    %1012 = vst [vmem:[#allocation2 + $0xf8] sm:$0xff] %v976
    %1013 = vst [vmem:[#allocation2 + $0x100] sm:$0xff] %v977
    %1014 = vst [vmem:[#allocation2 + $0x108] sm:$0xff] %v978
    %1015 = vst [vmem:[#allocation2 + $0x110] sm:$0xff] %v979
    %1016 = vst [vmem:[#allocation2 + $0x118] sm:$0xff] %v980
    %v1017 = vld [vmem:[#allocation2] sm:$0xff]
    %v1018 = vld [vmem:[#allocation2 + $0x8] sm:$0xff]
    %v1019 = vld [vmem:[#allocation2 + $0x10] sm:$0xff]
    %v1020 = vld [vmem:[#allocation2 + $0x18] sm:$0xff]
    %v1021 = vld [vmem:[#allocation2 + $0x20] sm:$0xff]
    %v1022 = vld [vmem:[#allocation2 + $0x28] sm:$0xff]
    %v1023 = vld [vmem:[#allocation2 + $0x30] sm:$0xff]
    %v1024 = vld [vmem:[#allocation2 + $0x38] sm:$0xff]
    %v1025 = vld [vmem:[#allocation2 + $0x40] sm:$0xff]
    %v1026 = vld [vmem:[#allocation2 + $0x48] sm:$0xff]
    %v1027 = vld [vmem:[#allocation2 + $0x50] sm:$0xff]
    %v1028 = vld [vmem:[#allocation2 + $0x58] sm:$0xff]
    %v1029 = vld [vmem:[#allocation2 + $0x60] sm:$0xff]
    %v1030 = vld [vmem:[#allocation2 + $0x68] sm:$0xff]
    %v1031 = vld [vmem:[#allocation2 + $0x70] sm:$0xff]
    %v1032 = vld [vmem:[#allocation2 + $0x78] sm:$0xff]
    %v1033 = vld [vmem:[#allocation2 + $0x80] sm:$0xff]
    %v1034 = vld [vmem:[#allocation2 + $0x88] sm:$0xff]
    %v1035 = vld [vmem:[#allocation2 + $0x90] sm:$0xff]
    %v1036 = vld [vmem:[#allocation2 + $0x98] sm:$0xff]
    %v1037 = vld [vmem:[#allocation2 + $0xa0] sm:$0xff]
    %v1038 = vld [vmem:[#allocation2 + $0xa8] sm:$0xff]
    %v1039 = vld [vmem:[#allocation2 + $0xb0] sm:$0xff]
    %v1040 = vld [vmem:[#allocation2 + $0xb8] sm:$0xff]
    %v1041 = vld [vmem:[#allocation2 + $0xc0] sm:$0xff]
    %v1042 = vld [vmem:[#allocation2 + $0xc8] sm:$0xff]
    %v1043 = vld [vmem:[#allocation2 + $0xd0] sm:$0xff]
    %v1044 = vld [vmem:[#allocation2 + $0xd8] sm:$0xff]
    %v1045 = vld [vmem:[#allocation2 + $0xe0] sm:$0xff]
    %v1046 = vld [vmem:[#allocation2 + $0xe8] sm:$0xff]
    %v1047 = vld [vmem:[#allocation2 + $0xf0] sm:$0xff]
    %v1048 = vld [vmem:[#allocation2 + $0xf8] sm:$0xff]
    %v1049 = vld [vmem:[#allocation2 + $0x100] sm:$0xff]
    %v1050 = vld [vmem:[#allocation2 + $0x18] sm:$0xff]
    %v1051 = vld [vmem:[#allocation2 + $0x20] sm:$0xff]
    %v1052 = vld [vmem:[#allocation2 + $0x28] sm:$0xff]
    %v1053 = vld [vmem:[#allocation2 + $0x30] sm:$0xff]
    %v1054 = vld [vmem:[#allocation2 + $0x38] sm:$0xff]
    %v1055 = vld [vmem:[#allocation2 + $0x40] sm:$0xff]
    %v1056 = vld [vmem:[#allocation2 + $0x48] sm:$0xff]
    %v1057 = vld [vmem:[#allocation2 + $0x50] sm:$0xff]
    %v1058 = vld [vmem:[#allocation2 + $0x58] sm:$0xff]
    %v1059 = vld [vmem:[#allocation2 + $0x60] sm:$0xff]
    %v1060 = vld [vmem:[#allocation2 + $0x68] sm:$0xff]
    %v1061 = vld [vmem:[#allocation2 + $0x70] sm:$0xff]
    %v1062 = vld [vmem:[#allocation2 + $0x78] sm:$0xff]
    %v1063 = vld [vmem:[#allocation2 + $0x80] sm:$0xff]
    %v1064 = vld [vmem:[#allocation2 + $0x88] sm:$0xff]
    %v1065 = vld [vmem:[#allocation2 + $0x90] sm:$0xff]
    %v1066 = vld [vmem:[#allocation2 + $0x98] sm:$0xff]
    %v1067 = vld [vmem:[#allocation2 + $0xa0] sm:$0xff]
    %v1068 = vld [vmem:[#allocation2 + $0xa8] sm:$0xff]
    %v1069 = vld [vmem:[#allocation2 + $0xb0] sm:$0xff]
    %v1070 = vld [vmem:[#allocation2 + $0xb8] sm:$0xff]
    %v1071 = vld [vmem:[#allocation2 + $0xc0] sm:$0xff]
    %v1072 = vld [vmem:[#allocation2 + $0xc8] sm:$0xff]
    %v1073 = vld [vmem:[#allocation2 + $0xd0] sm:$0xff]
    %v1074 = vld [vmem:[#allocation2 + $0xd8] sm:$0xff]
    %v1075 = vld [vmem:[#allocation2 + $0xe0] sm:$0xff]
    %v1076 = vld [vmem:[#allocation2 + $0xe8] sm:$0xff]
    %v1077 = vld [vmem:[#allocation2 + $0xf0] sm:$0xff]
    %v1078 = vld [vmem:[#allocation2 + $0xf8] sm:$0xff]
    %v1079 = vld [vmem:[#allocation2 + $0x100] sm:$0xff]
    %v1080 = vld [vmem:[#allocation2 + $0x108] sm:$0xff]
    %v1081 = vld [vmem:[#allocation2 + $0x110] sm:$0xff]
    %v1082 = vld [vmem:[#allocation2 + $0x118] sm:$0xff]
    %v1083 = vld [vmem:[#allocation10] sm:$0xff]
    %v1084 = vld [vmem:[#allocation10 + $0x8] sm:$0xf]
    %v1085 = vld [vmem:[#allocation10 + $0xc] sm:$0xff]
    %v1086 = vld [vmem:[#allocation10 + $0x14] sm:$0xf]
    %v1087 = vld [vmem:[#allocation10 + $0x18] sm:$0xff]
    %v1088 = vld [vmem:[#allocation10 + $0x20] sm:$0xf]
    %v1089 = vld [vmem:[#allocation10 + $0x24] sm:$0xff]
    %v1090 = vld [vmem:[#allocation10 + $0x2c] sm:$0xf]
    %v1091 = vld [vmem:[#allocation10 + $0x30] sm:$0xff]
    %v1092 = vld [vmem:[#allocation10 + $0x38] sm:$0xf]
    %v1093 = vld [vmem:[#allocation10 + $0x3c] sm:$0xff]
    %v1094 = vld [vmem:[#allocation10 + $0x44] sm:$0xf]
    %v1095 = vld [vmem:[#allocation10 + $0x48] sm:$0xff]
    %v1096 = vld [vmem:[#allocation10 + $0x50] sm:$0xf]
    %v1097 = vld [vmem:[#allocation10 + $0x54] sm:$0xff]
    %v1098 = vld [vmem:[#allocation10 + $0x5c] sm:$0xf]
    %v1099 = vld [vmem:[#allocation10 + $0x60] sm:$0xff]
    %v1100 = vld [vmem:[#allocation10 + $0x68] sm:$0xf]
    %v1101 = vld [vmem:[#allocation10 + $0x6c] sm:$0xff]
    %v1102 = vld [vmem:[#allocation10 + $0x74] sm:$0xf]
    %v1103 = vld [vmem:[#allocation10 + $0x78] sm:$0xff]
    %v1104 = vld [vmem:[#allocation10 + $0x80] sm:$0xf]
    %v1105 = vld [vmem:[#allocation10 + $0x84] sm:$0xff]
    %v1106 = vld [vmem:[#allocation10 + $0x8c] sm:$0xf]
    %v1107 = vld [vmem:[#allocation10 + $0x90] sm:$0xff]
    %v1108 = vld [vmem:[#allocation10 + $0x98] sm:$0xf]
    %v1109 = vld [vmem:[#allocation10 + $0x9c] sm:$0xff]
    %v1110 = vld [vmem:[#allocation10 + $0xa4] sm:$0xf]
    %v1111 = vld [vmem:[#allocation10 + $0xa8] sm:$0xff]
    %v1112 = vld [vmem:[#allocation10 + $0xb0] sm:$0xf]
    %v1113 = vld [vmem:[#allocation10 + $0xb4] sm:$0xff]
    %v1114 = vld [vmem:[#allocation10 + $0xbc] sm:$0xf]
    %v1115 = vld [vmem:[#allocation10 + $0xc0] sm:$0xff]
    %v1116 = vld [vmem:[#allocation10 + $0xc8] sm:$0xf]
    %v1117 = vld [vmem:[#allocation10 + $0xcc] sm:$0xff]
    %v1118 = vld [vmem:[#allocation10 + $0xd4] sm:$0xf]
    %v1119 = vld [vmem:[#allocation10 + $0xd8] sm:$0xff]
    %v1120 = vld [vmem:[#allocation10 + $0xe0] sm:$0xf]
    %v1121 = vld [vmem:[#allocation10 + $0xe4] sm:$0xff]
    %v1122 = vld [vmem:[#allocation10 + $0xec] sm:$0xf]
    %v1123 = vld [vmem:[#allocation10 + $0xf0] sm:$0xff]
    %v1124 = vld [vmem:[#allocation10 + $0xf8] sm:$0xf]
    %v1125 = vld [vmem:[#allocation10 + $0xfc] sm:$0xff]
    %v1126 = vld [vmem:[#allocation10 + $0x104] sm:$0xf]
    %v1127 = vld [vmem:[#allocation10 + $0x108] sm:$0xff]
    %v1128 = vld [vmem:[#allocation10 + $0x110] sm:$0xf]
    %v1129 = vld [vmem:[#allocation10 + $0x114] sm:$0xff]
    %v1130 = vld [vmem:[#allocation10 + $0x11c] sm:$0xf]
    %v1131 = vld [vmem:[#allocation10 + $0x120] sm:$0xff]
    %v1132 = vld [vmem:[#allocation10 + $0x128] sm:$0xf]
    %v1133 = vld [vmem:[#allocation10 + $0x12c] sm:$0xff]
    %v1134 = vld [vmem:[#allocation10 + $0x134] sm:$0xf]
    %v1135 = vld [vmem:[#allocation10 + $0x138] sm:$0xff]
    %v1136 = vld [vmem:[#allocation10 + $0x140] sm:$0xf]
    %v1137 = vld [vmem:[#allocation10 + $0x144] sm:$0xff]
    %v1138 = vld [vmem:[#allocation10 + $0x14c] sm:$0xf]
    %v1139 = vld [vmem:[#allocation10 + $0x150] sm:$0xff]
    %v1140 = vld [vmem:[#allocation10 + $0x158] sm:$0xf]
    %v1141 = vld [vmem:[#allocation10 + $0x15c] sm:$0xff]
    %v1142 = vld [vmem:[#allocation10 + $0x164] sm:$0xf]
    %v1143 = vld [vmem:[#allocation10 + $0x168] sm:$0xff]
    %v1144 = vld [vmem:[#allocation10 + $0x170] sm:$0xf]
    %v1145 = vld [vmem:[#allocation10 + $0x174] sm:$0xff]
    %v1146 = vld [vmem:[#allocation10 + $0x17c] sm:$0xf]
    %v1147 = vld [vmem:[#allocation10 + $0x180] sm:$0xff]
    %v1148 = vld [vmem:[#allocation10 + $0x188] sm:$0xf]
    %v1149 = vld [vmem:[#allocation10 + $0x18c] sm:$0xff]
    %v1150 = vld [vmem:[#allocation10 + $0x194] sm:$0xf]
    %v1151 = vld [vmem:[#allocation10 + $0x198] sm:$0xff]
    %v1152 = vld [vmem:[#allocation10 + $0x1a0] sm:$0xf]
    %v1153 = vld [vmem:[#allocation10 + $0x1a4] sm:$0xff]
    %v1154 = vld [vmem:[#allocation10 + $0x1ac] sm:$0xf]
    %v1155 = vld [vmem:[#allocation10 + $0x1b0] sm:$0xff]
    %v1156 = vld [vmem:[#allocation10 + $0x1b8] sm:$0xf]
    %v1157 = vld [vmem:[#allocation10 + $0x1bc] sm:$0xff]
    %v1158 = vld [vmem:[#allocation10 + $0x1c4] sm:$0xf]
    %v1159 = vld [vmem:[#allocation10 + $0x1c8] sm:$0xff]
    %v1160 = vld [vmem:[#allocation10 + $0x1d0] sm:$0xf]
    %v1161 = vld [vmem:[#allocation10 + $0x1d4] sm:$0xff]
    %v1162 = vld [vmem:[#allocation10 + $0x1dc] sm:$0xf]
    %v1163 = vld [vmem:[#allocation10 + $0x1e0] sm:$0xff]
    %v1164 = vld [vmem:[#allocation10 + $0x1e8] sm:$0xf]
    %v1165 = vld [vmem:[#allocation10 + $0x1ec] sm:$0xff]
    %v1166 = vld [vmem:[#allocation10 + $0x1f4] sm:$0xf]
    %v1167 = vld [vmem:[#allocation10 + $0x1f8] sm:$0xff]
    %v1168 = vld [vmem:[#allocation10 + $0x200] sm:$0xf]
    %v1169 = vld [vmem:[#allocation10 + $0x204] sm:$0xff]
    %v1170 = vld [vmem:[#allocation10 + $0x20c] sm:$0xf]
    %v1171 = vld [vmem:[#allocation10 + $0x210] sm:$0xff]
    %v1172 = vld [vmem:[#allocation10 + $0x218] sm:$0xf]
    %v1173 = vld [vmem:[#allocation10 + $0x21c] sm:$0xff]
    %v1174 = vld [vmem:[#allocation10 + $0x224] sm:$0xf]
    %v1175 = vld [vmem:[#allocation10 + $0x228] sm:$0xff]
    %v1176 = vld [vmem:[#allocation10 + $0x230] sm:$0xf]
    %v1177 = vld [vmem:[#allocation10 + $0x234] sm:$0xff]
    %v1178 = vld [vmem:[#allocation10 + $0x23c] sm:$0xf]
    %s1179 = scalar_lea.vmem [#allocation10], 576
    %v1180 = vld [vmem:[%s1179] sm:$0xff]
    %v1181 = vld [vmem:[%s1179 + $0x8] sm:$0xf]
    %v1182 = vld [vmem:[%s1179 + $0xc] sm:$0xff]
    %v1183 = vld [vmem:[%s1179 + $0x14] sm:$0xf]
    %v1184 = vld [vmem:[%s1179 + $0x18] sm:$0xff]
    %v1185 = vld [vmem:[%s1179 + $0x20] sm:$0xf]
    %v1186 = vld [vmem:[%s1179 + $0x24] sm:$0xff]
    %v1187 = vld [vmem:[%s1179 + $0x2c] sm:$0xf]
    %v1188 = vld [vmem:[%s1179 + $0x30] sm:$0xff]
    %v1189 = vld [vmem:[%s1179 + $0x38] sm:$0xf]
    %v1190 = vld [vmem:[%s1179 + $0x3c] sm:$0xff]
    %v1191 = vld [vmem:[%s1179 + $0x44] sm:$0xf]
    %v1192 = vld [vmem:[%s1179 + $0x48] sm:$0xff]
    %v1193 = vld [vmem:[%s1179 + $0x50] sm:$0xf]
    %v1194 = vld [vmem:[%s1179 + $0x54] sm:$0xff]
    %v1195 = vld [vmem:[%s1179 + $0x5c] sm:$0xf]
    %v1196 = vld [vmem:[%s1179 + $0x60] sm:$0xff]
    %v1197 = vld [vmem:[%s1179 + $0x68] sm:$0xf]
    %v1198 = vld [vmem:[%s1179 + $0x6c] sm:$0xff]
    %v1199 = vld [vmem:[%s1179 + $0x74] sm:$0xf]
    %v1200 = vld [vmem:[%s1179 + $0x78] sm:$0xff]
    %v1201 = vld [vmem:[%s1179 + $0x80] sm:$0xf]
    %v1202 = vld [vmem:[%s1179 + $0x84] sm:$0xff]
    %v1203 = vld [vmem:[%s1179 + $0x8c] sm:$0xf]
    %v1204 = vld [vmem:[%s1179 + $0x90] sm:$0xff]
    %v1205 = vld [vmem:[%s1179 + $0x98] sm:$0xf]
    %v1206 = vld [vmem:[%s1179 + $0x9c] sm:$0xff]
    %v1207 = vld [vmem:[%s1179 + $0xa4] sm:$0xf]
    %v1208 = vld [vmem:[%s1179 + $0xa8] sm:$0xff]
    %v1209 = vld [vmem:[%s1179 + $0xb0] sm:$0xf]
    %v1210 = vld [vmem:[%s1179 + $0xb4] sm:$0xff]
    %v1211 = vld [vmem:[%s1179 + $0xbc] sm:$0xf]
    %v1212 = vld [vmem:[%s1179 + $0xc0] sm:$0xff]
    %v1213 = vld [vmem:[%s1179 + $0xc8] sm:$0xf]
    %v1214 = vld [vmem:[%s1179 + $0xcc] sm:$0xff]
    %v1215 = vld [vmem:[%s1179 + $0xd4] sm:$0xf]
    %v1216 = vld [vmem:[%s1179 + $0xd8] sm:$0xff]
    %v1217 = vld [vmem:[%s1179 + $0xe0] sm:$0xf]
    %v1218 = vld [vmem:[%s1179 + $0xe4] sm:$0xff]
    %v1219 = vld [vmem:[%s1179 + $0xec] sm:$0xf]
    %v1220 = vld [vmem:[%s1179 + $0xf0] sm:$0xff]
    %v1221 = vld [vmem:[%s1179 + $0xf8] sm:$0xf]
    %v1222 = vld [vmem:[%s1179 + $0xfc] sm:$0xff]
    %v1223 = vld [vmem:[%s1179 + $0x104] sm:$0xf]
    %v1224 = vld [vmem:[%s1179 + $0x108] sm:$0xff]
    %v1225 = vld [vmem:[%s1179 + $0x110] sm:$0xf]
    %v1226 = vld [vmem:[%s1179 + $0x114] sm:$0xff]
    %v1227 = vld [vmem:[%s1179 + $0x11c] sm:$0xf]
    %v1228 = vld [vmem:[%s1179 + $0x120] sm:$0xff]
    %v1229 = vld [vmem:[%s1179 + $0x128] sm:$0xf]
    %v1230 = vld [vmem:[%s1179 + $0x12c] sm:$0xff]
    %v1231 = vld [vmem:[%s1179 + $0x134] sm:$0xf]
    %v1232 = vld [vmem:[%s1179 + $0x138] sm:$0xff]
    %v1233 = vld [vmem:[%s1179 + $0x140] sm:$0xf]
    %v1234 = vld [vmem:[%s1179 + $0x144] sm:$0xff]
    %v1235 = vld [vmem:[%s1179 + $0x14c] sm:$0xf]
    %v1236 = vld [vmem:[%s1179 + $0x150] sm:$0xff]
    %v1237 = vld [vmem:[%s1179 + $0x158] sm:$0xf]
    %v1238 = vld [vmem:[%s1179 + $0x15c] sm:$0xff]
    %v1239 = vld [vmem:[%s1179 + $0x164] sm:$0xf]
    %v1240 = vld [vmem:[%s1179 + $0x168] sm:$0xff]
    %v1241 = vld [vmem:[%s1179 + $0x170] sm:$0xf]
    %v1242 = vld [vmem:[%s1179 + $0x174] sm:$0xff]
    %v1243 = vld [vmem:[%s1179 + $0x17c] sm:$0xf]
    %v1244 = vld [vmem:[%s1179 + $0x180] sm:$0xff]
    %v1245 = vld [vmem:[%s1179 + $0x188] sm:$0xf]
    %v1246 = vld [vmem:[%s1179 + $0x18c] sm:$0xff]
    %v1247 = vld [vmem:[%s1179 + $0x194] sm:$0xf]
    %v1248 = vld [vmem:[%s1179 + $0x198] sm:$0xff]
    %v1249 = vld [vmem:[%s1179 + $0x1a0] sm:$0xf]
    %v1250 = vld [vmem:[%s1179 + $0x1a4] sm:$0xff]
    %v1251 = vld [vmem:[%s1179 + $0x1ac] sm:$0xf]
    %v1252 = vld [vmem:[%s1179 + $0x1b0] sm:$0xff]
    %v1253 = vld [vmem:[%s1179 + $0x1b8] sm:$0xf]
    %v1254 = vld [vmem:[%s1179 + $0x1bc] sm:$0xff]
    %v1255 = vld [vmem:[%s1179 + $0x1c4] sm:$0xf]
    %v1256 = vld [vmem:[%s1179 + $0x1c8] sm:$0xff]
    %v1257 = vld [vmem:[%s1179 + $0x1d0] sm:$0xf]
    %v1258 = vld [vmem:[%s1179 + $0x1d4] sm:$0xff]
    %v1259 = vld [vmem:[%s1179 + $0x1dc] sm:$0xf]
    %v1260 = vld [vmem:[%s1179 + $0x1e0] sm:$0xff]
    %v1261 = vld [vmem:[%s1179 + $0x1e8] sm:$0xf]
    %v1262 = vld [vmem:[%s1179 + $0x1ec] sm:$0xff]
    %v1263 = vld [vmem:[%s1179 + $0x1f4] sm:$0xf]
    %v1264 = vld [vmem:[%s1179 + $0x1f8] sm:$0xff]
    %v1265 = vld [vmem:[%s1179 + $0x200] sm:$0xf]
    %v1266 = vld [vmem:[%s1179 + $0x204] sm:$0xff]
    %v1267 = vld [vmem:[%s1179 + $0x20c] sm:$0xf]
    %v1268 = vld [vmem:[%s1179 + $0x210] sm:$0xff]
    %v1269 = vld [vmem:[%s1179 + $0x218] sm:$0xf]
    %v1270 = vld [vmem:[%s1179 + $0x21c] sm:$0xff]
    %v1271 = vld [vmem:[%s1179 + $0x224] sm:$0xf]
    %v1272 = vld [vmem:[%s1179 + $0x228] sm:$0xff]
    %v1273 = vld [vmem:[%s1179 + $0x230] sm:$0xf]
    %v1274 = vld [vmem:[%s1179 + $0x234] sm:$0xff]
    %v1275 = vld [vmem:[%s1179 + $0x23c] sm:$0xf]
    %v1372 = vunpack.c.l.b16 %v1180
    %v1373 = vunpack.c.h.b16 %v1180
    %v1374 = vunpack.c.l.b16 %v1181
    %v1375 = vunpack.c.l.b16 %v1182
    %v1376 = vunpack.c.h.b16 %v1182
    %v1377 = vunpack.c.l.b16 %v1183
    %v1378 = vunpack.c.l.b16 %v1184
    %v1379 = vunpack.c.h.b16 %v1184
    %v1380 = vunpack.c.l.b16 %v1185
    %v1381 = vunpack.c.l.b16 %v1186
    %v1382 = vunpack.c.h.b16 %v1186
    %v1383 = vunpack.c.l.b16 %v1187
    %v1384 = vunpack.c.l.b16 %v1188
    %v1385 = vunpack.c.h.b16 %v1188
    %v1386 = vunpack.c.l.b16 %v1189
    %v1387 = vunpack.c.l.b16 %v1190
    %v1388 = vunpack.c.h.b16 %v1190
    %v1389 = vunpack.c.l.b16 %v1191
    %v1390 = vunpack.c.l.b16 %v1192
    %v1391 = vunpack.c.h.b16 %v1192
    %v1392 = vunpack.c.l.b16 %v1193
    %v1393 = vunpack.c.l.b16 %v1194
    %v1394 = vunpack.c.h.b16 %v1194
    %v1395 = vunpack.c.l.b16 %v1195
    %v1396 = vunpack.c.l.b16 %v1196
    %v1397 = vunpack.c.h.b16 %v1196
    %v1398 = vunpack.c.l.b16 %v1197
    %v1399 = vunpack.c.l.b16 %v1198
    %v1400 = vunpack.c.h.b16 %v1198
    %v1401 = vunpack.c.l.b16 %v1199
    %v1402 = vunpack.c.l.b16 %v1200
    %v1403 = vunpack.c.h.b16 %v1200
    %v1404 = vunpack.c.l.b16 %v1201
    %v1405 = vunpack.c.l.b16 %v1202
    %v1406 = vunpack.c.h.b16 %v1202
    %v1407 = vunpack.c.l.b16 %v1203
    %v1408 = vunpack.c.l.b16 %v1204
    %v1409 = vunpack.c.h.b16 %v1204
    %v1410 = vunpack.c.l.b16 %v1205
    %v1411 = vunpack.c.l.b16 %v1206
    %v1412 = vunpack.c.h.b16 %v1206
    %v1413 = vunpack.c.l.b16 %v1207
    %v1414 = vunpack.c.l.b16 %v1208
    %v1415 = vunpack.c.h.b16 %v1208
    %v1416 = vunpack.c.l.b16 %v1209
    %v1417 = vunpack.c.l.b16 %v1210
    %v1418 = vunpack.c.h.b16 %v1210
    %v1419 = vunpack.c.l.b16 %v1211
    %v1420 = vunpack.c.l.b16 %v1212
    %v1421 = vunpack.c.h.b16 %v1212
    %v1422 = vunpack.c.l.b16 %v1213
    %v1423 = vunpack.c.l.b16 %v1214
    %v1424 = vunpack.c.h.b16 %v1214
    %v1425 = vunpack.c.l.b16 %v1215
    %v1426 = vunpack.c.l.b16 %v1216
    %v1427 = vunpack.c.h.b16 %v1216
    %v1428 = vunpack.c.l.b16 %v1217
    %v1429 = vunpack.c.l.b16 %v1218
    %v1430 = vunpack.c.h.b16 %v1218
    %v1431 = vunpack.c.l.b16 %v1219
    %v1432 = vunpack.c.l.b16 %v1220
    %v1433 = vunpack.c.h.b16 %v1220
    %v1434 = vunpack.c.l.b16 %v1221
    %v1435 = vunpack.c.l.b16 %v1222
    %v1436 = vunpack.c.h.b16 %v1222
    %v1437 = vunpack.c.l.b16 %v1223
    %v1438 = vunpack.c.l.b16 %v1224
    %v1439 = vunpack.c.h.b16 %v1224
    %v1440 = vunpack.c.l.b16 %v1225
    %v1441 = vunpack.c.l.b16 %v1226
    %v1442 = vunpack.c.h.b16 %v1226
    %v1443 = vunpack.c.l.b16 %v1227
    %v1444 = vunpack.c.l.b16 %v1228
    %v1445 = vunpack.c.h.b16 %v1228
    %v1446 = vunpack.c.l.b16 %v1229
    %v1447 = vunpack.c.l.b16 %v1230
    %v1448 = vunpack.c.h.b16 %v1230
    %v1449 = vunpack.c.l.b16 %v1231
    %v1450 = vunpack.c.l.b16 %v1232
    %v1451 = vunpack.c.h.b16 %v1232
    %v1452 = vunpack.c.l.b16 %v1233
    %v1453 = vunpack.c.l.b16 %v1234
    %v1454 = vunpack.c.h.b16 %v1234
    %v1455 = vunpack.c.l.b16 %v1235
    %v1456 = vunpack.c.l.b16 %v1236
    %v1457 = vunpack.c.h.b16 %v1236
    %v1458 = vunpack.c.l.b16 %v1237
    %v1459 = vunpack.c.l.b16 %v1238
    %v1460 = vunpack.c.h.b16 %v1238
    %v1461 = vunpack.c.l.b16 %v1239
    %v1462 = vunpack.c.l.b16 %v1240
    %v1463 = vunpack.c.h.b16 %v1240
    %v1464 = vunpack.c.l.b16 %v1241
    %v1465 = vunpack.c.l.b16 %v1242
    %v1466 = vunpack.c.h.b16 %v1242
    %v1467 = vunpack.c.l.b16 %v1243
    %v1468 = vunpack.c.l.b16 %v1244
    %v1469 = vunpack.c.h.b16 %v1244
    %v1470 = vunpack.c.l.b16 %v1245
    %v1471 = vunpack.c.l.b16 %v1246
    %v1472 = vunpack.c.h.b16 %v1246
    %v1473 = vunpack.c.l.b16 %v1247
    %v1474 = vunpack.c.l.b16 %v1248
    %v1475 = vunpack.c.h.b16 %v1248
    %v1476 = vunpack.c.l.b16 %v1249
    %v1477 = vunpack.c.l.b16 %v1250
    %v1478 = vunpack.c.h.b16 %v1250
    %v1479 = vunpack.c.l.b16 %v1251
    %v1480 = vunpack.c.l.b16 %v1252
    %v1481 = vunpack.c.h.b16 %v1252
    %v1482 = vunpack.c.l.b16 %v1253
    %v1483 = vunpack.c.l.b16 %v1254
    %v1484 = vunpack.c.h.b16 %v1254
    %v1485 = vunpack.c.l.b16 %v1255
    %v1486 = vunpack.c.l.b16 %v1256
    %v1487 = vunpack.c.h.b16 %v1256
    %v1488 = vunpack.c.l.b16 %v1257
    %v1489 = vunpack.c.l.b16 %v1258
    %v1490 = vunpack.c.h.b16 %v1258
    %v1491 = vunpack.c.l.b16 %v1259
    %v1492 = vunpack.c.l.b16 %v1260
    %v1493 = vunpack.c.h.b16 %v1260
    %v1494 = vunpack.c.l.b16 %v1261
    %v1495 = vunpack.c.l.b16 %v1262
    %v1496 = vunpack.c.h.b16 %v1262
    %v1497 = vunpack.c.l.b16 %v1263
    %v1498 = vunpack.c.l.b16 %v1264
    %v1499 = vunpack.c.h.b16 %v1264
    %v1500 = vunpack.c.l.b16 %v1265
    %v1501 = vunpack.c.l.b16 %v1266
    %v1502 = vunpack.c.h.b16 %v1266
    %v1503 = vunpack.c.l.b16 %v1267
    %v1504 = vunpack.c.l.b16 %v1268
    %v1505 = vunpack.c.h.b16 %v1268
    %v1506 = vunpack.c.l.b16 %v1269
    %v1507 = vunpack.c.l.b16 %v1270
    %v1508 = vunpack.c.h.b16 %v1270
    %v1509 = vunpack.c.l.b16 %v1271
    %v1510 = vunpack.c.l.b16 %v1272
    %v1511 = vunpack.c.h.b16 %v1272
    %v1512 = vunpack.c.l.b16 %v1273
    %v1513 = vunpack.c.l.b16 %v1274
    %v1514 = vunpack.c.h.b16 %v1274
    %v1515 = vunpack.c.l.b16 %v1275
    %v1516 = vpack.c.b16 %v1375, %v1372
    %v1517 = vpack.c.b16 %v1376, %v1373
    %v1518 = vpack.c.b16 %v1377, %v1374
    %v1519 = vpack.c.b16 %v1381, %v1378
    %v1520 = vpack.c.b16 %v1382, %v1379
    %v1521 = vpack.c.b16 %v1383, %v1380
    %v1522 = vpack.c.b16 %v1387, %v1384
    %v1523 = vpack.c.b16 %v1388, %v1385
    %v1524 = vpack.c.b16 %v1389, %v1386
    %v1525 = vpack.c.b16 %v1393, %v1390
    %v1526 = vpack.c.b16 %v1394, %v1391
    %v1527 = vpack.c.b16 %v1395, %v1392
    %v1528 = vpack.c.b16 %v1399, %v1396
    %v1529 = vpack.c.b16 %v1400, %v1397
    %v1530 = vpack.c.b16 %v1401, %v1398
    %v1531 = vpack.c.b16 %v1405, %v1402
    %v1532 = vpack.c.b16 %v1406, %v1403
    %v1533 = vpack.c.b16 %v1407, %v1404
    %v1534 = vpack.c.b16 %v1411, %v1408
    %v1535 = vpack.c.b16 %v1412, %v1409
    %v1536 = vpack.c.b16 %v1413, %v1410
    %v1537 = vpack.c.b16 %v1417, %v1414
    %v1538 = vpack.c.b16 %v1418, %v1415
    %v1539 = vpack.c.b16 %v1419, %v1416
    %v1540 = vpack.c.b16 %v1423, %v1420
    %v1541 = vpack.c.b16 %v1424, %v1421
    %v1542 = vpack.c.b16 %v1425, %v1422
    %v1543 = vpack.c.b16 %v1429, %v1426
    %v1544 = vpack.c.b16 %v1430, %v1427
    %v1545 = vpack.c.b16 %v1431, %v1428
    %v1546 = vpack.c.b16 %v1435, %v1432
    %v1547 = vpack.c.b16 %v1436, %v1433
    %v1548 = vpack.c.b16 %v1437, %v1434
    %v1549 = vpack.c.b16 %v1441, %v1438
    %v1550 = vpack.c.b16 %v1442, %v1439
    %v1551 = vpack.c.b16 %v1443, %v1440
    %v1552 = vpack.c.b16 %v1447, %v1444
    %v1553 = vpack.c.b16 %v1448, %v1445
    %v1554 = vpack.c.b16 %v1449, %v1446
    %v1555 = vpack.c.b16 %v1453, %v1450
    %v1556 = vpack.c.b16 %v1454, %v1451
    %v1557 = vpack.c.b16 %v1455, %v1452
    %v1558 = vpack.c.b16 %v1459, %v1456
    %v1559 = vpack.c.b16 %v1460, %v1457
    %v1560 = vpack.c.b16 %v1461, %v1458
    %v1561 = vpack.c.b16 %v1465, %v1462
    %v1562 = vpack.c.b16 %v1466, %v1463
    %v1563 = vpack.c.b16 %v1467, %v1464
    %v1564 = vpack.c.b16 %v1471, %v1468
    %v1565 = vpack.c.b16 %v1472, %v1469
    %v1566 = vpack.c.b16 %v1473, %v1470
    %v1567 = vpack.c.b16 %v1477, %v1474
    %v1568 = vpack.c.b16 %v1478, %v1475
    %v1569 = vpack.c.b16 %v1479, %v1476
    %v1570 = vpack.c.b16 %v1483, %v1480
    %v1571 = vpack.c.b16 %v1484, %v1481
    %v1572 = vpack.c.b16 %v1485, %v1482
    %v1573 = vpack.c.b16 %v1489, %v1486
    %v1574 = vpack.c.b16 %v1490, %v1487
    %v1575 = vpack.c.b16 %v1491, %v1488
    %v1576 = vpack.c.b16 %v1495, %v1492
    %v1577 = vpack.c.b16 %v1496, %v1493
    %v1578 = vpack.c.b16 %v1497, %v1494
    %v1579 = vpack.c.b16 %v1501, %v1498
    %v1580 = vpack.c.b16 %v1502, %v1499
    %v1581 = vpack.c.b16 %v1503, %v1500
    %v1582 = vpack.c.b16 %v1507, %v1504
    %v1583 = vpack.c.b16 %v1508, %v1505
    %v1584 = vpack.c.b16 %v1509, %v1506
    %v1585 = vpack.c.b16 %v1513, %v1510
    %v1586 = vpack.c.b16 %v1514, %v1511
    %v1587 = vpack.c.b16 %v1515, %v1512
    %1660 = vmatprep.subr.bf16.mxu0 %v1517
    %1661 = vmatpush1.bf16.msra.mxu0 %v1516
    %1662 = vmatprep.subr.bf16.mxu0 %v1520
    %1663 = vmatpush1.bf16.msra.mxu0 %v1519
    %1664 = vmatprep.subr.bf16.mxu0 %v1523
    %1665 = vmatpush1.bf16.msra.mxu0 %v1522
    %1666 = vmatprep.subr.bf16.mxu0 %v1526
    %1667 = vmatpush1.bf16.msra.mxu0 %v1525
    %1668 = vmatprep.subr.bf16.mxu0 %v1529
    %1669 = vmatpush1.bf16.msra.mxu0 %v1528
    %1670 = vmatprep.subr.bf16.mxu0 %v1532
    %1671 = vmatpush1.bf16.msra.mxu0 %v1531
    %1672 = vmatprep.subr.bf16.mxu0 %v1535
    %1673 = vmatpush1.bf16.msra.mxu0 %v1534
    %1674 = vmatprep.subr.bf16.mxu0 %v1538
    %1675 = vmatpush1.bf16.msra.mxu0 %v1537
    %1676 = vmatprep.subr.bf16.mxu0 %v1541
    %1677 = vmatpush1.bf16.msra.mxu0 %v1540
    %1678 = vmatprep.subr.bf16.mxu0 %v1544
    %1679 = vmatpush1.bf16.msra.mxu0 %v1543
    %1680 = vmatprep.subr.bf16.mxu0 %v1547
    %1681 = vmatpush1.bf16.msra.mxu0 %v1546
    %1682 = vmatprep.subr.bf16.mxu0 %v1550
    %1683 = vmatpush1.bf16.msra.mxu0 %v1549
    %1684 = vmatprep.subr.bf16.mxu0 %v1553
    %1685 = vmatpush1.bf16.msra.mxu0 %v1552
    %1686 = vmatprep.subr.bf16.mxu0 %v1556
    %1687 = vmatpush1.bf16.msra.mxu0 %v1555
    %1688 = vmatprep.subr.bf16.mxu0 %v1559
    %1689 = vmatpush1.bf16.msra.mxu0 %v1558
    %1690 = vmatprep.subr.bf16.mxu0 %v1562
    %1691 = vmatpush1.bf16.msra.mxu0 %v1561
    %1692 = vmatprep.mubr.bf16.mxu0 %v1051
    %1693 = vmatmul.mubr.bf16.gmra.mrb[0].mxu0 %v1050
    %v1694 = vpop.f32.mrb[0].mxu0
    %v1695 = vadd.f32 0.0, %v1694
    %v1696 = vpop.f32.mrb[0].mxu0
    %v1697 = vadd.f32 0.0, %v1696
    %v1698 = vpop.f32.mrb[0].mxu0
    %v1699 = vadd.f32 0.0, %v1698
    %v1700 = vpop.f32.mrb[0].mxu0
    %v1701 = vadd.f32 0.0, %v1700
    %1702 = vmatprep.mubr.bf16.mxu0 %v1054
    %1703 = vmatmul.mubr.bf16.gmra.mrb[0].mxu0 %v1053
    %v1704 = vpop.f32.mrb[0].mxu0
    %v1705 = vadd.f32 0.0, %v1704
    %v1706 = vpop.f32.mrb[0].mxu0
    %v1707 = vadd.f32 0.0, %v1706
    %v1708 = vpop.f32.mrb[0].mxu0
    %v1709 = vadd.f32 0.0, %v1708
    %v1710 = vpop.f32.mrb[0].mxu0
    %v1711 = vadd.f32 0.0, %v1710
    %1712 = vmatprep.mubr.bf16.mxu0 %v1057
    %1713 = vmatmul.mubr.bf16.gmra.mrb[0].mxu0 %v1056
    %v1714 = vpop.f32.mrb[0].mxu0
    %v1715 = vadd.f32 0.0, %v1714
    %v1716 = vpop.f32.mrb[0].mxu0
    %v1717 = vadd.f32 0.0, %v1716
    %v1718 = vpop.f32.mrb[0].mxu0
    %v1719 = vadd.f32 0.0, %v1718
    %v1720 = vpop.f32.mrb[0].mxu0
    %v1721 = vadd.f32 0.0, %v1720
    %1722 = vmatprep.mubr.bf16.mxu0 %v1060
    %1723 = vmatmul.mubr.bf16.gmra.mrb[0].mxu0 %v1059
    %v1724 = vpop.f32.mrb[0].mxu0
    %v1725 = vadd.f32 0.0, %v1724
    %v1726 = vpop.f32.mrb[0].mxu0
    %v1727 = vadd.f32 0.0, %v1726
    %v1728 = vpop.f32.mrb[0].mxu0
    %v1729 = vadd.f32 0.0, %v1728
    %v1730 = vpop.f32.mrb[0].mxu0
    %v1731 = vadd.f32 0.0, %v1730
    %1732 = vmatprep.mubr.bf16.mxu0 %v1063
    %1733 = vmatmul.mubr.bf16.gmra.mrb[0].mxu0 %v1062
    %v1734 = vpop.f32.mrb[0].mxu0
    %v1735 = vadd.f32 0.0, %v1734
    %v1736 = vpop.f32.mrb[0].mxu0
    %v1737 = vadd.f32 0.0, %v1736
    %v1738 = vpop.f32.mrb[0].mxu0
    %v1739 = vadd.f32 0.0, %v1738
    %v1740 = vpop.f32.mrb[0].mxu0
    %v1741 = vadd.f32 0.0, %v1740
    %1742 = vmatprep.mubr.bf16.mxu0 %v1066
    %1743 = vmatmul.mubr.bf16.gmra.mrb[0].mxu0 %v1065
    %v1744 = vpop.f32.mrb[0].mxu0
    %v1745 = vadd.f32 0.0, %v1744
    %v1746 = vpop.f32.mrb[0].mxu0
    %v1747 = vadd.f32 0.0, %v1746
    %v1748 = vpop.f32.mrb[0].mxu0
    %v1749 = vadd.f32 0.0, %v1748
    %v1750 = vpop.f32.mrb[0].mxu0
    %v1751 = vadd.f32 0.0, %v1750
    %1752 = vmatprep.mubr.bf16.mxu0 %v1069
    %1753 = vmatmul.mubr.bf16.gmra.mrb[0].mxu0 %v1068
    %v1754 = vpop.f32.mrb[0].mxu0
    %v1755 = vadd.f32 0.0, %v1754
    %v1756 = vpop.f32.mrb[0].mxu0
    %v1757 = vadd.f32 0.0, %v1756
    %v1758 = vpop.f32.mrb[0].mxu0
    %v1759 = vadd.f32 0.0, %v1758
    %v1760 = vpop.f32.mrb[0].mxu0
    %v1761 = vadd.f32 0.0, %v1760
    %1762 = vmatprep.mubr.bf16.mxu0 %v1072
    %1763 = vmatmul.mubr.bf16.gmra.mrb[0].mxu0 %v1071
    %v1764 = vpop.f32.mrb[0].mxu0
    %v1765 = vadd.f32 0.0, %v1764
    %v1766 = vpop.f32.mrb[0].mxu0
    %v1767 = vadd.f32 0.0, %v1766
    %v1768 = vpop.f32.mrb[0].mxu0
    %v1769 = vadd.f32 0.0, %v1768
    %v1770 = vpop.f32.mrb[0].mxu0
    %v1771 = vadd.f32 0.0, %v1770
    %1772 = vmatprep.mubr.bf16.mxu0 %v1075
    %1773 = vmatmul.mubr.bf16.gmra.mrb[0].mxu0 %v1074
    %v1774 = vpop.f32.mrb[0].mxu0
    %v1775 = vadd.f32 0.0, %v1774
    %v1776 = vpop.f32.mrb[0].mxu0
    %v1777 = vadd.f32 0.0, %v1776
    %v1778 = vpop.f32.mrb[0].mxu0
    %v1779 = vadd.f32 0.0, %v1778
    %v1780 = vpop.f32.mrb[0].mxu0
    %v1781 = vadd.f32 0.0, %v1780
    %1782 = vmatprep.mubr.bf16.mxu0 %v1078
    %1783 = vmatmul.mubr.bf16.gmra.mrb[0].mxu0 %v1077
    %v1784 = vpop.f32.mrb[0].mxu0
    %v1785 = vadd.f32 0.0, %v1784
    %v1786 = vpop.f32.mrb[0].mxu0
    %v1787 = vadd.f32 0.0, %v1786
    %v1788 = vpop.f32.mrb[0].mxu0
    %v1789 = vadd.f32 0.0, %v1788
    %v1790 = vpop.f32.mrb[0].mxu0
    %v1791 = vadd.f32 0.0, %v1790
    %1792 = vmatprep.mubr.bf16.mxu0 %v1081
    %1793 = vmatmul.mubr.bf16.gmra.mrb[0].mxu0 %v1080
    %v1794 = vpop.f32.mrb[0].mxu0
    %v1795 = vadd.f32 0.0, %v1794
    %v1796 = vpop.f32.mrb[0].mxu0
    %v1797 = vadd.f32 0.0, %v1796
    %v1798 = vpop.f32.mrb[0].mxu0
    %v1799 = vadd.f32 0.0, %v1798
    %v1800 = vpop.f32.mrb[0].mxu0
    %v1801 = vadd.f32 0.0, %v1800
    %1802 = vdwg.mxu0
    %1803 = vmatprep.subr.bf16.mxu0 %v1565
    %1804 = vmatpush1.bf16.msra.mxu0 %v1564
    %1805 = vmatprep.subr.bf16.mxu0 %v1568
    %1806 = vmatpush1.bf16.msra.mxu0 %v1567
    %1807 = vmatprep.subr.bf16.mxu0 %v1571
    %1808 = vmatpush1.bf16.msra.mxu0 %v1570
    %1809 = vmatprep.subr.bf16.mxu0 %v1574
    %1810 = vmatpush1.bf16.msra.mxu0 %v1573
    %1811 = vmatprep.subr.bf16.mxu0 %v1577
    %1812 = vmatpush1.bf16.msra.mxu0 %v1576
    %1813 = vmatprep.subr.bf16.mxu0 %v1580
    %1814 = vmatpush1.bf16.msra.mxu0 %v1579
    %1815 = vmatprep.subr.bf16.mxu0 %v1583
    %1816 = vmatpush1.bf16.msra.mxu0 %v1582
    %1817 = vmatprep.subr.bf16.mxu0 %v1586
    %1818 = vmatpush1.bf16.msra.mxu0 %v1585
    %1819 = vmatprep.subr.bf16.mxu0 0
    %1820 = vmatpush1.bf16.msra.mxu0 0
    %1821 = vmatprep.subr.bf16.mxu0 0
    %1822 = vmatpush1.bf16.msra.mxu0 0
    %1823 = vmatprep.subr.bf16.mxu0 0
    %1824 = vmatpush1.bf16.msra.mxu0 0
    %1825 = vmatprep.subr.bf16.mxu0 0
    %1826 = vmatpush1.bf16.msra.mxu0 0
    %1827 = vmatprep.subr.bf16.mxu0 0
    %1828 = vmatpush1.bf16.msra.mxu0 0
    %1829 = vmatprep.subr.bf16.mxu0 0
    %1830 = vmatpush1.bf16.msra.mxu0 0
    %1831 = vmatprep.subr.bf16.mxu0 0
    %1832 = vmatpush1.bf16.msra.mxu0 0
    %1833 = vmatprep.subr.bf16.mxu0 0
    %1834 = vmatpush1.bf16.msra.mxu0 0
    %1835 = vmatprep.mubr.bf16.mxu0 0
    %1836 = vmatmul.mubr.bf16.gmra.mrb[0].mxu0 %v1052
    %v1837 = vpop.f32.mrb[0].mxu0
    %v1838 = vadd.f32 %v1695, %v1837
    %v1839 = vpop.f32.mrb[0].mxu0
    %v1840 = vadd.f32 %v1697, %v1839
    %v1841 = vpop.f32.mrb[0].mxu0
    %v1842 = vadd.f32 %v1699, %v1841
    %v1843 = vpop.f32.mrb[0].mxu0
    %v1844 = vadd.f32 %v1701, %v1843
    %1845 = vmatprep.mubr.bf16.mxu0 0
    %1846 = vmatmul.mubr.bf16.gmra.mrb[0].mxu0 %v1055
    %v1847 = vpop.f32.mrb[0].mxu0
    %v1848 = vadd.f32 %v1705, %v1847
    %v1849 = vpop.f32.mrb[0].mxu0
    %v1850 = vadd.f32 %v1707, %v1849
    %v1851 = vpop.f32.mrb[0].mxu0
    %v1852 = vadd.f32 %v1709, %v1851
    %v1853 = vpop.f32.mrb[0].mxu0
    %v1854 = vadd.f32 %v1711, %v1853
    %1855 = vmatprep.mubr.bf16.mxu0 0
    %1856 = vmatmul.mubr.bf16.gmra.mrb[0].mxu0 %v1058
    %v1857 = vpop.f32.mrb[0].mxu0
    %v1858 = vadd.f32 %v1715, %v1857
    %v1859 = vpop.f32.mrb[0].mxu0
    %v1860 = vadd.f32 %v1717, %v1859
    %v1861 = vpop.f32.mrb[0].mxu0
    %v1862 = vadd.f32 %v1719, %v1861
    %v1863 = vpop.f32.mrb[0].mxu0
    %v1864 = vadd.f32 %v1721, %v1863
    %1865 = vmatprep.mubr.bf16.mxu0 0
    %1866 = vmatmul.mubr.bf16.gmra.mrb[0].mxu0 %v1061
    %v1867 = vpop.f32.mrb[0].mxu0
    %v1868 = vadd.f32 %v1725, %v1867
    %v1869 = vpop.f32.mrb[0].mxu0
    %v1870 = vadd.f32 %v1727, %v1869
    %v1871 = vpop.f32.mrb[0].mxu0
    %v1872 = vadd.f32 %v1729, %v1871
    %v1873 = vpop.f32.mrb[0].mxu0
    %v1874 = vadd.f32 %v1731, %v1873
    %1875 = vmatprep.mubr.bf16.mxu0 0
    %1876 = vmatmul.mubr.bf16.gmra.mrb[0].mxu0 %v1064
    %v1877 = vpop.f32.mrb[0].mxu0
    %v1878 = vadd.f32 %v1735, %v1877
    %v1879 = vpop.f32.mrb[0].mxu0
    %v1880 = vadd.f32 %v1737, %v1879
    %v1881 = vpop.f32.mrb[0].mxu0
    %v1882 = vadd.f32 %v1739, %v1881
    %v1883 = vpop.f32.mrb[0].mxu0
    %v1884 = vadd.f32 %v1741, %v1883
    %1885 = vmatprep.mubr.bf16.mxu0 0
    %1886 = vmatmul.mubr.bf16.gmra.mrb[0].mxu0 %v1067
    %v1887 = vpop.f32.mrb[0].mxu0
    %v1888 = vadd.f32 %v1745, %v1887
    %v1889 = vpop.f32.mrb[0].mxu0
    %v1890 = vadd.f32 %v1747, %v1889
    %v1891 = vpop.f32.mrb[0].mxu0
    %v1892 = vadd.f32 %v1749, %v1891
    %v1893 = vpop.f32.mrb[0].mxu0
    %v1894 = vadd.f32 %v1751, %v1893
    %1895 = vmatprep.mubr.bf16.mxu0 0
    %1896 = vmatmul.mubr.bf16.gmra.mrb[0].mxu0 %v1070
    %v1897 = vpop.f32.mrb[0].mxu0
    %v1898 = vadd.f32 %v1755, %v1897
    %v1899 = vpop.f32.mrb[0].mxu0
    %v1900 = vadd.f32 %v1757, %v1899
    %v1901 = vpop.f32.mrb[0].mxu0
    %v1902 = vadd.f32 %v1759, %v1901
    %v1903 = vpop.f32.mrb[0].mxu0
    %v1904 = vadd.f32 %v1761, %v1903
    %1905 = vmatprep.mubr.bf16.mxu0 0
    %1906 = vmatmul.mubr.bf16.gmra.mrb[0].mxu0 %v1073
    %v1907 = vpop.f32.mrb[0].mxu0
    %v1908 = vadd.f32 %v1765, %v1907
    %v1909 = vpop.f32.mrb[0].mxu0
    %v1910 = vadd.f32 %v1767, %v1909
    %v1911 = vpop.f32.mrb[0].mxu0
    %v1912 = vadd.f32 %v1769, %v1911
    %v1913 = vpop.f32.mrb[0].mxu0
    %v1914 = vadd.f32 %v1771, %v1913
    %1915 = vmatprep.mubr.bf16.mxu0 0
    %1916 = vmatmul.mubr.bf16.gmra.mrb[0].mxu0 %v1076
    %v1917 = vpop.f32.mrb[0].mxu0
    %v1918 = vadd.f32 %v1775, %v1917
    %v1919 = vpop.f32.mrb[0].mxu0
    %v1920 = vadd.f32 %v1777, %v1919
    %v1921 = vpop.f32.mrb[0].mxu0
    %v1922 = vadd.f32 %v1779, %v1921
    %v1923 = vpop.f32.mrb[0].mxu0
    %v1924 = vadd.f32 %v1781, %v1923
    %1925 = vmatprep.mubr.bf16.mxu0 0
    %1926 = vmatmul.mubr.bf16.gmra.mrb[0].mxu0 %v1079
    %v1927 = vpop.f32.mrb[0].mxu0
    %v1928 = vadd.f32 %v1785, %v1927
    %v1929 = vpop.f32.mrb[0].mxu0
    %v1930 = vadd.f32 %v1787, %v1929
    %v1931 = vpop.f32.mrb[0].mxu0
    %v1932 = vadd.f32 %v1789, %v1931
    %v1933 = vpop.f32.mrb[0].mxu0
    %v1934 = vadd.f32 %v1791, %v1933
    %1935 = vmatprep.mubr.bf16.mxu0 0
    %1936 = vmatmul.mubr.bf16.gmra.mrb[0].mxu0 %v1082
    %v1937 = vpop.f32.mrb[0].mxu0
    %v1938 = vadd.f32 %v1795, %v1937
    %v1939 = vpop.f32.mrb[0].mxu0
    %v1940 = vadd.f32 %v1797, %v1939
    %v1941 = vpop.f32.mrb[0].mxu0
    %v1942 = vadd.f32 %v1799, %v1941
    %v1943 = vpop.f32.mrb[0].mxu0
    %v1944 = vadd.f32 %v1801, %v1943
    %1945 = vdwg.mxu0
    %1946 = vmatprep.subr.bf16.mxu0 0
    %1947 = vmatpush1.bf16.msra.mxu0 %v1518
    %1948 = vmatprep.subr.bf16.mxu0 0
    %1949 = vmatpush1.bf16.msra.mxu0 %v1521
    %1950 = vmatprep.subr.bf16.mxu0 0
    %1951 = vmatpush1.bf16.msra.mxu0 %v1524
    %1952 = vmatprep.subr.bf16.mxu0 0
    %1953 = vmatpush1.bf16.msra.mxu0 %v1527
    %1954 = vmatprep.subr.bf16.mxu0 0
    %1955 = vmatpush1.bf16.msra.mxu0 %v1530
    %1956 = vmatprep.subr.bf16.mxu0 0
    %1957 = vmatpush1.bf16.msra.mxu0 %v1533
    %1958 = vmatprep.subr.bf16.mxu0 0
    %1959 = vmatpush1.bf16.msra.mxu0 %v1536
    %1960 = vmatprep.subr.bf16.mxu0 0
    %1961 = vmatpush1.bf16.msra.mxu0 %v1539
    %1962 = vmatprep.subr.bf16.mxu0 0
    %1963 = vmatpush1.bf16.msra.mxu0 %v1542
    %1964 = vmatprep.subr.bf16.mxu0 0
    %1965 = vmatpush1.bf16.msra.mxu0 %v1545
    %1966 = vmatprep.subr.bf16.mxu0 0
    %1967 = vmatpush1.bf16.msra.mxu0 %v1548
    %1968 = vmatprep.subr.bf16.mxu0 0
    %1969 = vmatpush1.bf16.msra.mxu0 %v1551
    %1970 = vmatprep.subr.bf16.mxu0 0
    %1971 = vmatpush1.bf16.msra.mxu0 %v1554
    %1972 = vmatprep.subr.bf16.mxu0 0
    %1973 = vmatpush1.bf16.msra.mxu0 %v1557
    %1974 = vmatprep.subr.bf16.mxu0 0
    %1975 = vmatpush1.bf16.msra.mxu0 %v1560
    %1976 = vmatprep.subr.bf16.mxu0 0
    %1977 = vmatpush1.bf16.msra.mxu0 %v1563
    %1978 = vmatprep.mubr.bf16.mxu0 %v1051
    %1979 = vmatmul.mubr.bf16.gmra.mrb[0].mxu0 %v1050
    %v1980 = vpop.f32.mrb[0].mxu0
    %v1981 = vadd.f32 0.0, %v1980
    %v1982 = vpop.f32.mrb[0].mxu0
    %v1983 = vpop.f32.mrb[0].mxu0
    %v1984 = vadd.f32 0.0, %v1983
    %v1985 = vpop.f32.mrb[0].mxu0
    %1986 = vmatprep.mubr.bf16.mxu0 %v1054
    %1987 = vmatmul.mubr.bf16.gmra.mrb[0].mxu0 %v1053
    %v1988 = vpop.f32.mrb[0].mxu0
    %v1989 = vadd.f32 0.0, %v1988
    %v1990 = vpop.f32.mrb[0].mxu0
    %v1991 = vpop.f32.mrb[0].mxu0
    %v1992 = vadd.f32 0.0, %v1991
    %v1993 = vpop.f32.mrb[0].mxu0
    %1994 = vmatprep.mubr.bf16.mxu0 %v1057
    %1995 = vmatmul.mubr.bf16.gmra.mrb[0].mxu0 %v1056
    %v1996 = vpop.f32.mrb[0].mxu0
    %v1997 = vadd.f32 0.0, %v1996
    %v1998 = vpop.f32.mrb[0].mxu0
    %v1999 = vpop.f32.mrb[0].mxu0
    %v2000 = vadd.f32 0.0, %v1999
    %v2001 = vpop.f32.mrb[0].mxu0
    %2002 = vmatprep.mubr.bf16.mxu0 %v1060
    %2003 = vmatmul.mubr.bf16.gmra.mrb[0].mxu0 %v1059
    %v2004 = vpop.f32.mrb[0].mxu0
    %v2005 = vadd.f32 0.0, %v2004
    %v2006 = vpop.f32.mrb[0].mxu0
    %v2007 = vpop.f32.mrb[0].mxu0
    %v2008 = vadd.f32 0.0, %v2007
    %v2009 = vpop.f32.mrb[0].mxu0
    %2010 = vmatprep.mubr.bf16.mxu0 %v1063
    %2011 = vmatmul.mubr.bf16.gmra.mrb[0].mxu0 %v1062
    %v2012 = vpop.f32.mrb[0].mxu0
    %v2013 = vadd.f32 0.0, %v2012
    %v2014 = vpop.f32.mrb[0].mxu0
    %v2015 = vpop.f32.mrb[0].mxu0
    %v2016 = vadd.f32 0.0, %v2015
    %v2017 = vpop.f32.mrb[0].mxu0
    %2018 = vmatprep.mubr.bf16.mxu0 %v1066
    %2019 = vmatmul.mubr.bf16.gmra.mrb[0].mxu0 %v1065
    %v2020 = vpop.f32.mrb[0].mxu0
    %v2021 = vadd.f32 0.0, %v2020
    %v2022 = vpop.f32.mrb[0].mxu0
    %v2023 = vpop.f32.mrb[0].mxu0
    %v2024 = vadd.f32 0.0, %v2023
    %v2025 = vpop.f32.mrb[0].mxu0
    %2026 = vmatprep.mubr.bf16.mxu0 %v1069
    %2027 = vmatmul.mubr.bf16.gmra.mrb[0].mxu0 %v1068
    %v2028 = vpop.f32.mrb[0].mxu0
    %v2029 = vadd.f32 0.0, %v2028
    %v2030 = vpop.f32.mrb[0].mxu0
    %v2031 = vpop.f32.mrb[0].mxu0
    %v2032 = vadd.f32 0.0, %v2031
    %v2033 = vpop.f32.mrb[0].mxu0
    %2034 = vmatprep.mubr.bf16.mxu0 %v1072
    %2035 = vmatmul.mubr.bf16.gmra.mrb[0].mxu0 %v1071
    %v2036 = vpop.f32.mrb[0].mxu0
    %v2037 = vadd.f32 0.0, %v2036
    %v2038 = vpop.f32.mrb[0].mxu0
    %v2039 = vpop.f32.mrb[0].mxu0
    %v2040 = vadd.f32 0.0, %v2039
    %v2041 = vpop.f32.mrb[0].mxu0
    %2042 = vmatprep.mubr.bf16.mxu0 %v1075
    %2043 = vmatmul.mubr.bf16.gmra.mrb[0].mxu0 %v1074
    %v2044 = vpop.f32.mrb[0].mxu0
    %v2045 = vadd.f32 0.0, %v2044
    %v2046 = vpop.f32.mrb[0].mxu0
    %v2047 = vpop.f32.mrb[0].mxu0
    %v2048 = vadd.f32 0.0, %v2047
    %v2049 = vpop.f32.mrb[0].mxu0
    %2050 = vmatprep.mubr.bf16.mxu0 %v1078
    %2051 = vmatmul.mubr.bf16.gmra.mrb[0].mxu0 %v1077
    %v2052 = vpop.f32.mrb[0].mxu0
    %v2053 = vadd.f32 0.0, %v2052
    %v2054 = vpop.f32.mrb[0].mxu0
    %v2055 = vpop.f32.mrb[0].mxu0
    %v2056 = vadd.f32 0.0, %v2055
    %v2057 = vpop.f32.mrb[0].mxu0
    %2058 = vmatprep.mubr.bf16.mxu0 %v1081
    %2059 = vmatmul.mubr.bf16.gmra.mrb[0].mxu0 %v1080
    %v2060 = vpop.f32.mrb[0].mxu0
    %v2061 = vadd.f32 0.0, %v2060
    %v2062 = vpop.f32.mrb[0].mxu0
    %v2063 = vpop.f32.mrb[0].mxu0
    %v2064 = vadd.f32 0.0, %v2063
    %v2065 = vpop.f32.mrb[0].mxu0
    %2066 = vdwg.mxu0
    %2067 = vmatprep.subr.bf16.mxu0 0
    %2068 = vmatpush1.bf16.msra.mxu0 %v1566
    %2069 = vmatprep.subr.bf16.mxu0 0
    %2070 = vmatpush1.bf16.msra.mxu0 %v1569
    %2071 = vmatprep.subr.bf16.mxu0 0
    %2072 = vmatpush1.bf16.msra.mxu0 %v1572
    %2073 = vmatprep.subr.bf16.mxu0 0
    %2074 = vmatpush1.bf16.msra.mxu0 %v1575
    %2075 = vmatprep.subr.bf16.mxu0 0
    %2076 = vmatpush1.bf16.msra.mxu0 %v1578
    %2077 = vmatprep.subr.bf16.mxu0 0
    %2078 = vmatpush1.bf16.msra.mxu0 %v1581
    %2079 = vmatprep.subr.bf16.mxu0 0
    %2080 = vmatpush1.bf16.msra.mxu0 %v1584
    %2081 = vmatprep.subr.bf16.mxu0 0
    %2082 = vmatpush1.bf16.msra.mxu0 %v1587
    %2083 = vmatprep.subr.bf16.mxu0 0
    %2084 = vmatpush1.bf16.msra.mxu0 0
    %2085 = vmatprep.subr.bf16.mxu0 0
    %2086 = vmatpush1.bf16.msra.mxu0 0
    %2087 = vmatprep.subr.bf16.mxu0 0
    %2088 = vmatpush1.bf16.msra.mxu0 0
    %2089 = vmatprep.subr.bf16.mxu0 0
    %2090 = vmatpush1.bf16.msra.mxu0 0
    %2091 = vmatprep.subr.bf16.mxu0 0
    %2092 = vmatpush1.bf16.msra.mxu0 0
    %2093 = vmatprep.subr.bf16.mxu0 0
    %2094 = vmatpush1.bf16.msra.mxu0 0
    %2095 = vmatprep.subr.bf16.mxu0 0
    %2096 = vmatpush1.bf16.msra.mxu0 0
    %2097 = vmatprep.subr.bf16.mxu0 0
    %2098 = vmatpush1.bf16.msra.mxu0 0
    %2099 = vmatprep.mubr.bf16.mxu0 0
    %2100 = vmatmul.mubr.bf16.gmra.mrb[0].mxu0 %v1052
    %v2101 = vpop.f32.mrb[0].mxu0
    %v2102 = vadd.f32 %v1981, %v2101
    %v2103 = vpop.f32.mrb[0].mxu0
    %v2104 = vpop.f32.mrb[0].mxu0
    %v2105 = vadd.f32 %v1984, %v2104
    %v2106 = vpop.f32.mrb[0].mxu0
    %2107 = vmatprep.mubr.bf16.mxu0 0
    %2108 = vmatmul.mubr.bf16.gmra.mrb[0].mxu0 %v1055
    %v2109 = vpop.f32.mrb[0].mxu0
    %v2110 = vadd.f32 %v1989, %v2109
    %v2111 = vpop.f32.mrb[0].mxu0
    %v2112 = vpop.f32.mrb[0].mxu0
    %v2113 = vadd.f32 %v1992, %v2112
    %v2114 = vpop.f32.mrb[0].mxu0
    %2115 = vmatprep.mubr.bf16.mxu0 0
    %2116 = vmatmul.mubr.bf16.gmra.mrb[0].mxu0 %v1058
    %v2117 = vpop.f32.mrb[0].mxu0
    %v2118 = vadd.f32 %v1997, %v2117
    %v2119 = vpop.f32.mrb[0].mxu0
    %v2120 = vpop.f32.mrb[0].mxu0
    %v2121 = vadd.f32 %v2000, %v2120
    %v2122 = vpop.f32.mrb[0].mxu0
    %2123 = vmatprep.mubr.bf16.mxu0 0
    %2124 = vmatmul.mubr.bf16.gmra.mrb[0].mxu0 %v1061
    %v2125 = vpop.f32.mrb[0].mxu0
    %v2126 = vadd.f32 %v2005, %v2125
    %v2127 = vpop.f32.mrb[0].mxu0
    %v2128 = vpop.f32.mrb[0].mxu0
    %v2129 = vadd.f32 %v2008, %v2128
    %v2130 = vpop.f32.mrb[0].mxu0
    %2131 = vmatprep.mubr.bf16.mxu0 0
    %2132 = vmatmul.mubr.bf16.gmra.mrb[0].mxu0 %v1064
    %v2133 = vpop.f32.mrb[0].mxu0
    %v2134 = vadd.f32 %v2013, %v2133
    %v2135 = vpop.f32.mrb[0].mxu0
    %v2136 = vpop.f32.mrb[0].mxu0
    %v2137 = vadd.f32 %v2016, %v2136
    %v2138 = vpop.f32.mrb[0].mxu0
    %2139 = vmatprep.mubr.bf16.mxu0 0
    %2140 = vmatmul.mubr.bf16.gmra.mrb[0].mxu0 %v1067
    %v2141 = vpop.f32.mrb[0].mxu0
    %v2142 = vadd.f32 %v2021, %v2141
    %v2143 = vpop.f32.mrb[0].mxu0
    %v2144 = vpop.f32.mrb[0].mxu0
    %v2145 = vadd.f32 %v2024, %v2144
    %v2146 = vpop.f32.mrb[0].mxu0
    %2147 = vmatprep.mubr.bf16.mxu0 0
    %2148 = vmatmul.mubr.bf16.gmra.mrb[0].mxu0 %v1070
    %v2149 = vpop.f32.mrb[0].mxu0
    %v2150 = vadd.f32 %v2029, %v2149
    %v2151 = vpop.f32.mrb[0].mxu0
    %v2152 = vpop.f32.mrb[0].mxu0
    %v2153 = vadd.f32 %v2032, %v2152
    %v2154 = vpop.f32.mrb[0].mxu0
    %2155 = vmatprep.mubr.bf16.mxu0 0
    %2156 = vmatmul.mubr.bf16.gmra.mrb[0].mxu0 %v1073
    %v2157 = vpop.f32.mrb[0].mxu0
    %v2158 = vadd.f32 %v2037, %v2157
    %v2159 = vpop.f32.mrb[0].mxu0
    %v2160 = vpop.f32.mrb[0].mxu0
    %v2161 = vadd.f32 %v2040, %v2160
    %v2162 = vpop.f32.mrb[0].mxu0
    %2163 = vmatprep.mubr.bf16.mxu0 0
    %2164 = vmatmul.mubr.bf16.gmra.mrb[0].mxu0 %v1076
    %v2165 = vpop.f32.mrb[0].mxu0
    %v2166 = vadd.f32 %v2045, %v2165
    %v2167 = vpop.f32.mrb[0].mxu0
    %v2168 = vpop.f32.mrb[0].mxu0
    %v2169 = vadd.f32 %v2048, %v2168
    %v2170 = vpop.f32.mrb[0].mxu0
    %2171 = vmatprep.mubr.bf16.mxu0 0
    %2172 = vmatmul.mubr.bf16.gmra.mrb[0].mxu0 %v1079
    %v2173 = vpop.f32.mrb[0].mxu0
    %v2174 = vadd.f32 %v2053, %v2173
    %v2175 = vpop.f32.mrb[0].mxu0
    %v2176 = vpop.f32.mrb[0].mxu0
    %v2177 = vadd.f32 %v2056, %v2176
    %v2178 = vpop.f32.mrb[0].mxu0
    %2179 = vmatprep.mubr.bf16.mxu0 0
    %2180 = vmatmul.mubr.bf16.gmra.mrb[0].mxu0 %v1082
    %v2181 = vpop.f32.mrb[0].mxu0
    %v2182 = vadd.f32 %v2061, %v2181
    %v2183 = vpop.f32.mrb[0].mxu0
    %v2184 = vpop.f32.mrb[0].mxu0
    %v2185 = vadd.f32 %v2064, %v2184
    %v2186 = vpop.f32.mrb[0].mxu0
    %2187 = vdwg.mxu0
    %v2284 = vunpack.c.l.b16 %v1083
    %v2285 = vunpack.c.h.b16 %v1083
    %v2286 = vunpack.c.l.b16 %v1084
    %v2287 = vunpack.c.l.b16 %v1085
    %v2288 = vunpack.c.h.b16 %v1085
    %v2289 = vunpack.c.l.b16 %v1086
    %v2290 = vunpack.c.l.b16 %v1087
    %v2291 = vunpack.c.h.b16 %v1087
    %v2292 = vunpack.c.l.b16 %v1088
    %v2293 = vunpack.c.l.b16 %v1089
    %v2294 = vunpack.c.h.b16 %v1089
    %v2295 = vunpack.c.l.b16 %v1090
    %v2296 = vunpack.c.l.b16 %v1091
    %v2297 = vunpack.c.h.b16 %v1091
    %v2298 = vunpack.c.l.b16 %v1092
    %v2299 = vunpack.c.l.b16 %v1093
    %v2300 = vunpack.c.h.b16 %v1093
    %v2301 = vunpack.c.l.b16 %v1094
    %v2302 = vunpack.c.l.b16 %v1095
    %v2303 = vunpack.c.h.b16 %v1095
    %v2304 = vunpack.c.l.b16 %v1096
    %v2305 = vunpack.c.l.b16 %v1097
    %v2306 = vunpack.c.h.b16 %v1097
    %v2307 = vunpack.c.l.b16 %v1098
    %v2308 = vunpack.c.l.b16 %v1099
    %v2309 = vunpack.c.h.b16 %v1099
    %v2310 = vunpack.c.l.b16 %v1100
    %v2311 = vunpack.c.l.b16 %v1101
    %v2312 = vunpack.c.h.b16 %v1101
    %v2313 = vunpack.c.l.b16 %v1102
    %v2314 = vunpack.c.l.b16 %v1103
    %v2315 = vunpack.c.h.b16 %v1103
    %v2316 = vunpack.c.l.b16 %v1104
    %v2317 = vunpack.c.l.b16 %v1105
    %v2318 = vunpack.c.h.b16 %v1105
    %v2319 = vunpack.c.l.b16 %v1106
    %v2320 = vunpack.c.l.b16 %v1107
    %v2321 = vunpack.c.h.b16 %v1107
    %v2322 = vunpack.c.l.b16 %v1108
    %v2323 = vunpack.c.l.b16 %v1109
    %v2324 = vunpack.c.h.b16 %v1109
    %v2325 = vunpack.c.l.b16 %v1110
    %v2326 = vunpack.c.l.b16 %v1111
    %v2327 = vunpack.c.h.b16 %v1111
    %v2328 = vunpack.c.l.b16 %v1112
    %v2329 = vunpack.c.l.b16 %v1113
    %v2330 = vunpack.c.h.b16 %v1113
    %v2331 = vunpack.c.l.b16 %v1114
    %v2332 = vunpack.c.l.b16 %v1115
    %v2333 = vunpack.c.h.b16 %v1115
    %v2334 = vunpack.c.l.b16 %v1116
    %v2335 = vunpack.c.l.b16 %v1117
    %v2336 = vunpack.c.h.b16 %v1117
    %v2337 = vunpack.c.l.b16 %v1118
    %v2338 = vunpack.c.l.b16 %v1119
    %v2339 = vunpack.c.h.b16 %v1119
    %v2340 = vunpack.c.l.b16 %v1120
    %v2341 = vunpack.c.l.b16 %v1121
    %v2342 = vunpack.c.h.b16 %v1121
    %v2343 = vunpack.c.l.b16 %v1122
    %v2344 = vunpack.c.l.b16 %v1123
    %v2345 = vunpack.c.h.b16 %v1123
    %v2346 = vunpack.c.l.b16 %v1124
    %v2347 = vunpack.c.l.b16 %v1125
    %v2348 = vunpack.c.h.b16 %v1125
    %v2349 = vunpack.c.l.b16 %v1126
    %v2350 = vunpack.c.l.b16 %v1127
    %v2351 = vunpack.c.h.b16 %v1127
    %v2352 = vunpack.c.l.b16 %v1128
    %v2353 = vunpack.c.l.b16 %v1129
    %v2354 = vunpack.c.h.b16 %v1129
    %v2355 = vunpack.c.l.b16 %v1130
    %v2356 = vunpack.c.l.b16 %v1131
    %v2357 = vunpack.c.h.b16 %v1131
    %v2358 = vunpack.c.l.b16 %v1132
    %v2359 = vunpack.c.l.b16 %v1133
    %v2360 = vunpack.c.h.b16 %v1133
    %v2361 = vunpack.c.l.b16 %v1134
    %v2362 = vunpack.c.l.b16 %v1135
    %v2363 = vunpack.c.h.b16 %v1135
    %v2364 = vunpack.c.l.b16 %v1136
    %v2365 = vunpack.c.l.b16 %v1137
    %v2366 = vunpack.c.h.b16 %v1137
    %v2367 = vunpack.c.l.b16 %v1138
    %v2368 = vunpack.c.l.b16 %v1139
    %v2369 = vunpack.c.h.b16 %v1139
    %v2370 = vunpack.c.l.b16 %v1140
    %v2371 = vunpack.c.l.b16 %v1141
    %v2372 = vunpack.c.h.b16 %v1141
    %v2373 = vunpack.c.l.b16 %v1142
    %v2374 = vunpack.c.l.b16 %v1143
    %v2375 = vunpack.c.h.b16 %v1143
    %v2376 = vunpack.c.l.b16 %v1144
    %v2377 = vunpack.c.l.b16 %v1145
    %v2378 = vunpack.c.h.b16 %v1145
    %v2379 = vunpack.c.l.b16 %v1146
    %v2380 = vunpack.c.l.b16 %v1147
    %v2381 = vunpack.c.h.b16 %v1147
    %v2382 = vunpack.c.l.b16 %v1148
    %v2383 = vunpack.c.l.b16 %v1149
    %v2384 = vunpack.c.h.b16 %v1149
    %v2385 = vunpack.c.l.b16 %v1150
    %v2386 = vunpack.c.l.b16 %v1151
    %v2387 = vunpack.c.h.b16 %v1151
    %v2388 = vunpack.c.l.b16 %v1152
    %v2389 = vunpack.c.l.b16 %v1153
    %v2390 = vunpack.c.h.b16 %v1153
    %v2391 = vunpack.c.l.b16 %v1154
    %v2392 = vunpack.c.l.b16 %v1155
    %v2393 = vunpack.c.h.b16 %v1155
    %v2394 = vunpack.c.l.b16 %v1156
    %v2395 = vunpack.c.l.b16 %v1157
    %v2396 = vunpack.c.h.b16 %v1157
    %v2397 = vunpack.c.l.b16 %v1158
    %v2398 = vunpack.c.l.b16 %v1159
    %v2399 = vunpack.c.h.b16 %v1159
    %v2400 = vunpack.c.l.b16 %v1160
    %v2401 = vunpack.c.l.b16 %v1161
    %v2402 = vunpack.c.h.b16 %v1161
    %v2403 = vunpack.c.l.b16 %v1162
    %v2404 = vunpack.c.l.b16 %v1163
    %v2405 = vunpack.c.h.b16 %v1163
    %v2406 = vunpack.c.l.b16 %v1164
    %v2407 = vunpack.c.l.b16 %v1165
    %v2408 = vunpack.c.h.b16 %v1165
    %v2409 = vunpack.c.l.b16 %v1166
    %v2410 = vunpack.c.l.b16 %v1167
    %v2411 = vunpack.c.h.b16 %v1167
    %v2412 = vunpack.c.l.b16 %v1168
    %v2413 = vunpack.c.l.b16 %v1169
    %v2414 = vunpack.c.h.b16 %v1169
    %v2415 = vunpack.c.l.b16 %v1170
    %v2416 = vunpack.c.l.b16 %v1171
    %v2417 = vunpack.c.h.b16 %v1171
    %v2418 = vunpack.c.l.b16 %v1172
    %v2419 = vunpack.c.l.b16 %v1173
    %v2420 = vunpack.c.h.b16 %v1173
    %v2421 = vunpack.c.l.b16 %v1174
    %v2422 = vunpack.c.l.b16 %v1175
    %v2423 = vunpack.c.h.b16 %v1175
    %v2424 = vunpack.c.l.b16 %v1176
    %v2425 = vunpack.c.l.b16 %v1177
    %v2426 = vunpack.c.h.b16 %v1177
    %v2427 = vunpack.c.l.b16 %v1178
    %v2428 = vpack.c.b16 %v2287, %v2284
    %v2429 = vpack.c.b16 %v2288, %v2285
    %v2430 = vpack.c.b16 %v2289, %v2286
    %v2431 = vpack.c.b16 %v2293, %v2290
    %v2432 = vpack.c.b16 %v2294, %v2291
    %v2433 = vpack.c.b16 %v2295, %v2292
    %v2434 = vpack.c.b16 %v2299, %v2296
    %v2435 = vpack.c.b16 %v2300, %v2297
    %v2436 = vpack.c.b16 %v2301, %v2298
    %v2437 = vpack.c.b16 %v2305, %v2302
    %v2438 = vpack.c.b16 %v2306, %v2303
    %v2439 = vpack.c.b16 %v2307, %v2304
    %v2440 = vpack.c.b16 %v2311, %v2308
    %v2441 = vpack.c.b16 %v2312, %v2309
    %v2442 = vpack.c.b16 %v2313, %v2310
    %v2443 = vpack.c.b16 %v2317, %v2314
    %v2444 = vpack.c.b16 %v2318, %v2315
    %v2445 = vpack.c.b16 %v2319, %v2316
    %v2446 = vpack.c.b16 %v2323, %v2320
    %v2447 = vpack.c.b16 %v2324, %v2321
    %v2448 = vpack.c.b16 %v2325, %v2322
    %v2449 = vpack.c.b16 %v2329, %v2326
    %v2450 = vpack.c.b16 %v2330, %v2327
    %v2451 = vpack.c.b16 %v2331, %v2328
    %v2452 = vpack.c.b16 %v2335, %v2332
    %v2453 = vpack.c.b16 %v2336, %v2333
    %v2454 = vpack.c.b16 %v2337, %v2334
    %v2455 = vpack.c.b16 %v2341, %v2338
    %v2456 = vpack.c.b16 %v2342, %v2339
    %v2457 = vpack.c.b16 %v2343, %v2340
    %v2458 = vpack.c.b16 %v2347, %v2344
    %v2459 = vpack.c.b16 %v2348, %v2345
    %v2460 = vpack.c.b16 %v2349, %v2346
    %v2461 = vpack.c.b16 %v2353, %v2350
    %v2462 = vpack.c.b16 %v2354, %v2351
    %v2463 = vpack.c.b16 %v2355, %v2352
    %v2464 = vpack.c.b16 %v2359, %v2356
    %v2465 = vpack.c.b16 %v2360, %v2357
    %v2466 = vpack.c.b16 %v2361, %v2358
    %v2467 = vpack.c.b16 %v2365, %v2362
    %v2468 = vpack.c.b16 %v2366, %v2363
    %v2469 = vpack.c.b16 %v2367, %v2364
    %v2470 = vpack.c.b16 %v2371, %v2368
    %v2471 = vpack.c.b16 %v2372, %v2369
    %v2472 = vpack.c.b16 %v2373, %v2370
    %v2473 = vpack.c.b16 %v2377, %v2374
    %v2474 = vpack.c.b16 %v2378, %v2375
    %v2475 = vpack.c.b16 %v2379, %v2376
    %v2476 = vpack.c.b16 %v2383, %v2380
    %v2477 = vpack.c.b16 %v2384, %v2381
    %v2478 = vpack.c.b16 %v2385, %v2382
    %v2479 = vpack.c.b16 %v2389, %v2386
    %v2480 = vpack.c.b16 %v2390, %v2387
    %v2481 = vpack.c.b16 %v2391, %v2388
    %v2482 = vpack.c.b16 %v2395, %v2392
    %v2483 = vpack.c.b16 %v2396, %v2393
    %v2484 = vpack.c.b16 %v2397, %v2394
    %v2485 = vpack.c.b16 %v2401, %v2398
    %v2486 = vpack.c.b16 %v2402, %v2399
    %v2487 = vpack.c.b16 %v2403, %v2400
    %v2488 = vpack.c.b16 %v2407, %v2404
    %v2489 = vpack.c.b16 %v2408, %v2405
    %v2490 = vpack.c.b16 %v2409, %v2406
    %v2491 = vpack.c.b16 %v2413, %v2410
    %v2492 = vpack.c.b16 %v2414, %v2411
    %v2493 = vpack.c.b16 %v2415, %v2412
    %v2494 = vpack.c.b16 %v2419, %v2416
    %v2495 = vpack.c.b16 %v2420, %v2417
    %v2496 = vpack.c.b16 %v2421, %v2418
    %v2497 = vpack.c.b16 %v2425, %v2422
    %v2498 = vpack.c.b16 %v2426, %v2423
    %v2499 = vpack.c.b16 %v2427, %v2424
    %2572 = vmatprep.subr.bf16.mxu0 %v2429
    %2573 = vmatpush1.bf16.msra.mxu0 %v2428
    %2574 = vmatprep.subr.bf16.mxu0 %v2432
    %2575 = vmatpush1.bf16.msra.mxu0 %v2431
    %2576 = vmatprep.subr.bf16.mxu0 %v2435
    %2577 = vmatpush1.bf16.msra.mxu0 %v2434
    %2578 = vmatprep.subr.bf16.mxu0 %v2438
    %2579 = vmatpush1.bf16.msra.mxu0 %v2437
    %2580 = vmatprep.subr.bf16.mxu0 %v2441
    %2581 = vmatpush1.bf16.msra.mxu0 %v2440
    %2582 = vmatprep.subr.bf16.mxu0 %v2444
    %2583 = vmatpush1.bf16.msra.mxu0 %v2443
    %2584 = vmatprep.subr.bf16.mxu0 %v2447
    %2585 = vmatpush1.bf16.msra.mxu0 %v2446
    %2586 = vmatprep.subr.bf16.mxu0 %v2450
    %2587 = vmatpush1.bf16.msra.mxu0 %v2449
    %2588 = vmatprep.subr.bf16.mxu0 %v2453
    %2589 = vmatpush1.bf16.msra.mxu0 %v2452
    %2590 = vmatprep.subr.bf16.mxu0 %v2456
    %2591 = vmatpush1.bf16.msra.mxu0 %v2455
    %2592 = vmatprep.subr.bf16.mxu0 %v2459
    %2593 = vmatpush1.bf16.msra.mxu0 %v2458
    %2594 = vmatprep.subr.bf16.mxu0 %v2462
    %2595 = vmatpush1.bf16.msra.mxu0 %v2461
    %2596 = vmatprep.subr.bf16.mxu0 %v2465
    %2597 = vmatpush1.bf16.msra.mxu0 %v2464
    %2598 = vmatprep.subr.bf16.mxu0 %v2468
    %2599 = vmatpush1.bf16.msra.mxu0 %v2467
    %2600 = vmatprep.subr.bf16.mxu0 %v2471
    %2601 = vmatpush1.bf16.msra.mxu0 %v2470
    %2602 = vmatprep.subr.bf16.mxu0 %v2474
    %2603 = vmatpush1.bf16.msra.mxu0 %v2473
    %2604 = vmatprep.mubr.bf16.mxu0 %v1018
    %2605 = vmatmul.mubr.bf16.gmra.mrb[0].mxu0 %v1017
    %v2606 = vpop.f32.mrb[0].mxu0
    %v2607 = vadd.f32 %v1838, %v2606
    %v2608 = vpop.f32.mrb[0].mxu0
    %v2609 = vadd.f32 %v1840, %v2608
    %v2610 = vpop.f32.mrb[0].mxu0
    %v2611 = vadd.f32 %v1842, %v2610
    %v2612 = vpop.f32.mrb[0].mxu0
    %v2613 = vadd.f32 %v1844, %v2612
    %2614 = vmatprep.mubr.bf16.mxu0 %v1021
    %2615 = vmatmul.mubr.bf16.gmra.mrb[0].mxu0 %v1020
    %v2616 = vpop.f32.mrb[0].mxu0
    %v2617 = vadd.f32 %v1848, %v2616
    %v2618 = vpop.f32.mrb[0].mxu0
    %v2619 = vadd.f32 %v1850, %v2618
    %v2620 = vpop.f32.mrb[0].mxu0
    %v2621 = vadd.f32 %v1852, %v2620
    %v2622 = vpop.f32.mrb[0].mxu0
    %v2623 = vadd.f32 %v1854, %v2622
    %2624 = vmatprep.mubr.bf16.mxu0 %v1024
    %2625 = vmatmul.mubr.bf16.gmra.mrb[0].mxu0 %v1023
    %v2626 = vpop.f32.mrb[0].mxu0
    %v2627 = vadd.f32 %v1858, %v2626
    %v2628 = vpop.f32.mrb[0].mxu0
    %v2629 = vadd.f32 %v1860, %v2628
    %v2630 = vpop.f32.mrb[0].mxu0
    %v2631 = vadd.f32 %v1862, %v2630
    %v2632 = vpop.f32.mrb[0].mxu0
    %v2633 = vadd.f32 %v1864, %v2632
    %2634 = vmatprep.mubr.bf16.mxu0 %v1027
    %2635 = vmatmul.mubr.bf16.gmra.mrb[0].mxu0 %v1026
    %v2636 = vpop.f32.mrb[0].mxu0
    %v2637 = vadd.f32 %v1868, %v2636
    %v2638 = vpop.f32.mrb[0].mxu0
    %v2639 = vadd.f32 %v1870, %v2638
    %v2640 = vpop.f32.mrb[0].mxu0
    %v2641 = vadd.f32 %v1872, %v2640
    %v2642 = vpop.f32.mrb[0].mxu0
    %v2643 = vadd.f32 %v1874, %v2642
    %2644 = vmatprep.mubr.bf16.mxu0 %v1030
    %2645 = vmatmul.mubr.bf16.gmra.mrb[0].mxu0 %v1029
    %v2646 = vpop.f32.mrb[0].mxu0
    %v2647 = vadd.f32 %v1878, %v2646
    %v2648 = vpop.f32.mrb[0].mxu0
    %v2649 = vadd.f32 %v1880, %v2648
    %v2650 = vpop.f32.mrb[0].mxu0
    %v2651 = vadd.f32 %v1882, %v2650
    %v2652 = vpop.f32.mrb[0].mxu0
    %v2653 = vadd.f32 %v1884, %v2652
    %2654 = vmatprep.mubr.bf16.mxu0 %v1033
    %2655 = vmatmul.mubr.bf16.gmra.mrb[0].mxu0 %v1032
    %v2656 = vpop.f32.mrb[0].mxu0
    %v2657 = vadd.f32 %v1888, %v2656
    %v2658 = vpop.f32.mrb[0].mxu0
    %v2659 = vadd.f32 %v1890, %v2658
    %v2660 = vpop.f32.mrb[0].mxu0
    %v2661 = vadd.f32 %v1892, %v2660
    %v2662 = vpop.f32.mrb[0].mxu0
    %v2663 = vadd.f32 %v1894, %v2662
    %2664 = vmatprep.mubr.bf16.mxu0 %v1036
    %2665 = vmatmul.mubr.bf16.gmra.mrb[0].mxu0 %v1035
    %v2666 = vpop.f32.mrb[0].mxu0
    %v2667 = vadd.f32 %v1898, %v2666
    %v2668 = vpop.f32.mrb[0].mxu0
    %v2669 = vadd.f32 %v1900, %v2668
    %v2670 = vpop.f32.mrb[0].mxu0
    %v2671 = vadd.f32 %v1902, %v2670
    %v2672 = vpop.f32.mrb[0].mxu0
    %v2673 = vadd.f32 %v1904, %v2672
    %2674 = vmatprep.mubr.bf16.mxu0 %v1039
    %2675 = vmatmul.mubr.bf16.gmra.mrb[0].mxu0 %v1038
    %v2676 = vpop.f32.mrb[0].mxu0
    %v2677 = vadd.f32 %v1908, %v2676
    %v2678 = vpop.f32.mrb[0].mxu0
    %v2679 = vadd.f32 %v1910, %v2678
    %v2680 = vpop.f32.mrb[0].mxu0
    %v2681 = vadd.f32 %v1912, %v2680
    %v2682 = vpop.f32.mrb[0].mxu0
    %v2683 = vadd.f32 %v1914, %v2682
    %2684 = vmatprep.mubr.bf16.mxu0 %v1042
    %2685 = vmatmul.mubr.bf16.gmra.mrb[0].mxu0 %v1041
    %v2686 = vpop.f32.mrb[0].mxu0
    %v2687 = vadd.f32 %v1918, %v2686
    %v2688 = vpop.f32.mrb[0].mxu0
    %v2689 = vadd.f32 %v1920, %v2688
    %v2690 = vpop.f32.mrb[0].mxu0
    %v2691 = vadd.f32 %v1922, %v2690
    %v2692 = vpop.f32.mrb[0].mxu0
    %v2693 = vadd.f32 %v1924, %v2692
    %2694 = vmatprep.mubr.bf16.mxu0 %v1045
    %2695 = vmatmul.mubr.bf16.gmra.mrb[0].mxu0 %v1044
    %v2696 = vpop.f32.mrb[0].mxu0
    %v2697 = vadd.f32 %v1928, %v2696
    %v2698 = vpop.f32.mrb[0].mxu0
    %v2699 = vadd.f32 %v1930, %v2698
    %v2700 = vpop.f32.mrb[0].mxu0
    %v2701 = vadd.f32 %v1932, %v2700
    %v2702 = vpop.f32.mrb[0].mxu0
    %v2703 = vadd.f32 %v1934, %v2702
    %2704 = vmatprep.mubr.bf16.mxu0 %v1048
    %2705 = vmatmul.mubr.bf16.gmra.mrb[0].mxu0 %v1047
    %v2706 = vpop.f32.mrb[0].mxu0
    %v2707 = vadd.f32 %v1938, %v2706
    %v2708 = vpop.f32.mrb[0].mxu0
    %v2709 = vadd.f32 %v1940, %v2708
    %v2710 = vpop.f32.mrb[0].mxu0
    %v2711 = vadd.f32 %v1942, %v2710
    %v2712 = vpop.f32.mrb[0].mxu0
    %v2713 = vadd.f32 %v1944, %v2712
    %2714 = vdwg.mxu0
    %2715 = vmatprep.subr.bf16.mxu0 %v2477
    %2716 = vmatpush1.bf16.msra.mxu0 %v2476
    %2717 = vmatprep.subr.bf16.mxu0 %v2480
    %2718 = vmatpush1.bf16.msra.mxu0 %v2479
    %2719 = vmatprep.subr.bf16.mxu0 %v2483
    %2720 = vmatpush1.bf16.msra.mxu0 %v2482
    %2721 = vmatprep.subr.bf16.mxu0 %v2486
    %2722 = vmatpush1.bf16.msra.mxu0 %v2485
    %2723 = vmatprep.subr.bf16.mxu0 %v2489
    %2724 = vmatpush1.bf16.msra.mxu0 %v2488
    %2725 = vmatprep.subr.bf16.mxu0 %v2492
    %2726 = vmatpush1.bf16.msra.mxu0 %v2491
    %2727 = vmatprep.subr.bf16.mxu0 %v2495
    %2728 = vmatpush1.bf16.msra.mxu0 %v2494
    %2729 = vmatprep.subr.bf16.mxu0 %v2498
    %2730 = vmatpush1.bf16.msra.mxu0 %v2497
    %2731 = vmatprep.subr.bf16.mxu0 0
    %2732 = vmatpush1.bf16.msra.mxu0 0
    %2733 = vmatprep.subr.bf16.mxu0 0
    %2734 = vmatpush1.bf16.msra.mxu0 0
    %2735 = vmatprep.subr.bf16.mxu0 0
    %2736 = vmatpush1.bf16.msra.mxu0 0
    %2737 = vmatprep.subr.bf16.mxu0 0
    %2738 = vmatpush1.bf16.msra.mxu0 0
    %2739 = vmatprep.subr.bf16.mxu0 0
    %2740 = vmatpush1.bf16.msra.mxu0 0
    %2741 = vmatprep.subr.bf16.mxu0 0
    %2742 = vmatpush1.bf16.msra.mxu0 0
    %2743 = vmatprep.subr.bf16.mxu0 0
    %2744 = vmatpush1.bf16.msra.mxu0 0
    %2745 = vmatprep.subr.bf16.mxu0 0
    %2746 = vmatpush1.bf16.msra.mxu0 0
    %2747 = vmatprep.mubr.bf16.mxu0 0
    %2748 = vmatmul.mubr.bf16.gmra.mrb[0].mxu0 %v1019
    %v2749 = vpop.f32.mrb[0].mxu0
    %v2750 = vadd.f32 %v2607, %v2749
    %v2751 = vpop.f32.mrb[0].mxu0
    %v2752 = vadd.f32 %v2609, %v2751
    %v2753 = vpop.f32.mrb[0].mxu0
    %v2754 = vadd.f32 %v2611, %v2753
    %v2755 = vpop.f32.mrb[0].mxu0
    %v2756 = vadd.f32 %v2613, %v2755
    %2757 = vmatprep.mubr.bf16.mxu0 0
    %2758 = vmatmul.mubr.bf16.gmra.mrb[0].mxu0 %v1022
    %v2759 = vpop.f32.mrb[0].mxu0
    %v2760 = vadd.f32 %v2617, %v2759
    %v2761 = vpop.f32.mrb[0].mxu0
    %v2762 = vadd.f32 %v2619, %v2761
    %v2763 = vpop.f32.mrb[0].mxu0
    %v2764 = vadd.f32 %v2621, %v2763
    %v2765 = vpop.f32.mrb[0].mxu0
    %v2766 = vadd.f32 %v2623, %v2765
    %2767 = vmatprep.mubr.bf16.mxu0 0
    %2768 = vmatmul.mubr.bf16.gmra.mrb[0].mxu0 %v1025
    %v2769 = vpop.f32.mrb[0].mxu0
    %v2770 = vadd.f32 %v2627, %v2769
    %v2771 = vpop.f32.mrb[0].mxu0
    %v2772 = vadd.f32 %v2629, %v2771
    %v2773 = vpop.f32.mrb[0].mxu0
    %v2774 = vadd.f32 %v2631, %v2773
    %v2775 = vpop.f32.mrb[0].mxu0
    %v2776 = vadd.f32 %v2633, %v2775
    %2777 = vmatprep.mubr.bf16.mxu0 0
    %2778 = vmatmul.mubr.bf16.gmra.mrb[0].mxu0 %v1028
    %v2779 = vpop.f32.mrb[0].mxu0
    %v2780 = vadd.f32 %v2637, %v2779
    %v2781 = vpop.f32.mrb[0].mxu0
    %v2782 = vadd.f32 %v2639, %v2781
    %v2783 = vpop.f32.mrb[0].mxu0
    %v2784 = vadd.f32 %v2641, %v2783
    %v2785 = vpop.f32.mrb[0].mxu0
    %v2786 = vadd.f32 %v2643, %v2785
    %2787 = vmatprep.mubr.bf16.mxu0 0
    %2788 = vmatmul.mubr.bf16.gmra.mrb[0].mxu0 %v1031
    %v2789 = vpop.f32.mrb[0].mxu0
    %v2790 = vadd.f32 %v2647, %v2789
    %v2791 = vpop.f32.mrb[0].mxu0
    %v2792 = vadd.f32 %v2649, %v2791
    %v2793 = vpop.f32.mrb[0].mxu0
    %v2794 = vadd.f32 %v2651, %v2793
    %v2795 = vpop.f32.mrb[0].mxu0
    %v2796 = vadd.f32 %v2653, %v2795
    %2797 = vmatprep.mubr.bf16.mxu0 0
    %2798 = vmatmul.mubr.bf16.gmra.mrb[0].mxu0 %v1034
    %v2799 = vpop.f32.mrb[0].mxu0
    %v2800 = vadd.f32 %v2657, %v2799
    %v2801 = vpop.f32.mrb[0].mxu0
    %v2802 = vadd.f32 %v2659, %v2801
    %v2803 = vpop.f32.mrb[0].mxu0
    %v2804 = vadd.f32 %v2661, %v2803
    %v2805 = vpop.f32.mrb[0].mxu0
    %v2806 = vadd.f32 %v2663, %v2805
    %2807 = vmatprep.mubr.bf16.mxu0 0
    %2808 = vmatmul.mubr.bf16.gmra.mrb[0].mxu0 %v1037
    %v2809 = vpop.f32.mrb[0].mxu0
    %v2810 = vadd.f32 %v2667, %v2809
    %v2811 = vpop.f32.mrb[0].mxu0
    %v2812 = vadd.f32 %v2669, %v2811
    %v2813 = vpop.f32.mrb[0].mxu0
    %v2814 = vadd.f32 %v2671, %v2813
    %v2815 = vpop.f32.mrb[0].mxu0
    %v2816 = vadd.f32 %v2673, %v2815
    %2817 = vmatprep.mubr.bf16.mxu0 0
    %2818 = vmatmul.mubr.bf16.gmra.mrb[0].mxu0 %v1040
    %v2819 = vpop.f32.mrb[0].mxu0
    %v2820 = vadd.f32 %v2677, %v2819
    %v2821 = vpop.f32.mrb[0].mxu0
    %v2822 = vadd.f32 %v2679, %v2821
    %v2823 = vpop.f32.mrb[0].mxu0
    %v2824 = vadd.f32 %v2681, %v2823
    %v2825 = vpop.f32.mrb[0].mxu0
    %v2826 = vadd.f32 %v2683, %v2825
    %2827 = vmatprep.mubr.bf16.mxu0 0
    %2828 = vmatmul.mubr.bf16.gmra.mrb[0].mxu0 %v1043
    %v2829 = vpop.f32.mrb[0].mxu0
    %v2830 = vadd.f32 %v2687, %v2829
    %v2831 = vpop.f32.mrb[0].mxu0
    %v2832 = vadd.f32 %v2689, %v2831
    %v2833 = vpop.f32.mrb[0].mxu0
    %v2834 = vadd.f32 %v2691, %v2833
    %v2835 = vpop.f32.mrb[0].mxu0
    %v2836 = vadd.f32 %v2693, %v2835
    %2837 = vmatprep.mubr.bf16.mxu0 0
    %2838 = vmatmul.mubr.bf16.gmra.mrb[0].mxu0 %v1046
    %v2839 = vpop.f32.mrb[0].mxu0
    %v2840 = vadd.f32 %v2697, %v2839
    %v2841 = vpop.f32.mrb[0].mxu0
    %v2842 = vadd.f32 %v2699, %v2841
    %v2843 = vpop.f32.mrb[0].mxu0
    %v2844 = vadd.f32 %v2701, %v2843
    %v2845 = vpop.f32.mrb[0].mxu0
    %v2846 = vadd.f32 %v2703, %v2845
    %2847 = vmatprep.mubr.bf16.mxu0 0
    %2848 = vmatmul.mubr.bf16.gmra.mrb[0].mxu0 %v1049
    %v2849 = vpop.f32.mrb[0].mxu0
    %v2850 = vadd.f32 %v2707, %v2849
    %v2851 = vpop.f32.mrb[0].mxu0
    %v2852 = vadd.f32 %v2709, %v2851
    %v2853 = vpop.f32.mrb[0].mxu0
    %v2854 = vadd.f32 %v2711, %v2853
    %v2855 = vpop.f32.mrb[0].mxu0
    %v2856 = vadd.f32 %v2713, %v2855
    %2857 = vdwg.mxu0
    %2858 = vmatprep.subr.bf16.mxu0 0
    %2859 = vmatpush1.bf16.msra.mxu0 %v2430
    %2860 = vmatprep.subr.bf16.mxu0 0
    %2861 = vmatpush1.bf16.msra.mxu0 %v2433
    %2862 = vmatprep.subr.bf16.mxu0 0
    %2863 = vmatpush1.bf16.msra.mxu0 %v2436
    %2864 = vmatprep.subr.bf16.mxu0 0
    %2865 = vmatpush1.bf16.msra.mxu0 %v2439
    %2866 = vmatprep.subr.bf16.mxu0 0
    %2867 = vmatpush1.bf16.msra.mxu0 %v2442
    %2868 = vmatprep.subr.bf16.mxu0 0
    %2869 = vmatpush1.bf16.msra.mxu0 %v2445
    %2870 = vmatprep.subr.bf16.mxu0 0
    %2871 = vmatpush1.bf16.msra.mxu0 %v2448
    %2872 = vmatprep.subr.bf16.mxu0 0
    %2873 = vmatpush1.bf16.msra.mxu0 %v2451
    %2874 = vmatprep.subr.bf16.mxu0 0
    %2875 = vmatpush1.bf16.msra.mxu0 %v2454
    %2876 = vmatprep.subr.bf16.mxu0 0
    %2877 = vmatpush1.bf16.msra.mxu0 %v2457
    %2878 = vmatprep.subr.bf16.mxu0 0
    %2879 = vmatpush1.bf16.msra.mxu0 %v2460
    %2880 = vmatprep.subr.bf16.mxu0 0
    %2881 = vmatpush1.bf16.msra.mxu0 %v2463
    %2882 = vmatprep.subr.bf16.mxu0 0
    %2883 = vmatpush1.bf16.msra.mxu0 %v2466
    %2884 = vmatprep.subr.bf16.mxu0 0
    %2885 = vmatpush1.bf16.msra.mxu0 %v2469
    %2886 = vmatprep.subr.bf16.mxu0 0
    %2887 = vmatpush1.bf16.msra.mxu0 %v2472
    %2888 = vmatprep.subr.bf16.mxu0 0
    %2889 = vmatpush1.bf16.msra.mxu0 %v2475
    %2890 = vmatprep.mubr.bf16.mxu0 %v1018
    %2891 = vmatmul.mubr.bf16.gmra.mrb[0].mxu0 %v1017
    %v2892 = vpop.f32.mrb[0].mxu0
    %v2893 = vadd.f32 %v2102, %v2892
    %v2894 = vpop.f32.mrb[0].mxu0
    %v2895 = vpop.f32.mrb[0].mxu0
    %v2896 = vadd.f32 %v2105, %v2895
    %v2897 = vpop.f32.mrb[0].mxu0
    %2898 = vmatprep.mubr.bf16.mxu0 %v1021
    %2899 = vmatmul.mubr.bf16.gmra.mrb[0].mxu0 %v1020
    %v2900 = vpop.f32.mrb[0].mxu0
    %v2901 = vadd.f32 %v2110, %v2900
    %v2902 = vpop.f32.mrb[0].mxu0
    %v2903 = vpop.f32.mrb[0].mxu0
    %v2904 = vadd.f32 %v2113, %v2903
    %v2905 = vpop.f32.mrb[0].mxu0
    %2906 = vmatprep.mubr.bf16.mxu0 %v1024
    %2907 = vmatmul.mubr.bf16.gmra.mrb[0].mxu0 %v1023
    %v2908 = vpop.f32.mrb[0].mxu0
    %v2909 = vadd.f32 %v2118, %v2908
    %v2910 = vpop.f32.mrb[0].mxu0
    %v2911 = vpop.f32.mrb[0].mxu0
    %v2912 = vadd.f32 %v2121, %v2911
    %v2913 = vpop.f32.mrb[0].mxu0
    %2914 = vmatprep.mubr.bf16.mxu0 %v1027
    %2915 = vmatmul.mubr.bf16.gmra.mrb[0].mxu0 %v1026
    %v2916 = vpop.f32.mrb[0].mxu0
    %v2917 = vadd.f32 %v2126, %v2916
    %v2918 = vpop.f32.mrb[0].mxu0
    %v2919 = vpop.f32.mrb[0].mxu0
    %v2920 = vadd.f32 %v2129, %v2919
    %v2921 = vpop.f32.mrb[0].mxu0
    %2922 = vmatprep.mubr.bf16.mxu0 %v1030
    %2923 = vmatmul.mubr.bf16.gmra.mrb[0].mxu0 %v1029
    %v2924 = vpop.f32.mrb[0].mxu0
    %v2925 = vadd.f32 %v2134, %v2924
    %v2926 = vpop.f32.mrb[0].mxu0
    %v2927 = vpop.f32.mrb[0].mxu0
    %v2928 = vadd.f32 %v2137, %v2927
    %v2929 = vpop.f32.mrb[0].mxu0
    %2930 = vmatprep.mubr.bf16.mxu0 %v1033
    %2931 = vmatmul.mubr.bf16.gmra.mrb[0].mxu0 %v1032
    %v2932 = vpop.f32.mrb[0].mxu0
    %v2933 = vadd.f32 %v2142, %v2932
    %v2934 = vpop.f32.mrb[0].mxu0
    %v2935 = vpop.f32.mrb[0].mxu0
    %v2936 = vadd.f32 %v2145, %v2935
    %v2937 = vpop.f32.mrb[0].mxu0
    %2938 = vmatprep.mubr.bf16.mxu0 %v1036
    %2939 = vmatmul.mubr.bf16.gmra.mrb[0].mxu0 %v1035
    %v2940 = vpop.f32.mrb[0].mxu0
    %v2941 = vadd.f32 %v2150, %v2940
    %v2942 = vpop.f32.mrb[0].mxu0
    %v2943 = vpop.f32.mrb[0].mxu0
    %v2944 = vadd.f32 %v2153, %v2943
    %v2945 = vpop.f32.mrb[0].mxu0
    %2946 = vmatprep.mubr.bf16.mxu0 %v1039
    %2947 = vmatmul.mubr.bf16.gmra.mrb[0].mxu0 %v1038
    %v2948 = vpop.f32.mrb[0].mxu0
    %v2949 = vadd.f32 %v2158, %v2948
    %v2950 = vpop.f32.mrb[0].mxu0
    %v2951 = vpop.f32.mrb[0].mxu0
    %v2952 = vadd.f32 %v2161, %v2951
    %v2953 = vpop.f32.mrb[0].mxu0
    %2954 = vmatprep.mubr.bf16.mxu0 %v1042
    %2955 = vmatmul.mubr.bf16.gmra.mrb[0].mxu0 %v1041
    %v2956 = vpop.f32.mrb[0].mxu0
    %v2957 = vadd.f32 %v2166, %v2956
    %v2958 = vpop.f32.mrb[0].mxu0
    %v2959 = vpop.f32.mrb[0].mxu0
    %v2960 = vadd.f32 %v2169, %v2959
    %v2961 = vpop.f32.mrb[0].mxu0
    %2962 = vmatprep.mubr.bf16.mxu0 %v1045
    %2963 = vmatmul.mubr.bf16.gmra.mrb[0].mxu0 %v1044
    %v2964 = vpop.f32.mrb[0].mxu0
    %v2965 = vadd.f32 %v2174, %v2964
    %v2966 = vpop.f32.mrb[0].mxu0
    %v2967 = vpop.f32.mrb[0].mxu0
    %v2968 = vadd.f32 %v2177, %v2967
    %v2969 = vpop.f32.mrb[0].mxu0
    %2970 = vmatprep.mubr.bf16.mxu0 %v1048
    %2971 = vmatmul.mubr.bf16.gmra.mrb[0].mxu0 %v1047
    %v2972 = vpop.f32.mrb[0].mxu0
    %v2973 = vadd.f32 %v2182, %v2972
    %v2974 = vpop.f32.mrb[0].mxu0
    %v2975 = vpop.f32.mrb[0].mxu0
    %v2976 = vadd.f32 %v2185, %v2975
    %v2977 = vpop.f32.mrb[0].mxu0
    %2978 = vdwg.mxu0
    %2979 = vmatprep.subr.bf16.mxu0 0
    %2980 = vmatpush1.bf16.msra.mxu0 %v2478
    %2981 = vmatprep.subr.bf16.mxu0 0
    %2982 = vmatpush1.bf16.msra.mxu0 %v2481
    %2983 = vmatprep.subr.bf16.mxu0 0
    %2984 = vmatpush1.bf16.msra.mxu0 %v2484
    %2985 = vmatprep.subr.bf16.mxu0 0
    %2986 = vmatpush1.bf16.msra.mxu0 %v2487
    %2987 = vmatprep.subr.bf16.mxu0 0
    %2988 = vmatpush1.bf16.msra.mxu0 %v2490
    %2989 = vmatprep.subr.bf16.mxu0 0
    %2990 = vmatpush1.bf16.msra.mxu0 %v2493
    %2991 = vmatprep.subr.bf16.mxu0 0
    %2992 = vmatpush1.bf16.msra.mxu0 %v2496
    %2993 = vmatprep.subr.bf16.mxu0 0
    %2994 = vmatpush1.bf16.msra.mxu0 %v2499
    %2995 = vmatprep.subr.bf16.mxu0 0
    %2996 = vmatpush1.bf16.msra.mxu0 0
    %2997 = vmatprep.subr.bf16.mxu0 0
    %2998 = vmatpush1.bf16.msra.mxu0 0
    %2999 = vmatprep.subr.bf16.mxu0 0
    %3000 = vmatpush1.bf16.msra.mxu0 0
    %3001 = vmatprep.subr.bf16.mxu0 0
    %3002 = vmatpush1.bf16.msra.mxu0 0
    %3003 = vmatprep.subr.bf16.mxu0 0
    %3004 = vmatpush1.bf16.msra.mxu0 0
    %3005 = vmatprep.subr.bf16.mxu0 0
    %3006 = vmatpush1.bf16.msra.mxu0 0
    %3007 = vmatprep.subr.bf16.mxu0 0
    %3008 = vmatpush1.bf16.msra.mxu0 0
    %3009 = vmatprep.subr.bf16.mxu0 0
    %3010 = vmatpush1.bf16.msra.mxu0 0
    %3011 = vmatprep.mubr.bf16.mxu0 0
    %3012 = vmatmul.mubr.bf16.gmra.mrb[0].mxu0 %v1019
    %v3013 = vpop.f32.mrb[0].mxu0
    %v3014 = vadd.f32 %v2893, %v3013
    %v3015 = vpop.f32.mrb[0].mxu0
    %v3016 = vpop.f32.mrb[0].mxu0
    %v3017 = vadd.f32 %v2896, %v3016
    %v3018 = vpop.f32.mrb[0].mxu0
    %3019 = vmatprep.mubr.bf16.mxu0 0
    %3020 = vmatmul.mubr.bf16.gmra.mrb[0].mxu0 %v1022
    %v3021 = vpop.f32.mrb[0].mxu0
    %v3022 = vadd.f32 %v2901, %v3021
    %v3023 = vpop.f32.mrb[0].mxu0
    %v3024 = vpop.f32.mrb[0].mxu0
    %v3025 = vadd.f32 %v2904, %v3024
    %v3026 = vpop.f32.mrb[0].mxu0
    %3027 = vmatprep.mubr.bf16.mxu0 0
    %3028 = vmatmul.mubr.bf16.gmra.mrb[0].mxu0 %v1025
    %v3029 = vpop.f32.mrb[0].mxu0
    %v3030 = vadd.f32 %v2909, %v3029
    %v3031 = vpop.f32.mrb[0].mxu0
    %v3032 = vpop.f32.mrb[0].mxu0
    %v3033 = vadd.f32 %v2912, %v3032
    %v3034 = vpop.f32.mrb[0].mxu0
    %3035 = vmatprep.mubr.bf16.mxu0 0
    %3036 = vmatmul.mubr.bf16.gmra.mrb[0].mxu0 %v1028
    %v3037 = vpop.f32.mrb[0].mxu0
    %v3038 = vadd.f32 %v2917, %v3037
    %v3039 = vpop.f32.mrb[0].mxu0
    %v3040 = vpop.f32.mrb[0].mxu0
    %v3041 = vadd.f32 %v2920, %v3040
    %v3042 = vpop.f32.mrb[0].mxu0
    %3043 = vmatprep.mubr.bf16.mxu0 0
    %3044 = vmatmul.mubr.bf16.gmra.mrb[0].mxu0 %v1031
    %v3045 = vpop.f32.mrb[0].mxu0
    %v3046 = vadd.f32 %v2925, %v3045
    %v3047 = vpop.f32.mrb[0].mxu0
    %v3048 = vpop.f32.mrb[0].mxu0
    %v3049 = vadd.f32 %v2928, %v3048
    %v3050 = vpop.f32.mrb[0].mxu0
    %3051 = vmatprep.mubr.bf16.mxu0 0
    %3052 = vmatmul.mubr.bf16.gmra.mrb[0].mxu0 %v1034
    %v3053 = vpop.f32.mrb[0].mxu0
    %v3054 = vadd.f32 %v2933, %v3053
    %v3055 = vpop.f32.mrb[0].mxu0
    %v3056 = vpop.f32.mrb[0].mxu0
    %v3057 = vadd.f32 %v2936, %v3056
    %v3058 = vpop.f32.mrb[0].mxu0
    %3059 = vmatprep.mubr.bf16.mxu0 0
    %3060 = vmatmul.mubr.bf16.gmra.mrb[0].mxu0 %v1037
    %v3061 = vpop.f32.mrb[0].mxu0
    %v3062 = vadd.f32 %v2941, %v3061
    %v3063 = vpop.f32.mrb[0].mxu0
    %v3064 = vpop.f32.mrb[0].mxu0
    %v3065 = vadd.f32 %v2944, %v3064
    %v3066 = vpop.f32.mrb[0].mxu0
    %3067 = vmatprep.mubr.bf16.mxu0 0
    %3068 = vmatmul.mubr.bf16.gmra.mrb[0].mxu0 %v1040
    %v3069 = vpop.f32.mrb[0].mxu0
    %v3070 = vadd.f32 %v2949, %v3069
    %v3071 = vpop.f32.mrb[0].mxu0
    %v3072 = vpop.f32.mrb[0].mxu0
    %v3073 = vadd.f32 %v2952, %v3072
    %v3074 = vpop.f32.mrb[0].mxu0
    %3075 = vmatprep.mubr.bf16.mxu0 0
    %3076 = vmatmul.mubr.bf16.gmra.mrb[0].mxu0 %v1043
    %v3077 = vpop.f32.mrb[0].mxu0
    %v3078 = vadd.f32 %v2957, %v3077
    %v3079 = vpop.f32.mrb[0].mxu0
    %v3080 = vpop.f32.mrb[0].mxu0
    %v3081 = vadd.f32 %v2960, %v3080
    %v3082 = vpop.f32.mrb[0].mxu0
    %3083 = vmatprep.mubr.bf16.mxu0 0
    %3084 = vmatmul.mubr.bf16.gmra.mrb[0].mxu0 %v1046
    %v3085 = vpop.f32.mrb[0].mxu0
    %v3086 = vadd.f32 %v2965, %v3085
    %v3087 = vpop.f32.mrb[0].mxu0
    %v3088 = vpop.f32.mrb[0].mxu0
    %v3089 = vadd.f32 %v2968, %v3088
    %v3090 = vpop.f32.mrb[0].mxu0
    %3091 = vmatprep.mubr.bf16.mxu0 0
    %3092 = vmatmul.mubr.bf16.gmra.mrb[0].mxu0 %v1049
    %v3093 = vpop.f32.mrb[0].mxu0
    %v3094 = vadd.f32 %v2973, %v3093
    %v3095 = vpop.f32.mrb[0].mxu0
    %v3096 = vpop.f32.mrb[0].mxu0
    %v3097 = vadd.f32 %v2976, %v3096
    %v3098 = vpop.f32.mrb[0].mxu0
    %3099 = vdwg.mxu0
    %v3100 = vld [vmem:[#allocation11] sm:$0x7]
    %v3102 = vlaneseq
    %v3103 = vshrl.u32 %v3102, 7
    %v3104 = vsub.s32 0, %v3103
    %v3105 = vrot.slane %v3100, %v3104
    %v3106 = vlaneseq
    %v3107 = vshrl.u32 %v3106, 7
    %v3108 = vsub.s32 1, %v3107
    %v3109 = vrot.slane %v3100, %v3108
    %v3110 = vlaneseq
    %v3111 = vshrl.u32 %v3110, 7
    %v3112 = vsub.s32 2, %v3111
    %v3113 = vrot.slane %v3100, %v3112
    %v3117 = vadd.f32 %v2750, %v3105
    %v3118 = vadd.f32 %v2752, %v3109
    %v3119 = vadd.f32 %v3014, %v3113
    %v3120 = vadd.f32 %v2754, %v3105
    %v3121 = vadd.f32 %v2756, %v3109
    %v3122 = vadd.f32 %v3017, %v3113
    %v3123 = vadd.f32 %v2760, %v3105
    %v3124 = vadd.f32 %v2762, %v3109
    %v3125 = vadd.f32 %v3022, %v3113
    %v3126 = vadd.f32 %v2764, %v3105
    %v3127 = vadd.f32 %v2766, %v3109
    %v3128 = vadd.f32 %v3025, %v3113
    %v3129 = vadd.f32 %v2770, %v3105
    %v3130 = vadd.f32 %v2772, %v3109
    %v3131 = vadd.f32 %v3030, %v3113
    %v3132 = vadd.f32 %v2774, %v3105
    %v3133 = vadd.f32 %v2776, %v3109
    %v3134 = vadd.f32 %v3033, %v3113
    %v3135 = vadd.f32 %v2780, %v3105
    %v3136 = vadd.f32 %v2782, %v3109
    %v3137 = vadd.f32 %v3038, %v3113
    %v3138 = vadd.f32 %v2784, %v3105
    %v3139 = vadd.f32 %v2786, %v3109
    %v3140 = vadd.f32 %v3041, %v3113
    %v3141 = vadd.f32 %v2790, %v3105
    %v3142 = vadd.f32 %v2792, %v3109
    %v3143 = vadd.f32 %v3046, %v3113
    %v3144 = vadd.f32 %v2794, %v3105
    %v3145 = vadd.f32 %v2796, %v3109
    %v3146 = vadd.f32 %v3049, %v3113
    %v3147 = vadd.f32 %v2800, %v3105
    %v3148 = vadd.f32 %v2802, %v3109
    %v3149 = vadd.f32 %v3054, %v3113
    %v3150 = vadd.f32 %v2804, %v3105
    %v3151 = vadd.f32 %v2806, %v3109
    %v3152 = vadd.f32 %v3057, %v3113
    %v3153 = vadd.f32 %v2810, %v3105
    %v3154 = vadd.f32 %v2812, %v3109
    %v3155 = vadd.f32 %v3062, %v3113
    %v3156 = vadd.f32 %v2814, %v3105
    %v3157 = vadd.f32 %v2816, %v3109
    %v3158 = vadd.f32 %v3065, %v3113
    %v3159 = vadd.f32 %v2820, %v3105
    %v3160 = vadd.f32 %v2822, %v3109
    %v3161 = vadd.f32 %v3070, %v3113
    %v3162 = vadd.f32 %v2824, %v3105
    %v3163 = vadd.f32 %v2826, %v3109
    %v3164 = vadd.f32 %v3073, %v3113
    %v3165 = vadd.f32 %v2830, %v3105
    %v3166 = vadd.f32 %v2832, %v3109
    %v3167 = vadd.f32 %v3078, %v3113
    %v3168 = vadd.f32 %v2834, %v3105
    %v3169 = vadd.f32 %v2836, %v3109
    %v3170 = vadd.f32 %v3081, %v3113
    %v3171 = vadd.f32 %v2840, %v3105
    %v3172 = vadd.f32 %v2842, %v3109
    %v3173 = vadd.f32 %v3086, %v3113
    %v3174 = vadd.f32 %v2844, %v3105
    %v3175 = vadd.f32 %v2846, %v3109
    %v3176 = vadd.f32 %v3089, %v3113
    %v3177 = vadd.f32 %v2850, %v3105
    %v3178 = vadd.f32 %v2852, %v3109
    %v3179 = vadd.f32 %v3094, %v3113
    %v3180 = vadd.f32 %v2854, %v3105
    %v3181 = vadd.f32 %v2856, %v3109
    %v3182 = vadd.f32 %v3097, %v3113
    %v3183 = vmax.f32 %v3117, 0.0
    %v3184 = vmax.f32 %v3118, 0.0
    %v3185 = vmax.f32 %v3119, 0.0
    %v3186 = vmax.f32 %v3120, 0.0
    %v3187 = vmax.f32 %v3121, 0.0
    %v3188 = vmax.f32 %v3122, 0.0
    %v3189 = vmax.f32 %v3123, 0.0
    %v3190 = vmax.f32 %v3124, 0.0
    %v3191 = vmax.f32 %v3125, 0.0
    %v3192 = vmax.f32 %v3126, 0.0
    %v3193 = vmax.f32 %v3127, 0.0
    %v3194 = vmax.f32 %v3128, 0.0
    %v3195 = vmax.f32 %v3129, 0.0
    %v3196 = vmax.f32 %v3130, 0.0
    %v3197 = vmax.f32 %v3131, 0.0
    %v3198 = vmax.f32 %v3132, 0.0
    %v3199 = vmax.f32 %v3133, 0.0
    %v3200 = vmax.f32 %v3134, 0.0
    %v3201 = vmax.f32 %v3135, 0.0
    %v3202 = vmax.f32 %v3136, 0.0
    %v3203 = vmax.f32 %v3137, 0.0
    %v3204 = vmax.f32 %v3138, 0.0
    %v3205 = vmax.f32 %v3139, 0.0
    %v3206 = vmax.f32 %v3140, 0.0
    %v3207 = vmax.f32 %v3141, 0.0
    %v3208 = vmax.f32 %v3142, 0.0
    %v3209 = vmax.f32 %v3143, 0.0
    %v3210 = vmax.f32 %v3144, 0.0
    %v3211 = vmax.f32 %v3145, 0.0
    %v3212 = vmax.f32 %v3146, 0.0
    %v3213 = vmax.f32 %v3147, 0.0
    %v3214 = vmax.f32 %v3148, 0.0
    %v3215 = vmax.f32 %v3149, 0.0
    %v3216 = vmax.f32 %v3150, 0.0
    %v3217 = vmax.f32 %v3151, 0.0
    %v3218 = vmax.f32 %v3152, 0.0
    %v3219 = vmax.f32 %v3153, 0.0
    %v3220 = vmax.f32 %v3154, 0.0
    %v3221 = vmax.f32 %v3155, 0.0
    %v3222 = vmax.f32 %v3156, 0.0
    %v3223 = vmax.f32 %v3157, 0.0
    %v3224 = vmax.f32 %v3158, 0.0
    %v3225 = vmax.f32 %v3159, 0.0
    %v3226 = vmax.f32 %v3160, 0.0
    %v3227 = vmax.f32 %v3161, 0.0
    %v3228 = vmax.f32 %v3162, 0.0
    %v3229 = vmax.f32 %v3163, 0.0
    %v3230 = vmax.f32 %v3164, 0.0
    %v3231 = vmax.f32 %v3165, 0.0
    %v3232 = vmax.f32 %v3166, 0.0
    %v3233 = vmax.f32 %v3167, 0.0
    %v3234 = vmax.f32 %v3168, 0.0
    %v3235 = vmax.f32 %v3169, 0.0
    %v3236 = vmax.f32 %v3170, 0.0
    %v3237 = vmax.f32 %v3171, 0.0
    %v3238 = vmax.f32 %v3172, 0.0
    %v3239 = vmax.f32 %v3173, 0.0
    %v3240 = vmax.f32 %v3174, 0.0
    %v3241 = vmax.f32 %v3175, 0.0
    %v3242 = vmax.f32 %v3176, 0.0
    %v3243 = vmax.f32 %v3177, 0.0
    %v3244 = vmax.f32 %v3178, 0.0
    %v3245 = vmax.f32 %v3179, 0.0
    %v3246 = vmax.f32 %v3180, 0.0
    %v3247 = vmax.f32 %v3181, 0.0
    %v3248 = vmax.f32 %v3182, 0.0
    %v3249 = vpack.c.bf16 %v3186, %v3183
    %v3250 = vpack.c.bf16 %v3187, %v3184
    %v3251 = vpack.c.bf16 %v3188, %v3185
    %v3252 = vpack.c.bf16 %v3192, %v3189
    %v3253 = vpack.c.bf16 %v3193, %v3190
    %v3254 = vpack.c.bf16 %v3194, %v3191
    %v3255 = vpack.c.bf16 %v3198, %v3195
    %v3256 = vpack.c.bf16 %v3199, %v3196
    %v3257 = vpack.c.bf16 %v3200, %v3197
    %v3258 = vpack.c.bf16 %v3204, %v3201
    %v3259 = vpack.c.bf16 %v3205, %v3202
    %v3260 = vpack.c.bf16 %v3206, %v3203
    %v3261 = vpack.c.bf16 %v3210, %v3207
    %v3262 = vpack.c.bf16 %v3211, %v3208
    %v3263 = vpack.c.bf16 %v3212, %v3209
    %v3264 = vpack.c.bf16 %v3216, %v3213
    %v3265 = vpack.c.bf16 %v3217, %v3214
    %v3266 = vpack.c.bf16 %v3218, %v3215
    %v3267 = vpack.c.bf16 %v3222, %v3219
    %v3268 = vpack.c.bf16 %v3223, %v3220
    %v3269 = vpack.c.bf16 %v3224, %v3221
    %v3270 = vpack.c.bf16 %v3228, %v3225
    %v3271 = vpack.c.bf16 %v3229, %v3226
    %v3272 = vpack.c.bf16 %v3230, %v3227
    %v3273 = vpack.c.bf16 %v3234, %v3231
    %v3274 = vpack.c.bf16 %v3235, %v3232
    %v3275 = vpack.c.bf16 %v3236, %v3233
    %v3276 = vpack.c.bf16 %v3240, %v3237
    %v3277 = vpack.c.bf16 %v3241, %v3238
    %v3278 = vpack.c.bf16 %v3242, %v3239
    %v3279 = vpack.c.bf16 %v3246, %v3243
    %v3280 = vpack.c.bf16 %v3247, %v3244
    %v3281 = vpack.c.bf16 %v3248, %v3245
    %3282 = vst [vmem:[#allocation3] sm:$0xff] %v3249
    %3283 = vst [vmem:[#allocation3 + $0x8] sm:$0xff] %v3250
    %3284 = vst [vmem:[#allocation3 + $0x10] sm:$0xff] %v3251
    %3285 = vst [vmem:[#allocation3 + $0x18] sm:$0xff] %v3252
    %3286 = vst [vmem:[#allocation3 + $0x20] sm:$0xff] %v3253
    %3287 = vst [vmem:[#allocation3 + $0x28] sm:$0xff] %v3254
    %3288 = vst [vmem:[#allocation3 + $0x30] sm:$0xff] %v3255
    %3289 = vst [vmem:[#allocation3 + $0x38] sm:$0xff] %v3256
    %3290 = vst [vmem:[#allocation3 + $0x40] sm:$0xff] %v3257
    %3291 = vst [vmem:[#allocation3 + $0x48] sm:$0xff] %v3258
    %3292 = vst [vmem:[#allocation3 + $0x50] sm:$0xff] %v3259
    %3293 = vst [vmem:[#allocation3 + $0x58] sm:$0xff] %v3260
    %3294 = vst [vmem:[#allocation3 + $0x60] sm:$0xff] %v3261
    %3295 = vst [vmem:[#allocation3 + $0x68] sm:$0xff] %v3262
    %3296 = vst [vmem:[#allocation3 + $0x70] sm:$0xff] %v3263
    %3297 = vst [vmem:[#allocation3 + $0x78] sm:$0xff] %v3264
    %3298 = vst [vmem:[#allocation3 + $0x80] sm:$0xff] %v3265
    %3299 = vst [vmem:[#allocation3 + $0x88] sm:$0xff] %v3266
    %3300 = vst [vmem:[#allocation3 + $0x90] sm:$0xff] %v3267
    %3301 = vst [vmem:[#allocation3 + $0x98] sm:$0xff] %v3268
    %3302 = vst [vmem:[#allocation3 + $0xa0] sm:$0xff] %v3269
    %3303 = vst [vmem:[#allocation3 + $0xa8] sm:$0xff] %v3270
    %3304 = vst [vmem:[#allocation3 + $0xb0] sm:$0xff] %v3271
    %3305 = vst [vmem:[#allocation3 + $0xb8] sm:$0xff] %v3272
    %3306 = vst [vmem:[#allocation3 + $0xc0] sm:$0xff] %v3273
    %3307 = vst [vmem:[#allocation3 + $0xc8] sm:$0xff] %v3274
    %3308 = vst [vmem:[#allocation3 + $0xd0] sm:$0xff] %v3275
    %3309 = vst [vmem:[#allocation3 + $0xd8] sm:$0xff] %v3276
    %3310 = vst [vmem:[#allocation3 + $0xe0] sm:$0xff] %v3277
    %3311 = vst [vmem:[#allocation3 + $0xe8] sm:$0xff] %v3278
    %3312 = vst [vmem:[#allocation3 + $0xf0] sm:$0xff] %v3279
    %3313 = vst [vmem:[#allocation3 + $0xf8] sm:$0xff] %v3280
    %3314 = vst [vmem:[#allocation3 + $0x100] sm:$0xff] %v3281
    %v3315 = vld [vmem:[#allocation3] sm:$0xff]
    %v3316 = vld [vmem:[#allocation3 + $0x8] sm:$0xff]
    %v3317 = vld [vmem:[#allocation3 + $0x10] sm:$0xff]
    %v3318 = vld [vmem:[#allocation3 + $0x18] sm:$0xff]
    %v3319 = vld [vmem:[#allocation3 + $0x20] sm:$0xff]
    %v3320 = vld [vmem:[#allocation3 + $0x28] sm:$0xff]
    %v3321 = vld [vmem:[#allocation3 + $0x30] sm:$0xff]
    %v3322 = vld [vmem:[#allocation3 + $0x38] sm:$0xff]
    %v3323 = vld [vmem:[#allocation3 + $0x40] sm:$0xff]
    %v3324 = vld [vmem:[#allocation3 + $0x48] sm:$0xff]
    %v3325 = vld [vmem:[#allocation3 + $0x50] sm:$0xff]
    %v3326 = vld [vmem:[#allocation3 + $0x58] sm:$0xff]
    %v3327 = vld [vmem:[#allocation3 + $0x60] sm:$0xff]
    %v3328 = vld [vmem:[#allocation3 + $0x68] sm:$0xff]
    %v3329 = vld [vmem:[#allocation3 + $0x70] sm:$0xff]
    %v3330 = vld [vmem:[#allocation3 + $0x78] sm:$0xff]
    %v3331 = vld [vmem:[#allocation3 + $0x80] sm:$0xff]
    %v3332 = vld [vmem:[#allocation3 + $0x88] sm:$0xff]
    %v3333 = vld [vmem:[#allocation3 + $0x90] sm:$0xff]
    %v3334 = vld [vmem:[#allocation3 + $0x98] sm:$0xff]
    %v3335 = vld [vmem:[#allocation3 + $0xa0] sm:$0xff]
    %v3336 = vld [vmem:[#allocation3 + $0xa8] sm:$0xff]
    %v3337 = vld [vmem:[#allocation3 + $0xb0] sm:$0xff]
    %v3338 = vld [vmem:[#allocation3 + $0xb8] sm:$0xff]
    %v3339 = vld [vmem:[#allocation3 + $0xc0] sm:$0xff]
    %v3340 = vld [vmem:[#allocation3 + $0xc8] sm:$0xff]
    %v3341 = vld [vmem:[#allocation3 + $0xd0] sm:$0xff]
    %v3342 = vld [vmem:[#allocation3 + $0xd8] sm:$0xff]
    %v3343 = vld [vmem:[#allocation3 + $0xe0] sm:$0xff]
    %v3344 = vld [vmem:[#allocation3 + $0xe8] sm:$0xff]
    %v3345 = vld [vmem:[#allocation3 + $0x18] sm:$0xff]
    %v3346 = vld [vmem:[#allocation3 + $0x20] sm:$0xff]
    %v3347 = vld [vmem:[#allocation3 + $0x28] sm:$0xff]
    %v3348 = vld [vmem:[#allocation3 + $0x30] sm:$0xff]
    %v3349 = vld [vmem:[#allocation3 + $0x38] sm:$0xff]
    %v3350 = vld [vmem:[#allocation3 + $0x40] sm:$0xff]
    %v3351 = vld [vmem:[#allocation3 + $0x48] sm:$0xff]
    %v3352 = vld [vmem:[#allocation3 + $0x50] sm:$0xff]
    %v3353 = vld [vmem:[#allocation3 + $0x58] sm:$0xff]
    %v3354 = vld [vmem:[#allocation3 + $0x60] sm:$0xff]
    %v3355 = vld [vmem:[#allocation3 + $0x68] sm:$0xff]
    %v3356 = vld [vmem:[#allocation3 + $0x70] sm:$0xff]
    %v3357 = vld [vmem:[#allocation3 + $0x78] sm:$0xff]
    %v3358 = vld [vmem:[#allocation3 + $0x80] sm:$0xff]
    %v3359 = vld [vmem:[#allocation3 + $0x88] sm:$0xff]
    %v3360 = vld [vmem:[#allocation3 + $0x90] sm:$0xff]
    %v3361 = vld [vmem:[#allocation3 + $0x98] sm:$0xff]
    %v3362 = vld [vmem:[#allocation3 + $0xa0] sm:$0xff]
    %v3363 = vld [vmem:[#allocation3 + $0xa8] sm:$0xff]
    %v3364 = vld [vmem:[#allocation3 + $0xb0] sm:$0xff]
    %v3365 = vld [vmem:[#allocation3 + $0xb8] sm:$0xff]
    %v3366 = vld [vmem:[#allocation3 + $0xc0] sm:$0xff]
    %v3367 = vld [vmem:[#allocation3 + $0xc8] sm:$0xff]
    %v3368 = vld [vmem:[#allocation3 + $0xd0] sm:$0xff]
    %v3369 = vld [vmem:[#allocation3 + $0xd8] sm:$0xff]
    %v3370 = vld [vmem:[#allocation3 + $0xe0] sm:$0xff]
    %v3371 = vld [vmem:[#allocation3 + $0xe8] sm:$0xff]
    %v3372 = vld [vmem:[#allocation3 + $0xf0] sm:$0xff]
    %v3373 = vld [vmem:[#allocation3 + $0xf8] sm:$0xff]
    %v3374 = vld [vmem:[#allocation3 + $0x100] sm:$0xff]
    %v3375 = vld [vmem:[#allocation13] sm:$0xff]
    %v3376 = vld [vmem:[#allocation13 + $0x8] sm:$0xf]
    %v3377 = vld [vmem:[#allocation13 + $0xc] sm:$0xff]
    %v3378 = vld [vmem:[#allocation13 + $0x14] sm:$0xf]
    %v3379 = vld [vmem:[#allocation13 + $0x18] sm:$0xff]
    %v3380 = vld [vmem:[#allocation13 + $0x20] sm:$0xf]
    %v3381 = vld [vmem:[#allocation13 + $0x24] sm:$0xff]
    %v3382 = vld [vmem:[#allocation13 + $0x2c] sm:$0xf]
    %v3383 = vld [vmem:[#allocation13 + $0x30] sm:$0xff]
    %v3384 = vld [vmem:[#allocation13 + $0x38] sm:$0xf]
    %v3385 = vld [vmem:[#allocation13 + $0x3c] sm:$0xff]
    %v3386 = vld [vmem:[#allocation13 + $0x44] sm:$0xf]
    %v3387 = vld [vmem:[#allocation13 + $0x48] sm:$0xff]
    %v3388 = vld [vmem:[#allocation13 + $0x50] sm:$0xf]
    %v3389 = vld [vmem:[#allocation13 + $0x54] sm:$0xff]
    %v3390 = vld [vmem:[#allocation13 + $0x5c] sm:$0xf]
    %v3391 = vld [vmem:[#allocation13 + $0x60] sm:$0xff]
    %v3392 = vld [vmem:[#allocation13 + $0x68] sm:$0xf]
    %v3393 = vld [vmem:[#allocation13 + $0x6c] sm:$0xff]
    %v3394 = vld [vmem:[#allocation13 + $0x74] sm:$0xf]
    %v3395 = vld [vmem:[#allocation13 + $0x78] sm:$0xff]
    %v3396 = vld [vmem:[#allocation13 + $0x80] sm:$0xf]
    %v3397 = vld [vmem:[#allocation13 + $0x84] sm:$0xff]
    %v3398 = vld [vmem:[#allocation13 + $0x8c] sm:$0xf]
    %v3399 = vld [vmem:[#allocation13 + $0x90] sm:$0xff]
    %v3400 = vld [vmem:[#allocation13 + $0x98] sm:$0xf]
    %v3401 = vld [vmem:[#allocation13 + $0x9c] sm:$0xff]
    %v3402 = vld [vmem:[#allocation13 + $0xa4] sm:$0xf]
    %v3403 = vld [vmem:[#allocation13 + $0xa8] sm:$0xff]
    %v3404 = vld [vmem:[#allocation13 + $0xb0] sm:$0xf]
    %v3405 = vld [vmem:[#allocation13 + $0xb4] sm:$0xff]
    %v3406 = vld [vmem:[#allocation13 + $0xbc] sm:$0xf]
    %v3407 = vld [vmem:[#allocation13 + $0xc0] sm:$0xff]
    %v3408 = vld [vmem:[#allocation13 + $0xc8] sm:$0xf]
    %v3409 = vld [vmem:[#allocation13 + $0xcc] sm:$0xff]
    %v3410 = vld [vmem:[#allocation13 + $0xd4] sm:$0xf]
    %v3411 = vld [vmem:[#allocation13 + $0xd8] sm:$0xff]
    %v3412 = vld [vmem:[#allocation13 + $0xe0] sm:$0xf]
    %v3413 = vld [vmem:[#allocation13 + $0xe4] sm:$0xff]
    %v3414 = vld [vmem:[#allocation13 + $0xec] sm:$0xf]
    %v3415 = vld [vmem:[#allocation13 + $0xf0] sm:$0xff]
    %v3416 = vld [vmem:[#allocation13 + $0xf8] sm:$0xf]
    %v3417 = vld [vmem:[#allocation13 + $0xfc] sm:$0xff]
    %v3418 = vld [vmem:[#allocation13 + $0x104] sm:$0xf]
    %v3419 = vld [vmem:[#allocation13 + $0x108] sm:$0xff]
    %v3420 = vld [vmem:[#allocation13 + $0x110] sm:$0xf]
    %v3421 = vld [vmem:[#allocation13 + $0x114] sm:$0xff]
    %v3422 = vld [vmem:[#allocation13 + $0x11c] sm:$0xf]
    %v3423 = vld [vmem:[#allocation13 + $0x120] sm:$0xff]
    %v3424 = vld [vmem:[#allocation13 + $0x128] sm:$0xf]
    %v3425 = vld [vmem:[#allocation13 + $0x12c] sm:$0xff]
    %v3426 = vld [vmem:[#allocation13 + $0x134] sm:$0xf]
    %v3427 = vld [vmem:[#allocation13 + $0x138] sm:$0xff]
    %v3428 = vld [vmem:[#allocation13 + $0x140] sm:$0xf]
    %v3429 = vld [vmem:[#allocation13 + $0x144] sm:$0xff]
    %v3430 = vld [vmem:[#allocation13 + $0x14c] sm:$0xf]
    %v3431 = vld [vmem:[#allocation13 + $0x150] sm:$0xff]
    %v3432 = vld [vmem:[#allocation13 + $0x158] sm:$0xf]
    %v3433 = vld [vmem:[#allocation13 + $0x15c] sm:$0xff]
    %v3434 = vld [vmem:[#allocation13 + $0x164] sm:$0xf]
    %v3435 = vld [vmem:[#allocation13 + $0x168] sm:$0xff]
    %v3436 = vld [vmem:[#allocation13 + $0x170] sm:$0xf]
    %v3437 = vld [vmem:[#allocation13 + $0x174] sm:$0xff]
    %v3438 = vld [vmem:[#allocation13 + $0x17c] sm:$0xf]
    %v3439 = vld [vmem:[#allocation13 + $0x180] sm:$0xff]
    %v3440 = vld [vmem:[#allocation13 + $0x188] sm:$0xf]
    %v3441 = vld [vmem:[#allocation13 + $0x18c] sm:$0xff]
    %v3442 = vld [vmem:[#allocation13 + $0x194] sm:$0xf]
    %v3443 = vld [vmem:[#allocation13 + $0x198] sm:$0xff]
    %v3444 = vld [vmem:[#allocation13 + $0x1a0] sm:$0xf]
    %v3445 = vld [vmem:[#allocation13 + $0x1a4] sm:$0xff]
    %v3446 = vld [vmem:[#allocation13 + $0x1ac] sm:$0xf]
    %v3447 = vld [vmem:[#allocation13 + $0x1b0] sm:$0xff]
    %v3448 = vld [vmem:[#allocation13 + $0x1b8] sm:$0xf]
    %v3449 = vld [vmem:[#allocation13 + $0x1bc] sm:$0xff]
    %v3450 = vld [vmem:[#allocation13 + $0x1c4] sm:$0xf]
    %v3451 = vld [vmem:[#allocation13 + $0x1c8] sm:$0xff]
    %v3452 = vld [vmem:[#allocation13 + $0x1d0] sm:$0xf]
    %v3453 = vld [vmem:[#allocation13 + $0x1d4] sm:$0xff]
    %v3454 = vld [vmem:[#allocation13 + $0x1dc] sm:$0xf]
    %v3455 = vld [vmem:[#allocation13 + $0x1e0] sm:$0xff]
    %v3456 = vld [vmem:[#allocation13 + $0x1e8] sm:$0xf]
    %v3457 = vld [vmem:[#allocation13 + $0x1ec] sm:$0xff]
    %v3458 = vld [vmem:[#allocation13 + $0x1f4] sm:$0xf]
    %v3459 = vld [vmem:[#allocation13 + $0x1f8] sm:$0xff]
    %v3460 = vld [vmem:[#allocation13 + $0x200] sm:$0xf]
    %v3461 = vld [vmem:[#allocation13 + $0x204] sm:$0xff]
    %v3462 = vld [vmem:[#allocation13 + $0x20c] sm:$0xf]
    %v3463 = vld [vmem:[#allocation13 + $0x210] sm:$0xff]
    %v3464 = vld [vmem:[#allocation13 + $0x218] sm:$0xf]
    %v3465 = vld [vmem:[#allocation13 + $0x21c] sm:$0xff]
    %v3466 = vld [vmem:[#allocation13 + $0x224] sm:$0xf]
    %v3467 = vld [vmem:[#allocation13 + $0x228] sm:$0xff]
    %v3468 = vld [vmem:[#allocation13 + $0x230] sm:$0xf]
    %v3469 = vld [vmem:[#allocation13 + $0x234] sm:$0xff]
    %v3470 = vld [vmem:[#allocation13 + $0x23c] sm:$0xf]
    %s3471 = scalar_lea.vmem [#allocation13], 576
    %v3472 = vld [vmem:[%s3471] sm:$0xff]
    %v3473 = vld [vmem:[%s3471 + $0x8] sm:$0xf]
    %v3474 = vld [vmem:[%s3471 + $0xc] sm:$0xff]
    %v3475 = vld [vmem:[%s3471 + $0x14] sm:$0xf]
    %v3476 = vld [vmem:[%s3471 + $0x18] sm:$0xff]
    %v3477 = vld [vmem:[%s3471 + $0x20] sm:$0xf]
    %v3478 = vld [vmem:[%s3471 + $0x24] sm:$0xff]
    %v3479 = vld [vmem:[%s3471 + $0x2c] sm:$0xf]
    %v3480 = vld [vmem:[%s3471 + $0x30] sm:$0xff]
    %v3481 = vld [vmem:[%s3471 + $0x38] sm:$0xf]
    %v3482 = vld [vmem:[%s3471 + $0x3c] sm:$0xff]
    %v3483 = vld [vmem:[%s3471 + $0x44] sm:$0xf]
    %v3484 = vld [vmem:[%s3471 + $0x48] sm:$0xff]
    %v3485 = vld [vmem:[%s3471 + $0x50] sm:$0xf]
    %v3486 = vld [vmem:[%s3471 + $0x54] sm:$0xff]
    %v3487 = vld [vmem:[%s3471 + $0x5c] sm:$0xf]
    %v3488 = vld [vmem:[%s3471 + $0x60] sm:$0xff]
    %v3489 = vld [vmem:[%s3471 + $0x68] sm:$0xf]
    %v3490 = vld [vmem:[%s3471 + $0x6c] sm:$0xff]
    %v3491 = vld [vmem:[%s3471 + $0x74] sm:$0xf]
    %v3492 = vld [vmem:[%s3471 + $0x78] sm:$0xff]
    %v3493 = vld [vmem:[%s3471 + $0x80] sm:$0xf]
    %v3494 = vld [vmem:[%s3471 + $0x84] sm:$0xff]
    %v3495 = vld [vmem:[%s3471 + $0x8c] sm:$0xf]
    %v3496 = vld [vmem:[%s3471 + $0x90] sm:$0xff]
    %v3497 = vld [vmem:[%s3471 + $0x98] sm:$0xf]
    %v3498 = vld [vmem:[%s3471 + $0x9c] sm:$0xff]
    %v3499 = vld [vmem:[%s3471 + $0xa4] sm:$0xf]
    %v3500 = vld [vmem:[%s3471 + $0xa8] sm:$0xff]
    %v3501 = vld [vmem:[%s3471 + $0xb0] sm:$0xf]
    %v3502 = vld [vmem:[%s3471 + $0xb4] sm:$0xff]
    %v3503 = vld [vmem:[%s3471 + $0xbc] sm:$0xf]
    %v3504 = vld [vmem:[%s3471 + $0xc0] sm:$0xff]
    %v3505 = vld [vmem:[%s3471 + $0xc8] sm:$0xf]
    %v3506 = vld [vmem:[%s3471 + $0xcc] sm:$0xff]
    %v3507 = vld [vmem:[%s3471 + $0xd4] sm:$0xf]
    %v3508 = vld [vmem:[%s3471 + $0xd8] sm:$0xff]
    %v3509 = vld [vmem:[%s3471 + $0xe0] sm:$0xf]
    %v3510 = vld [vmem:[%s3471 + $0xe4] sm:$0xff]
    %v3511 = vld [vmem:[%s3471 + $0xec] sm:$0xf]
    %v3512 = vld [vmem:[%s3471 + $0xf0] sm:$0xff]
    %v3513 = vld [vmem:[%s3471 + $0xf8] sm:$0xf]
    %v3514 = vld [vmem:[%s3471 + $0xfc] sm:$0xff]
    %v3515 = vld [vmem:[%s3471 + $0x104] sm:$0xf]
    %v3516 = vld [vmem:[%s3471 + $0x108] sm:$0xff]
    %v3517 = vld [vmem:[%s3471 + $0x110] sm:$0xf]
    %v3518 = vld [vmem:[%s3471 + $0x114] sm:$0xff]
    %v3519 = vld [vmem:[%s3471 + $0x11c] sm:$0xf]
    %v3520 = vld [vmem:[%s3471 + $0x120] sm:$0xff]
    %v3521 = vld [vmem:[%s3471 + $0x128] sm:$0xf]
    %v3522 = vld [vmem:[%s3471 + $0x12c] sm:$0xff]
    %v3523 = vld [vmem:[%s3471 + $0x134] sm:$0xf]
    %v3524 = vld [vmem:[%s3471 + $0x138] sm:$0xff]
    %v3525 = vld [vmem:[%s3471 + $0x140] sm:$0xf]
    %v3526 = vld [vmem:[%s3471 + $0x144] sm:$0xff]
    %v3527 = vld [vmem:[%s3471 + $0x14c] sm:$0xf]
    %v3528 = vld [vmem:[%s3471 + $0x150] sm:$0xff]
    %v3529 = vld [vmem:[%s3471 + $0x158] sm:$0xf]
    %v3530 = vld [vmem:[%s3471 + $0x15c] sm:$0xff]
    %v3531 = vld [vmem:[%s3471 + $0x164] sm:$0xf]
    %v3532 = vld [vmem:[%s3471 + $0x168] sm:$0xff]
    %v3533 = vld [vmem:[%s3471 + $0x170] sm:$0xf]
    %v3534 = vld [vmem:[%s3471 + $0x174] sm:$0xff]
    %v3535 = vld [vmem:[%s3471 + $0x17c] sm:$0xf]
    %v3536 = vld [vmem:[%s3471 + $0x180] sm:$0xff]
    %v3537 = vld [vmem:[%s3471 + $0x188] sm:$0xf]
    %v3538 = vld [vmem:[%s3471 + $0x18c] sm:$0xff]
    %v3539 = vld [vmem:[%s3471 + $0x194] sm:$0xf]
    %v3540 = vld [vmem:[%s3471 + $0x198] sm:$0xff]
    %v3541 = vld [vmem:[%s3471 + $0x1a0] sm:$0xf]
    %v3542 = vld [vmem:[%s3471 + $0x1a4] sm:$0xff]
    %v3543 = vld [vmem:[%s3471 + $0x1ac] sm:$0xf]
    %v3544 = vld [vmem:[%s3471 + $0x1b0] sm:$0xff]
    %v3545 = vld [vmem:[%s3471 + $0x1b8] sm:$0xf]
    %v3546 = vld [vmem:[%s3471 + $0x1bc] sm:$0xff]
    %v3547 = vld [vmem:[%s3471 + $0x1c4] sm:$0xf]
    %v3548 = vld [vmem:[%s3471 + $0x1c8] sm:$0xff]
    %v3549 = vld [vmem:[%s3471 + $0x1d0] sm:$0xf]
    %v3550 = vld [vmem:[%s3471 + $0x1d4] sm:$0xff]
    %v3551 = vld [vmem:[%s3471 + $0x1dc] sm:$0xf]
    %v3552 = vld [vmem:[%s3471 + $0x1e0] sm:$0xff]
    %v3553 = vld [vmem:[%s3471 + $0x1e8] sm:$0xf]
    %v3554 = vld [vmem:[%s3471 + $0x1ec] sm:$0xff]
    %v3555 = vld [vmem:[%s3471 + $0x1f4] sm:$0xf]
    %v3556 = vld [vmem:[%s3471 + $0x1f8] sm:$0xff]
    %v3557 = vld [vmem:[%s3471 + $0x200] sm:$0xf]
    %v3558 = vld [vmem:[%s3471 + $0x204] sm:$0xff]
    %v3559 = vld [vmem:[%s3471 + $0x20c] sm:$0xf]
    %v3560 = vld [vmem:[%s3471 + $0x210] sm:$0xff]
    %v3561 = vld [vmem:[%s3471 + $0x218] sm:$0xf]
    %v3562 = vld [vmem:[%s3471 + $0x21c] sm:$0xff]
    %v3563 = vld [vmem:[%s3471 + $0x224] sm:$0xf]
    %v3564 = vld [vmem:[%s3471 + $0x228] sm:$0xff]
    %v3565 = vld [vmem:[%s3471 + $0x230] sm:$0xf]
    %v3566 = vld [vmem:[%s3471 + $0x234] sm:$0xff]
    %v3567 = vld [vmem:[%s3471 + $0x23c] sm:$0xf]
    %v3664 = vunpack.c.l.b16 %v3472
    %v3665 = vunpack.c.h.b16 %v3472
    %v3666 = vunpack.c.l.b16 %v3473
    %v3667 = vunpack.c.l.b16 %v3474
    %v3668 = vunpack.c.h.b16 %v3474
    %v3669 = vunpack.c.l.b16 %v3475
    %v3670 = vunpack.c.l.b16 %v3476
    %v3671 = vunpack.c.h.b16 %v3476
    %v3672 = vunpack.c.l.b16 %v3477
    %v3673 = vunpack.c.l.b16 %v3478
    %v3674 = vunpack.c.h.b16 %v3478
    %v3675 = vunpack.c.l.b16 %v3479
    %v3676 = vunpack.c.l.b16 %v3480
    %v3677 = vunpack.c.h.b16 %v3480
    %v3678 = vunpack.c.l.b16 %v3481
    %v3679 = vunpack.c.l.b16 %v3482
    %v3680 = vunpack.c.h.b16 %v3482
    %v3681 = vunpack.c.l.b16 %v3483
    %v3682 = vunpack.c.l.b16 %v3484
    %v3683 = vunpack.c.h.b16 %v3484
    %v3684 = vunpack.c.l.b16 %v3485
    %v3685 = vunpack.c.l.b16 %v3486
    %v3686 = vunpack.c.h.b16 %v3486
    %v3687 = vunpack.c.l.b16 %v3487
    %v3688 = vunpack.c.l.b16 %v3488
    %v3689 = vunpack.c.h.b16 %v3488
    %v3690 = vunpack.c.l.b16 %v3489
    %v3691 = vunpack.c.l.b16 %v3490
    %v3692 = vunpack.c.h.b16 %v3490
    %v3693 = vunpack.c.l.b16 %v3491
    %v3694 = vunpack.c.l.b16 %v3492
    %v3695 = vunpack.c.h.b16 %v3492
    %v3696 = vunpack.c.l.b16 %v3493
    %v3697 = vunpack.c.l.b16 %v3494
    %v3698 = vunpack.c.h.b16 %v3494
    %v3699 = vunpack.c.l.b16 %v3495
    %v3700 = vunpack.c.l.b16 %v3496
    %v3701 = vunpack.c.h.b16 %v3496
    %v3702 = vunpack.c.l.b16 %v3497
    %v3703 = vunpack.c.l.b16 %v3498
    %v3704 = vunpack.c.h.b16 %v3498
    %v3705 = vunpack.c.l.b16 %v3499
    %v3706 = vunpack.c.l.b16 %v3500
    %v3707 = vunpack.c.h.b16 %v3500
    %v3708 = vunpack.c.l.b16 %v3501
    %v3709 = vunpack.c.l.b16 %v3502
    %v3710 = vunpack.c.h.b16 %v3502
    %v3711 = vunpack.c.l.b16 %v3503
    %v3712 = vunpack.c.l.b16 %v3504
    %v3713 = vunpack.c.h.b16 %v3504
    %v3714 = vunpack.c.l.b16 %v3505
    %v3715 = vunpack.c.l.b16 %v3506
    %v3716 = vunpack.c.h.b16 %v3506
    %v3717 = vunpack.c.l.b16 %v3507
    %v3718 = vunpack.c.l.b16 %v3508
    %v3719 = vunpack.c.h.b16 %v3508
    %v3720 = vunpack.c.l.b16 %v3509
    %v3721 = vunpack.c.l.b16 %v3510
    %v3722 = vunpack.c.h.b16 %v3510
    %v3723 = vunpack.c.l.b16 %v3511
    %v3724 = vunpack.c.l.b16 %v3512
    %v3725 = vunpack.c.h.b16 %v3512
    %v3726 = vunpack.c.l.b16 %v3513
    %v3727 = vunpack.c.l.b16 %v3514
    %v3728 = vunpack.c.h.b16 %v3514
    %v3729 = vunpack.c.l.b16 %v3515
    %v3730 = vunpack.c.l.b16 %v3516
    %v3731 = vunpack.c.h.b16 %v3516
    %v3732 = vunpack.c.l.b16 %v3517
    %v3733 = vunpack.c.l.b16 %v3518
    %v3734 = vunpack.c.h.b16 %v3518
    %v3735 = vunpack.c.l.b16 %v3519
    %v3736 = vunpack.c.l.b16 %v3520
    %v3737 = vunpack.c.h.b16 %v3520
    %v3738 = vunpack.c.l.b16 %v3521
    %v3739 = vunpack.c.l.b16 %v3522
    %v3740 = vunpack.c.h.b16 %v3522
    %v3741 = vunpack.c.l.b16 %v3523
    %v3742 = vunpack.c.l.b16 %v3524
    %v3743 = vunpack.c.h.b16 %v3524
    %v3744 = vunpack.c.l.b16 %v3525
    %v3745 = vunpack.c.l.b16 %v3526
    %v3746 = vunpack.c.h.b16 %v3526
    %v3747 = vunpack.c.l.b16 %v3527
    %v3748 = vunpack.c.l.b16 %v3528
    %v3749 = vunpack.c.h.b16 %v3528
    %v3750 = vunpack.c.l.b16 %v3529
    %v3751 = vunpack.c.l.b16 %v3530
    %v3752 = vunpack.c.h.b16 %v3530
    %v3753 = vunpack.c.l.b16 %v3531
    %v3754 = vunpack.c.l.b16 %v3532
    %v3755 = vunpack.c.h.b16 %v3532
    %v3756 = vunpack.c.l.b16 %v3533
    %v3757 = vunpack.c.l.b16 %v3534
    %v3758 = vunpack.c.h.b16 %v3534
    %v3759 = vunpack.c.l.b16 %v3535
    %v3760 = vunpack.c.l.b16 %v3536
    %v3761 = vunpack.c.h.b16 %v3536
    %v3762 = vunpack.c.l.b16 %v3537
    %v3763 = vunpack.c.l.b16 %v3538
    %v3764 = vunpack.c.h.b16 %v3538
    %v3765 = vunpack.c.l.b16 %v3539
    %v3766 = vunpack.c.l.b16 %v3540
    %v3767 = vunpack.c.h.b16 %v3540
    %v3768 = vunpack.c.l.b16 %v3541
    %v3769 = vunpack.c.l.b16 %v3542
    %v3770 = vunpack.c.h.b16 %v3542
    %v3771 = vunpack.c.l.b16 %v3543
    %v3772 = vunpack.c.l.b16 %v3544
    %v3773 = vunpack.c.h.b16 %v3544
    %v3774 = vunpack.c.l.b16 %v3545
    %v3775 = vunpack.c.l.b16 %v3546
    %v3776 = vunpack.c.h.b16 %v3546
    %v3777 = vunpack.c.l.b16 %v3547
    %v3778 = vunpack.c.l.b16 %v3548
    %v3779 = vunpack.c.h.b16 %v3548
    %v3780 = vunpack.c.l.b16 %v3549
    %v3781 = vunpack.c.l.b16 %v3550
    %v3782 = vunpack.c.h.b16 %v3550
    %v3783 = vunpack.c.l.b16 %v3551
    %v3784 = vunpack.c.l.b16 %v3552
    %v3785 = vunpack.c.h.b16 %v3552
    %v3786 = vunpack.c.l.b16 %v3553
    %v3787 = vunpack.c.l.b16 %v3554
    %v3788 = vunpack.c.h.b16 %v3554
    %v3789 = vunpack.c.l.b16 %v3555
    %v3790 = vunpack.c.l.b16 %v3556
    %v3791 = vunpack.c.h.b16 %v3556
    %v3792 = vunpack.c.l.b16 %v3557
    %v3793 = vunpack.c.l.b16 %v3558
    %v3794 = vunpack.c.h.b16 %v3558
    %v3795 = vunpack.c.l.b16 %v3559
    %v3796 = vunpack.c.l.b16 %v3560
    %v3797 = vunpack.c.h.b16 %v3560
    %v3798 = vunpack.c.l.b16 %v3561
    %v3799 = vunpack.c.l.b16 %v3562
    %v3800 = vunpack.c.h.b16 %v3562
    %v3801 = vunpack.c.l.b16 %v3563
    %v3802 = vunpack.c.l.b16 %v3564
    %v3803 = vunpack.c.h.b16 %v3564
    %v3804 = vunpack.c.l.b16 %v3565
    %v3805 = vunpack.c.l.b16 %v3566
    %v3806 = vunpack.c.h.b16 %v3566
    %v3807 = vunpack.c.l.b16 %v3567
    %v3808 = vpack.c.b16 %v3667, %v3664
    %v3809 = vpack.c.b16 %v3668, %v3665
    %v3810 = vpack.c.b16 %v3669, %v3666
    %v3811 = vpack.c.b16 %v3673, %v3670
    %v3812 = vpack.c.b16 %v3674, %v3671
    %v3813 = vpack.c.b16 %v3675, %v3672
    %v3814 = vpack.c.b16 %v3679, %v3676
    %v3815 = vpack.c.b16 %v3680, %v3677
    %v3816 = vpack.c.b16 %v3681, %v3678
    %v3817 = vpack.c.b16 %v3685, %v3682
    %v3818 = vpack.c.b16 %v3686, %v3683
    %v3819 = vpack.c.b16 %v3687, %v3684
    %v3820 = vpack.c.b16 %v3691, %v3688
    %v3821 = vpack.c.b16 %v3692, %v3689
    %v3822 = vpack.c.b16 %v3693, %v3690
    %v3823 = vpack.c.b16 %v3697, %v3694
    %v3824 = vpack.c.b16 %v3698, %v3695
    %v3825 = vpack.c.b16 %v3699, %v3696
    %v3826 = vpack.c.b16 %v3703, %v3700
    %v3827 = vpack.c.b16 %v3704, %v3701
    %v3828 = vpack.c.b16 %v3705, %v3702
    %v3829 = vpack.c.b16 %v3709, %v3706
    %v3830 = vpack.c.b16 %v3710, %v3707
    %v3831 = vpack.c.b16 %v3711, %v3708
    %v3832 = vpack.c.b16 %v3715, %v3712
    %v3833 = vpack.c.b16 %v3716, %v3713
    %v3834 = vpack.c.b16 %v3717, %v3714
    %v3835 = vpack.c.b16 %v3721, %v3718
    %v3836 = vpack.c.b16 %v3722, %v3719
    %v3837 = vpack.c.b16 %v3723, %v3720
    %v3838 = vpack.c.b16 %v3727, %v3724
    %v3839 = vpack.c.b16 %v3728, %v3725
    %v3840 = vpack.c.b16 %v3729, %v3726
    %v3841 = vpack.c.b16 %v3733, %v3730
    %v3842 = vpack.c.b16 %v3734, %v3731
    %v3843 = vpack.c.b16 %v3735, %v3732
    %v3844 = vpack.c.b16 %v3739, %v3736
    %v3845 = vpack.c.b16 %v3740, %v3737
    %v3846 = vpack.c.b16 %v3741, %v3738
    %v3847 = vpack.c.b16 %v3745, %v3742
    %v3848 = vpack.c.b16 %v3746, %v3743
    %v3849 = vpack.c.b16 %v3747, %v3744
    %v3850 = vpack.c.b16 %v3751, %v3748
    %v3851 = vpack.c.b16 %v3752, %v3749
    %v3852 = vpack.c.b16 %v3753, %v3750
    %v3853 = vpack.c.b16 %v3757, %v3754
    %v3854 = vpack.c.b16 %v3758, %v3755
    %v3855 = vpack.c.b16 %v3759, %v3756
    %v3856 = vpack.c.b16 %v3763, %v3760
    %v3857 = vpack.c.b16 %v3764, %v3761
    %v3858 = vpack.c.b16 %v3765, %v3762
    %v3859 = vpack.c.b16 %v3769, %v3766
    %v3860 = vpack.c.b16 %v3770, %v3767
    %v3861 = vpack.c.b16 %v3771, %v3768
    %v3862 = vpack.c.b16 %v3775, %v3772
    %v3863 = vpack.c.b16 %v3776, %v3773
    %v3864 = vpack.c.b16 %v3777, %v3774
    %v3865 = vpack.c.b16 %v3781, %v3778
    %v3866 = vpack.c.b16 %v3782, %v3779
    %v3867 = vpack.c.b16 %v3783, %v3780
    %v3868 = vpack.c.b16 %v3787, %v3784
    %v3869 = vpack.c.b16 %v3788, %v3785
    %v3870 = vpack.c.b16 %v3789, %v3786
    %v3871 = vpack.c.b16 %v3793, %v3790
    %v3872 = vpack.c.b16 %v3794, %v3791
    %v3873 = vpack.c.b16 %v3795, %v3792
    %v3874 = vpack.c.b16 %v3799, %v3796
    %v3875 = vpack.c.b16 %v3800, %v3797
    %v3876 = vpack.c.b16 %v3801, %v3798
    %v3877 = vpack.c.b16 %v3805, %v3802
    %v3878 = vpack.c.b16 %v3806, %v3803
    %v3879 = vpack.c.b16 %v3807, %v3804
    %3952 = vmatprep.subr.bf16.mxu0 %v3809
    %3953 = vmatpush1.bf16.msra.mxu0 %v3808
    %3954 = vmatprep.subr.bf16.mxu0 %v3812
    %3955 = vmatpush1.bf16.msra.mxu0 %v3811
    %3956 = vmatprep.subr.bf16.mxu0 %v3815
    %3957 = vmatpush1.bf16.msra.mxu0 %v3814
    %3958 = vmatprep.subr.bf16.mxu0 %v3818
    %3959 = vmatpush1.bf16.msra.mxu0 %v3817
    %3960 = vmatprep.subr.bf16.mxu0 %v3821
    %3961 = vmatpush1.bf16.msra.mxu0 %v3820
    %3962 = vmatprep.subr.bf16.mxu0 %v3824
    %3963 = vmatpush1.bf16.msra.mxu0 %v3823
    %3964 = vmatprep.subr.bf16.mxu0 %v3827
    %3965 = vmatpush1.bf16.msra.mxu0 %v3826
    %3966 = vmatprep.subr.bf16.mxu0 %v3830
    %3967 = vmatpush1.bf16.msra.mxu0 %v3829
    %3968 = vmatprep.subr.bf16.mxu0 %v3833
    %3969 = vmatpush1.bf16.msra.mxu0 %v3832
    %3970 = vmatprep.subr.bf16.mxu0 %v3836
    %3971 = vmatpush1.bf16.msra.mxu0 %v3835
    %3972 = vmatprep.subr.bf16.mxu0 %v3839
    %3973 = vmatpush1.bf16.msra.mxu0 %v3838
    %3974 = vmatprep.subr.bf16.mxu0 %v3842
    %3975 = vmatpush1.bf16.msra.mxu0 %v3841
    %3976 = vmatprep.subr.bf16.mxu0 %v3845
    %3977 = vmatpush1.bf16.msra.mxu0 %v3844
    %3978 = vmatprep.subr.bf16.mxu0 %v3848
    %3979 = vmatpush1.bf16.msra.mxu0 %v3847
    %3980 = vmatprep.subr.bf16.mxu0 %v3851
    %3981 = vmatpush1.bf16.msra.mxu0 %v3850
    %3982 = vmatprep.subr.bf16.mxu0 %v3854
    %3983 = vmatpush1.bf16.msra.mxu0 %v3853
    %3984 = vmatprep.mubr.bf16.mxu0 %v3346
    %3985 = vmatmul.mubr.bf16.gmra.mrb[0].mxu0 %v3345
    %v3986 = vpop.f32.mrb[0].mxu0
    %v3987 = vadd.f32 0.0, %v3986
    %v3988 = vpop.f32.mrb[0].mxu0
    %v3989 = vadd.f32 0.0, %v3988
    %v3990 = vpop.f32.mrb[0].mxu0
    %v3991 = vadd.f32 0.0, %v3990
    %v3992 = vpop.f32.mrb[0].mxu0
    %v3993 = vadd.f32 0.0, %v3992
    %3994 = vmatprep.mubr.bf16.mxu0 %v3349
    %3995 = vmatmul.mubr.bf16.gmra.mrb[0].mxu0 %v3348
    %v3996 = vpop.f32.mrb[0].mxu0
    %v3997 = vadd.f32 0.0, %v3996
    %v3998 = vpop.f32.mrb[0].mxu0
    %v3999 = vadd.f32 0.0, %v3998
    %v4000 = vpop.f32.mrb[0].mxu0
    %v4001 = vadd.f32 0.0, %v4000
    %v4002 = vpop.f32.mrb[0].mxu0
    %v4003 = vadd.f32 0.0, %v4002
    %4004 = vmatprep.mubr.bf16.mxu0 %v3352
    %4005 = vmatmul.mubr.bf16.gmra.mrb[0].mxu0 %v3351
    %v4006 = vpop.f32.mrb[0].mxu0
    %v4007 = vadd.f32 0.0, %v4006
    %v4008 = vpop.f32.mrb[0].mxu0
    %v4009 = vadd.f32 0.0, %v4008
    %v4010 = vpop.f32.mrb[0].mxu0
    %v4011 = vadd.f32 0.0, %v4010
    %v4012 = vpop.f32.mrb[0].mxu0
    %v4013 = vadd.f32 0.0, %v4012
    %4014 = vmatprep.mubr.bf16.mxu0 %v3355
    %4015 = vmatmul.mubr.bf16.gmra.mrb[0].mxu0 %v3354
    %v4016 = vpop.f32.mrb[0].mxu0
    %v4017 = vadd.f32 0.0, %v4016
    %v4018 = vpop.f32.mrb[0].mxu0
    %v4019 = vadd.f32 0.0, %v4018
    %v4020 = vpop.f32.mrb[0].mxu0
    %v4021 = vadd.f32 0.0, %v4020
    %v4022 = vpop.f32.mrb[0].mxu0
    %v4023 = vadd.f32 0.0, %v4022
    %4024 = vmatprep.mubr.bf16.mxu0 %v3358
    %4025 = vmatmul.mubr.bf16.gmra.mrb[0].mxu0 %v3357
    %v4026 = vpop.f32.mrb[0].mxu0
    %v4027 = vadd.f32 0.0, %v4026
    %v4028 = vpop.f32.mrb[0].mxu0
    %v4029 = vadd.f32 0.0, %v4028
    %v4030 = vpop.f32.mrb[0].mxu0
    %v4031 = vadd.f32 0.0, %v4030
    %v4032 = vpop.f32.mrb[0].mxu0
    %v4033 = vadd.f32 0.0, %v4032
    %4034 = vmatprep.mubr.bf16.mxu0 %v3361
    %4035 = vmatmul.mubr.bf16.gmra.mrb[0].mxu0 %v3360
    %v4036 = vpop.f32.mrb[0].mxu0
    %v4037 = vadd.f32 0.0, %v4036
    %v4038 = vpop.f32.mrb[0].mxu0
    %v4039 = vadd.f32 0.0, %v4038
    %v4040 = vpop.f32.mrb[0].mxu0
    %v4041 = vadd.f32 0.0, %v4040
    %v4042 = vpop.f32.mrb[0].mxu0
    %v4043 = vadd.f32 0.0, %v4042
    %4044 = vmatprep.mubr.bf16.mxu0 %v3364
    %4045 = vmatmul.mubr.bf16.gmra.mrb[0].mxu0 %v3363
    %v4046 = vpop.f32.mrb[0].mxu0
    %v4047 = vadd.f32 0.0, %v4046
    %v4048 = vpop.f32.mrb[0].mxu0
    %v4049 = vadd.f32 0.0, %v4048
    %v4050 = vpop.f32.mrb[0].mxu0
    %v4051 = vadd.f32 0.0, %v4050
    %v4052 = vpop.f32.mrb[0].mxu0
    %v4053 = vadd.f32 0.0, %v4052
    %4054 = vmatprep.mubr.bf16.mxu0 %v3367
    %4055 = vmatmul.mubr.bf16.gmra.mrb[0].mxu0 %v3366
    %v4056 = vpop.f32.mrb[0].mxu0
    %v4057 = vadd.f32 0.0, %v4056
    %v4058 = vpop.f32.mrb[0].mxu0
    %v4059 = vadd.f32 0.0, %v4058
    %v4060 = vpop.f32.mrb[0].mxu0
    %v4061 = vadd.f32 0.0, %v4060
    %v4062 = vpop.f32.mrb[0].mxu0
    %v4063 = vadd.f32 0.0, %v4062
    %4064 = vmatprep.mubr.bf16.mxu0 %v3370
    %4065 = vmatmul.mubr.bf16.gmra.mrb[0].mxu0 %v3369
    %v4066 = vpop.f32.mrb[0].mxu0
    %v4067 = vadd.f32 0.0, %v4066
    %v4068 = vpop.f32.mrb[0].mxu0
    %v4069 = vadd.f32 0.0, %v4068
    %v4070 = vpop.f32.mrb[0].mxu0
    %v4071 = vadd.f32 0.0, %v4070
    %v4072 = vpop.f32.mrb[0].mxu0
    %v4073 = vadd.f32 0.0, %v4072
    %4074 = vmatprep.mubr.bf16.mxu0 %v3373
    %4075 = vmatmul.mubr.bf16.gmra.mrb[0].mxu0 %v3372
    %v4076 = vpop.f32.mrb[0].mxu0
    %v4077 = vadd.f32 0.0, %v4076
    %v4078 = vpop.f32.mrb[0].mxu0
    %v4079 = vadd.f32 0.0, %v4078
    %v4080 = vpop.f32.mrb[0].mxu0
    %v4081 = vadd.f32 0.0, %v4080
    %v4082 = vpop.f32.mrb[0].mxu0
    %v4083 = vadd.f32 0.0, %v4082
    %4084 = vdwg.mxu0
    %4085 = vmatprep.subr.bf16.mxu0 %v3857
    %4086 = vmatpush1.bf16.msra.mxu0 %v3856
    %4087 = vmatprep.subr.bf16.mxu0 %v3860
    %4088 = vmatpush1.bf16.msra.mxu0 %v3859
    %4089 = vmatprep.subr.bf16.mxu0 %v3863
    %4090 = vmatpush1.bf16.msra.mxu0 %v3862
    %4091 = vmatprep.subr.bf16.mxu0 %v3866
    %4092 = vmatpush1.bf16.msra.mxu0 %v3865
    %4093 = vmatprep.subr.bf16.mxu0 %v3869
    %4094 = vmatpush1.bf16.msra.mxu0 %v3868
    %4095 = vmatprep.subr.bf16.mxu0 %v3872
    %4096 = vmatpush1.bf16.msra.mxu0 %v3871
    %4097 = vmatprep.subr.bf16.mxu0 %v3875
    %4098 = vmatpush1.bf16.msra.mxu0 %v3874
    %4099 = vmatprep.subr.bf16.mxu0 %v3878
    %4100 = vmatpush1.bf16.msra.mxu0 %v3877
    %4101 = vmatprep.subr.bf16.mxu0 0
    %4102 = vmatpush1.bf16.msra.mxu0 0
    %4103 = vmatprep.subr.bf16.mxu0 0
    %4104 = vmatpush1.bf16.msra.mxu0 0
    %4105 = vmatprep.subr.bf16.mxu0 0
    %4106 = vmatpush1.bf16.msra.mxu0 0
    %4107 = vmatprep.subr.bf16.mxu0 0
    %4108 = vmatpush1.bf16.msra.mxu0 0
    %4109 = vmatprep.subr.bf16.mxu0 0
    %4110 = vmatpush1.bf16.msra.mxu0 0
    %4111 = vmatprep.subr.bf16.mxu0 0
    %4112 = vmatpush1.bf16.msra.mxu0 0
    %4113 = vmatprep.subr.bf16.mxu0 0
    %4114 = vmatpush1.bf16.msra.mxu0 0
    %4115 = vmatprep.subr.bf16.mxu0 0
    %4116 = vmatpush1.bf16.msra.mxu0 0
    %4117 = vmatprep.mubr.bf16.mxu0 0
    %4118 = vmatmul.mubr.bf16.gmra.mrb[0].mxu0 %v3347
    %v4119 = vpop.f32.mrb[0].mxu0
    %v4120 = vadd.f32 %v3987, %v4119
    %v4121 = vpop.f32.mrb[0].mxu0
    %v4122 = vadd.f32 %v3989, %v4121
    %v4123 = vpop.f32.mrb[0].mxu0
    %v4124 = vadd.f32 %v3991, %v4123
    %v4125 = vpop.f32.mrb[0].mxu0
    %v4126 = vadd.f32 %v3993, %v4125
    %4127 = vmatprep.mubr.bf16.mxu0 0
    %4128 = vmatmul.mubr.bf16.gmra.mrb[0].mxu0 %v3350
    %v4129 = vpop.f32.mrb[0].mxu0
    %v4130 = vadd.f32 %v3997, %v4129
    %v4131 = vpop.f32.mrb[0].mxu0
    %v4132 = vadd.f32 %v3999, %v4131
    %v4133 = vpop.f32.mrb[0].mxu0
    %v4134 = vadd.f32 %v4001, %v4133
    %v4135 = vpop.f32.mrb[0].mxu0
    %v4136 = vadd.f32 %v4003, %v4135
    %4137 = vmatprep.mubr.bf16.mxu0 0
    %4138 = vmatmul.mubr.bf16.gmra.mrb[0].mxu0 %v3353
    %v4139 = vpop.f32.mrb[0].mxu0
    %v4140 = vadd.f32 %v4007, %v4139
    %v4141 = vpop.f32.mrb[0].mxu0
    %v4142 = vadd.f32 %v4009, %v4141
    %v4143 = vpop.f32.mrb[0].mxu0
    %v4144 = vadd.f32 %v4011, %v4143
    %v4145 = vpop.f32.mrb[0].mxu0
    %v4146 = vadd.f32 %v4013, %v4145
    %4147 = vmatprep.mubr.bf16.mxu0 0
    %4148 = vmatmul.mubr.bf16.gmra.mrb[0].mxu0 %v3356
    %v4149 = vpop.f32.mrb[0].mxu0
    %v4150 = vadd.f32 %v4017, %v4149
    %v4151 = vpop.f32.mrb[0].mxu0
    %v4152 = vadd.f32 %v4019, %v4151
    %v4153 = vpop.f32.mrb[0].mxu0
    %v4154 = vadd.f32 %v4021, %v4153
    %v4155 = vpop.f32.mrb[0].mxu0
    %v4156 = vadd.f32 %v4023, %v4155
    %4157 = vmatprep.mubr.bf16.mxu0 0
    %4158 = vmatmul.mubr.bf16.gmra.mrb[0].mxu0 %v3359
    %v4159 = vpop.f32.mrb[0].mxu0
    %v4160 = vadd.f32 %v4027, %v4159
    %v4161 = vpop.f32.mrb[0].mxu0
    %v4162 = vadd.f32 %v4029, %v4161
    %v4163 = vpop.f32.mrb[0].mxu0
    %v4164 = vadd.f32 %v4031, %v4163
    %v4165 = vpop.f32.mrb[0].mxu0
    %v4166 = vadd.f32 %v4033, %v4165
    %4167 = vmatprep.mubr.bf16.mxu0 0
    %4168 = vmatmul.mubr.bf16.gmra.mrb[0].mxu0 %v3362
    %v4169 = vpop.f32.mrb[0].mxu0
    %v4170 = vadd.f32 %v4037, %v4169
    %v4171 = vpop.f32.mrb[0].mxu0
    %v4172 = vadd.f32 %v4039, %v4171
    %v4173 = vpop.f32.mrb[0].mxu0
    %v4174 = vadd.f32 %v4041, %v4173
    %v4175 = vpop.f32.mrb[0].mxu0
    %v4176 = vadd.f32 %v4043, %v4175
    %4177 = vmatprep.mubr.bf16.mxu0 0
    %4178 = vmatmul.mubr.bf16.gmra.mrb[0].mxu0 %v3365
    %v4179 = vpop.f32.mrb[0].mxu0
    %v4180 = vadd.f32 %v4047, %v4179
    %v4181 = vpop.f32.mrb[0].mxu0
    %v4182 = vadd.f32 %v4049, %v4181
    %v4183 = vpop.f32.mrb[0].mxu0
    %v4184 = vadd.f32 %v4051, %v4183
    %v4185 = vpop.f32.mrb[0].mxu0
    %v4186 = vadd.f32 %v4053, %v4185
    %4187 = vmatprep.mubr.bf16.mxu0 0
    %4188 = vmatmul.mubr.bf16.gmra.mrb[0].mxu0 %v3368
    %v4189 = vpop.f32.mrb[0].mxu0
    %v4190 = vadd.f32 %v4057, %v4189
    %v4191 = vpop.f32.mrb[0].mxu0
    %v4192 = vadd.f32 %v4059, %v4191
    %v4193 = vpop.f32.mrb[0].mxu0
    %v4194 = vadd.f32 %v4061, %v4193
    %v4195 = vpop.f32.mrb[0].mxu0
    %v4196 = vadd.f32 %v4063, %v4195
    %4197 = vmatprep.mubr.bf16.mxu0 0
    %4198 = vmatmul.mubr.bf16.gmra.mrb[0].mxu0 %v3371
    %v4199 = vpop.f32.mrb[0].mxu0
    %v4200 = vadd.f32 %v4067, %v4199
    %v4201 = vpop.f32.mrb[0].mxu0
    %v4202 = vadd.f32 %v4069, %v4201
    %v4203 = vpop.f32.mrb[0].mxu0
    %v4204 = vadd.f32 %v4071, %v4203
    %v4205 = vpop.f32.mrb[0].mxu0
    %v4206 = vadd.f32 %v4073, %v4205
    %4207 = vmatprep.mubr.bf16.mxu0 0
    %4208 = vmatmul.mubr.bf16.gmra.mrb[0].mxu0 %v3374
    %v4209 = vpop.f32.mrb[0].mxu0
    %v4210 = vadd.f32 %v4077, %v4209
    %v4211 = vpop.f32.mrb[0].mxu0
    %v4212 = vadd.f32 %v4079, %v4211
    %v4213 = vpop.f32.mrb[0].mxu0
    %v4214 = vadd.f32 %v4081, %v4213
    %v4215 = vpop.f32.mrb[0].mxu0
    %v4216 = vadd.f32 %v4083, %v4215
    %4217 = vdwg.mxu0
    %4218 = vmatprep.subr.bf16.mxu0 0
    %4219 = vmatpush1.bf16.msra.mxu0 %v3810
    %4220 = vmatprep.subr.bf16.mxu0 0
    %4221 = vmatpush1.bf16.msra.mxu0 %v3813
    %4222 = vmatprep.subr.bf16.mxu0 0
    %4223 = vmatpush1.bf16.msra.mxu0 %v3816
    %4224 = vmatprep.subr.bf16.mxu0 0
    %4225 = vmatpush1.bf16.msra.mxu0 %v3819
    %4226 = vmatprep.subr.bf16.mxu0 0
    %4227 = vmatpush1.bf16.msra.mxu0 %v3822
    %4228 = vmatprep.subr.bf16.mxu0 0
    %4229 = vmatpush1.bf16.msra.mxu0 %v3825
    %4230 = vmatprep.subr.bf16.mxu0 0
    %4231 = vmatpush1.bf16.msra.mxu0 %v3828
    %4232 = vmatprep.subr.bf16.mxu0 0
    %4233 = vmatpush1.bf16.msra.mxu0 %v3831
    %4234 = vmatprep.subr.bf16.mxu0 0
    %4235 = vmatpush1.bf16.msra.mxu0 %v3834
    %4236 = vmatprep.subr.bf16.mxu0 0
    %4237 = vmatpush1.bf16.msra.mxu0 %v3837
    %4238 = vmatprep.subr.bf16.mxu0 0
    %4239 = vmatpush1.bf16.msra.mxu0 %v3840
    %4240 = vmatprep.subr.bf16.mxu0 0
    %4241 = vmatpush1.bf16.msra.mxu0 %v3843
    %4242 = vmatprep.subr.bf16.mxu0 0
    %4243 = vmatpush1.bf16.msra.mxu0 %v3846
    %4244 = vmatprep.subr.bf16.mxu0 0
    %4245 = vmatpush1.bf16.msra.mxu0 %v3849
    %4246 = vmatprep.subr.bf16.mxu0 0
    %4247 = vmatpush1.bf16.msra.mxu0 %v3852
    %4248 = vmatprep.subr.bf16.mxu0 0
    %4249 = vmatpush1.bf16.msra.mxu0 %v3855
    %4250 = vmatprep.mubr.bf16.mxu0 %v3346
    %4251 = vmatmul.mubr.bf16.gmra.mrb[0].mxu0 %v3345
    %v4252 = vpop.f32.mrb[0].mxu0
    %v4253 = vadd.f32 0.0, %v4252
    %v4254 = vpop.f32.mrb[0].mxu0
    %v4255 = vpop.f32.mrb[0].mxu0
    %v4256 = vadd.f32 0.0, %v4255
    %v4257 = vpop.f32.mrb[0].mxu0
    %4258 = vmatprep.mubr.bf16.mxu0 %v3349
    %4259 = vmatmul.mubr.bf16.gmra.mrb[0].mxu0 %v3348
    %v4260 = vpop.f32.mrb[0].mxu0
    %v4261 = vadd.f32 0.0, %v4260
    %v4262 = vpop.f32.mrb[0].mxu0
    %v4263 = vpop.f32.mrb[0].mxu0
    %v4264 = vadd.f32 0.0, %v4263
    %v4265 = vpop.f32.mrb[0].mxu0
    %4266 = vmatprep.mubr.bf16.mxu0 %v3352
    %4267 = vmatmul.mubr.bf16.gmra.mrb[0].mxu0 %v3351
    %v4268 = vpop.f32.mrb[0].mxu0
    %v4269 = vadd.f32 0.0, %v4268
    %v4270 = vpop.f32.mrb[0].mxu0
    %v4271 = vpop.f32.mrb[0].mxu0
    %v4272 = vadd.f32 0.0, %v4271
    %v4273 = vpop.f32.mrb[0].mxu0
    %4274 = vmatprep.mubr.bf16.mxu0 %v3355
    %4275 = vmatmul.mubr.bf16.gmra.mrb[0].mxu0 %v3354
    %v4276 = vpop.f32.mrb[0].mxu0
    %v4277 = vadd.f32 0.0, %v4276
    %v4278 = vpop.f32.mrb[0].mxu0
    %v4279 = vpop.f32.mrb[0].mxu0
    %v4280 = vadd.f32 0.0, %v4279
    %v4281 = vpop.f32.mrb[0].mxu0
    %4282 = vmatprep.mubr.bf16.mxu0 %v3358
    %4283 = vmatmul.mubr.bf16.gmra.mrb[0].mxu0 %v3357
    %v4284 = vpop.f32.mrb[0].mxu0
    %v4285 = vadd.f32 0.0, %v4284
    %v4286 = vpop.f32.mrb[0].mxu0
    %v4287 = vpop.f32.mrb[0].mxu0
    %v4288 = vadd.f32 0.0, %v4287
    %v4289 = vpop.f32.mrb[0].mxu0
    %4290 = vmatprep.mubr.bf16.mxu0 %v3361
    %4291 = vmatmul.mubr.bf16.gmra.mrb[0].mxu0 %v3360
    %v4292 = vpop.f32.mrb[0].mxu0
    %v4293 = vadd.f32 0.0, %v4292
    %v4294 = vpop.f32.mrb[0].mxu0
    %v4295 = vpop.f32.mrb[0].mxu0
    %v4296 = vadd.f32 0.0, %v4295
    %v4297 = vpop.f32.mrb[0].mxu0
    %4298 = vmatprep.mubr.bf16.mxu0 %v3364
    %4299 = vmatmul.mubr.bf16.gmra.mrb[0].mxu0 %v3363
    %v4300 = vpop.f32.mrb[0].mxu0
    %v4301 = vadd.f32 0.0, %v4300
    %v4302 = vpop.f32.mrb[0].mxu0
    %v4303 = vpop.f32.mrb[0].mxu0
    %v4304 = vadd.f32 0.0, %v4303
    %v4305 = vpop.f32.mrb[0].mxu0
    %4306 = vmatprep.mubr.bf16.mxu0 %v3367
    %4307 = vmatmul.mubr.bf16.gmra.mrb[0].mxu0 %v3366
    %v4308 = vpop.f32.mrb[0].mxu0
    %v4309 = vadd.f32 0.0, %v4308
    %v4310 = vpop.f32.mrb[0].mxu0
    %v4311 = vpop.f32.mrb[0].mxu0
    %v4312 = vadd.f32 0.0, %v4311
    %v4313 = vpop.f32.mrb[0].mxu0
    %4314 = vmatprep.mubr.bf16.mxu0 %v3370
    %4315 = vmatmul.mubr.bf16.gmra.mrb[0].mxu0 %v3369
    %v4316 = vpop.f32.mrb[0].mxu0
    %v4317 = vadd.f32 0.0, %v4316
    %v4318 = vpop.f32.mrb[0].mxu0
    %v4319 = vpop.f32.mrb[0].mxu0
    %v4320 = vadd.f32 0.0, %v4319
    %v4321 = vpop.f32.mrb[0].mxu0
    %4322 = vmatprep.mubr.bf16.mxu0 %v3373
    %4323 = vmatmul.mubr.bf16.gmra.mrb[0].mxu0 %v3372
    %v4324 = vpop.f32.mrb[0].mxu0
    %v4325 = vadd.f32 0.0, %v4324
    %v4326 = vpop.f32.mrb[0].mxu0
    %v4327 = vpop.f32.mrb[0].mxu0
    %v4328 = vadd.f32 0.0, %v4327
    %v4329 = vpop.f32.mrb[0].mxu0
    %4330 = vdwg.mxu0
    %4331 = vmatprep.subr.bf16.mxu0 0
    %4332 = vmatpush1.bf16.msra.mxu0 %v3858
    %4333 = vmatprep.subr.bf16.mxu0 0
    %4334 = vmatpush1.bf16.msra.mxu0 %v3861
    %4335 = vmatprep.subr.bf16.mxu0 0
    %4336 = vmatpush1.bf16.msra.mxu0 %v3864
    %4337 = vmatprep.subr.bf16.mxu0 0
    %4338 = vmatpush1.bf16.msra.mxu0 %v3867
    %4339 = vmatprep.subr.bf16.mxu0 0
    %4340 = vmatpush1.bf16.msra.mxu0 %v3870
    %4341 = vmatprep.subr.bf16.mxu0 0
    %4342 = vmatpush1.bf16.msra.mxu0 %v3873
    %4343 = vmatprep.subr.bf16.mxu0 0
    %4344 = vmatpush1.bf16.msra.mxu0 %v3876
    %4345 = vmatprep.subr.bf16.mxu0 0
    %4346 = vmatpush1.bf16.msra.mxu0 %v3879
    %4347 = vmatprep.subr.bf16.mxu0 0
    %4348 = vmatpush1.bf16.msra.mxu0 0
    %4349 = vmatprep.subr.bf16.mxu0 0
    %4350 = vmatpush1.bf16.msra.mxu0 0
    %4351 = vmatprep.subr.bf16.mxu0 0
    %4352 = vmatpush1.bf16.msra.mxu0 0
    %4353 = vmatprep.subr.bf16.mxu0 0
    %4354 = vmatpush1.bf16.msra.mxu0 0
    %4355 = vmatprep.subr.bf16.mxu0 0
    %4356 = vmatpush1.bf16.msra.mxu0 0
    %4357 = vmatprep.subr.bf16.mxu0 0
    %4358 = vmatpush1.bf16.msra.mxu0 0
    %4359 = vmatprep.subr.bf16.mxu0 0
    %4360 = vmatpush1.bf16.msra.mxu0 0
    %4361 = vmatprep.subr.bf16.mxu0 0
    %4362 = vmatpush1.bf16.msra.mxu0 0
    %4363 = vmatprep.mubr.bf16.mxu0 0
    %4364 = vmatmul.mubr.bf16.gmra.mrb[0].mxu0 %v3347
    %v4365 = vpop.f32.mrb[0].mxu0
    %v4366 = vadd.f32 %v4253, %v4365
    %v4367 = vpop.f32.mrb[0].mxu0
    %v4368 = vpop.f32.mrb[0].mxu0
    %v4369 = vadd.f32 %v4256, %v4368
    %v4370 = vpop.f32.mrb[0].mxu0
    %4371 = vmatprep.mubr.bf16.mxu0 0
    %4372 = vmatmul.mubr.bf16.gmra.mrb[0].mxu0 %v3350
    %v4373 = vpop.f32.mrb[0].mxu0
    %v4374 = vadd.f32 %v4261, %v4373
    %v4375 = vpop.f32.mrb[0].mxu0
    %v4376 = vpop.f32.mrb[0].mxu0
    %v4377 = vadd.f32 %v4264, %v4376
    %v4378 = vpop.f32.mrb[0].mxu0
    %4379 = vmatprep.mubr.bf16.mxu0 0
    %4380 = vmatmul.mubr.bf16.gmra.mrb[0].mxu0 %v3353
    %v4381 = vpop.f32.mrb[0].mxu0
    %v4382 = vadd.f32 %v4269, %v4381
    %v4383 = vpop.f32.mrb[0].mxu0
    %v4384 = vpop.f32.mrb[0].mxu0
    %v4385 = vadd.f32 %v4272, %v4384
    %v4386 = vpop.f32.mrb[0].mxu0
    %4387 = vmatprep.mubr.bf16.mxu0 0
    %4388 = vmatmul.mubr.bf16.gmra.mrb[0].mxu0 %v3356
    %v4389 = vpop.f32.mrb[0].mxu0
    %v4390 = vadd.f32 %v4277, %v4389
    %v4391 = vpop.f32.mrb[0].mxu0
    %v4392 = vpop.f32.mrb[0].mxu0
    %v4393 = vadd.f32 %v4280, %v4392
    %v4394 = vpop.f32.mrb[0].mxu0
    %4395 = vmatprep.mubr.bf16.mxu0 0
    %4396 = vmatmul.mubr.bf16.gmra.mrb[0].mxu0 %v3359
    %v4397 = vpop.f32.mrb[0].mxu0
    %v4398 = vadd.f32 %v4285, %v4397
    %v4399 = vpop.f32.mrb[0].mxu0
    %v4400 = vpop.f32.mrb[0].mxu0
    %v4401 = vadd.f32 %v4288, %v4400
    %v4402 = vpop.f32.mrb[0].mxu0
    %4403 = vmatprep.mubr.bf16.mxu0 0
    %4404 = vmatmul.mubr.bf16.gmra.mrb[0].mxu0 %v3362
    %v4405 = vpop.f32.mrb[0].mxu0
    %v4406 = vadd.f32 %v4293, %v4405
    %v4407 = vpop.f32.mrb[0].mxu0
    %v4408 = vpop.f32.mrb[0].mxu0
    %v4409 = vadd.f32 %v4296, %v4408
    %v4410 = vpop.f32.mrb[0].mxu0
    %4411 = vmatprep.mubr.bf16.mxu0 0
    %4412 = vmatmul.mubr.bf16.gmra.mrb[0].mxu0 %v3365
    %v4413 = vpop.f32.mrb[0].mxu0
    %v4414 = vadd.f32 %v4301, %v4413
    %v4415 = vpop.f32.mrb[0].mxu0
    %v4416 = vpop.f32.mrb[0].mxu0
    %v4417 = vadd.f32 %v4304, %v4416
    %v4418 = vpop.f32.mrb[0].mxu0
    %4419 = vmatprep.mubr.bf16.mxu0 0
    %4420 = vmatmul.mubr.bf16.gmra.mrb[0].mxu0 %v3368
    %v4421 = vpop.f32.mrb[0].mxu0
    %v4422 = vadd.f32 %v4309, %v4421
    %v4423 = vpop.f32.mrb[0].mxu0
    %v4424 = vpop.f32.mrb[0].mxu0
    %v4425 = vadd.f32 %v4312, %v4424
    %v4426 = vpop.f32.mrb[0].mxu0
    %4427 = vmatprep.mubr.bf16.mxu0 0
    %4428 = vmatmul.mubr.bf16.gmra.mrb[0].mxu0 %v3371
    %v4429 = vpop.f32.mrb[0].mxu0
    %v4430 = vadd.f32 %v4317, %v4429
    %v4431 = vpop.f32.mrb[0].mxu0
    %v4432 = vpop.f32.mrb[0].mxu0
    %v4433 = vadd.f32 %v4320, %v4432
    %v4434 = vpop.f32.mrb[0].mxu0
    %4435 = vmatprep.mubr.bf16.mxu0 0
    %4436 = vmatmul.mubr.bf16.gmra.mrb[0].mxu0 %v3374
    %v4437 = vpop.f32.mrb[0].mxu0
    %v4438 = vadd.f32 %v4325, %v4437
    %v4439 = vpop.f32.mrb[0].mxu0
    %v4440 = vpop.f32.mrb[0].mxu0
    %v4441 = vadd.f32 %v4328, %v4440
    %v4442 = vpop.f32.mrb[0].mxu0
    %4443 = vdwg.mxu0
    %v4540 = vunpack.c.l.b16 %v3375
    %v4541 = vunpack.c.h.b16 %v3375
    %v4542 = vunpack.c.l.b16 %v3376
    %v4543 = vunpack.c.l.b16 %v3377
    %v4544 = vunpack.c.h.b16 %v3377
    %v4545 = vunpack.c.l.b16 %v3378
    %v4546 = vunpack.c.l.b16 %v3379
    %v4547 = vunpack.c.h.b16 %v3379
    %v4548 = vunpack.c.l.b16 %v3380
    %v4549 = vunpack.c.l.b16 %v3381
    %v4550 = vunpack.c.h.b16 %v3381
    %v4551 = vunpack.c.l.b16 %v3382
    %v4552 = vunpack.c.l.b16 %v3383
    %v4553 = vunpack.c.h.b16 %v3383
    %v4554 = vunpack.c.l.b16 %v3384
    %v4555 = vunpack.c.l.b16 %v3385
    %v4556 = vunpack.c.h.b16 %v3385
    %v4557 = vunpack.c.l.b16 %v3386
    %v4558 = vunpack.c.l.b16 %v3387
    %v4559 = vunpack.c.h.b16 %v3387
    %v4560 = vunpack.c.l.b16 %v3388
    %v4561 = vunpack.c.l.b16 %v3389
    %v4562 = vunpack.c.h.b16 %v3389
    %v4563 = vunpack.c.l.b16 %v3390
    %v4564 = vunpack.c.l.b16 %v3391
    %v4565 = vunpack.c.h.b16 %v3391
    %v4566 = vunpack.c.l.b16 %v3392
    %v4567 = vunpack.c.l.b16 %v3393
    %v4568 = vunpack.c.h.b16 %v3393
    %v4569 = vunpack.c.l.b16 %v3394
    %v4570 = vunpack.c.l.b16 %v3395
    %v4571 = vunpack.c.h.b16 %v3395
    %v4572 = vunpack.c.l.b16 %v3396
    %v4573 = vunpack.c.l.b16 %v3397
    %v4574 = vunpack.c.h.b16 %v3397
    %v4575 = vunpack.c.l.b16 %v3398
    %v4576 = vunpack.c.l.b16 %v3399
    %v4577 = vunpack.c.h.b16 %v3399
    %v4578 = vunpack.c.l.b16 %v3400
    %v4579 = vunpack.c.l.b16 %v3401
    %v4580 = vunpack.c.h.b16 %v3401
    %v4581 = vunpack.c.l.b16 %v3402
    %v4582 = vunpack.c.l.b16 %v3403
    %v4583 = vunpack.c.h.b16 %v3403
    %v4584 = vunpack.c.l.b16 %v3404
    %v4585 = vunpack.c.l.b16 %v3405
    %v4586 = vunpack.c.h.b16 %v3405
    %v4587 = vunpack.c.l.b16 %v3406
    %v4588 = vunpack.c.l.b16 %v3407
    %v4589 = vunpack.c.h.b16 %v3407
    %v4590 = vunpack.c.l.b16 %v3408
    %v4591 = vunpack.c.l.b16 %v3409
    %v4592 = vunpack.c.h.b16 %v3409
    %v4593 = vunpack.c.l.b16 %v3410
    %v4594 = vunpack.c.l.b16 %v3411
    %v4595 = vunpack.c.h.b16 %v3411
    %v4596 = vunpack.c.l.b16 %v3412
    %v4597 = vunpack.c.l.b16 %v3413
    %v4598 = vunpack.c.h.b16 %v3413
    %v4599 = vunpack.c.l.b16 %v3414
    %v4600 = vunpack.c.l.b16 %v3415
    %v4601 = vunpack.c.h.b16 %v3415
    %v4602 = vunpack.c.l.b16 %v3416
    %v4603 = vunpack.c.l.b16 %v3417
    %v4604 = vunpack.c.h.b16 %v3417
    %v4605 = vunpack.c.l.b16 %v3418
    %v4606 = vunpack.c.l.b16 %v3419
    %v4607 = vunpack.c.h.b16 %v3419
    %v4608 = vunpack.c.l.b16 %v3420
    %v4609 = vunpack.c.l.b16 %v3421
    %v4610 = vunpack.c.h.b16 %v3421
    %v4611 = vunpack.c.l.b16 %v3422
    %v4612 = vunpack.c.l.b16 %v3423
    %v4613 = vunpack.c.h.b16 %v3423
    %v4614 = vunpack.c.l.b16 %v3424
    %v4615 = vunpack.c.l.b16 %v3425
    %v4616 = vunpack.c.h.b16 %v3425
    %v4617 = vunpack.c.l.b16 %v3426
    %v4618 = vunpack.c.l.b16 %v3427
    %v4619 = vunpack.c.h.b16 %v3427
    %v4620 = vunpack.c.l.b16 %v3428
    %v4621 = vunpack.c.l.b16 %v3429
    %v4622 = vunpack.c.h.b16 %v3429
    %v4623 = vunpack.c.l.b16 %v3430
    %v4624 = vunpack.c.l.b16 %v3431
    %v4625 = vunpack.c.h.b16 %v3431
    %v4626 = vunpack.c.l.b16 %v3432
    %v4627 = vunpack.c.l.b16 %v3433
    %v4628 = vunpack.c.h.b16 %v3433
    %v4629 = vunpack.c.l.b16 %v3434
    %v4630 = vunpack.c.l.b16 %v3435
    %v4631 = vunpack.c.h.b16 %v3435
    %v4632 = vunpack.c.l.b16 %v3436
    %v4633 = vunpack.c.l.b16 %v3437
    %v4634 = vunpack.c.h.b16 %v3437
    %v4635 = vunpack.c.l.b16 %v3438
    %v4636 = vunpack.c.l.b16 %v3439
    %v4637 = vunpack.c.h.b16 %v3439
    %v4638 = vunpack.c.l.b16 %v3440
    %v4639 = vunpack.c.l.b16 %v3441
    %v4640 = vunpack.c.h.b16 %v3441
    %v4641 = vunpack.c.l.b16 %v3442
    %v4642 = vunpack.c.l.b16 %v3443
    %v4643 = vunpack.c.h.b16 %v3443
    %v4644 = vunpack.c.l.b16 %v3444
    %v4645 = vunpack.c.l.b16 %v3445
    %v4646 = vunpack.c.h.b16 %v3445
    %v4647 = vunpack.c.l.b16 %v3446
    %v4648 = vunpack.c.l.b16 %v3447
    %v4649 = vunpack.c.h.b16 %v3447
    %v4650 = vunpack.c.l.b16 %v3448
    %v4651 = vunpack.c.l.b16 %v3449
    %v4652 = vunpack.c.h.b16 %v3449
    %v4653 = vunpack.c.l.b16 %v3450
    %v4654 = vunpack.c.l.b16 %v3451
    %v4655 = vunpack.c.h.b16 %v3451
    %v4656 = vunpack.c.l.b16 %v3452
    %v4657 = vunpack.c.l.b16 %v3453
    %v4658 = vunpack.c.h.b16 %v3453
    %v4659 = vunpack.c.l.b16 %v3454
    %v4660 = vunpack.c.l.b16 %v3455
    %v4661 = vunpack.c.h.b16 %v3455
    %v4662 = vunpack.c.l.b16 %v3456
    %v4663 = vunpack.c.l.b16 %v3457
    %v4664 = vunpack.c.h.b16 %v3457
    %v4665 = vunpack.c.l.b16 %v3458
    %v4666 = vunpack.c.l.b16 %v3459
    %v4667 = vunpack.c.h.b16 %v3459
    %v4668 = vunpack.c.l.b16 %v3460
    %v4669 = vunpack.c.l.b16 %v3461
    %v4670 = vunpack.c.h.b16 %v3461
    %v4671 = vunpack.c.l.b16 %v3462
    %v4672 = vunpack.c.l.b16 %v3463
    %v4673 = vunpack.c.h.b16 %v3463
    %v4674 = vunpack.c.l.b16 %v3464
    %v4675 = vunpack.c.l.b16 %v3465
    %v4676 = vunpack.c.h.b16 %v3465
    %v4677 = vunpack.c.l.b16 %v3466
    %v4678 = vunpack.c.l.b16 %v3467
    %v4679 = vunpack.c.h.b16 %v3467
    %v4680 = vunpack.c.l.b16 %v3468
    %v4681 = vunpack.c.l.b16 %v3469
    %v4682 = vunpack.c.h.b16 %v3469
    %v4683 = vunpack.c.l.b16 %v3470
    %v4684 = vpack.c.b16 %v4543, %v4540
    %v4685 = vpack.c.b16 %v4544, %v4541
    %v4686 = vpack.c.b16 %v4545, %v4542
    %v4687 = vpack.c.b16 %v4549, %v4546
    %v4688 = vpack.c.b16 %v4550, %v4547
    %v4689 = vpack.c.b16 %v4551, %v4548
    %v4690 = vpack.c.b16 %v4555, %v4552
    %v4691 = vpack.c.b16 %v4556, %v4553
    %v4692 = vpack.c.b16 %v4557, %v4554
    %v4693 = vpack.c.b16 %v4561, %v4558
    %v4694 = vpack.c.b16 %v4562, %v4559
    %v4695 = vpack.c.b16 %v4563, %v4560
    %v4696 = vpack.c.b16 %v4567, %v4564
    %v4697 = vpack.c.b16 %v4568, %v4565
    %v4698 = vpack.c.b16 %v4569, %v4566
    %v4699 = vpack.c.b16 %v4573, %v4570
    %v4700 = vpack.c.b16 %v4574, %v4571
    %v4701 = vpack.c.b16 %v4575, %v4572
    %v4702 = vpack.c.b16 %v4579, %v4576
    %v4703 = vpack.c.b16 %v4580, %v4577
    %v4704 = vpack.c.b16 %v4581, %v4578
    %v4705 = vpack.c.b16 %v4585, %v4582
    %v4706 = vpack.c.b16 %v4586, %v4583
    %v4707 = vpack.c.b16 %v4587, %v4584
    %v4708 = vpack.c.b16 %v4591, %v4588
    %v4709 = vpack.c.b16 %v4592, %v4589
    %v4710 = vpack.c.b16 %v4593, %v4590
    %v4711 = vpack.c.b16 %v4597, %v4594
    %v4712 = vpack.c.b16 %v4598, %v4595
    %v4713 = vpack.c.b16 %v4599, %v4596
    %v4714 = vpack.c.b16 %v4603, %v4600
    %v4715 = vpack.c.b16 %v4604, %v4601
    %v4716 = vpack.c.b16 %v4605, %v4602
    %v4717 = vpack.c.b16 %v4609, %v4606
    %v4718 = vpack.c.b16 %v4610, %v4607
    %v4719 = vpack.c.b16 %v4611, %v4608
    %v4720 = vpack.c.b16 %v4615, %v4612
    %v4721 = vpack.c.b16 %v4616, %v4613
    %v4722 = vpack.c.b16 %v4617, %v4614
    %v4723 = vpack.c.b16 %v4621, %v4618
    %v4724 = vpack.c.b16 %v4622, %v4619
    %v4725 = vpack.c.b16 %v4623, %v4620
    %v4726 = vpack.c.b16 %v4627, %v4624
    %v4727 = vpack.c.b16 %v4628, %v4625
    %v4728 = vpack.c.b16 %v4629, %v4626
    %v4729 = vpack.c.b16 %v4633, %v4630
    %v4730 = vpack.c.b16 %v4634, %v4631
    %v4731 = vpack.c.b16 %v4635, %v4632
    %v4732 = vpack.c.b16 %v4639, %v4636
    %v4733 = vpack.c.b16 %v4640, %v4637
    %v4734 = vpack.c.b16 %v4641, %v4638
    %v4735 = vpack.c.b16 %v4645, %v4642
    %v4736 = vpack.c.b16 %v4646, %v4643
    %v4737 = vpack.c.b16 %v4647, %v4644
    %v4738 = vpack.c.b16 %v4651, %v4648
    %v4739 = vpack.c.b16 %v4652, %v4649
    %v4740 = vpack.c.b16 %v4653, %v4650
    %v4741 = vpack.c.b16 %v4657, %v4654
    %v4742 = vpack.c.b16 %v4658, %v4655
    %v4743 = vpack.c.b16 %v4659, %v4656
    %v4744 = vpack.c.b16 %v4663, %v4660
    %v4745 = vpack.c.b16 %v4664, %v4661
    %v4746 = vpack.c.b16 %v4665, %v4662
    %v4747 = vpack.c.b16 %v4669, %v4666
    %v4748 = vpack.c.b16 %v4670, %v4667
    %v4749 = vpack.c.b16 %v4671, %v4668
    %v4750 = vpack.c.b16 %v4675, %v4672
    %v4751 = vpack.c.b16 %v4676, %v4673
    %v4752 = vpack.c.b16 %v4677, %v4674
    %v4753 = vpack.c.b16 %v4681, %v4678
    %v4754 = vpack.c.b16 %v4682, %v4679
    %v4755 = vpack.c.b16 %v4683, %v4680
    %4828 = vmatprep.subr.bf16.mxu0 %v4685
    %4829 = vmatpush1.bf16.msra.mxu0 %v4684
    %4830 = vmatprep.subr.bf16.mxu0 %v4688
    %4831 = vmatpush1.bf16.msra.mxu0 %v4687
    %4832 = vmatprep.subr.bf16.mxu0 %v4691
    %4833 = vmatpush1.bf16.msra.mxu0 %v4690
    %4834 = vmatprep.subr.bf16.mxu0 %v4694
    %4835 = vmatpush1.bf16.msra.mxu0 %v4693
    %4836 = vmatprep.subr.bf16.mxu0 %v4697
    %4837 = vmatpush1.bf16.msra.mxu0 %v4696
    %4838 = vmatprep.subr.bf16.mxu0 %v4700
    %4839 = vmatpush1.bf16.msra.mxu0 %v4699
    %4840 = vmatprep.subr.bf16.mxu0 %v4703
    %4841 = vmatpush1.bf16.msra.mxu0 %v4702
    %4842 = vmatprep.subr.bf16.mxu0 %v4706
    %4843 = vmatpush1.bf16.msra.mxu0 %v4705
    %4844 = vmatprep.subr.bf16.mxu0 %v4709
    %4845 = vmatpush1.bf16.msra.mxu0 %v4708
    %4846 = vmatprep.subr.bf16.mxu0 %v4712
    %4847 = vmatpush1.bf16.msra.mxu0 %v4711
    %4848 = vmatprep.subr.bf16.mxu0 %v4715
    %4849 = vmatpush1.bf16.msra.mxu0 %v4714
    %4850 = vmatprep.subr.bf16.mxu0 %v4718
    %4851 = vmatpush1.bf16.msra.mxu0 %v4717
    %4852 = vmatprep.subr.bf16.mxu0 %v4721
    %4853 = vmatpush1.bf16.msra.mxu0 %v4720
    %4854 = vmatprep.subr.bf16.mxu0 %v4724
    %4855 = vmatpush1.bf16.msra.mxu0 %v4723
    %4856 = vmatprep.subr.bf16.mxu0 %v4727
    %4857 = vmatpush1.bf16.msra.mxu0 %v4726
    %4858 = vmatprep.subr.bf16.mxu0 %v4730
    %4859 = vmatpush1.bf16.msra.mxu0 %v4729
    %4860 = vmatprep.mubr.bf16.mxu0 %v3316
    %4861 = vmatmul.mubr.bf16.gmra.mrb[0].mxu0 %v3315
    %v4862 = vpop.f32.mrb[0].mxu0
    %v4863 = vadd.f32 %v4120, %v4862
    %v4864 = vpop.f32.mrb[0].mxu0
    %v4865 = vadd.f32 %v4122, %v4864
    %v4866 = vpop.f32.mrb[0].mxu0
    %v4867 = vadd.f32 %v4124, %v4866
    %v4868 = vpop.f32.mrb[0].mxu0
    %v4869 = vadd.f32 %v4126, %v4868
    %4870 = vmatprep.mubr.bf16.mxu0 %v3319
    %4871 = vmatmul.mubr.bf16.gmra.mrb[0].mxu0 %v3318
    %v4872 = vpop.f32.mrb[0].mxu0
    %v4873 = vadd.f32 %v4130, %v4872
    %v4874 = vpop.f32.mrb[0].mxu0
    %v4875 = vadd.f32 %v4132, %v4874
    %v4876 = vpop.f32.mrb[0].mxu0
    %v4877 = vadd.f32 %v4134, %v4876
    %v4878 = vpop.f32.mrb[0].mxu0
    %v4879 = vadd.f32 %v4136, %v4878
    %4880 = vmatprep.mubr.bf16.mxu0 %v3322
    %4881 = vmatmul.mubr.bf16.gmra.mrb[0].mxu0 %v3321
    %v4882 = vpop.f32.mrb[0].mxu0
    %v4883 = vadd.f32 %v4140, %v4882
    %v4884 = vpop.f32.mrb[0].mxu0
    %v4885 = vadd.f32 %v4142, %v4884
    %v4886 = vpop.f32.mrb[0].mxu0
    %v4887 = vadd.f32 %v4144, %v4886
    %v4888 = vpop.f32.mrb[0].mxu0
    %v4889 = vadd.f32 %v4146, %v4888
    %4890 = vmatprep.mubr.bf16.mxu0 %v3325
    %4891 = vmatmul.mubr.bf16.gmra.mrb[0].mxu0 %v3324
    %v4892 = vpop.f32.mrb[0].mxu0
    %v4893 = vadd.f32 %v4150, %v4892
    %v4894 = vpop.f32.mrb[0].mxu0
    %v4895 = vadd.f32 %v4152, %v4894
    %v4896 = vpop.f32.mrb[0].mxu0
    %v4897 = vadd.f32 %v4154, %v4896
    %v4898 = vpop.f32.mrb[0].mxu0
    %v4899 = vadd.f32 %v4156, %v4898
    %4900 = vmatprep.mubr.bf16.mxu0 %v3328
    %4901 = vmatmul.mubr.bf16.gmra.mrb[0].mxu0 %v3327
    %v4902 = vpop.f32.mrb[0].mxu0
    %v4903 = vadd.f32 %v4160, %v4902
    %v4904 = vpop.f32.mrb[0].mxu0
    %v4905 = vadd.f32 %v4162, %v4904
    %v4906 = vpop.f32.mrb[0].mxu0
    %v4907 = vadd.f32 %v4164, %v4906
    %v4908 = vpop.f32.mrb[0].mxu0
    %v4909 = vadd.f32 %v4166, %v4908
    %4910 = vmatprep.mubr.bf16.mxu0 %v3331
    %4911 = vmatmul.mubr.bf16.gmra.mrb[0].mxu0 %v3330
    %v4912 = vpop.f32.mrb[0].mxu0
    %v4913 = vadd.f32 %v4170, %v4912
    %v4914 = vpop.f32.mrb[0].mxu0
    %v4915 = vadd.f32 %v4172, %v4914
    %v4916 = vpop.f32.mrb[0].mxu0
    %v4917 = vadd.f32 %v4174, %v4916
    %v4918 = vpop.f32.mrb[0].mxu0
    %v4919 = vadd.f32 %v4176, %v4918
    %4920 = vmatprep.mubr.bf16.mxu0 %v3334
    %4921 = vmatmul.mubr.bf16.gmra.mrb[0].mxu0 %v3333
    %v4922 = vpop.f32.mrb[0].mxu0
    %v4923 = vadd.f32 %v4180, %v4922
    %v4924 = vpop.f32.mrb[0].mxu0
    %v4925 = vadd.f32 %v4182, %v4924
    %v4926 = vpop.f32.mrb[0].mxu0
    %v4927 = vadd.f32 %v4184, %v4926
    %v4928 = vpop.f32.mrb[0].mxu0
    %v4929 = vadd.f32 %v4186, %v4928
    %4930 = vmatprep.mubr.bf16.mxu0 %v3337
    %4931 = vmatmul.mubr.bf16.gmra.mrb[0].mxu0 %v3336
    %v4932 = vpop.f32.mrb[0].mxu0
    %v4933 = vadd.f32 %v4190, %v4932
    %v4934 = vpop.f32.mrb[0].mxu0
    %v4935 = vadd.f32 %v4192, %v4934
    %v4936 = vpop.f32.mrb[0].mxu0
    %v4937 = vadd.f32 %v4194, %v4936
    %v4938 = vpop.f32.mrb[0].mxu0
    %v4939 = vadd.f32 %v4196, %v4938
    %4940 = vmatprep.mubr.bf16.mxu0 %v3340
    %4941 = vmatmul.mubr.bf16.gmra.mrb[0].mxu0 %v3339
    %v4942 = vpop.f32.mrb[0].mxu0
    %v4943 = vadd.f32 %v4200, %v4942
    %v4944 = vpop.f32.mrb[0].mxu0
    %v4945 = vadd.f32 %v4202, %v4944
    %v4946 = vpop.f32.mrb[0].mxu0
    %v4947 = vadd.f32 %v4204, %v4946
    %v4948 = vpop.f32.mrb[0].mxu0
    %v4949 = vadd.f32 %v4206, %v4948
    %4950 = vmatprep.mubr.bf16.mxu0 %v3343
    %4951 = vmatmul.mubr.bf16.gmra.mrb[0].mxu0 %v3342
    %v4952 = vpop.f32.mrb[0].mxu0
    %v4953 = vadd.f32 %v4210, %v4952
    %v4954 = vpop.f32.mrb[0].mxu0
    %v4955 = vadd.f32 %v4212, %v4954
    %v4956 = vpop.f32.mrb[0].mxu0
    %v4957 = vadd.f32 %v4214, %v4956
    %v4958 = vpop.f32.mrb[0].mxu0
    %v4959 = vadd.f32 %v4216, %v4958
    %4960 = vdwg.mxu0
    %4961 = vmatprep.subr.bf16.mxu0 %v4733
    %4962 = vmatpush1.bf16.msra.mxu0 %v4732
    %4963 = vmatprep.subr.bf16.mxu0 %v4736
    %4964 = vmatpush1.bf16.msra.mxu0 %v4735
    %4965 = vmatprep.subr.bf16.mxu0 %v4739
    %4966 = vmatpush1.bf16.msra.mxu0 %v4738
    %4967 = vmatprep.subr.bf16.mxu0 %v4742
    %4968 = vmatpush1.bf16.msra.mxu0 %v4741
    %4969 = vmatprep.subr.bf16.mxu0 %v4745
    %4970 = vmatpush1.bf16.msra.mxu0 %v4744
    %4971 = vmatprep.subr.bf16.mxu0 %v4748
    %4972 = vmatpush1.bf16.msra.mxu0 %v4747
    %4973 = vmatprep.subr.bf16.mxu0 %v4751
    %4974 = vmatpush1.bf16.msra.mxu0 %v4750
    %4975 = vmatprep.subr.bf16.mxu0 %v4754
    %4976 = vmatpush1.bf16.msra.mxu0 %v4753
    %4977 = vmatprep.subr.bf16.mxu0 0
    %4978 = vmatpush1.bf16.msra.mxu0 0
    %4979 = vmatprep.subr.bf16.mxu0 0
    %4980 = vmatpush1.bf16.msra.mxu0 0
    %4981 = vmatprep.subr.bf16.mxu0 0
    %4982 = vmatpush1.bf16.msra.mxu0 0
    %4983 = vmatprep.subr.bf16.mxu0 0
    %4984 = vmatpush1.bf16.msra.mxu0 0
    %4985 = vmatprep.subr.bf16.mxu0 0
    %4986 = vmatpush1.bf16.msra.mxu0 0
    %4987 = vmatprep.subr.bf16.mxu0 0
    %4988 = vmatpush1.bf16.msra.mxu0 0
    %4989 = vmatprep.subr.bf16.mxu0 0
    %4990 = vmatpush1.bf16.msra.mxu0 0
    %4991 = vmatprep.subr.bf16.mxu0 0
    %4992 = vmatpush1.bf16.msra.mxu0 0
    %4993 = vmatprep.mubr.bf16.mxu0 0
    %4994 = vmatmul.mubr.bf16.gmra.mrb[0].mxu0 %v3317
    %v4995 = vpop.f32.mrb[0].mxu0
    %v4996 = vadd.f32 %v4863, %v4995
    %v4997 = vpop.f32.mrb[0].mxu0
    %v4998 = vadd.f32 %v4865, %v4997
    %v4999 = vpop.f32.mrb[0].mxu0
    %v5000 = vadd.f32 %v4867, %v4999
    %v5001 = vpop.f32.mrb[0].mxu0
    %v5002 = vadd.f32 %v4869, %v5001
    %5003 = vmatprep.mubr.bf16.mxu0 0
    %5004 = vmatmul.mubr.bf16.gmra.mrb[0].mxu0 %v3320
    %v5005 = vpop.f32.mrb[0].mxu0
    %v5006 = vadd.f32 %v4873, %v5005
    %v5007 = vpop.f32.mrb[0].mxu0
    %v5008 = vadd.f32 %v4875, %v5007
    %v5009 = vpop.f32.mrb[0].mxu0
    %v5010 = vadd.f32 %v4877, %v5009
    %v5011 = vpop.f32.mrb[0].mxu0
    %v5012 = vadd.f32 %v4879, %v5011
    %5013 = vmatprep.mubr.bf16.mxu0 0
    %5014 = vmatmul.mubr.bf16.gmra.mrb[0].mxu0 %v3323
    %v5015 = vpop.f32.mrb[0].mxu0
    %v5016 = vadd.f32 %v4883, %v5015
    %v5017 = vpop.f32.mrb[0].mxu0
    %v5018 = vadd.f32 %v4885, %v5017
    %v5019 = vpop.f32.mrb[0].mxu0
    %v5020 = vadd.f32 %v4887, %v5019
    %v5021 = vpop.f32.mrb[0].mxu0
    %v5022 = vadd.f32 %v4889, %v5021
    %5023 = vmatprep.mubr.bf16.mxu0 0
    %5024 = vmatmul.mubr.bf16.gmra.mrb[0].mxu0 %v3326
    %v5025 = vpop.f32.mrb[0].mxu0
    %v5026 = vadd.f32 %v4893, %v5025
    %v5027 = vpop.f32.mrb[0].mxu0
    %v5028 = vadd.f32 %v4895, %v5027
    %v5029 = vpop.f32.mrb[0].mxu0
    %v5030 = vadd.f32 %v4897, %v5029
    %v5031 = vpop.f32.mrb[0].mxu0
    %v5032 = vadd.f32 %v4899, %v5031
    %5033 = vmatprep.mubr.bf16.mxu0 0
    %5034 = vmatmul.mubr.bf16.gmra.mrb[0].mxu0 %v3329
    %v5035 = vpop.f32.mrb[0].mxu0
    %v5036 = vadd.f32 %v4903, %v5035
    %v5037 = vpop.f32.mrb[0].mxu0
    %v5038 = vadd.f32 %v4905, %v5037
    %v5039 = vpop.f32.mrb[0].mxu0
    %v5040 = vadd.f32 %v4907, %v5039
    %v5041 = vpop.f32.mrb[0].mxu0
    %v5042 = vadd.f32 %v4909, %v5041
    %5043 = vmatprep.mubr.bf16.mxu0 0
    %5044 = vmatmul.mubr.bf16.gmra.mrb[0].mxu0 %v3332
    %v5045 = vpop.f32.mrb[0].mxu0
    %v5046 = vadd.f32 %v4913, %v5045
    %v5047 = vpop.f32.mrb[0].mxu0
    %v5048 = vadd.f32 %v4915, %v5047
    %v5049 = vpop.f32.mrb[0].mxu0
    %v5050 = vadd.f32 %v4917, %v5049
    %v5051 = vpop.f32.mrb[0].mxu0
    %v5052 = vadd.f32 %v4919, %v5051
    %5053 = vmatprep.mubr.bf16.mxu0 0
    %5054 = vmatmul.mubr.bf16.gmra.mrb[0].mxu0 %v3335
    %v5055 = vpop.f32.mrb[0].mxu0
    %v5056 = vadd.f32 %v4923, %v5055
    %v5057 = vpop.f32.mrb[0].mxu0
    %v5058 = vadd.f32 %v4925, %v5057
    %v5059 = vpop.f32.mrb[0].mxu0
    %v5060 = vadd.f32 %v4927, %v5059
    %v5061 = vpop.f32.mrb[0].mxu0
    %v5062 = vadd.f32 %v4929, %v5061
    %5063 = vmatprep.mubr.bf16.mxu0 0
    %5064 = vmatmul.mubr.bf16.gmra.mrb[0].mxu0 %v3338
    %v5065 = vpop.f32.mrb[0].mxu0
    %v5066 = vadd.f32 %v4933, %v5065
    %v5067 = vpop.f32.mrb[0].mxu0
    %v5068 = vadd.f32 %v4935, %v5067
    %v5069 = vpop.f32.mrb[0].mxu0
    %v5070 = vadd.f32 %v4937, %v5069
    %v5071 = vpop.f32.mrb[0].mxu0
    %v5072 = vadd.f32 %v4939, %v5071
    %5073 = vmatprep.mubr.bf16.mxu0 0
    %5074 = vmatmul.mubr.bf16.gmra.mrb[0].mxu0 %v3341
    %v5075 = vpop.f32.mrb[0].mxu0
    %v5076 = vadd.f32 %v4943, %v5075
    %v5077 = vpop.f32.mrb[0].mxu0
    %v5078 = vadd.f32 %v4945, %v5077
    %v5079 = vpop.f32.mrb[0].mxu0
    %v5080 = vadd.f32 %v4947, %v5079
    %v5081 = vpop.f32.mrb[0].mxu0
    %v5082 = vadd.f32 %v4949, %v5081
    %5083 = vmatprep.mubr.bf16.mxu0 0
    %5084 = vmatmul.mubr.bf16.gmra.mrb[0].mxu0 %v3344
    %v5085 = vpop.f32.mrb[0].mxu0
    %v5086 = vadd.f32 %v4953, %v5085
    %v5087 = vpop.f32.mrb[0].mxu0
    %v5088 = vadd.f32 %v4955, %v5087
    %v5089 = vpop.f32.mrb[0].mxu0
    %v5090 = vadd.f32 %v4957, %v5089
    %v5091 = vpop.f32.mrb[0].mxu0
    %v5092 = vadd.f32 %v4959, %v5091
    %5093 = vdwg.mxu0
    %5094 = vmatprep.subr.bf16.mxu0 0
    %5095 = vmatpush1.bf16.msra.mxu0 %v4686
    %5096 = vmatprep.subr.bf16.mxu0 0
    %5097 = vmatpush1.bf16.msra.mxu0 %v4689
    %5098 = vmatprep.subr.bf16.mxu0 0
    %5099 = vmatpush1.bf16.msra.mxu0 %v4692
    %5100 = vmatprep.subr.bf16.mxu0 0
    %5101 = vmatpush1.bf16.msra.mxu0 %v4695
    %5102 = vmatprep.subr.bf16.mxu0 0
    %5103 = vmatpush1.bf16.msra.mxu0 %v4698
    %5104 = vmatprep.subr.bf16.mxu0 0
    %5105 = vmatpush1.bf16.msra.mxu0 %v4701
    %5106 = vmatprep.subr.bf16.mxu0 0
    %5107 = vmatpush1.bf16.msra.mxu0 %v4704
    %5108 = vmatprep.subr.bf16.mxu0 0
    %5109 = vmatpush1.bf16.msra.mxu0 %v4707
    %5110 = vmatprep.subr.bf16.mxu0 0
    %5111 = vmatpush1.bf16.msra.mxu0 %v4710
    %5112 = vmatprep.subr.bf16.mxu0 0
    %5113 = vmatpush1.bf16.msra.mxu0 %v4713
    %5114 = vmatprep.subr.bf16.mxu0 0
    %5115 = vmatpush1.bf16.msra.mxu0 %v4716
    %5116 = vmatprep.subr.bf16.mxu0 0
    %5117 = vmatpush1.bf16.msra.mxu0 %v4719
    %5118 = vmatprep.subr.bf16.mxu0 0
    %5119 = vmatpush1.bf16.msra.mxu0 %v4722
    %5120 = vmatprep.subr.bf16.mxu0 0
    %5121 = vmatpush1.bf16.msra.mxu0 %v4725
    %5122 = vmatprep.subr.bf16.mxu0 0
    %5123 = vmatpush1.bf16.msra.mxu0 %v4728
    %5124 = vmatprep.subr.bf16.mxu0 0
    %5125 = vmatpush1.bf16.msra.mxu0 %v4731
    %5126 = vmatprep.mubr.bf16.mxu0 %v3316
    %5127 = vmatmul.mubr.bf16.gmra.mrb[0].mxu0 %v3315
    %v5128 = vpop.f32.mrb[0].mxu0
    %v5129 = vadd.f32 %v4366, %v5128
    %v5130 = vpop.f32.mrb[0].mxu0
    %v5131 = vpop.f32.mrb[0].mxu0
    %v5132 = vadd.f32 %v4369, %v5131
    %v5133 = vpop.f32.mrb[0].mxu0
    %5134 = vmatprep.mubr.bf16.mxu0 %v3319
    %5135 = vmatmul.mubr.bf16.gmra.mrb[0].mxu0 %v3318
    %v5136 = vpop.f32.mrb[0].mxu0
    %v5137 = vadd.f32 %v4374, %v5136
    %v5138 = vpop.f32.mrb[0].mxu0
    %v5139 = vpop.f32.mrb[0].mxu0
    %v5140 = vadd.f32 %v4377, %v5139
    %v5141 = vpop.f32.mrb[0].mxu0
    %5142 = vmatprep.mubr.bf16.mxu0 %v3322
    %5143 = vmatmul.mubr.bf16.gmra.mrb[0].mxu0 %v3321
    %v5144 = vpop.f32.mrb[0].mxu0
    %v5145 = vadd.f32 %v4382, %v5144
    %v5146 = vpop.f32.mrb[0].mxu0
    %v5147 = vpop.f32.mrb[0].mxu0
    %v5148 = vadd.f32 %v4385, %v5147
    %v5149 = vpop.f32.mrb[0].mxu0
    %5150 = vmatprep.mubr.bf16.mxu0 %v3325
    %5151 = vmatmul.mubr.bf16.gmra.mrb[0].mxu0 %v3324
    %v5152 = vpop.f32.mrb[0].mxu0
    %v5153 = vadd.f32 %v4390, %v5152
    %v5154 = vpop.f32.mrb[0].mxu0
    %v5155 = vpop.f32.mrb[0].mxu0
    %v5156 = vadd.f32 %v4393, %v5155
    %v5157 = vpop.f32.mrb[0].mxu0
    %5158 = vmatprep.mubr.bf16.mxu0 %v3328
    %5159 = vmatmul.mubr.bf16.gmra.mrb[0].mxu0 %v3327
    %v5160 = vpop.f32.mrb[0].mxu0
    %v5161 = vadd.f32 %v4398, %v5160
    %v5162 = vpop.f32.mrb[0].mxu0
    %v5163 = vpop.f32.mrb[0].mxu0
    %v5164 = vadd.f32 %v4401, %v5163
    %v5165 = vpop.f32.mrb[0].mxu0
    %5166 = vmatprep.mubr.bf16.mxu0 %v3331
    %5167 = vmatmul.mubr.bf16.gmra.mrb[0].mxu0 %v3330
    %v5168 = vpop.f32.mrb[0].mxu0
    %v5169 = vadd.f32 %v4406, %v5168
    %v5170 = vpop.f32.mrb[0].mxu0
    %v5171 = vpop.f32.mrb[0].mxu0
    %v5172 = vadd.f32 %v4409, %v5171
    %v5173 = vpop.f32.mrb[0].mxu0
    %5174 = vmatprep.mubr.bf16.mxu0 %v3334
    %5175 = vmatmul.mubr.bf16.gmra.mrb[0].mxu0 %v3333
    %v5176 = vpop.f32.mrb[0].mxu0
    %v5177 = vadd.f32 %v4414, %v5176
    %v5178 = vpop.f32.mrb[0].mxu0
    %v5179 = vpop.f32.mrb[0].mxu0
    %v5180 = vadd.f32 %v4417, %v5179
    %v5181 = vpop.f32.mrb[0].mxu0
    %5182 = vmatprep.mubr.bf16.mxu0 %v3337
    %5183 = vmatmul.mubr.bf16.gmra.mrb[0].mxu0 %v3336
    %v5184 = vpop.f32.mrb[0].mxu0
    %v5185 = vadd.f32 %v4422, %v5184
    %v5186 = vpop.f32.mrb[0].mxu0
    %v5187 = vpop.f32.mrb[0].mxu0
    %v5188 = vadd.f32 %v4425, %v5187
    %v5189 = vpop.f32.mrb[0].mxu0
    %5190 = vmatprep.mubr.bf16.mxu0 %v3340
    %5191 = vmatmul.mubr.bf16.gmra.mrb[0].mxu0 %v3339
    %v5192 = vpop.f32.mrb[0].mxu0
    %v5193 = vadd.f32 %v4430, %v5192
    %v5194 = vpop.f32.mrb[0].mxu0
    %v5195 = vpop.f32.mrb[0].mxu0
    %v5196 = vadd.f32 %v4433, %v5195
    %v5197 = vpop.f32.mrb[0].mxu0
    %5198 = vmatprep.mubr.bf16.mxu0 %v3343
    %5199 = vmatmul.mubr.bf16.gmra.mrb[0].mxu0 %v3342
    %v5200 = vpop.f32.mrb[0].mxu0
    %v5201 = vadd.f32 %v4438, %v5200
    %v5202 = vpop.f32.mrb[0].mxu0
    %v5203 = vpop.f32.mrb[0].mxu0
    %v5204 = vadd.f32 %v4441, %v5203
    %v5205 = vpop.f32.mrb[0].mxu0
    %5206 = vdwg.mxu0
    %5207 = vmatprep.subr.bf16.mxu0 0
    %5208 = vmatpush1.bf16.msra.mxu0 %v4734
    %5209 = vmatprep.subr.bf16.mxu0 0
    %5210 = vmatpush1.bf16.msra.mxu0 %v4737
    %5211 = vmatprep.subr.bf16.mxu0 0
    %5212 = vmatpush1.bf16.msra.mxu0 %v4740
    %5213 = vmatprep.subr.bf16.mxu0 0
    %5214 = vmatpush1.bf16.msra.mxu0 %v4743
    %5215 = vmatprep.subr.bf16.mxu0 0
    %5216 = vmatpush1.bf16.msra.mxu0 %v4746
    %5217 = vmatprep.subr.bf16.mxu0 0
    %5218 = vmatpush1.bf16.msra.mxu0 %v4749
    %5219 = vmatprep.subr.bf16.mxu0 0
    %5220 = vmatpush1.bf16.msra.mxu0 %v4752
    %5221 = vmatprep.subr.bf16.mxu0 0
    %5222 = vmatpush1.bf16.msra.mxu0 %v4755
    %5223 = vmatprep.subr.bf16.mxu0 0
    %5224 = vmatpush1.bf16.msra.mxu0 0
    %5225 = vmatprep.subr.bf16.mxu0 0
    %5226 = vmatpush1.bf16.msra.mxu0 0
    %5227 = vmatprep.subr.bf16.mxu0 0
    %5228 = vmatpush1.bf16.msra.mxu0 0
    %5229 = vmatprep.subr.bf16.mxu0 0
    %5230 = vmatpush1.bf16.msra.mxu0 0
    %5231 = vmatprep.subr.bf16.mxu0 0
    %5232 = vmatpush1.bf16.msra.mxu0 0
    %5233 = vmatprep.subr.bf16.mxu0 0
    %5234 = vmatpush1.bf16.msra.mxu0 0
    %5235 = vmatprep.subr.bf16.mxu0 0
    %5236 = vmatpush1.bf16.msra.mxu0 0
    %5237 = vmatprep.subr.bf16.mxu0 0
    %5238 = vmatpush1.bf16.msra.mxu0 0
    %5239 = vmatprep.mubr.bf16.mxu0 0
    %5240 = vmatmul.mubr.bf16.gmra.mrb[0].mxu0 %v3317
    %v5241 = vpop.f32.mrb[0].mxu0
    %v5242 = vadd.f32 %v5129, %v5241
    %v5243 = vpop.f32.mrb[0].mxu0
    %v5244 = vpop.f32.mrb[0].mxu0
    %v5245 = vadd.f32 %v5132, %v5244
    %v5246 = vpop.f32.mrb[0].mxu0
    %5247 = vmatprep.mubr.bf16.mxu0 0
    %5248 = vmatmul.mubr.bf16.gmra.mrb[0].mxu0 %v3320
    %v5249 = vpop.f32.mrb[0].mxu0
    %v5250 = vadd.f32 %v5137, %v5249
    %v5251 = vpop.f32.mrb[0].mxu0
    %v5252 = vpop.f32.mrb[0].mxu0
    %v5253 = vadd.f32 %v5140, %v5252
    %v5254 = vpop.f32.mrb[0].mxu0
    %5255 = vmatprep.mubr.bf16.mxu0 0
    %5256 = vmatmul.mubr.bf16.gmra.mrb[0].mxu0 %v3323
    %v5257 = vpop.f32.mrb[0].mxu0
    %v5258 = vadd.f32 %v5145, %v5257
    %v5259 = vpop.f32.mrb[0].mxu0
    %v5260 = vpop.f32.mrb[0].mxu0
    %v5261 = vadd.f32 %v5148, %v5260
    %v5262 = vpop.f32.mrb[0].mxu0
    %5263 = vmatprep.mubr.bf16.mxu0 0
    %5264 = vmatmul.mubr.bf16.gmra.mrb[0].mxu0 %v3326
    %v5265 = vpop.f32.mrb[0].mxu0
    %v5266 = vadd.f32 %v5153, %v5265
    %v5267 = vpop.f32.mrb[0].mxu0
    %v5268 = vpop.f32.mrb[0].mxu0
    %v5269 = vadd.f32 %v5156, %v5268
    %v5270 = vpop.f32.mrb[0].mxu0
    %5271 = vmatprep.mubr.bf16.mxu0 0
    %5272 = vmatmul.mubr.bf16.gmra.mrb[0].mxu0 %v3329
    %v5273 = vpop.f32.mrb[0].mxu0
    %v5274 = vadd.f32 %v5161, %v5273
    %v5275 = vpop.f32.mrb[0].mxu0
    %v5276 = vpop.f32.mrb[0].mxu0
    %v5277 = vadd.f32 %v5164, %v5276
    %v5278 = vpop.f32.mrb[0].mxu0
    %5279 = vmatprep.mubr.bf16.mxu0 0
    %5280 = vmatmul.mubr.bf16.gmra.mrb[0].mxu0 %v3332
    %v5281 = vpop.f32.mrb[0].mxu0
    %v5282 = vadd.f32 %v5169, %v5281
    %v5283 = vpop.f32.mrb[0].mxu0
    %v5284 = vpop.f32.mrb[0].mxu0
    %v5285 = vadd.f32 %v5172, %v5284
    %v5286 = vpop.f32.mrb[0].mxu0
    %5287 = vmatprep.mubr.bf16.mxu0 0
    %5288 = vmatmul.mubr.bf16.gmra.mrb[0].mxu0 %v3335
    %v5289 = vpop.f32.mrb[0].mxu0
    %v5290 = vadd.f32 %v5177, %v5289
    %v5291 = vpop.f32.mrb[0].mxu0
    %v5292 = vpop.f32.mrb[0].mxu0
    %v5293 = vadd.f32 %v5180, %v5292
    %v5294 = vpop.f32.mrb[0].mxu0
    %5295 = vmatprep.mubr.bf16.mxu0 0
    %5296 = vmatmul.mubr.bf16.gmra.mrb[0].mxu0 %v3338
    %v5297 = vpop.f32.mrb[0].mxu0
    %v5298 = vadd.f32 %v5185, %v5297
    %v5299 = vpop.f32.mrb[0].mxu0
    %v5300 = vpop.f32.mrb[0].mxu0
    %v5301 = vadd.f32 %v5188, %v5300
    %v5302 = vpop.f32.mrb[0].mxu0
    %5303 = vmatprep.mubr.bf16.mxu0 0
    %5304 = vmatmul.mubr.bf16.gmra.mrb[0].mxu0 %v3341
    %v5305 = vpop.f32.mrb[0].mxu0
    %v5306 = vadd.f32 %v5193, %v5305
    %v5307 = vpop.f32.mrb[0].mxu0
    %v5308 = vpop.f32.mrb[0].mxu0
    %v5309 = vadd.f32 %v5196, %v5308
    %v5310 = vpop.f32.mrb[0].mxu0
    %5311 = vmatprep.mubr.bf16.mxu0 0
    %5312 = vmatmul.mubr.bf16.gmra.mrb[0].mxu0 %v3344
    %v5313 = vpop.f32.mrb[0].mxu0
    %v5314 = vadd.f32 %v5201, %v5313
    %v5315 = vpop.f32.mrb[0].mxu0
    %v5316 = vpop.f32.mrb[0].mxu0
    %v5317 = vadd.f32 %v5204, %v5316
    %v5318 = vpop.f32.mrb[0].mxu0
    %5319 = vdwg.mxu0
    %v5320 = vld [vmem:[#allocation14] sm:$0x7]
    %v5322 = vlaneseq
    %v5323 = vshrl.u32 %v5322, 7
    %v5324 = vsub.s32 0, %v5323
    %v5325 = vrot.slane %v5320, %v5324
    %v5326 = vlaneseq
    %v5327 = vshrl.u32 %v5326, 7
    %v5328 = vsub.s32 1, %v5327
    %v5329 = vrot.slane %v5320, %v5328
    %v5330 = vlaneseq
    %v5331 = vshrl.u32 %v5330, 7
    %v5332 = vsub.s32 2, %v5331
    %v5333 = vrot.slane %v5320, %v5332
    %v5337 = vadd.f32 %v4996, %v5325
    %v5338 = vadd.f32 %v4998, %v5329
    %v5339 = vadd.f32 %v5242, %v5333
    %v5340 = vadd.f32 %v5000, %v5325
    %v5341 = vadd.f32 %v5002, %v5329
    %v5342 = vadd.f32 %v5245, %v5333
    %v5343 = vadd.f32 %v5006, %v5325
    %v5344 = vadd.f32 %v5008, %v5329
    %v5345 = vadd.f32 %v5250, %v5333
    %v5346 = vadd.f32 %v5010, %v5325
    %v5347 = vadd.f32 %v5012, %v5329
    %v5348 = vadd.f32 %v5253, %v5333
    %v5349 = vadd.f32 %v5016, %v5325
    %v5350 = vadd.f32 %v5018, %v5329
    %v5351 = vadd.f32 %v5258, %v5333
    %v5352 = vadd.f32 %v5020, %v5325
    %v5353 = vadd.f32 %v5022, %v5329
    %v5354 = vadd.f32 %v5261, %v5333
    %v5355 = vadd.f32 %v5026, %v5325
    %v5356 = vadd.f32 %v5028, %v5329
    %v5357 = vadd.f32 %v5266, %v5333
    %v5358 = vadd.f32 %v5030, %v5325
    %v5359 = vadd.f32 %v5032, %v5329
    %v5360 = vadd.f32 %v5269, %v5333
    %v5361 = vadd.f32 %v5036, %v5325
    %v5362 = vadd.f32 %v5038, %v5329
    %v5363 = vadd.f32 %v5274, %v5333
    %v5364 = vadd.f32 %v5040, %v5325
    %v5365 = vadd.f32 %v5042, %v5329
    %v5366 = vadd.f32 %v5277, %v5333
    %v5367 = vadd.f32 %v5046, %v5325
    %v5368 = vadd.f32 %v5048, %v5329
    %v5369 = vadd.f32 %v5282, %v5333
    %v5370 = vadd.f32 %v5050, %v5325
    %v5371 = vadd.f32 %v5052, %v5329
    %v5372 = vadd.f32 %v5285, %v5333
    %v5373 = vadd.f32 %v5056, %v5325
    %v5374 = vadd.f32 %v5058, %v5329
    %v5375 = vadd.f32 %v5290, %v5333
    %v5376 = vadd.f32 %v5060, %v5325
    %v5377 = vadd.f32 %v5062, %v5329
    %v5378 = vadd.f32 %v5293, %v5333
    %v5379 = vadd.f32 %v5066, %v5325
    %v5380 = vadd.f32 %v5068, %v5329
    %v5381 = vadd.f32 %v5298, %v5333
    %v5382 = vadd.f32 %v5070, %v5325
    %v5383 = vadd.f32 %v5072, %v5329
    %v5384 = vadd.f32 %v5301, %v5333
    %v5385 = vadd.f32 %v5076, %v5325
    %v5386 = vadd.f32 %v5078, %v5329
    %v5387 = vadd.f32 %v5306, %v5333
    %v5388 = vadd.f32 %v5080, %v5325
    %v5389 = vadd.f32 %v5082, %v5329
    %v5390 = vadd.f32 %v5309, %v5333
    %v5391 = vadd.f32 %v5086, %v5325
    %v5392 = vadd.f32 %v5088, %v5329
    %v5393 = vadd.f32 %v5314, %v5333
    %v5394 = vadd.f32 %v5090, %v5325
    %v5395 = vadd.f32 %v5092, %v5329
    %v5396 = vadd.f32 %v5317, %v5333
    %v5397 = vmax.f32 %v5337, 0.0
    %v5398 = vmax.f32 %v5338, 0.0
    %v5399 = vmax.f32 %v5339, 0.0
    %v5400 = vmax.f32 %v5340, 0.0
    %v5401 = vmax.f32 %v5341, 0.0
    %v5402 = vmax.f32 %v5342, 0.0
    %v5403 = vmax.f32 %v5343, 0.0
    %v5404 = vmax.f32 %v5344, 0.0
    %v5405 = vmax.f32 %v5345, 0.0
    %v5406 = vmax.f32 %v5346, 0.0
    %v5407 = vmax.f32 %v5347, 0.0
    %v5408 = vmax.f32 %v5348, 0.0
    %v5409 = vmax.f32 %v5349, 0.0
    %v5410 = vmax.f32 %v5350, 0.0
    %v5411 = vmax.f32 %v5351, 0.0
    %v5412 = vmax.f32 %v5352, 0.0
    %v5413 = vmax.f32 %v5353, 0.0
    %v5414 = vmax.f32 %v5354, 0.0
    %v5415 = vmax.f32 %v5355, 0.0
    %v5416 = vmax.f32 %v5356, 0.0
    %v5417 = vmax.f32 %v5357, 0.0
    %v5418 = vmax.f32 %v5358, 0.0
    %v5419 = vmax.f32 %v5359, 0.0
    %v5420 = vmax.f32 %v5360, 0.0
    %v5421 = vmax.f32 %v5361, 0.0
    %v5422 = vmax.f32 %v5362, 0.0
    %v5423 = vmax.f32 %v5363, 0.0
    %v5424 = vmax.f32 %v5364, 0.0
    %v5425 = vmax.f32 %v5365, 0.0
    %v5426 = vmax.f32 %v5366, 0.0
    %v5427 = vmax.f32 %v5367, 0.0
    %v5428 = vmax.f32 %v5368, 0.0
    %v5429 = vmax.f32 %v5369, 0.0
    %v5430 = vmax.f32 %v5370, 0.0
    %v5431 = vmax.f32 %v5371, 0.0
    %v5432 = vmax.f32 %v5372, 0.0
    %v5433 = vmax.f32 %v5373, 0.0
    %v5434 = vmax.f32 %v5374, 0.0
    %v5435 = vmax.f32 %v5375, 0.0
    %v5436 = vmax.f32 %v5376, 0.0
    %v5437 = vmax.f32 %v5377, 0.0
    %v5438 = vmax.f32 %v5378, 0.0
    %v5439 = vmax.f32 %v5379, 0.0
    %v5440 = vmax.f32 %v5380, 0.0
    %v5441 = vmax.f32 %v5381, 0.0
    %v5442 = vmax.f32 %v5382, 0.0
    %v5443 = vmax.f32 %v5383, 0.0
    %v5444 = vmax.f32 %v5384, 0.0
    %v5445 = vmax.f32 %v5385, 0.0
    %v5446 = vmax.f32 %v5386, 0.0
    %v5447 = vmax.f32 %v5387, 0.0
    %v5448 = vmax.f32 %v5388, 0.0
    %v5449 = vmax.f32 %v5389, 0.0
    %v5450 = vmax.f32 %v5390, 0.0
    %v5451 = vmax.f32 %v5391, 0.0
    %v5452 = vmax.f32 %v5392, 0.0
    %v5453 = vmax.f32 %v5393, 0.0
    %v5454 = vmax.f32 %v5394, 0.0
    %v5455 = vmax.f32 %v5395, 0.0
    %v5456 = vmax.f32 %v5396, 0.0
    %v5457 = vpack.c.bf16 %v5400, %v5397
    %v5458 = vpack.c.bf16 %v5401, %v5398
    %v5459 = vpack.c.bf16 %v5402, %v5399
    %v5460 = vpack.c.bf16 %v5406, %v5403
    %v5461 = vpack.c.bf16 %v5407, %v5404
    %v5462 = vpack.c.bf16 %v5408, %v5405
    %v5463 = vpack.c.bf16 %v5412, %v5409
    %v5464 = vpack.c.bf16 %v5413, %v5410
    %v5465 = vpack.c.bf16 %v5414, %v5411
    %v5466 = vpack.c.bf16 %v5418, %v5415
    %v5467 = vpack.c.bf16 %v5419, %v5416
    %v5468 = vpack.c.bf16 %v5420, %v5417
    %v5469 = vpack.c.bf16 %v5424, %v5421
    %v5470 = vpack.c.bf16 %v5425, %v5422
    %v5471 = vpack.c.bf16 %v5426, %v5423
    %v5472 = vpack.c.bf16 %v5430, %v5427
    %v5473 = vpack.c.bf16 %v5431, %v5428
    %v5474 = vpack.c.bf16 %v5432, %v5429
    %v5475 = vpack.c.bf16 %v5436, %v5433
    %v5476 = vpack.c.bf16 %v5437, %v5434
    %v5477 = vpack.c.bf16 %v5438, %v5435
    %v5478 = vpack.c.bf16 %v5442, %v5439
    %v5479 = vpack.c.bf16 %v5443, %v5440
    %v5480 = vpack.c.bf16 %v5444, %v5441
    %v5481 = vpack.c.bf16 %v5448, %v5445
    %v5482 = vpack.c.bf16 %v5449, %v5446
    %v5483 = vpack.c.bf16 %v5450, %v5447
    %v5484 = vpack.c.bf16 %v5454, %v5451
    %v5485 = vpack.c.bf16 %v5455, %v5452
    %v5486 = vpack.c.bf16 %v5456, %v5453
    %5487 = vst [vmem:[#allocation4] sm:$0xff] %v5457
    %5488 = vst [vmem:[#allocation4 + $0x8] sm:$0xff] %v5458
    %5489 = vst [vmem:[#allocation4 + $0x10] sm:$0xff] %v5459
    %5490 = vst [vmem:[#allocation4 + $0x18] sm:$0xff] %v5460
    %5491 = vst [vmem:[#allocation4 + $0x20] sm:$0xff] %v5461
    %5492 = vst [vmem:[#allocation4 + $0x28] sm:$0xff] %v5462
    %5493 = vst [vmem:[#allocation4 + $0x30] sm:$0xff] %v5463
    %5494 = vst [vmem:[#allocation4 + $0x38] sm:$0xff] %v5464
    %5495 = vst [vmem:[#allocation4 + $0x40] sm:$0xff] %v5465
    %5496 = vst [vmem:[#allocation4 + $0x48] sm:$0xff] %v5466
    %5497 = vst [vmem:[#allocation4 + $0x50] sm:$0xff] %v5467
    %5498 = vst [vmem:[#allocation4 + $0x58] sm:$0xff] %v5468
    %5499 = vst [vmem:[#allocation4 + $0x60] sm:$0xff] %v5469
    %5500 = vst [vmem:[#allocation4 + $0x68] sm:$0xff] %v5470
    %5501 = vst [vmem:[#allocation4 + $0x70] sm:$0xff] %v5471
    %5502 = vst [vmem:[#allocation4 + $0x78] sm:$0xff] %v5472
    %5503 = vst [vmem:[#allocation4 + $0x80] sm:$0xff] %v5473
    %5504 = vst [vmem:[#allocation4 + $0x88] sm:$0xff] %v5474
    %5505 = vst [vmem:[#allocation4 + $0x90] sm:$0xff] %v5475
    %5506 = vst [vmem:[#allocation4 + $0x98] sm:$0xff] %v5476
    %5507 = vst [vmem:[#allocation4 + $0xa0] sm:$0xff] %v5477
    %5508 = vst [vmem:[#allocation4 + $0xa8] sm:$0xff] %v5478
    %5509 = vst [vmem:[#allocation4 + $0xb0] sm:$0xff] %v5479
    %5510 = vst [vmem:[#allocation4 + $0xb8] sm:$0xff] %v5480
    %5511 = vst [vmem:[#allocation4 + $0xc0] sm:$0xff] %v5481
    %5512 = vst [vmem:[#allocation4 + $0xc8] sm:$0xff] %v5482
    %5513 = vst [vmem:[#allocation4 + $0xd0] sm:$0xff] %v5483
    %5514 = vst [vmem:[#allocation4 + $0xd8] sm:$0xff] %v5484
    %5515 = vst [vmem:[#allocation4 + $0xe0] sm:$0xff] %v5485
    %5516 = vst [vmem:[#allocation4 + $0xe8] sm:$0xff] %v5486
    %v5517 = vld [vmem:[#allocation4] sm:$0xff]
    %v5518 = vld [vmem:[#allocation4 + $0x8] sm:$0xff]
    %v5519 = vld [vmem:[#allocation4 + $0x10] sm:$0xff]
    %v5520 = vld [vmem:[#allocation4 + $0x18] sm:$0xff]
    %v5521 = vld [vmem:[#allocation4 + $0x20] sm:$0xff]
    %v5522 = vld [vmem:[#allocation4 + $0x28] sm:$0xff]
    %v5523 = vld [vmem:[#allocation4 + $0x30] sm:$0xff]
    %v5524 = vld [vmem:[#allocation4 + $0x38] sm:$0xff]
    %v5525 = vld [vmem:[#allocation4 + $0x40] sm:$0xff]
    %v5526 = vld [vmem:[#allocation4 + $0x48] sm:$0xff]
    %v5527 = vld [vmem:[#allocation4 + $0x50] sm:$0xff]
    %v5528 = vld [vmem:[#allocation4 + $0x58] sm:$0xff]
    %v5529 = vld [vmem:[#allocation4 + $0x60] sm:$0xff]
    %v5530 = vld [vmem:[#allocation4 + $0x68] sm:$0xff]
    %v5531 = vld [vmem:[#allocation4 + $0x70] sm:$0xff]
    %v5532 = vld [vmem:[#allocation4 + $0x78] sm:$0xff]
    %v5533 = vld [vmem:[#allocation4 + $0x80] sm:$0xff]
    %v5534 = vld [vmem:[#allocation4 + $0x88] sm:$0xff]
    %v5535 = vld [vmem:[#allocation4 + $0x90] sm:$0xff]
    %v5536 = vld [vmem:[#allocation4 + $0x98] sm:$0xff]
    %v5537 = vld [vmem:[#allocation4 + $0xa0] sm:$0xff]
    %v5538 = vld [vmem:[#allocation4 + $0xa8] sm:$0xff]
    %v5539 = vld [vmem:[#allocation4 + $0xb0] sm:$0xff]
    %v5540 = vld [vmem:[#allocation4 + $0xb8] sm:$0xff]
    %v5541 = vld [vmem:[#allocation4 + $0xc0] sm:$0xff]
    %v5542 = vld [vmem:[#allocation4 + $0xc8] sm:$0xff]
    %v5543 = vld [vmem:[#allocation4 + $0xd0] sm:$0xff]
    %v5544 = vld [vmem:[#allocation4 + $0x18] sm:$0xff]
    %v5545 = vld [vmem:[#allocation4 + $0x20] sm:$0xff]
    %v5546 = vld [vmem:[#allocation4 + $0x28] sm:$0xff]
    %v5547 = vld [vmem:[#allocation4 + $0x30] sm:$0xff]
    %v5548 = vld [vmem:[#allocation4 + $0x38] sm:$0xff]
    %v5549 = vld [vmem:[#allocation4 + $0x40] sm:$0xff]
    %v5550 = vld [vmem:[#allocation4 + $0x48] sm:$0xff]
    %v5551 = vld [vmem:[#allocation4 + $0x50] sm:$0xff]
    %v5552 = vld [vmem:[#allocation4 + $0x58] sm:$0xff]
    %v5553 = vld [vmem:[#allocation4 + $0x60] sm:$0xff]
    %v5554 = vld [vmem:[#allocation4 + $0x68] sm:$0xff]
    %v5555 = vld [vmem:[#allocation4 + $0x70] sm:$0xff]
    %v5556 = vld [vmem:[#allocation4 + $0x78] sm:$0xff]
    %v5557 = vld [vmem:[#allocation4 + $0x80] sm:$0xff]
    %v5558 = vld [vmem:[#allocation4 + $0x88] sm:$0xff]
    %v5559 = vld [vmem:[#allocation4 + $0x90] sm:$0xff]
    %v5560 = vld [vmem:[#allocation4 + $0x98] sm:$0xff]
    %v5561 = vld [vmem:[#allocation4 + $0xa0] sm:$0xff]
    %v5562 = vld [vmem:[#allocation4 + $0xa8] sm:$0xff]
    %v5563 = vld [vmem:[#allocation4 + $0xb0] sm:$0xff]
    %v5564 = vld [vmem:[#allocation4 + $0xb8] sm:$0xff]
    %v5565 = vld [vmem:[#allocation4 + $0xc0] sm:$0xff]
    %v5566 = vld [vmem:[#allocation4 + $0xc8] sm:$0xff]
    %v5567 = vld [vmem:[#allocation4 + $0xd0] sm:$0xff]
    %v5568 = vld [vmem:[#allocation4 + $0xd8] sm:$0xff]
    %v5569 = vld [vmem:[#allocation4 + $0xe0] sm:$0xff]
    %v5570 = vld [vmem:[#allocation4 + $0xe8] sm:$0xff]
    %v5571 = vld [vmem:[#allocation16] sm:$0xff]
    %v5572 = vld [vmem:[#allocation16 + $0x8] sm:$0xf]
    %v5573 = vld [vmem:[#allocation16 + $0xc] sm:$0xff]
    %v5574 = vld [vmem:[#allocation16 + $0x14] sm:$0xf]
    %v5575 = vld [vmem:[#allocation16 + $0x18] sm:$0xff]
    %v5576 = vld [vmem:[#allocation16 + $0x20] sm:$0xf]
    %v5577 = vld [vmem:[#allocation16 + $0x24] sm:$0xff]
    %v5578 = vld [vmem:[#allocation16 + $0x2c] sm:$0xf]
    %v5579 = vld [vmem:[#allocation16 + $0x30] sm:$0xff]
    %v5580 = vld [vmem:[#allocation16 + $0x38] sm:$0xf]
    %v5581 = vld [vmem:[#allocation16 + $0x3c] sm:$0xff]
    %v5582 = vld [vmem:[#allocation16 + $0x44] sm:$0xf]
    %v5583 = vld [vmem:[#allocation16 + $0x48] sm:$0xff]
    %v5584 = vld [vmem:[#allocation16 + $0x50] sm:$0xf]
    %v5585 = vld [vmem:[#allocation16 + $0x54] sm:$0xff]
    %v5586 = vld [vmem:[#allocation16 + $0x5c] sm:$0xf]
    %v5587 = vld [vmem:[#allocation16 + $0x60] sm:$0xff]
    %v5588 = vld [vmem:[#allocation16 + $0x68] sm:$0xf]
    %v5589 = vld [vmem:[#allocation16 + $0x6c] sm:$0xff]
    %v5590 = vld [vmem:[#allocation16 + $0x74] sm:$0xf]
    %v5591 = vld [vmem:[#allocation16 + $0x78] sm:$0xff]
    %v5592 = vld [vmem:[#allocation16 + $0x80] sm:$0xf]
    %v5593 = vld [vmem:[#allocation16 + $0x84] sm:$0xff]
    %v5594 = vld [vmem:[#allocation16 + $0x8c] sm:$0xf]
    %v5595 = vld [vmem:[#allocation16 + $0x90] sm:$0xff]
    %v5596 = vld [vmem:[#allocation16 + $0x98] sm:$0xf]
    %v5597 = vld [vmem:[#allocation16 + $0x9c] sm:$0xff]
    %v5598 = vld [vmem:[#allocation16 + $0xa4] sm:$0xf]
    %v5599 = vld [vmem:[#allocation16 + $0xa8] sm:$0xff]
    %v5600 = vld [vmem:[#allocation16 + $0xb0] sm:$0xf]
    %v5601 = vld [vmem:[#allocation16 + $0xb4] sm:$0xff]
    %v5602 = vld [vmem:[#allocation16 + $0xbc] sm:$0xf]
    %v5603 = vld [vmem:[#allocation16 + $0xc0] sm:$0xff]
    %v5604 = vld [vmem:[#allocation16 + $0xc8] sm:$0xf]
    %v5605 = vld [vmem:[#allocation16 + $0xcc] sm:$0xff]
    %v5606 = vld [vmem:[#allocation16 + $0xd4] sm:$0xf]
    %v5607 = vld [vmem:[#allocation16 + $0xd8] sm:$0xff]
    %v5608 = vld [vmem:[#allocation16 + $0xe0] sm:$0xf]
    %v5609 = vld [vmem:[#allocation16 + $0xe4] sm:$0xff]
    %v5610 = vld [vmem:[#allocation16 + $0xec] sm:$0xf]
    %v5611 = vld [vmem:[#allocation16 + $0xf0] sm:$0xff]
    %v5612 = vld [vmem:[#allocation16 + $0xf8] sm:$0xf]
    %v5613 = vld [vmem:[#allocation16 + $0xfc] sm:$0xff]
    %v5614 = vld [vmem:[#allocation16 + $0x104] sm:$0xf]
    %v5615 = vld [vmem:[#allocation16 + $0x108] sm:$0xff]
    %v5616 = vld [vmem:[#allocation16 + $0x110] sm:$0xf]
    %v5617 = vld [vmem:[#allocation16 + $0x114] sm:$0xff]
    %v5618 = vld [vmem:[#allocation16 + $0x11c] sm:$0xf]
    %v5619 = vld [vmem:[#allocation16 + $0x120] sm:$0xff]
    %v5620 = vld [vmem:[#allocation16 + $0x128] sm:$0xf]
    %v5621 = vld [vmem:[#allocation16 + $0x12c] sm:$0xff]
    %v5622 = vld [vmem:[#allocation16 + $0x134] sm:$0xf]
    %v5623 = vld [vmem:[#allocation16 + $0x138] sm:$0xff]
    %v5624 = vld [vmem:[#allocation16 + $0x140] sm:$0xf]
    %v5625 = vld [vmem:[#allocation16 + $0x144] sm:$0xff]
    %v5626 = vld [vmem:[#allocation16 + $0x14c] sm:$0xf]
    %v5627 = vld [vmem:[#allocation16 + $0x150] sm:$0xff]
    %v5628 = vld [vmem:[#allocation16 + $0x158] sm:$0xf]
    %v5629 = vld [vmem:[#allocation16 + $0x15c] sm:$0xff]
    %v5630 = vld [vmem:[#allocation16 + $0x164] sm:$0xf]
    %v5631 = vld [vmem:[#allocation16 + $0x168] sm:$0xff]
    %v5632 = vld [vmem:[#allocation16 + $0x170] sm:$0xf]
    %v5633 = vld [vmem:[#allocation16 + $0x174] sm:$0xff]
    %v5634 = vld [vmem:[#allocation16 + $0x17c] sm:$0xf]
    %v5635 = vld [vmem:[#allocation16 + $0x180] sm:$0xff]
    %v5636 = vld [vmem:[#allocation16 + $0x188] sm:$0xf]
    %v5637 = vld [vmem:[#allocation16 + $0x18c] sm:$0xff]
    %v5638 = vld [vmem:[#allocation16 + $0x194] sm:$0xf]
    %v5639 = vld [vmem:[#allocation16 + $0x198] sm:$0xff]
    %v5640 = vld [vmem:[#allocation16 + $0x1a0] sm:$0xf]
    %v5641 = vld [vmem:[#allocation16 + $0x1a4] sm:$0xff]
    %v5642 = vld [vmem:[#allocation16 + $0x1ac] sm:$0xf]
    %v5643 = vld [vmem:[#allocation16 + $0x1b0] sm:$0xff]
    %v5644 = vld [vmem:[#allocation16 + $0x1b8] sm:$0xf]
    %v5645 = vld [vmem:[#allocation16 + $0x1bc] sm:$0xff]
    %v5646 = vld [vmem:[#allocation16 + $0x1c4] sm:$0xf]
    %v5647 = vld [vmem:[#allocation16 + $0x1c8] sm:$0xff]
    %v5648 = vld [vmem:[#allocation16 + $0x1d0] sm:$0xf]
    %v5649 = vld [vmem:[#allocation16 + $0x1d4] sm:$0xff]
    %v5650 = vld [vmem:[#allocation16 + $0x1dc] sm:$0xf]
    %v5651 = vld [vmem:[#allocation16 + $0x1e0] sm:$0xff]
    %v5652 = vld [vmem:[#allocation16 + $0x1e8] sm:$0xf]
    %v5653 = vld [vmem:[#allocation16 + $0x1ec] sm:$0xff]
    %v5654 = vld [vmem:[#allocation16 + $0x1f4] sm:$0xf]
    %v5655 = vld [vmem:[#allocation16 + $0x1f8] sm:$0xff]
    %v5656 = vld [vmem:[#allocation16 + $0x200] sm:$0xf]
    %v5657 = vld [vmem:[#allocation16 + $0x204] sm:$0xff]
    %v5658 = vld [vmem:[#allocation16 + $0x20c] sm:$0xf]
    %v5659 = vld [vmem:[#allocation16 + $0x210] sm:$0xff]
    %v5660 = vld [vmem:[#allocation16 + $0x218] sm:$0xf]
    %v5661 = vld [vmem:[#allocation16 + $0x21c] sm:$0xff]
    %v5662 = vld [vmem:[#allocation16 + $0x224] sm:$0xf]
    %v5663 = vld [vmem:[#allocation16 + $0x228] sm:$0xff]
    %v5664 = vld [vmem:[#allocation16 + $0x230] sm:$0xf]
    %v5665 = vld [vmem:[#allocation16 + $0x234] sm:$0xff]
    %v5666 = vld [vmem:[#allocation16 + $0x23c] sm:$0xf]
    %s5667 = scalar_lea.vmem [#allocation16], 576
    %v5668 = vld [vmem:[%s5667] sm:$0xff]
    %v5669 = vld [vmem:[%s5667 + $0x8] sm:$0xf]
    %v5670 = vld [vmem:[%s5667 + $0xc] sm:$0xff]
    %v5671 = vld [vmem:[%s5667 + $0x14] sm:$0xf]
    %v5672 = vld [vmem:[%s5667 + $0x18] sm:$0xff]
    %v5673 = vld [vmem:[%s5667 + $0x20] sm:$0xf]
    %v5674 = vld [vmem:[%s5667 + $0x24] sm:$0xff]
    %v5675 = vld [vmem:[%s5667 + $0x2c] sm:$0xf]
    %v5676 = vld [vmem:[%s5667 + $0x30] sm:$0xff]
    %v5677 = vld [vmem:[%s5667 + $0x38] sm:$0xf]
    %v5678 = vld [vmem:[%s5667 + $0x3c] sm:$0xff]
    %v5679 = vld [vmem:[%s5667 + $0x44] sm:$0xf]
    %v5680 = vld [vmem:[%s5667 + $0x48] sm:$0xff]
    %v5681 = vld [vmem:[%s5667 + $0x50] sm:$0xf]
    %v5682 = vld [vmem:[%s5667 + $0x54] sm:$0xff]
    %v5683 = vld [vmem:[%s5667 + $0x5c] sm:$0xf]
    %v5684 = vld [vmem:[%s5667 + $0x60] sm:$0xff]
    %v5685 = vld [vmem:[%s5667 + $0x68] sm:$0xf]
    %v5686 = vld [vmem:[%s5667 + $0x6c] sm:$0xff]
    %v5687 = vld [vmem:[%s5667 + $0x74] sm:$0xf]
    %v5688 = vld [vmem:[%s5667 + $0x78] sm:$0xff]
    %v5689 = vld [vmem:[%s5667 + $0x80] sm:$0xf]
    %v5690 = vld [vmem:[%s5667 + $0x84] sm:$0xff]
    %v5691 = vld [vmem:[%s5667 + $0x8c] sm:$0xf]
    %v5692 = vld [vmem:[%s5667 + $0x90] sm:$0xff]
    %v5693 = vld [vmem:[%s5667 + $0x98] sm:$0xf]
    %v5694 = vld [vmem:[%s5667 + $0x9c] sm:$0xff]
    %v5695 = vld [vmem:[%s5667 + $0xa4] sm:$0xf]
    %v5696 = vld [vmem:[%s5667 + $0xa8] sm:$0xff]
    %v5697 = vld [vmem:[%s5667 + $0xb0] sm:$0xf]
    %v5698 = vld [vmem:[%s5667 + $0xb4] sm:$0xff]
    %v5699 = vld [vmem:[%s5667 + $0xbc] sm:$0xf]
    %v5700 = vld [vmem:[%s5667 + $0xc0] sm:$0xff]
    %v5701 = vld [vmem:[%s5667 + $0xc8] sm:$0xf]
    %v5702 = vld [vmem:[%s5667 + $0xcc] sm:$0xff]
    %v5703 = vld [vmem:[%s5667 + $0xd4] sm:$0xf]
    %v5704 = vld [vmem:[%s5667 + $0xd8] sm:$0xff]
    %v5705 = vld [vmem:[%s5667 + $0xe0] sm:$0xf]
    %v5706 = vld [vmem:[%s5667 + $0xe4] sm:$0xff]
    %v5707 = vld [vmem:[%s5667 + $0xec] sm:$0xf]
    %v5708 = vld [vmem:[%s5667 + $0xf0] sm:$0xff]
    %v5709 = vld [vmem:[%s5667 + $0xf8] sm:$0xf]
    %v5710 = vld [vmem:[%s5667 + $0xfc] sm:$0xff]
    %v5711 = vld [vmem:[%s5667 + $0x104] sm:$0xf]
    %v5712 = vld [vmem:[%s5667 + $0x108] sm:$0xff]
    %v5713 = vld [vmem:[%s5667 + $0x110] sm:$0xf]
    %v5714 = vld [vmem:[%s5667 + $0x114] sm:$0xff]
    %v5715 = vld [vmem:[%s5667 + $0x11c] sm:$0xf]
    %v5716 = vld [vmem:[%s5667 + $0x120] sm:$0xff]
    %v5717 = vld [vmem:[%s5667 + $0x128] sm:$0xf]
    %v5718 = vld [vmem:[%s5667 + $0x12c] sm:$0xff]
    %v5719 = vld [vmem:[%s5667 + $0x134] sm:$0xf]
    %v5720 = vld [vmem:[%s5667 + $0x138] sm:$0xff]
    %v5721 = vld [vmem:[%s5667 + $0x140] sm:$0xf]
    %v5722 = vld [vmem:[%s5667 + $0x144] sm:$0xff]
    %v5723 = vld [vmem:[%s5667 + $0x14c] sm:$0xf]
    %v5724 = vld [vmem:[%s5667 + $0x150] sm:$0xff]
    %v5725 = vld [vmem:[%s5667 + $0x158] sm:$0xf]
    %v5726 = vld [vmem:[%s5667 + $0x15c] sm:$0xff]
    %v5727 = vld [vmem:[%s5667 + $0x164] sm:$0xf]
    %v5728 = vld [vmem:[%s5667 + $0x168] sm:$0xff]
    %v5729 = vld [vmem:[%s5667 + $0x170] sm:$0xf]
    %v5730 = vld [vmem:[%s5667 + $0x174] sm:$0xff]
    %v5731 = vld [vmem:[%s5667 + $0x17c] sm:$0xf]
    %v5732 = vld [vmem:[%s5667 + $0x180] sm:$0xff]
    %v5733 = vld [vmem:[%s5667 + $0x188] sm:$0xf]
    %v5734 = vld [vmem:[%s5667 + $0x18c] sm:$0xff]
    %v5735 = vld [vmem:[%s5667 + $0x194] sm:$0xf]
    %v5736 = vld [vmem:[%s5667 + $0x198] sm:$0xff]
    %v5737 = vld [vmem:[%s5667 + $0x1a0] sm:$0xf]
    %v5738 = vld [vmem:[%s5667 + $0x1a4] sm:$0xff]
    %v5739 = vld [vmem:[%s5667 + $0x1ac] sm:$0xf]
    %v5740 = vld [vmem:[%s5667 + $0x1b0] sm:$0xff]
    %v5741 = vld [vmem:[%s5667 + $0x1b8] sm:$0xf]
    %v5742 = vld [vmem:[%s5667 + $0x1bc] sm:$0xff]
    %v5743 = vld [vmem:[%s5667 + $0x1c4] sm:$0xf]
    %v5744 = vld [vmem:[%s5667 + $0x1c8] sm:$0xff]
    %v5745 = vld [vmem:[%s5667 + $0x1d0] sm:$0xf]
    %v5746 = vld [vmem:[%s5667 + $0x1d4] sm:$0xff]
    %v5747 = vld [vmem:[%s5667 + $0x1dc] sm:$0xf]
    %v5748 = vld [vmem:[%s5667 + $0x1e0] sm:$0xff]
    %v5749 = vld [vmem:[%s5667 + $0x1e8] sm:$0xf]
    %v5750 = vld [vmem:[%s5667 + $0x1ec] sm:$0xff]
    %v5751 = vld [vmem:[%s5667 + $0x1f4] sm:$0xf]
    %v5752 = vld [vmem:[%s5667 + $0x1f8] sm:$0xff]
    %v5753 = vld [vmem:[%s5667 + $0x200] sm:$0xf]
    %v5754 = vld [vmem:[%s5667 + $0x204] sm:$0xff]
    %v5755 = vld [vmem:[%s5667 + $0x20c] sm:$0xf]
    %v5756 = vld [vmem:[%s5667 + $0x210] sm:$0xff]
    %v5757 = vld [vmem:[%s5667 + $0x218] sm:$0xf]
    %v5758 = vld [vmem:[%s5667 + $0x21c] sm:$0xff]
    %v5759 = vld [vmem:[%s5667 + $0x224] sm:$0xf]
    %v5760 = vld [vmem:[%s5667 + $0x228] sm:$0xff]
    %v5761 = vld [vmem:[%s5667 + $0x230] sm:$0xf]
    %v5762 = vld [vmem:[%s5667 + $0x234] sm:$0xff]
    %v5763 = vld [vmem:[%s5667 + $0x23c] sm:$0xf]
    %v5860 = vunpack.c.l.b16 %v5668
    %v5861 = vunpack.c.h.b16 %v5668
    %v5862 = vunpack.c.l.b16 %v5669
    %v5863 = vunpack.c.l.b16 %v5670
    %v5864 = vunpack.c.h.b16 %v5670
    %v5865 = vunpack.c.l.b16 %v5671
    %v5866 = vunpack.c.l.b16 %v5672
    %v5867 = vunpack.c.h.b16 %v5672
    %v5868 = vunpack.c.l.b16 %v5673
    %v5869 = vunpack.c.l.b16 %v5674
    %v5870 = vunpack.c.h.b16 %v5674
    %v5871 = vunpack.c.l.b16 %v5675
    %v5872 = vunpack.c.l.b16 %v5676
    %v5873 = vunpack.c.h.b16 %v5676
    %v5874 = vunpack.c.l.b16 %v5677
    %v5875 = vunpack.c.l.b16 %v5678
    %v5876 = vunpack.c.h.b16 %v5678
    %v5877 = vunpack.c.l.b16 %v5679
    %v5878 = vunpack.c.l.b16 %v5680
    %v5879 = vunpack.c.h.b16 %v5680
    %v5880 = vunpack.c.l.b16 %v5681
    %v5881 = vunpack.c.l.b16 %v5682
    %v5882 = vunpack.c.h.b16 %v5682
    %v5883 = vunpack.c.l.b16 %v5683
    %v5884 = vunpack.c.l.b16 %v5684
    %v5885 = vunpack.c.h.b16 %v5684
    %v5886 = vunpack.c.l.b16 %v5685
    %v5887 = vunpack.c.l.b16 %v5686
    %v5888 = vunpack.c.h.b16 %v5686
    %v5889 = vunpack.c.l.b16 %v5687
    %v5890 = vunpack.c.l.b16 %v5688
    %v5891 = vunpack.c.h.b16 %v5688
    %v5892 = vunpack.c.l.b16 %v5689
    %v5893 = vunpack.c.l.b16 %v5690
    %v5894 = vunpack.c.h.b16 %v5690
    %v5895 = vunpack.c.l.b16 %v5691
    %v5896 = vunpack.c.l.b16 %v5692
    %v5897 = vunpack.c.h.b16 %v5692
    %v5898 = vunpack.c.l.b16 %v5693
    %v5899 = vunpack.c.l.b16 %v5694
    %v5900 = vunpack.c.h.b16 %v5694
    %v5901 = vunpack.c.l.b16 %v5695
    %v5902 = vunpack.c.l.b16 %v5696
    %v5903 = vunpack.c.h.b16 %v5696
    %v5904 = vunpack.c.l.b16 %v5697
    %v5905 = vunpack.c.l.b16 %v5698
    %v5906 = vunpack.c.h.b16 %v5698
    %v5907 = vunpack.c.l.b16 %v5699
    %v5908 = vunpack.c.l.b16 %v5700
    %v5909 = vunpack.c.h.b16 %v5700
    %v5910 = vunpack.c.l.b16 %v5701
    %v5911 = vunpack.c.l.b16 %v5702
    %v5912 = vunpack.c.h.b16 %v5702
    %v5913 = vunpack.c.l.b16 %v5703
    %v5914 = vunpack.c.l.b16 %v5704
    %v5915 = vunpack.c.h.b16 %v5704
    %v5916 = vunpack.c.l.b16 %v5705
    %v5917 = vunpack.c.l.b16 %v5706
    %v5918 = vunpack.c.h.b16 %v5706
    %v5919 = vunpack.c.l.b16 %v5707
    %v5920 = vunpack.c.l.b16 %v5708
    %v5921 = vunpack.c.h.b16 %v5708
    %v5922 = vunpack.c.l.b16 %v5709
    %v5923 = vunpack.c.l.b16 %v5710
    %v5924 = vunpack.c.h.b16 %v5710
    %v5925 = vunpack.c.l.b16 %v5711
    %v5926 = vunpack.c.l.b16 %v5712
    %v5927 = vunpack.c.h.b16 %v5712
    %v5928 = vunpack.c.l.b16 %v5713
    %v5929 = vunpack.c.l.b16 %v5714
    %v5930 = vunpack.c.h.b16 %v5714
    %v5931 = vunpack.c.l.b16 %v5715
    %v5932 = vunpack.c.l.b16 %v5716
    %v5933 = vunpack.c.h.b16 %v5716
    %v5934 = vunpack.c.l.b16 %v5717
    %v5935 = vunpack.c.l.b16 %v5718
    %v5936 = vunpack.c.h.b16 %v5718
    %v5937 = vunpack.c.l.b16 %v5719
    %v5938 = vunpack.c.l.b16 %v5720
    %v5939 = vunpack.c.h.b16 %v5720
    %v5940 = vunpack.c.l.b16 %v5721
    %v5941 = vunpack.c.l.b16 %v5722
    %v5942 = vunpack.c.h.b16 %v5722
    %v5943 = vunpack.c.l.b16 %v5723
    %v5944 = vunpack.c.l.b16 %v5724
    %v5945 = vunpack.c.h.b16 %v5724
    %v5946 = vunpack.c.l.b16 %v5725
    %v5947 = vunpack.c.l.b16 %v5726
    %v5948 = vunpack.c.h.b16 %v5726
    %v5949 = vunpack.c.l.b16 %v5727
    %v5950 = vunpack.c.l.b16 %v5728
    %v5951 = vunpack.c.h.b16 %v5728
    %v5952 = vunpack.c.l.b16 %v5729
    %v5953 = vunpack.c.l.b16 %v5730
    %v5954 = vunpack.c.h.b16 %v5730
    %v5955 = vunpack.c.l.b16 %v5731
    %v5956 = vunpack.c.l.b16 %v5732
    %v5957 = vunpack.c.h.b16 %v5732
    %v5958 = vunpack.c.l.b16 %v5733
    %v5959 = vunpack.c.l.b16 %v5734
    %v5960 = vunpack.c.h.b16 %v5734
    %v5961 = vunpack.c.l.b16 %v5735
    %v5962 = vunpack.c.l.b16 %v5736
    %v5963 = vunpack.c.h.b16 %v5736
    %v5964 = vunpack.c.l.b16 %v5737
    %v5965 = vunpack.c.l.b16 %v5738
    %v5966 = vunpack.c.h.b16 %v5738
    %v5967 = vunpack.c.l.b16 %v5739
    %v5968 = vunpack.c.l.b16 %v5740
    %v5969 = vunpack.c.h.b16 %v5740
    %v5970 = vunpack.c.l.b16 %v5741
    %v5971 = vunpack.c.l.b16 %v5742
    %v5972 = vunpack.c.h.b16 %v5742
    %v5973 = vunpack.c.l.b16 %v5743
    %v5974 = vunpack.c.l.b16 %v5744
    %v5975 = vunpack.c.h.b16 %v5744
    %v5976 = vunpack.c.l.b16 %v5745
    %v5977 = vunpack.c.l.b16 %v5746
    %v5978 = vunpack.c.h.b16 %v5746
    %v5979 = vunpack.c.l.b16 %v5747
    %v5980 = vunpack.c.l.b16 %v5748
    %v5981 = vunpack.c.h.b16 %v5748
    %v5982 = vunpack.c.l.b16 %v5749
    %v5983 = vunpack.c.l.b16 %v5750
    %v5984 = vunpack.c.h.b16 %v5750
    %v5985 = vunpack.c.l.b16 %v5751
    %v5986 = vunpack.c.l.b16 %v5752
    %v5987 = vunpack.c.h.b16 %v5752
    %v5988 = vunpack.c.l.b16 %v5753
    %v5989 = vunpack.c.l.b16 %v5754
    %v5990 = vunpack.c.h.b16 %v5754
    %v5991 = vunpack.c.l.b16 %v5755
    %v5992 = vunpack.c.l.b16 %v5756
    %v5993 = vunpack.c.h.b16 %v5756
    %v5994 = vunpack.c.l.b16 %v5757
    %v5995 = vunpack.c.l.b16 %v5758
    %v5996 = vunpack.c.h.b16 %v5758
    %v5997 = vunpack.c.l.b16 %v5759
    %v5998 = vunpack.c.l.b16 %v5760
    %v5999 = vunpack.c.h.b16 %v5760
    %v6000 = vunpack.c.l.b16 %v5761
    %v6001 = vunpack.c.l.b16 %v5762
    %v6002 = vunpack.c.h.b16 %v5762
    %v6003 = vunpack.c.l.b16 %v5763
    %v6004 = vpack.c.b16 %v5863, %v5860
    %v6005 = vpack.c.b16 %v5864, %v5861
    %v6006 = vpack.c.b16 %v5865, %v5862
    %v6007 = vpack.c.b16 %v5869, %v5866
    %v6008 = vpack.c.b16 %v5870, %v5867
    %v6009 = vpack.c.b16 %v5871, %v5868
    %v6010 = vpack.c.b16 %v5875, %v5872
    %v6011 = vpack.c.b16 %v5876, %v5873
    %v6012 = vpack.c.b16 %v5877, %v5874
    %v6013 = vpack.c.b16 %v5881, %v5878
    %v6014 = vpack.c.b16 %v5882, %v5879
    %v6015 = vpack.c.b16 %v5883, %v5880
    %v6016 = vpack.c.b16 %v5887, %v5884
    %v6017 = vpack.c.b16 %v5888, %v5885
    %v6018 = vpack.c.b16 %v5889, %v5886
    %v6019 = vpack.c.b16 %v5893, %v5890
    %v6020 = vpack.c.b16 %v5894, %v5891
    %v6021 = vpack.c.b16 %v5895, %v5892
    %v6022 = vpack.c.b16 %v5899, %v5896
    %v6023 = vpack.c.b16 %v5900, %v5897
    %v6024 = vpack.c.b16 %v5901, %v5898
    %v6025 = vpack.c.b16 %v5905, %v5902
    %v6026 = vpack.c.b16 %v5906, %v5903
    %v6027 = vpack.c.b16 %v5907, %v5904
    %v6028 = vpack.c.b16 %v5911, %v5908
    %v6029 = vpack.c.b16 %v5912, %v5909
    %v6030 = vpack.c.b16 %v5913, %v5910
    %v6031 = vpack.c.b16 %v5917, %v5914
    %v6032 = vpack.c.b16 %v5918, %v5915
    %v6033 = vpack.c.b16 %v5919, %v5916
    %v6034 = vpack.c.b16 %v5923, %v5920
    %v6035 = vpack.c.b16 %v5924, %v5921
    %v6036 = vpack.c.b16 %v5925, %v5922
    %v6037 = vpack.c.b16 %v5929, %v5926
    %v6038 = vpack.c.b16 %v5930, %v5927
    %v6039 = vpack.c.b16 %v5931, %v5928
    %v6040 = vpack.c.b16 %v5935, %v5932
    %v6041 = vpack.c.b16 %v5936, %v5933
    %v6042 = vpack.c.b16 %v5937, %v5934
    %v6043 = vpack.c.b16 %v5941, %v5938
    %v6044 = vpack.c.b16 %v5942, %v5939
    %v6045 = vpack.c.b16 %v5943, %v5940
    %v6046 = vpack.c.b16 %v5947, %v5944
    %v6047 = vpack.c.b16 %v5948, %v5945
    %v6048 = vpack.c.b16 %v5949, %v5946
    %v6049 = vpack.c.b16 %v5953, %v5950
    %v6050 = vpack.c.b16 %v5954, %v5951
    %v6051 = vpack.c.b16 %v5955, %v5952
    %v6052 = vpack.c.b16 %v5959, %v5956
    %v6053 = vpack.c.b16 %v5960, %v5957
    %v6054 = vpack.c.b16 %v5961, %v5958
    %v6055 = vpack.c.b16 %v5965, %v5962
    %v6056 = vpack.c.b16 %v5966, %v5963
    %v6057 = vpack.c.b16 %v5967, %v5964
    %v6058 = vpack.c.b16 %v5971, %v5968
    %v6059 = vpack.c.b16 %v5972, %v5969
    %v6060 = vpack.c.b16 %v5973, %v5970
    %v6061 = vpack.c.b16 %v5977, %v5974
    %v6062 = vpack.c.b16 %v5978, %v5975
    %v6063 = vpack.c.b16 %v5979, %v5976
    %v6064 = vpack.c.b16 %v5983, %v5980
    %v6065 = vpack.c.b16 %v5984, %v5981
    %v6066 = vpack.c.b16 %v5985, %v5982
    %v6067 = vpack.c.b16 %v5989, %v5986
    %v6068 = vpack.c.b16 %v5990, %v5987
    %v6069 = vpack.c.b16 %v5991, %v5988
    %v6070 = vpack.c.b16 %v5995, %v5992
    %v6071 = vpack.c.b16 %v5996, %v5993
    %v6072 = vpack.c.b16 %v5997, %v5994
    %v6073 = vpack.c.b16 %v6001, %v5998
    %v6074 = vpack.c.b16 %v6002, %v5999
    %v6075 = vpack.c.b16 %v6003, %v6000
    %6148 = vmatprep.subr.bf16.mxu0 %v6005
    %6149 = vmatpush1.bf16.msra.mxu0 %v6004
    %6150 = vmatprep.subr.bf16.mxu0 %v6008
    %6151 = vmatpush1.bf16.msra.mxu0 %v6007
    %6152 = vmatprep.subr.bf16.mxu0 %v6011
    %6153 = vmatpush1.bf16.msra.mxu0 %v6010
    %6154 = vmatprep.subr.bf16.mxu0 %v6014
    %6155 = vmatpush1.bf16.msra.mxu0 %v6013
    %6156 = vmatprep.subr.bf16.mxu0 %v6017
    %6157 = vmatpush1.bf16.msra.mxu0 %v6016
    %6158 = vmatprep.subr.bf16.mxu0 %v6020
    %6159 = vmatpush1.bf16.msra.mxu0 %v6019
    %6160 = vmatprep.subr.bf16.mxu0 %v6023
    %6161 = vmatpush1.bf16.msra.mxu0 %v6022
    %6162 = vmatprep.subr.bf16.mxu0 %v6026
    %6163 = vmatpush1.bf16.msra.mxu0 %v6025
    %6164 = vmatprep.subr.bf16.mxu0 %v6029
    %6165 = vmatpush1.bf16.msra.mxu0 %v6028
    %6166 = vmatprep.subr.bf16.mxu0 %v6032
    %6167 = vmatpush1.bf16.msra.mxu0 %v6031
    %6168 = vmatprep.subr.bf16.mxu0 %v6035
    %6169 = vmatpush1.bf16.msra.mxu0 %v6034
    %6170 = vmatprep.subr.bf16.mxu0 %v6038
    %6171 = vmatpush1.bf16.msra.mxu0 %v6037
    %6172 = vmatprep.subr.bf16.mxu0 %v6041
    %6173 = vmatpush1.bf16.msra.mxu0 %v6040
    %6174 = vmatprep.subr.bf16.mxu0 %v6044
    %6175 = vmatpush1.bf16.msra.mxu0 %v6043
    %6176 = vmatprep.subr.bf16.mxu0 %v6047
    %6177 = vmatpush1.bf16.msra.mxu0 %v6046
    %6178 = vmatprep.subr.bf16.mxu0 %v6050
    %6179 = vmatpush1.bf16.msra.mxu0 %v6049
    %6180 = vmatprep.mubr.bf16.mxu0 %v5545
    %6181 = vmatmul.mubr.bf16.gmra.mrb[0].mxu0 %v5544
    %v6182 = vpop.f32.mrb[0].mxu0
    %v6183 = vadd.f32 0.0, %v6182
    %v6184 = vpop.f32.mrb[0].mxu0
    %v6185 = vadd.f32 0.0, %v6184
    %v6186 = vpop.f32.mrb[0].mxu0
    %v6187 = vadd.f32 0.0, %v6186
    %v6188 = vpop.f32.mrb[0].mxu0
    %v6189 = vadd.f32 0.0, %v6188
    %6190 = vmatprep.mubr.bf16.mxu0 %v5548
    %6191 = vmatmul.mubr.bf16.gmra.mrb[0].mxu0 %v5547
    %v6192 = vpop.f32.mrb[0].mxu0
    %v6193 = vadd.f32 0.0, %v6192
    %v6194 = vpop.f32.mrb[0].mxu0
    %v6195 = vadd.f32 0.0, %v6194
    %v6196 = vpop.f32.mrb[0].mxu0
    %v6197 = vadd.f32 0.0, %v6196
    %v6198 = vpop.f32.mrb[0].mxu0
    %v6199 = vadd.f32 0.0, %v6198
    %6200 = vmatprep.mubr.bf16.mxu0 %v5551
    %6201 = vmatmul.mubr.bf16.gmra.mrb[0].mxu0 %v5550
    %v6202 = vpop.f32.mrb[0].mxu0
    %v6203 = vadd.f32 0.0, %v6202
    %v6204 = vpop.f32.mrb[0].mxu0
    %v6205 = vadd.f32 0.0, %v6204
    %v6206 = vpop.f32.mrb[0].mxu0
    %v6207 = vadd.f32 0.0, %v6206
    %v6208 = vpop.f32.mrb[0].mxu0
    %v6209 = vadd.f32 0.0, %v6208
    %6210 = vmatprep.mubr.bf16.mxu0 %v5554
    %6211 = vmatmul.mubr.bf16.gmra.mrb[0].mxu0 %v5553
    %v6212 = vpop.f32.mrb[0].mxu0
    %v6213 = vadd.f32 0.0, %v6212
    %v6214 = vpop.f32.mrb[0].mxu0
    %v6215 = vadd.f32 0.0, %v6214
    %v6216 = vpop.f32.mrb[0].mxu0
    %v6217 = vadd.f32 0.0, %v6216
    %v6218 = vpop.f32.mrb[0].mxu0
    %v6219 = vadd.f32 0.0, %v6218
    %6220 = vmatprep.mubr.bf16.mxu0 %v5557
    %6221 = vmatmul.mubr.bf16.gmra.mrb[0].mxu0 %v5556
    %v6222 = vpop.f32.mrb[0].mxu0
    %v6223 = vadd.f32 0.0, %v6222
    %v6224 = vpop.f32.mrb[0].mxu0
    %v6225 = vadd.f32 0.0, %v6224
    %v6226 = vpop.f32.mrb[0].mxu0
    %v6227 = vadd.f32 0.0, %v6226
    %v6228 = vpop.f32.mrb[0].mxu0
    %v6229 = vadd.f32 0.0, %v6228
    %6230 = vmatprep.mubr.bf16.mxu0 %v5560
    %6231 = vmatmul.mubr.bf16.gmra.mrb[0].mxu0 %v5559
    %v6232 = vpop.f32.mrb[0].mxu0
    %v6233 = vadd.f32 0.0, %v6232
    %v6234 = vpop.f32.mrb[0].mxu0
    %v6235 = vadd.f32 0.0, %v6234
    %v6236 = vpop.f32.mrb[0].mxu0
    %v6237 = vadd.f32 0.0, %v6236
    %v6238 = vpop.f32.mrb[0].mxu0
    %v6239 = vadd.f32 0.0, %v6238
    %6240 = vmatprep.mubr.bf16.mxu0 %v5563
    %6241 = vmatmul.mubr.bf16.gmra.mrb[0].mxu0 %v5562
    %v6242 = vpop.f32.mrb[0].mxu0
    %v6243 = vadd.f32 0.0, %v6242
    %v6244 = vpop.f32.mrb[0].mxu0
    %v6245 = vadd.f32 0.0, %v6244
    %v6246 = vpop.f32.mrb[0].mxu0
    %v6247 = vadd.f32 0.0, %v6246
    %v6248 = vpop.f32.mrb[0].mxu0
    %v6249 = vadd.f32 0.0, %v6248
    %6250 = vmatprep.mubr.bf16.mxu0 %v5566
    %6251 = vmatmul.mubr.bf16.gmra.mrb[0].mxu0 %v5565
    %v6252 = vpop.f32.mrb[0].mxu0
    %v6253 = vadd.f32 0.0, %v6252
    %v6254 = vpop.f32.mrb[0].mxu0
    %v6255 = vadd.f32 0.0, %v6254
    %v6256 = vpop.f32.mrb[0].mxu0
    %v6257 = vadd.f32 0.0, %v6256
    %v6258 = vpop.f32.mrb[0].mxu0
    %v6259 = vadd.f32 0.0, %v6258
    %6260 = vmatprep.mubr.bf16.mxu0 %v5569
    %6261 = vmatmul.mubr.bf16.gmra.mrb[0].mxu0 %v5568
    %v6262 = vpop.f32.mrb[0].mxu0
    %v6263 = vadd.f32 0.0, %v6262
    %v6264 = vpop.f32.mrb[0].mxu0
    %v6265 = vadd.f32 0.0, %v6264
    %v6266 = vpop.f32.mrb[0].mxu0
    %v6267 = vadd.f32 0.0, %v6266
    %v6268 = vpop.f32.mrb[0].mxu0
    %v6269 = vadd.f32 0.0, %v6268
    %6270 = vdwg.mxu0
    %6271 = vmatprep.subr.bf16.mxu0 %v6053
    %6272 = vmatpush1.bf16.msra.mxu0 %v6052
    %6273 = vmatprep.subr.bf16.mxu0 %v6056
    %6274 = vmatpush1.bf16.msra.mxu0 %v6055
    %6275 = vmatprep.subr.bf16.mxu0 %v6059
    %6276 = vmatpush1.bf16.msra.mxu0 %v6058
    %6277 = vmatprep.subr.bf16.mxu0 %v6062
    %6278 = vmatpush1.bf16.msra.mxu0 %v6061
    %6279 = vmatprep.subr.bf16.mxu0 %v6065
    %6280 = vmatpush1.bf16.msra.mxu0 %v6064
    %6281 = vmatprep.subr.bf16.mxu0 %v6068
    %6282 = vmatpush1.bf16.msra.mxu0 %v6067
    %6283 = vmatprep.subr.bf16.mxu0 %v6071
    %6284 = vmatpush1.bf16.msra.mxu0 %v6070
    %6285 = vmatprep.subr.bf16.mxu0 %v6074
    %6286 = vmatpush1.bf16.msra.mxu0 %v6073
    %6287 = vmatprep.subr.bf16.mxu0 0
    %6288 = vmatpush1.bf16.msra.mxu0 0
    %6289 = vmatprep.subr.bf16.mxu0 0
    %6290 = vmatpush1.bf16.msra.mxu0 0
    %6291 = vmatprep.subr.bf16.mxu0 0
    %6292 = vmatpush1.bf16.msra.mxu0 0
    %6293 = vmatprep.subr.bf16.mxu0 0
    %6294 = vmatpush1.bf16.msra.mxu0 0
    %6295 = vmatprep.subr.bf16.mxu0 0
    %6296 = vmatpush1.bf16.msra.mxu0 0
    %6297 = vmatprep.subr.bf16.mxu0 0
    %6298 = vmatpush1.bf16.msra.mxu0 0
    %6299 = vmatprep.subr.bf16.mxu0 0
    %6300 = vmatpush1.bf16.msra.mxu0 0
    %6301 = vmatprep.subr.bf16.mxu0 0
    %6302 = vmatpush1.bf16.msra.mxu0 0
    %6303 = vmatprep.mubr.bf16.mxu0 0
    %6304 = vmatmul.mubr.bf16.gmra.mrb[0].mxu0 %v5546
    %v6305 = vpop.f32.mrb[0].mxu0
    %v6306 = vadd.f32 %v6183, %v6305
    %v6307 = vpop.f32.mrb[0].mxu0
    %v6308 = vadd.f32 %v6185, %v6307
    %v6309 = vpop.f32.mrb[0].mxu0
    %v6310 = vadd.f32 %v6187, %v6309
    %v6311 = vpop.f32.mrb[0].mxu0
    %v6312 = vadd.f32 %v6189, %v6311
    %6313 = vmatprep.mubr.bf16.mxu0 0
    %6314 = vmatmul.mubr.bf16.gmra.mrb[0].mxu0 %v5549
    %v6315 = vpop.f32.mrb[0].mxu0
    %v6316 = vadd.f32 %v6193, %v6315
    %v6317 = vpop.f32.mrb[0].mxu0
    %v6318 = vadd.f32 %v6195, %v6317
    %v6319 = vpop.f32.mrb[0].mxu0
    %v6320 = vadd.f32 %v6197, %v6319
    %v6321 = vpop.f32.mrb[0].mxu0
    %v6322 = vadd.f32 %v6199, %v6321
    %6323 = vmatprep.mubr.bf16.mxu0 0
    %6324 = vmatmul.mubr.bf16.gmra.mrb[0].mxu0 %v5552
    %v6325 = vpop.f32.mrb[0].mxu0
    %v6326 = vadd.f32 %v6203, %v6325
    %v6327 = vpop.f32.mrb[0].mxu0
    %v6328 = vadd.f32 %v6205, %v6327
    %v6329 = vpop.f32.mrb[0].mxu0
    %v6330 = vadd.f32 %v6207, %v6329
    %v6331 = vpop.f32.mrb[0].mxu0
    %v6332 = vadd.f32 %v6209, %v6331
    %6333 = vmatprep.mubr.bf16.mxu0 0
    %6334 = vmatmul.mubr.bf16.gmra.mrb[0].mxu0 %v5555
    %v6335 = vpop.f32.mrb[0].mxu0
    %v6336 = vadd.f32 %v6213, %v6335
    %v6337 = vpop.f32.mrb[0].mxu0
    %v6338 = vadd.f32 %v6215, %v6337
    %v6339 = vpop.f32.mrb[0].mxu0
    %v6340 = vadd.f32 %v6217, %v6339
    %v6341 = vpop.f32.mrb[0].mxu0
    %v6342 = vadd.f32 %v6219, %v6341
    %6343 = vmatprep.mubr.bf16.mxu0 0
    %6344 = vmatmul.mubr.bf16.gmra.mrb[0].mxu0 %v5558
    %v6345 = vpop.f32.mrb[0].mxu0
    %v6346 = vadd.f32 %v6223, %v6345
    %v6347 = vpop.f32.mrb[0].mxu0
    %v6348 = vadd.f32 %v6225, %v6347
    %v6349 = vpop.f32.mrb[0].mxu0
    %v6350 = vadd.f32 %v6227, %v6349
    %v6351 = vpop.f32.mrb[0].mxu0
    %v6352 = vadd.f32 %v6229, %v6351
    %6353 = vmatprep.mubr.bf16.mxu0 0
    %6354 = vmatmul.mubr.bf16.gmra.mrb[0].mxu0 %v5561
    %v6355 = vpop.f32.mrb[0].mxu0
    %v6356 = vadd.f32 %v6233, %v6355
    %v6357 = vpop.f32.mrb[0].mxu0
    %v6358 = vadd.f32 %v6235, %v6357
    %v6359 = vpop.f32.mrb[0].mxu0
    %v6360 = vadd.f32 %v6237, %v6359
    %v6361 = vpop.f32.mrb[0].mxu0
    %v6362 = vadd.f32 %v6239, %v6361
    %6363 = vmatprep.mubr.bf16.mxu0 0
    %6364 = vmatmul.mubr.bf16.gmra.mrb[0].mxu0 %v5564
    %v6365 = vpop.f32.mrb[0].mxu0
    %v6366 = vadd.f32 %v6243, %v6365
    %v6367 = vpop.f32.mrb[0].mxu0
    %v6368 = vadd.f32 %v6245, %v6367
    %v6369 = vpop.f32.mrb[0].mxu0
    %v6370 = vadd.f32 %v6247, %v6369
    %v6371 = vpop.f32.mrb[0].mxu0
    %v6372 = vadd.f32 %v6249, %v6371
    %6373 = vmatprep.mubr.bf16.mxu0 0
    %6374 = vmatmul.mubr.bf16.gmra.mrb[0].mxu0 %v5567
    %v6375 = vpop.f32.mrb[0].mxu0
    %v6376 = vadd.f32 %v6253, %v6375
    %v6377 = vpop.f32.mrb[0].mxu0
    %v6378 = vadd.f32 %v6255, %v6377
    %v6379 = vpop.f32.mrb[0].mxu0
    %v6380 = vadd.f32 %v6257, %v6379
    %v6381 = vpop.f32.mrb[0].mxu0
    %v6382 = vadd.f32 %v6259, %v6381
    %6383 = vmatprep.mubr.bf16.mxu0 0
    %6384 = vmatmul.mubr.bf16.gmra.mrb[0].mxu0 %v5570
    %v6385 = vpop.f32.mrb[0].mxu0
    %v6386 = vadd.f32 %v6263, %v6385
    %v6387 = vpop.f32.mrb[0].mxu0
    %v6388 = vadd.f32 %v6265, %v6387
    %v6389 = vpop.f32.mrb[0].mxu0
    %v6390 = vadd.f32 %v6267, %v6389
    %v6391 = vpop.f32.mrb[0].mxu0
    %v6392 = vadd.f32 %v6269, %v6391
    %6393 = vdwg.mxu0
    %6394 = vmatprep.subr.bf16.mxu0 0
    %6395 = vmatpush1.bf16.msra.mxu0 %v6006
    %6396 = vmatprep.subr.bf16.mxu0 0
    %6397 = vmatpush1.bf16.msra.mxu0 %v6009
    %6398 = vmatprep.subr.bf16.mxu0 0
    %6399 = vmatpush1.bf16.msra.mxu0 %v6012
    %6400 = vmatprep.subr.bf16.mxu0 0
    %6401 = vmatpush1.bf16.msra.mxu0 %v6015
    %6402 = vmatprep.subr.bf16.mxu0 0
    %6403 = vmatpush1.bf16.msra.mxu0 %v6018
    %6404 = vmatprep.subr.bf16.mxu0 0
    %6405 = vmatpush1.bf16.msra.mxu0 %v6021
    %6406 = vmatprep.subr.bf16.mxu0 0
    %6407 = vmatpush1.bf16.msra.mxu0 %v6024
    %6408 = vmatprep.subr.bf16.mxu0 0
    %6409 = vmatpush1.bf16.msra.mxu0 %v6027
    %6410 = vmatprep.subr.bf16.mxu0 0
    %6411 = vmatpush1.bf16.msra.mxu0 %v6030
    %6412 = vmatprep.subr.bf16.mxu0 0
    %6413 = vmatpush1.bf16.msra.mxu0 %v6033
    %6414 = vmatprep.subr.bf16.mxu0 0
    %6415 = vmatpush1.bf16.msra.mxu0 %v6036
    %6416 = vmatprep.subr.bf16.mxu0 0
    %6417 = vmatpush1.bf16.msra.mxu0 %v6039
    %6418 = vmatprep.subr.bf16.mxu0 0
    %6419 = vmatpush1.bf16.msra.mxu0 %v6042
    %6420 = vmatprep.subr.bf16.mxu0 0
    %6421 = vmatpush1.bf16.msra.mxu0 %v6045
    %6422 = vmatprep.subr.bf16.mxu0 0
    %6423 = vmatpush1.bf16.msra.mxu0 %v6048
    %6424 = vmatprep.subr.bf16.mxu0 0
    %6425 = vmatpush1.bf16.msra.mxu0 %v6051
    %6426 = vmatprep.mubr.bf16.mxu0 %v5545
    %6427 = vmatmul.mubr.bf16.gmra.mrb[0].mxu0 %v5544
    %v6428 = vpop.f32.mrb[0].mxu0
    %v6429 = vadd.f32 0.0, %v6428
    %v6430 = vpop.f32.mrb[0].mxu0
    %v6431 = vpop.f32.mrb[0].mxu0
    %v6432 = vadd.f32 0.0, %v6431
    %v6433 = vpop.f32.mrb[0].mxu0
    %6434 = vmatprep.mubr.bf16.mxu0 %v5548
    %6435 = vmatmul.mubr.bf16.gmra.mrb[0].mxu0 %v5547
    %v6436 = vpop.f32.mrb[0].mxu0
    %v6437 = vadd.f32 0.0, %v6436
    %v6438 = vpop.f32.mrb[0].mxu0
    %v6439 = vpop.f32.mrb[0].mxu0
    %v6440 = vadd.f32 0.0, %v6439
    %v6441 = vpop.f32.mrb[0].mxu0
    %6442 = vmatprep.mubr.bf16.mxu0 %v5551
    %6443 = vmatmul.mubr.bf16.gmra.mrb[0].mxu0 %v5550
    %v6444 = vpop.f32.mrb[0].mxu0
    %v6445 = vadd.f32 0.0, %v6444
    %v6446 = vpop.f32.mrb[0].mxu0
    %v6447 = vpop.f32.mrb[0].mxu0
    %v6448 = vadd.f32 0.0, %v6447
    %v6449 = vpop.f32.mrb[0].mxu0
    %6450 = vmatprep.mubr.bf16.mxu0 %v5554
    %6451 = vmatmul.mubr.bf16.gmra.mrb[0].mxu0 %v5553
    %v6452 = vpop.f32.mrb[0].mxu0
    %v6453 = vadd.f32 0.0, %v6452
    %v6454 = vpop.f32.mrb[0].mxu0
    %v6455 = vpop.f32.mrb[0].mxu0
    %v6456 = vadd.f32 0.0, %v6455
    %v6457 = vpop.f32.mrb[0].mxu0
    %6458 = vmatprep.mubr.bf16.mxu0 %v5557
    %6459 = vmatmul.mubr.bf16.gmra.mrb[0].mxu0 %v5556
    %v6460 = vpop.f32.mrb[0].mxu0
    %v6461 = vadd.f32 0.0, %v6460
    %v6462 = vpop.f32.mrb[0].mxu0
    %v6463 = vpop.f32.mrb[0].mxu0
    %v6464 = vadd.f32 0.0, %v6463
    %v6465 = vpop.f32.mrb[0].mxu0
    %6466 = vmatprep.mubr.bf16.mxu0 %v5560
    %6467 = vmatmul.mubr.bf16.gmra.mrb[0].mxu0 %v5559
    %v6468 = vpop.f32.mrb[0].mxu0
    %v6469 = vadd.f32 0.0, %v6468
    %v6470 = vpop.f32.mrb[0].mxu0
    %v6471 = vpop.f32.mrb[0].mxu0
    %v6472 = vadd.f32 0.0, %v6471
    %v6473 = vpop.f32.mrb[0].mxu0
    %6474 = vmatprep.mubr.bf16.mxu0 %v5563
    %6475 = vmatmul.mubr.bf16.gmra.mrb[0].mxu0 %v5562
    %v6476 = vpop.f32.mrb[0].mxu0
    %v6477 = vadd.f32 0.0, %v6476
    %v6478 = vpop.f32.mrb[0].mxu0
    %v6479 = vpop.f32.mrb[0].mxu0
    %v6480 = vadd.f32 0.0, %v6479
    %v6481 = vpop.f32.mrb[0].mxu0
    %6482 = vmatprep.mubr.bf16.mxu0 %v5566
    %6483 = vmatmul.mubr.bf16.gmra.mrb[0].mxu0 %v5565
    %v6484 = vpop.f32.mrb[0].mxu0
    %v6485 = vadd.f32 0.0, %v6484
    %v6486 = vpop.f32.mrb[0].mxu0
    %v6487 = vpop.f32.mrb[0].mxu0
    %v6488 = vadd.f32 0.0, %v6487
    %v6489 = vpop.f32.mrb[0].mxu0
    %6490 = vmatprep.mubr.bf16.mxu0 %v5569
    %6491 = vmatmul.mubr.bf16.gmra.mrb[0].mxu0 %v5568
    %v6492 = vpop.f32.mrb[0].mxu0
    %v6493 = vadd.f32 0.0, %v6492
    %v6494 = vpop.f32.mrb[0].mxu0
    %v6495 = vpop.f32.mrb[0].mxu0
    %v6496 = vadd.f32 0.0, %v6495
    %v6497 = vpop.f32.mrb[0].mxu0
    %6498 = vdwg.mxu0
    %6499 = vmatprep.subr.bf16.mxu0 0
    %6500 = vmatpush1.bf16.msra.mxu0 %v6054
    %6501 = vmatprep.subr.bf16.mxu0 0
    %6502 = vmatpush1.bf16.msra.mxu0 %v6057
    %6503 = vmatprep.subr.bf16.mxu0 0
    %6504 = vmatpush1.bf16.msra.mxu0 %v6060
    %6505 = vmatprep.subr.bf16.mxu0 0
    %6506 = vmatpush1.bf16.msra.mxu0 %v6063
    %6507 = vmatprep.subr.bf16.mxu0 0
    %6508 = vmatpush1.bf16.msra.mxu0 %v6066
    %6509 = vmatprep.subr.bf16.mxu0 0
    %6510 = vmatpush1.bf16.msra.mxu0 %v6069
    %6511 = vmatprep.subr.bf16.mxu0 0
    %6512 = vmatpush1.bf16.msra.mxu0 %v6072
    %6513 = vmatprep.subr.bf16.mxu0 0
    %6514 = vmatpush1.bf16.msra.mxu0 %v6075
    %6515 = vmatprep.subr.bf16.mxu0 0
    %6516 = vmatpush1.bf16.msra.mxu0 0
    %6517 = vmatprep.subr.bf16.mxu0 0
    %6518 = vmatpush1.bf16.msra.mxu0 0
    %6519 = vmatprep.subr.bf16.mxu0 0
    %6520 = vmatpush1.bf16.msra.mxu0 0
    %6521 = vmatprep.subr.bf16.mxu0 0
    %6522 = vmatpush1.bf16.msra.mxu0 0
    %6523 = vmatprep.subr.bf16.mxu0 0
    %6524 = vmatpush1.bf16.msra.mxu0 0
    %6525 = vmatprep.subr.bf16.mxu0 0
    %6526 = vmatpush1.bf16.msra.mxu0 0
    %6527 = vmatprep.subr.bf16.mxu0 0
    %6528 = vmatpush1.bf16.msra.mxu0 0
    %6529 = vmatprep.subr.bf16.mxu0 0
    %6530 = vmatpush1.bf16.msra.mxu0 0
    %6531 = vmatprep.mubr.bf16.mxu0 0
    %6532 = vmatmul.mubr.bf16.gmra.mrb[0].mxu0 %v5546
    %v6533 = vpop.f32.mrb[0].mxu0
    %v6534 = vadd.f32 %v6429, %v6533
    %v6535 = vpop.f32.mrb[0].mxu0
    %v6536 = vpop.f32.mrb[0].mxu0
    %v6537 = vadd.f32 %v6432, %v6536
    %v6538 = vpop.f32.mrb[0].mxu0
    %6539 = vmatprep.mubr.bf16.mxu0 0
    %6540 = vmatmul.mubr.bf16.gmra.mrb[0].mxu0 %v5549
    %v6541 = vpop.f32.mrb[0].mxu0
    %v6542 = vadd.f32 %v6437, %v6541
    %v6543 = vpop.f32.mrb[0].mxu0
    %v6544 = vpop.f32.mrb[0].mxu0
    %v6545 = vadd.f32 %v6440, %v6544
    %v6546 = vpop.f32.mrb[0].mxu0
    %6547 = vmatprep.mubr.bf16.mxu0 0
    %6548 = vmatmul.mubr.bf16.gmra.mrb[0].mxu0 %v5552
    %v6549 = vpop.f32.mrb[0].mxu0
    %v6550 = vadd.f32 %v6445, %v6549
    %v6551 = vpop.f32.mrb[0].mxu0
    %v6552 = vpop.f32.mrb[0].mxu0
    %v6553 = vadd.f32 %v6448, %v6552
    %v6554 = vpop.f32.mrb[0].mxu0
    %6555 = vmatprep.mubr.bf16.mxu0 0
    %6556 = vmatmul.mubr.bf16.gmra.mrb[0].mxu0 %v5555
    %v6557 = vpop.f32.mrb[0].mxu0
    %v6558 = vadd.f32 %v6453, %v6557
    %v6559 = vpop.f32.mrb[0].mxu0
    %v6560 = vpop.f32.mrb[0].mxu0
    %v6561 = vadd.f32 %v6456, %v6560
    %v6562 = vpop.f32.mrb[0].mxu0
    %6563 = vmatprep.mubr.bf16.mxu0 0
    %6564 = vmatmul.mubr.bf16.gmra.mrb[0].mxu0 %v5558
    %v6565 = vpop.f32.mrb[0].mxu0
    %v6566 = vadd.f32 %v6461, %v6565
    %v6567 = vpop.f32.mrb[0].mxu0
    %v6568 = vpop.f32.mrb[0].mxu0
    %v6569 = vadd.f32 %v6464, %v6568
    %v6570 = vpop.f32.mrb[0].mxu0
    %6571 = vmatprep.mubr.bf16.mxu0 0
    %6572 = vmatmul.mubr.bf16.gmra.mrb[0].mxu0 %v5561
    %v6573 = vpop.f32.mrb[0].mxu0
    %v6574 = vadd.f32 %v6469, %v6573
    %v6575 = vpop.f32.mrb[0].mxu0
    %v6576 = vpop.f32.mrb[0].mxu0
    %v6577 = vadd.f32 %v6472, %v6576
    %v6578 = vpop.f32.mrb[0].mxu0
    %6579 = vmatprep.mubr.bf16.mxu0 0
    %6580 = vmatmul.mubr.bf16.gmra.mrb[0].mxu0 %v5564
    %v6581 = vpop.f32.mrb[0].mxu0
    %v6582 = vadd.f32 %v6477, %v6581
    %v6583 = vpop.f32.mrb[0].mxu0
    %v6584 = vpop.f32.mrb[0].mxu0
    %v6585 = vadd.f32 %v6480, %v6584
    %v6586 = vpop.f32.mrb[0].mxu0
    %6587 = vmatprep.mubr.bf16.mxu0 0
    %6588 = vmatmul.mubr.bf16.gmra.mrb[0].mxu0 %v5567
    %v6589 = vpop.f32.mrb[0].mxu0
    %v6590 = vadd.f32 %v6485, %v6589
    %v6591 = vpop.f32.mrb[0].mxu0
    %v6592 = vpop.f32.mrb[0].mxu0
    %v6593 = vadd.f32 %v6488, %v6592
    %v6594 = vpop.f32.mrb[0].mxu0
    %6595 = vmatprep.mubr.bf16.mxu0 0
    %6596 = vmatmul.mubr.bf16.gmra.mrb[0].mxu0 %v5570
    %v6597 = vpop.f32.mrb[0].mxu0
    %v6598 = vadd.f32 %v6493, %v6597
    %v6599 = vpop.f32.mrb[0].mxu0
    %v6600 = vpop.f32.mrb[0].mxu0
    %v6601 = vadd.f32 %v6496, %v6600
    %v6602 = vpop.f32.mrb[0].mxu0
    %6603 = vdwg.mxu0
    %v6700 = vunpack.c.l.b16 %v5571
    %v6701 = vunpack.c.h.b16 %v5571
    %v6702 = vunpack.c.l.b16 %v5572
    %v6703 = vunpack.c.l.b16 %v5573
    %v6704 = vunpack.c.h.b16 %v5573
    %v6705 = vunpack.c.l.b16 %v5574
    %v6706 = vunpack.c.l.b16 %v5575
    %v6707 = vunpack.c.h.b16 %v5575
    %v6708 = vunpack.c.l.b16 %v5576
    %v6709 = vunpack.c.l.b16 %v5577
    %v6710 = vunpack.c.h.b16 %v5577
    %v6711 = vunpack.c.l.b16 %v5578
    %v6712 = vunpack.c.l.b16 %v5579
    %v6713 = vunpack.c.h.b16 %v5579
    %v6714 = vunpack.c.l.b16 %v5580
    %v6715 = vunpack.c.l.b16 %v5581
    %v6716 = vunpack.c.h.b16 %v5581
    %v6717 = vunpack.c.l.b16 %v5582
    %v6718 = vunpack.c.l.b16 %v5583
    %v6719 = vunpack.c.h.b16 %v5583
    %v6720 = vunpack.c.l.b16 %v5584
    %v6721 = vunpack.c.l.b16 %v5585
    %v6722 = vunpack.c.h.b16 %v5585
    %v6723 = vunpack.c.l.b16 %v5586
    %v6724 = vunpack.c.l.b16 %v5587
    %v6725 = vunpack.c.h.b16 %v5587
    %v6726 = vunpack.c.l.b16 %v5588
    %v6727 = vunpack.c.l.b16 %v5589
    %v6728 = vunpack.c.h.b16 %v5589
    %v6729 = vunpack.c.l.b16 %v5590
    %v6730 = vunpack.c.l.b16 %v5591
    %v6731 = vunpack.c.h.b16 %v5591
    %v6732 = vunpack.c.l.b16 %v5592
    %v6733 = vunpack.c.l.b16 %v5593
    %v6734 = vunpack.c.h.b16 %v5593
    %v6735 = vunpack.c.l.b16 %v5594
    %v6736 = vunpack.c.l.b16 %v5595
    %v6737 = vunpack.c.h.b16 %v5595
    %v6738 = vunpack.c.l.b16 %v5596
    %v6739 = vunpack.c.l.b16 %v5597
    %v6740 = vunpack.c.h.b16 %v5597
    %v6741 = vunpack.c.l.b16 %v5598
    %v6742 = vunpack.c.l.b16 %v5599
    %v6743 = vunpack.c.h.b16 %v5599
    %v6744 = vunpack.c.l.b16 %v5600
    %v6745 = vunpack.c.l.b16 %v5601
    %v6746 = vunpack.c.h.b16 %v5601
    %v6747 = vunpack.c.l.b16 %v5602
    %v6748 = vunpack.c.l.b16 %v5603
    %v6749 = vunpack.c.h.b16 %v5603
    %v6750 = vunpack.c.l.b16 %v5604
    %v6751 = vunpack.c.l.b16 %v5605
    %v6752 = vunpack.c.h.b16 %v5605
    %v6753 = vunpack.c.l.b16 %v5606
    %v6754 = vunpack.c.l.b16 %v5607
    %v6755 = vunpack.c.h.b16 %v5607
    %v6756 = vunpack.c.l.b16 %v5608
    %v6757 = vunpack.c.l.b16 %v5609
    %v6758 = vunpack.c.h.b16 %v5609
    %v6759 = vunpack.c.l.b16 %v5610
    %v6760 = vunpack.c.l.b16 %v5611
    %v6761 = vunpack.c.h.b16 %v5611
    %v6762 = vunpack.c.l.b16 %v5612
    %v6763 = vunpack.c.l.b16 %v5613
    %v6764 = vunpack.c.h.b16 %v5613
    %v6765 = vunpack.c.l.b16 %v5614
    %v6766 = vunpack.c.l.b16 %v5615
    %v6767 = vunpack.c.h.b16 %v5615
    %v6768 = vunpack.c.l.b16 %v5616
    %v6769 = vunpack.c.l.b16 %v5617
    %v6770 = vunpack.c.h.b16 %v5617
    %v6771 = vunpack.c.l.b16 %v5618
    %v6772 = vunpack.c.l.b16 %v5619
    %v6773 = vunpack.c.h.b16 %v5619
    %v6774 = vunpack.c.l.b16 %v5620
    %v6775 = vunpack.c.l.b16 %v5621
    %v6776 = vunpack.c.h.b16 %v5621
    %v6777 = vunpack.c.l.b16 %v5622
    %v6778 = vunpack.c.l.b16 %v5623
    %v6779 = vunpack.c.h.b16 %v5623
    %v6780 = vunpack.c.l.b16 %v5624
    %v6781 = vunpack.c.l.b16 %v5625
    %v6782 = vunpack.c.h.b16 %v5625
    %v6783 = vunpack.c.l.b16 %v5626
    %v6784 = vunpack.c.l.b16 %v5627
    %v6785 = vunpack.c.h.b16 %v5627
    %v6786 = vunpack.c.l.b16 %v5628
    %v6787 = vunpack.c.l.b16 %v5629
    %v6788 = vunpack.c.h.b16 %v5629
    %v6789 = vunpack.c.l.b16 %v5630
    %v6790 = vunpack.c.l.b16 %v5631
    %v6791 = vunpack.c.h.b16 %v5631
    %v6792 = vunpack.c.l.b16 %v5632
    %v6793 = vunpack.c.l.b16 %v5633
    %v6794 = vunpack.c.h.b16 %v5633
    %v6795 = vunpack.c.l.b16 %v5634
    %v6796 = vunpack.c.l.b16 %v5635
    %v6797 = vunpack.c.h.b16 %v5635
    %v6798 = vunpack.c.l.b16 %v5636
    %v6799 = vunpack.c.l.b16 %v5637
    %v6800 = vunpack.c.h.b16 %v5637
    %v6801 = vunpack.c.l.b16 %v5638
    %v6802 = vunpack.c.l.b16 %v5639
    %v6803 = vunpack.c.h.b16 %v5639
    %v6804 = vunpack.c.l.b16 %v5640
    %v6805 = vunpack.c.l.b16 %v5641
    %v6806 = vunpack.c.h.b16 %v5641
    %v6807 = vunpack.c.l.b16 %v5642
    %v6808 = vunpack.c.l.b16 %v5643
    %v6809 = vunpack.c.h.b16 %v5643
    %v6810 = vunpack.c.l.b16 %v5644
    %v6811 = vunpack.c.l.b16 %v5645
    %v6812 = vunpack.c.h.b16 %v5645
    %v6813 = vunpack.c.l.b16 %v5646
    %v6814 = vunpack.c.l.b16 %v5647
    %v6815 = vunpack.c.h.b16 %v5647
    %v6816 = vunpack.c.l.b16 %v5648
    %v6817 = vunpack.c.l.b16 %v5649
    %v6818 = vunpack.c.h.b16 %v5649
    %v6819 = vunpack.c.l.b16 %v5650
    %v6820 = vunpack.c.l.b16 %v5651
    %v6821 = vunpack.c.h.b16 %v5651
    %v6822 = vunpack.c.l.b16 %v5652
    %v6823 = vunpack.c.l.b16 %v5653
    %v6824 = vunpack.c.h.b16 %v5653
    %v6825 = vunpack.c.l.b16 %v5654
    %v6826 = vunpack.c.l.b16 %v5655
    %v6827 = vunpack.c.h.b16 %v5655
    %v6828 = vunpack.c.l.b16 %v5656
    %v6829 = vunpack.c.l.b16 %v5657
    %v6830 = vunpack.c.h.b16 %v5657
    %v6831 = vunpack.c.l.b16 %v5658
    %v6832 = vunpack.c.l.b16 %v5659
    %v6833 = vunpack.c.h.b16 %v5659
    %v6834 = vunpack.c.l.b16 %v5660
    %v6835 = vunpack.c.l.b16 %v5661
    %v6836 = vunpack.c.h.b16 %v5661
    %v6837 = vunpack.c.l.b16 %v5662
    %v6838 = vunpack.c.l.b16 %v5663
    %v6839 = vunpack.c.h.b16 %v5663
    %v6840 = vunpack.c.l.b16 %v5664
    %v6841 = vunpack.c.l.b16 %v5665
    %v6842 = vunpack.c.h.b16 %v5665
    %v6843 = vunpack.c.l.b16 %v5666
    %v6844 = vpack.c.b16 %v6703, %v6700
    %v6845 = vpack.c.b16 %v6704, %v6701
    %v6846 = vpack.c.b16 %v6705, %v6702
    %v6847 = vpack.c.b16 %v6709, %v6706
    %v6848 = vpack.c.b16 %v6710, %v6707
    %v6849 = vpack.c.b16 %v6711, %v6708
    %v6850 = vpack.c.b16 %v6715, %v6712
    %v6851 = vpack.c.b16 %v6716, %v6713
    %v6852 = vpack.c.b16 %v6717, %v6714
    %v6853 = vpack.c.b16 %v6721, %v6718
    %v6854 = vpack.c.b16 %v6722, %v6719
    %v6855 = vpack.c.b16 %v6723, %v6720
    %v6856 = vpack.c.b16 %v6727, %v6724
    %v6857 = vpack.c.b16 %v6728, %v6725
    %v6858 = vpack.c.b16 %v6729, %v6726
    %v6859 = vpack.c.b16 %v6733, %v6730
    %v6860 = vpack.c.b16 %v6734, %v6731
    %v6861 = vpack.c.b16 %v6735, %v6732
    %v6862 = vpack.c.b16 %v6739, %v6736
    %v6863 = vpack.c.b16 %v6740, %v6737
    %v6864 = vpack.c.b16 %v6741, %v6738
    %v6865 = vpack.c.b16 %v6745, %v6742
    %v6866 = vpack.c.b16 %v6746, %v6743
    %v6867 = vpack.c.b16 %v6747, %v6744
    %v6868 = vpack.c.b16 %v6751, %v6748
    %v6869 = vpack.c.b16 %v6752, %v6749
    %v6870 = vpack.c.b16 %v6753, %v6750
    %v6871 = vpack.c.b16 %v6757, %v6754
    %v6872 = vpack.c.b16 %v6758, %v6755
    %v6873 = vpack.c.b16 %v6759, %v6756
    %v6874 = vpack.c.b16 %v6763, %v6760
    %v6875 = vpack.c.b16 %v6764, %v6761
    %v6876 = vpack.c.b16 %v6765, %v6762
    %v6877 = vpack.c.b16 %v6769, %v6766
    %v6878 = vpack.c.b16 %v6770, %v6767
    %v6879 = vpack.c.b16 %v6771, %v6768
    %v6880 = vpack.c.b16 %v6775, %v6772
    %v6881 = vpack.c.b16 %v6776, %v6773
    %v6882 = vpack.c.b16 %v6777, %v6774
    %v6883 = vpack.c.b16 %v6781, %v6778
    %v6884 = vpack.c.b16 %v6782, %v6779
    %v6885 = vpack.c.b16 %v6783, %v6780
    %v6886 = vpack.c.b16 %v6787, %v6784
    %v6887 = vpack.c.b16 %v6788, %v6785
    %v6888 = vpack.c.b16 %v6789, %v6786
    %v6889 = vpack.c.b16 %v6793, %v6790
    %v6890 = vpack.c.b16 %v6794, %v6791
    %v6891 = vpack.c.b16 %v6795, %v6792
    %v6892 = vpack.c.b16 %v6799, %v6796
    %v6893 = vpack.c.b16 %v6800, %v6797
    %v6894 = vpack.c.b16 %v6801, %v6798
    %v6895 = vpack.c.b16 %v6805, %v6802
    %v6896 = vpack.c.b16 %v6806, %v6803
    %v6897 = vpack.c.b16 %v6807, %v6804
    %v6898 = vpack.c.b16 %v6811, %v6808
    %v6899 = vpack.c.b16 %v6812, %v6809
    %v6900 = vpack.c.b16 %v6813, %v6810
    %v6901 = vpack.c.b16 %v6817, %v6814
    %v6902 = vpack.c.b16 %v6818, %v6815
    %v6903 = vpack.c.b16 %v6819, %v6816
    %v6904 = vpack.c.b16 %v6823, %v6820
    %v6905 = vpack.c.b16 %v6824, %v6821
    %v6906 = vpack.c.b16 %v6825, %v6822
    %v6907 = vpack.c.b16 %v6829, %v6826
    %v6908 = vpack.c.b16 %v6830, %v6827
    %v6909 = vpack.c.b16 %v6831, %v6828
    %v6910 = vpack.c.b16 %v6835, %v6832
    %v6911 = vpack.c.b16 %v6836, %v6833
    %v6912 = vpack.c.b16 %v6837, %v6834
    %v6913 = vpack.c.b16 %v6841, %v6838
    %v6914 = vpack.c.b16 %v6842, %v6839
    %v6915 = vpack.c.b16 %v6843, %v6840
    %6988 = vmatprep.subr.bf16.mxu0 %v6845
    %6989 = vmatpush1.bf16.msra.mxu0 %v6844
    %6990 = vmatprep.subr.bf16.mxu0 %v6848
    %6991 = vmatpush1.bf16.msra.mxu0 %v6847
    %6992 = vmatprep.subr.bf16.mxu0 %v6851
    %6993 = vmatpush1.bf16.msra.mxu0 %v6850
    %6994 = vmatprep.subr.bf16.mxu0 %v6854
    %6995 = vmatpush1.bf16.msra.mxu0 %v6853
    %6996 = vmatprep.subr.bf16.mxu0 %v6857
    %6997 = vmatpush1.bf16.msra.mxu0 %v6856
    %6998 = vmatprep.subr.bf16.mxu0 %v6860
    %6999 = vmatpush1.bf16.msra.mxu0 %v6859
    %7000 = vmatprep.subr.bf16.mxu0 %v6863
    %7001 = vmatpush1.bf16.msra.mxu0 %v6862
    %7002 = vmatprep.subr.bf16.mxu0 %v6866
    %7003 = vmatpush1.bf16.msra.mxu0 %v6865
    %7004 = vmatprep.subr.bf16.mxu0 %v6869
    %7005 = vmatpush1.bf16.msra.mxu0 %v6868
    %7006 = vmatprep.subr.bf16.mxu0 %v6872
    %7007 = vmatpush1.bf16.msra.mxu0 %v6871
    %7008 = vmatprep.subr.bf16.mxu0 %v6875
    %7009 = vmatpush1.bf16.msra.mxu0 %v6874
    %7010 = vmatprep.subr.bf16.mxu0 %v6878
    %7011 = vmatpush1.bf16.msra.mxu0 %v6877
    %7012 = vmatprep.subr.bf16.mxu0 %v6881
    %7013 = vmatpush1.bf16.msra.mxu0 %v6880
    %7014 = vmatprep.subr.bf16.mxu0 %v6884
    %7015 = vmatpush1.bf16.msra.mxu0 %v6883
    %7016 = vmatprep.subr.bf16.mxu0 %v6887
    %7017 = vmatpush1.bf16.msra.mxu0 %v6886
    %7018 = vmatprep.subr.bf16.mxu0 %v6890
    %7019 = vmatpush1.bf16.msra.mxu0 %v6889
    %7020 = vmatprep.mubr.bf16.mxu0 %v5518
    %7021 = vmatmul.mubr.bf16.gmra.mrb[0].mxu0 %v5517
    %v7022 = vpop.f32.mrb[0].mxu0
    %v7023 = vadd.f32 %v6306, %v7022
    %v7024 = vpop.f32.mrb[0].mxu0
    %v7025 = vadd.f32 %v6308, %v7024
    %v7026 = vpop.f32.mrb[0].mxu0
    %v7027 = vadd.f32 %v6310, %v7026
    %v7028 = vpop.f32.mrb[0].mxu0
    %v7029 = vadd.f32 %v6312, %v7028
    %7030 = vmatprep.mubr.bf16.mxu0 %v5521
    %7031 = vmatmul.mubr.bf16.gmra.mrb[0].mxu0 %v5520
    %v7032 = vpop.f32.mrb[0].mxu0
    %v7033 = vadd.f32 %v6316, %v7032
    %v7034 = vpop.f32.mrb[0].mxu0
    %v7035 = vadd.f32 %v6318, %v7034
    %v7036 = vpop.f32.mrb[0].mxu0
    %v7037 = vadd.f32 %v6320, %v7036
    %v7038 = vpop.f32.mrb[0].mxu0
    %v7039 = vadd.f32 %v6322, %v7038
    %7040 = vmatprep.mubr.bf16.mxu0 %v5524
    %7041 = vmatmul.mubr.bf16.gmra.mrb[0].mxu0 %v5523
    %v7042 = vpop.f32.mrb[0].mxu0
    %v7043 = vadd.f32 %v6326, %v7042
    %v7044 = vpop.f32.mrb[0].mxu0
    %v7045 = vadd.f32 %v6328, %v7044
    %v7046 = vpop.f32.mrb[0].mxu0
    %v7047 = vadd.f32 %v6330, %v7046
    %v7048 = vpop.f32.mrb[0].mxu0
    %v7049 = vadd.f32 %v6332, %v7048
    %7050 = vmatprep.mubr.bf16.mxu0 %v5527
    %7051 = vmatmul.mubr.bf16.gmra.mrb[0].mxu0 %v5526
    %v7052 = vpop.f32.mrb[0].mxu0
    %v7053 = vadd.f32 %v6336, %v7052
    %v7054 = vpop.f32.mrb[0].mxu0
    %v7055 = vadd.f32 %v6338, %v7054
    %v7056 = vpop.f32.mrb[0].mxu0
    %v7057 = vadd.f32 %v6340, %v7056
    %v7058 = vpop.f32.mrb[0].mxu0
    %v7059 = vadd.f32 %v6342, %v7058
    %7060 = vmatprep.mubr.bf16.mxu0 %v5530
    %7061 = vmatmul.mubr.bf16.gmra.mrb[0].mxu0 %v5529
    %v7062 = vpop.f32.mrb[0].mxu0
    %v7063 = vadd.f32 %v6346, %v7062
    %v7064 = vpop.f32.mrb[0].mxu0
    %v7065 = vadd.f32 %v6348, %v7064
    %v7066 = vpop.f32.mrb[0].mxu0
    %v7067 = vadd.f32 %v6350, %v7066
    %v7068 = vpop.f32.mrb[0].mxu0
    %v7069 = vadd.f32 %v6352, %v7068
    %7070 = vmatprep.mubr.bf16.mxu0 %v5533
    %7071 = vmatmul.mubr.bf16.gmra.mrb[0].mxu0 %v5532
    %v7072 = vpop.f32.mrb[0].mxu0
    %v7073 = vadd.f32 %v6356, %v7072
    %v7074 = vpop.f32.mrb[0].mxu0
    %v7075 = vadd.f32 %v6358, %v7074
    %v7076 = vpop.f32.mrb[0].mxu0
    %v7077 = vadd.f32 %v6360, %v7076
    %v7078 = vpop.f32.mrb[0].mxu0
    %v7079 = vadd.f32 %v6362, %v7078
    %7080 = vmatprep.mubr.bf16.mxu0 %v5536
    %7081 = vmatmul.mubr.bf16.gmra.mrb[0].mxu0 %v5535
    %v7082 = vpop.f32.mrb[0].mxu0
    %v7083 = vadd.f32 %v6366, %v7082
    %v7084 = vpop.f32.mrb[0].mxu0
    %v7085 = vadd.f32 %v6368, %v7084
    %v7086 = vpop.f32.mrb[0].mxu0
    %v7087 = vadd.f32 %v6370, %v7086
    %v7088 = vpop.f32.mrb[0].mxu0
    %v7089 = vadd.f32 %v6372, %v7088
    %7090 = vmatprep.mubr.bf16.mxu0 %v5539
    %7091 = vmatmul.mubr.bf16.gmra.mrb[0].mxu0 %v5538
    %v7092 = vpop.f32.mrb[0].mxu0
    %v7093 = vadd.f32 %v6376, %v7092
    %v7094 = vpop.f32.mrb[0].mxu0
    %v7095 = vadd.f32 %v6378, %v7094
    %v7096 = vpop.f32.mrb[0].mxu0
    %v7097 = vadd.f32 %v6380, %v7096
    %v7098 = vpop.f32.mrb[0].mxu0
    %v7099 = vadd.f32 %v6382, %v7098
    %7100 = vmatprep.mubr.bf16.mxu0 %v5542
    %7101 = vmatmul.mubr.bf16.gmra.mrb[0].mxu0 %v5541
    %v7102 = vpop.f32.mrb[0].mxu0
    %v7103 = vadd.f32 %v6386, %v7102
    %v7104 = vpop.f32.mrb[0].mxu0
    %v7105 = vadd.f32 %v6388, %v7104
    %v7106 = vpop.f32.mrb[0].mxu0
    %v7107 = vadd.f32 %v6390, %v7106
    %v7108 = vpop.f32.mrb[0].mxu0
    %v7109 = vadd.f32 %v6392, %v7108
    %7110 = vdwg.mxu0
    %7111 = vmatprep.subr.bf16.mxu0 %v6893
    %7112 = vmatpush1.bf16.msra.mxu0 %v6892
    %7113 = vmatprep.subr.bf16.mxu0 %v6896
    %7114 = vmatpush1.bf16.msra.mxu0 %v6895
    %7115 = vmatprep.subr.bf16.mxu0 %v6899
    %7116 = vmatpush1.bf16.msra.mxu0 %v6898
    %7117 = vmatprep.subr.bf16.mxu0 %v6902
    %7118 = vmatpush1.bf16.msra.mxu0 %v6901
    %7119 = vmatprep.subr.bf16.mxu0 %v6905
    %7120 = vmatpush1.bf16.msra.mxu0 %v6904
    %7121 = vmatprep.subr.bf16.mxu0 %v6908
    %7122 = vmatpush1.bf16.msra.mxu0 %v6907
    %7123 = vmatprep.subr.bf16.mxu0 %v6911
    %7124 = vmatpush1.bf16.msra.mxu0 %v6910
    %7125 = vmatprep.subr.bf16.mxu0 %v6914
    %7126 = vmatpush1.bf16.msra.mxu0 %v6913
    %7127 = vmatprep.subr.bf16.mxu0 0
    %7128 = vmatpush1.bf16.msra.mxu0 0
    %7129 = vmatprep.subr.bf16.mxu0 0
    %7130 = vmatpush1.bf16.msra.mxu0 0
    %7131 = vmatprep.subr.bf16.mxu0 0
    %7132 = vmatpush1.bf16.msra.mxu0 0
    %7133 = vmatprep.subr.bf16.mxu0 0
    %7134 = vmatpush1.bf16.msra.mxu0 0
    %7135 = vmatprep.subr.bf16.mxu0 0
    %7136 = vmatpush1.bf16.msra.mxu0 0
    %7137 = vmatprep.subr.bf16.mxu0 0
    %7138 = vmatpush1.bf16.msra.mxu0 0
    %7139 = vmatprep.subr.bf16.mxu0 0
    %7140 = vmatpush1.bf16.msra.mxu0 0
    %7141 = vmatprep.subr.bf16.mxu0 0
    %7142 = vmatpush1.bf16.msra.mxu0 0
    %7143 = vmatprep.mubr.bf16.mxu0 0
    %7144 = vmatmul.mubr.bf16.gmra.mrb[0].mxu0 %v5519
    %v7145 = vpop.f32.mrb[0].mxu0
    %v7146 = vadd.f32 %v7023, %v7145
    %v7147 = vpop.f32.mrb[0].mxu0
    %v7148 = vadd.f32 %v7025, %v7147
    %v7149 = vpop.f32.mrb[0].mxu0
    %v7150 = vadd.f32 %v7027, %v7149
    %v7151 = vpop.f32.mrb[0].mxu0
    %v7152 = vadd.f32 %v7029, %v7151
    %7153 = vmatprep.mubr.bf16.mxu0 0
    %7154 = vmatmul.mubr.bf16.gmra.mrb[0].mxu0 %v5522
    %v7155 = vpop.f32.mrb[0].mxu0
    %v7156 = vadd.f32 %v7033, %v7155
    %v7157 = vpop.f32.mrb[0].mxu0
    %v7158 = vadd.f32 %v7035, %v7157
    %v7159 = vpop.f32.mrb[0].mxu0
    %v7160 = vadd.f32 %v7037, %v7159
    %v7161 = vpop.f32.mrb[0].mxu0
    %v7162 = vadd.f32 %v7039, %v7161
    %7163 = vmatprep.mubr.bf16.mxu0 0
    %7164 = vmatmul.mubr.bf16.gmra.mrb[0].mxu0 %v5525
    %v7165 = vpop.f32.mrb[0].mxu0
    %v7166 = vadd.f32 %v7043, %v7165
    %v7167 = vpop.f32.mrb[0].mxu0
    %v7168 = vadd.f32 %v7045, %v7167
    %v7169 = vpop.f32.mrb[0].mxu0
    %v7170 = vadd.f32 %v7047, %v7169
    %v7171 = vpop.f32.mrb[0].mxu0
    %v7172 = vadd.f32 %v7049, %v7171
    %7173 = vmatprep.mubr.bf16.mxu0 0
    %7174 = vmatmul.mubr.bf16.gmra.mrb[0].mxu0 %v5528
    %v7175 = vpop.f32.mrb[0].mxu0
    %v7176 = vadd.f32 %v7053, %v7175
    %v7177 = vpop.f32.mrb[0].mxu0
    %v7178 = vadd.f32 %v7055, %v7177
    %v7179 = vpop.f32.mrb[0].mxu0
    %v7180 = vadd.f32 %v7057, %v7179
    %v7181 = vpop.f32.mrb[0].mxu0
    %v7182 = vadd.f32 %v7059, %v7181
    %7183 = vmatprep.mubr.bf16.mxu0 0
    %7184 = vmatmul.mubr.bf16.gmra.mrb[0].mxu0 %v5531
    %v7185 = vpop.f32.mrb[0].mxu0
    %v7186 = vadd.f32 %v7063, %v7185
    %v7187 = vpop.f32.mrb[0].mxu0
    %v7188 = vadd.f32 %v7065, %v7187
    %v7189 = vpop.f32.mrb[0].mxu0
    %v7190 = vadd.f32 %v7067, %v7189
    %v7191 = vpop.f32.mrb[0].mxu0
    %v7192 = vadd.f32 %v7069, %v7191
    %7193 = vmatprep.mubr.bf16.mxu0 0
    %7194 = vmatmul.mubr.bf16.gmra.mrb[0].mxu0 %v5534
    %v7195 = vpop.f32.mrb[0].mxu0
    %v7196 = vadd.f32 %v7073, %v7195
    %v7197 = vpop.f32.mrb[0].mxu0
    %v7198 = vadd.f32 %v7075, %v7197
    %v7199 = vpop.f32.mrb[0].mxu0
    %v7200 = vadd.f32 %v7077, %v7199
    %v7201 = vpop.f32.mrb[0].mxu0
    %v7202 = vadd.f32 %v7079, %v7201
    %7203 = vmatprep.mubr.bf16.mxu0 0
    %7204 = vmatmul.mubr.bf16.gmra.mrb[0].mxu0 %v5537
    %v7205 = vpop.f32.mrb[0].mxu0
    %v7206 = vadd.f32 %v7083, %v7205
    %v7207 = vpop.f32.mrb[0].mxu0
    %v7208 = vadd.f32 %v7085, %v7207
    %v7209 = vpop.f32.mrb[0].mxu0
    %v7210 = vadd.f32 %v7087, %v7209
    %v7211 = vpop.f32.mrb[0].mxu0
    %v7212 = vadd.f32 %v7089, %v7211
    %7213 = vmatprep.mubr.bf16.mxu0 0
    %7214 = vmatmul.mubr.bf16.gmra.mrb[0].mxu0 %v5540
    %v7215 = vpop.f32.mrb[0].mxu0
    %v7216 = vadd.f32 %v7093, %v7215
    %v7217 = vpop.f32.mrb[0].mxu0
    %v7218 = vadd.f32 %v7095, %v7217
    %v7219 = vpop.f32.mrb[0].mxu0
    %v7220 = vadd.f32 %v7097, %v7219
    %v7221 = vpop.f32.mrb[0].mxu0
    %v7222 = vadd.f32 %v7099, %v7221
    %7223 = vmatprep.mubr.bf16.mxu0 0
    %7224 = vmatmul.mubr.bf16.gmra.mrb[0].mxu0 %v5543
    %v7225 = vpop.f32.mrb[0].mxu0
    %v7226 = vadd.f32 %v7103, %v7225
    %v7227 = vpop.f32.mrb[0].mxu0
    %v7228 = vadd.f32 %v7105, %v7227
    %v7229 = vpop.f32.mrb[0].mxu0
    %v7230 = vadd.f32 %v7107, %v7229
    %v7231 = vpop.f32.mrb[0].mxu0
    %v7232 = vadd.f32 %v7109, %v7231
    %7233 = vdwg.mxu0
    %7234 = vmatprep.subr.bf16.mxu0 0
    %7235 = vmatpush1.bf16.msra.mxu0 %v6846
    %7236 = vmatprep.subr.bf16.mxu0 0
    %7237 = vmatpush1.bf16.msra.mxu0 %v6849
    %7238 = vmatprep.subr.bf16.mxu0 0
    %7239 = vmatpush1.bf16.msra.mxu0 %v6852
    %7240 = vmatprep.subr.bf16.mxu0 0
    %7241 = vmatpush1.bf16.msra.mxu0 %v6855
    %7242 = vmatprep.subr.bf16.mxu0 0
    %7243 = vmatpush1.bf16.msra.mxu0 %v6858
    %7244 = vmatprep.subr.bf16.mxu0 0
    %7245 = vmatpush1.bf16.msra.mxu0 %v6861
    %7246 = vmatprep.subr.bf16.mxu0 0
    %7247 = vmatpush1.bf16.msra.mxu0 %v6864
    %7248 = vmatprep.subr.bf16.mxu0 0
    %7249 = vmatpush1.bf16.msra.mxu0 %v6867
    %7250 = vmatprep.subr.bf16.mxu0 0
    %7251 = vmatpush1.bf16.msra.mxu0 %v6870
    %7252 = vmatprep.subr.bf16.mxu0 0
    %7253 = vmatpush1.bf16.msra.mxu0 %v6873
    %7254 = vmatprep.subr.bf16.mxu0 0
    %7255 = vmatpush1.bf16.msra.mxu0 %v6876
    %7256 = vmatprep.subr.bf16.mxu0 0
    %7257 = vmatpush1.bf16.msra.mxu0 %v6879
    %7258 = vmatprep.subr.bf16.mxu0 0
    %7259 = vmatpush1.bf16.msra.mxu0 %v6882
    %7260 = vmatprep.subr.bf16.mxu0 0
    %7261 = vmatpush1.bf16.msra.mxu0 %v6885
    %7262 = vmatprep.subr.bf16.mxu0 0
    %7263 = vmatpush1.bf16.msra.mxu0 %v6888
    %7264 = vmatprep.subr.bf16.mxu0 0
    %7265 = vmatpush1.bf16.msra.mxu0 %v6891
    %7266 = vmatprep.mubr.bf16.mxu0 %v5518
    %7267 = vmatmul.mubr.bf16.gmra.mrb[0].mxu0 %v5517
    %v7268 = vpop.f32.mrb[0].mxu0
    %v7269 = vadd.f32 %v6534, %v7268
    %v7270 = vpop.f32.mrb[0].mxu0
    %v7271 = vpop.f32.mrb[0].mxu0
    %v7272 = vadd.f32 %v6537, %v7271
    %v7273 = vpop.f32.mrb[0].mxu0
    %7274 = vmatprep.mubr.bf16.mxu0 %v5521
    %7275 = vmatmul.mubr.bf16.gmra.mrb[0].mxu0 %v5520
    %v7276 = vpop.f32.mrb[0].mxu0
    %v7277 = vadd.f32 %v6542, %v7276
    %v7278 = vpop.f32.mrb[0].mxu0
    %v7279 = vpop.f32.mrb[0].mxu0
    %v7280 = vadd.f32 %v6545, %v7279
    %v7281 = vpop.f32.mrb[0].mxu0
    %7282 = vmatprep.mubr.bf16.mxu0 %v5524
    %7283 = vmatmul.mubr.bf16.gmra.mrb[0].mxu0 %v5523
    %v7284 = vpop.f32.mrb[0].mxu0
    %v7285 = vadd.f32 %v6550, %v7284
    %v7286 = vpop.f32.mrb[0].mxu0
    %v7287 = vpop.f32.mrb[0].mxu0
    %v7288 = vadd.f32 %v6553, %v7287
    %v7289 = vpop.f32.mrb[0].mxu0
    %7290 = vmatprep.mubr.bf16.mxu0 %v5527
    %7291 = vmatmul.mubr.bf16.gmra.mrb[0].mxu0 %v5526
    %v7292 = vpop.f32.mrb[0].mxu0
    %v7293 = vadd.f32 %v6558, %v7292
    %v7294 = vpop.f32.mrb[0].mxu0
    %v7295 = vpop.f32.mrb[0].mxu0
    %v7296 = vadd.f32 %v6561, %v7295
    %v7297 = vpop.f32.mrb[0].mxu0
    %7298 = vmatprep.mubr.bf16.mxu0 %v5530
    %7299 = vmatmul.mubr.bf16.gmra.mrb[0].mxu0 %v5529
    %v7300 = vpop.f32.mrb[0].mxu0
    %v7301 = vadd.f32 %v6566, %v7300
    %v7302 = vpop.f32.mrb[0].mxu0
    %v7303 = vpop.f32.mrb[0].mxu0
    %v7304 = vadd.f32 %v6569, %v7303
    %v7305 = vpop.f32.mrb[0].mxu0
    %7306 = vmatprep.mubr.bf16.mxu0 %v5533
    %7307 = vmatmul.mubr.bf16.gmra.mrb[0].mxu0 %v5532
    %v7308 = vpop.f32.mrb[0].mxu0
    %v7309 = vadd.f32 %v6574, %v7308
    %v7310 = vpop.f32.mrb[0].mxu0
    %v7311 = vpop.f32.mrb[0].mxu0
    %v7312 = vadd.f32 %v6577, %v7311
    %v7313 = vpop.f32.mrb[0].mxu0
    %7314 = vmatprep.mubr.bf16.mxu0 %v5536
    %7315 = vmatmul.mubr.bf16.gmra.mrb[0].mxu0 %v5535
    %v7316 = vpop.f32.mrb[0].mxu0
    %v7317 = vadd.f32 %v6582, %v7316
    %v7318 = vpop.f32.mrb[0].mxu0
    %v7319 = vpop.f32.mrb[0].mxu0
    %v7320 = vadd.f32 %v6585, %v7319
    %v7321 = vpop.f32.mrb[0].mxu0
    %7322 = vmatprep.mubr.bf16.mxu0 %v5539
    %7323 = vmatmul.mubr.bf16.gmra.mrb[0].mxu0 %v5538
    %v7324 = vpop.f32.mrb[0].mxu0
    %v7325 = vadd.f32 %v6590, %v7324
    %v7326 = vpop.f32.mrb[0].mxu0
    %v7327 = vpop.f32.mrb[0].mxu0
    %v7328 = vadd.f32 %v6593, %v7327
    %v7329 = vpop.f32.mrb[0].mxu0
    %7330 = vmatprep.mubr.bf16.mxu0 %v5542
    %7331 = vmatmul.mubr.bf16.gmra.mrb[0].mxu0 %v5541
    %v7332 = vpop.f32.mrb[0].mxu0
    %v7333 = vadd.f32 %v6598, %v7332
    %v7334 = vpop.f32.mrb[0].mxu0
    %v7335 = vpop.f32.mrb[0].mxu0
    %v7336 = vadd.f32 %v6601, %v7335
    %v7337 = vpop.f32.mrb[0].mxu0
    %7338 = vdwg.mxu0
    %7339 = vmatprep.subr.bf16.mxu0 0
    %7340 = vmatpush1.bf16.msra.mxu0 %v6894
    %7341 = vmatprep.subr.bf16.mxu0 0
    %7342 = vmatpush1.bf16.msra.mxu0 %v6897
    %7343 = vmatprep.subr.bf16.mxu0 0
    %7344 = vmatpush1.bf16.msra.mxu0 %v6900
    %7345 = vmatprep.subr.bf16.mxu0 0
    %7346 = vmatpush1.bf16.msra.mxu0 %v6903
    %7347 = vmatprep.subr.bf16.mxu0 0
    %7348 = vmatpush1.bf16.msra.mxu0 %v6906
    %7349 = vmatprep.subr.bf16.mxu0 0
    %7350 = vmatpush1.bf16.msra.mxu0 %v6909
    %7351 = vmatprep.subr.bf16.mxu0 0
    %7352 = vmatpush1.bf16.msra.mxu0 %v6912
    %7353 = vmatprep.subr.bf16.mxu0 0
    %7354 = vmatpush1.bf16.msra.mxu0 %v6915
    %7355 = vmatprep.subr.bf16.mxu0 0
    %7356 = vmatpush1.bf16.msra.mxu0 0
    %7357 = vmatprep.subr.bf16.mxu0 0
    %7358 = vmatpush1.bf16.msra.mxu0 0
    %7359 = vmatprep.subr.bf16.mxu0 0
    %7360 = vmatpush1.bf16.msra.mxu0 0
    %7361 = vmatprep.subr.bf16.mxu0 0
    %7362 = vmatpush1.bf16.msra.mxu0 0
    %7363 = vmatprep.subr.bf16.mxu0 0
    %7364 = vmatpush1.bf16.msra.mxu0 0
    %7365 = vmatprep.subr.bf16.mxu0 0
    %7366 = vmatpush1.bf16.msra.mxu0 0
    %7367 = vmatprep.subr.bf16.mxu0 0
    %7368 = vmatpush1.bf16.msra.mxu0 0
    %7369 = vmatprep.subr.bf16.mxu0 0
    %7370 = vmatpush1.bf16.msra.mxu0 0
    %7371 = vmatprep.mubr.bf16.mxu0 0
    %7372 = vmatmul.mubr.bf16.gmra.mrb[0].mxu0 %v5519
    %v7373 = vpop.f32.mrb[0].mxu0
    %v7374 = vadd.f32 %v7269, %v7373
    %v7375 = vpop.f32.mrb[0].mxu0
    %v7376 = vpop.f32.mrb[0].mxu0
    %v7377 = vadd.f32 %v7272, %v7376
    %v7378 = vpop.f32.mrb[0].mxu0
    %7379 = vmatprep.mubr.bf16.mxu0 0
    %7380 = vmatmul.mubr.bf16.gmra.mrb[0].mxu0 %v5522
    %v7381 = vpop.f32.mrb[0].mxu0
    %v7382 = vadd.f32 %v7277, %v7381
    %v7383 = vpop.f32.mrb[0].mxu0
    %v7384 = vpop.f32.mrb[0].mxu0
    %v7385 = vadd.f32 %v7280, %v7384
    %v7386 = vpop.f32.mrb[0].mxu0
    %7387 = vmatprep.mubr.bf16.mxu0 0
    %7388 = vmatmul.mubr.bf16.gmra.mrb[0].mxu0 %v5525
    %v7389 = vpop.f32.mrb[0].mxu0
    %v7390 = vadd.f32 %v7285, %v7389
    %v7391 = vpop.f32.mrb[0].mxu0
    %v7392 = vpop.f32.mrb[0].mxu0
    %v7393 = vadd.f32 %v7288, %v7392
    %v7394 = vpop.f32.mrb[0].mxu0
    %7395 = vmatprep.mubr.bf16.mxu0 0
    %7396 = vmatmul.mubr.bf16.gmra.mrb[0].mxu0 %v5528
    %v7397 = vpop.f32.mrb[0].mxu0
    %v7398 = vadd.f32 %v7293, %v7397
    %v7399 = vpop.f32.mrb[0].mxu0
    %v7400 = vpop.f32.mrb[0].mxu0
    %v7401 = vadd.f32 %v7296, %v7400
    %v7402 = vpop.f32.mrb[0].mxu0
    %7403 = vmatprep.mubr.bf16.mxu0 0
    %7404 = vmatmul.mubr.bf16.gmra.mrb[0].mxu0 %v5531
    %v7405 = vpop.f32.mrb[0].mxu0
    %v7406 = vadd.f32 %v7301, %v7405
    %v7407 = vpop.f32.mrb[0].mxu0
    %v7408 = vpop.f32.mrb[0].mxu0
    %v7409 = vadd.f32 %v7304, %v7408
    %v7410 = vpop.f32.mrb[0].mxu0
    %7411 = vmatprep.mubr.bf16.mxu0 0
    %7412 = vmatmul.mubr.bf16.gmra.mrb[0].mxu0 %v5534
    %v7413 = vpop.f32.mrb[0].mxu0
    %v7414 = vadd.f32 %v7309, %v7413
    %v7415 = vpop.f32.mrb[0].mxu0
    %v7416 = vpop.f32.mrb[0].mxu0
    %v7417 = vadd.f32 %v7312, %v7416
    %v7418 = vpop.f32.mrb[0].mxu0
    %7419 = vmatprep.mubr.bf16.mxu0 0
    %7420 = vmatmul.mubr.bf16.gmra.mrb[0].mxu0 %v5537
    %v7421 = vpop.f32.mrb[0].mxu0
    %v7422 = vadd.f32 %v7317, %v7421
    %v7423 = vpop.f32.mrb[0].mxu0
    %v7424 = vpop.f32.mrb[0].mxu0
    %v7425 = vadd.f32 %v7320, %v7424
    %v7426 = vpop.f32.mrb[0].mxu0
    %7427 = vmatprep.mubr.bf16.mxu0 0
    %7428 = vmatmul.mubr.bf16.gmra.mrb[0].mxu0 %v5540
    %v7429 = vpop.f32.mrb[0].mxu0
    %v7430 = vadd.f32 %v7325, %v7429
    %v7431 = vpop.f32.mrb[0].mxu0
    %v7432 = vpop.f32.mrb[0].mxu0
    %v7433 = vadd.f32 %v7328, %v7432
    %v7434 = vpop.f32.mrb[0].mxu0
    %7435 = vmatprep.mubr.bf16.mxu0 0
    %7436 = vmatmul.mubr.bf16.gmra.mrb[0].mxu0 %v5543
    %v7437 = vpop.f32.mrb[0].mxu0
    %v7438 = vadd.f32 %v7333, %v7437
    %v7439 = vpop.f32.mrb[0].mxu0
    %v7440 = vpop.f32.mrb[0].mxu0
    %v7441 = vadd.f32 %v7336, %v7440
    %v7442 = vpop.f32.mrb[0].mxu0
    %7443 = vdwg.mxu0
    %v7444 = vld [vmem:[#allocation17] sm:$0x7]
    %v7446 = vlaneseq
    %v7447 = vshrl.u32 %v7446, 7
    %v7448 = vsub.s32 0, %v7447
    %v7449 = vrot.slane %v7444, %v7448
    %v7450 = vlaneseq
    %v7451 = vshrl.u32 %v7450, 7
    %v7452 = vsub.s32 1, %v7451
    %v7453 = vrot.slane %v7444, %v7452
    %v7454 = vlaneseq
    %v7455 = vshrl.u32 %v7454, 7
    %v7456 = vsub.s32 2, %v7455
    %v7457 = vrot.slane %v7444, %v7456
    %v7461 = vadd.f32 %v7146, %v7449
    %v7462 = vadd.f32 %v7148, %v7453
    %v7463 = vadd.f32 %v7374, %v7457
    %v7464 = vadd.f32 %v7150, %v7449
    %v7465 = vadd.f32 %v7152, %v7453
    %v7466 = vadd.f32 %v7377, %v7457
    %v7467 = vadd.f32 %v7156, %v7449
    %v7468 = vadd.f32 %v7158, %v7453
    %v7469 = vadd.f32 %v7382, %v7457
    %v7470 = vadd.f32 %v7160, %v7449
    %v7471 = vadd.f32 %v7162, %v7453
    %v7472 = vadd.f32 %v7385, %v7457
    %v7473 = vadd.f32 %v7166, %v7449
    %v7474 = vadd.f32 %v7168, %v7453
    %v7475 = vadd.f32 %v7390, %v7457
    %v7476 = vadd.f32 %v7170, %v7449
    %v7477 = vadd.f32 %v7172, %v7453
    %v7478 = vadd.f32 %v7393, %v7457
    %v7479 = vadd.f32 %v7176, %v7449
    %v7480 = vadd.f32 %v7178, %v7453
    %v7481 = vadd.f32 %v7398, %v7457
    %v7482 = vadd.f32 %v7180, %v7449
    %v7483 = vadd.f32 %v7182, %v7453
    %v7484 = vadd.f32 %v7401, %v7457
    %v7485 = vadd.f32 %v7186, %v7449
    %v7486 = vadd.f32 %v7188, %v7453
    %v7487 = vadd.f32 %v7406, %v7457
    %v7488 = vadd.f32 %v7190, %v7449
    %v7489 = vadd.f32 %v7192, %v7453
    %v7490 = vadd.f32 %v7409, %v7457
    %v7491 = vadd.f32 %v7196, %v7449
    %v7492 = vadd.f32 %v7198, %v7453
    %v7493 = vadd.f32 %v7414, %v7457
    %v7494 = vadd.f32 %v7200, %v7449
    %v7495 = vadd.f32 %v7202, %v7453
    %v7496 = vadd.f32 %v7417, %v7457
    %v7497 = vadd.f32 %v7206, %v7449
    %v7498 = vadd.f32 %v7208, %v7453
    %v7499 = vadd.f32 %v7422, %v7457
    %v7500 = vadd.f32 %v7210, %v7449
    %v7501 = vadd.f32 %v7212, %v7453
    %v7502 = vadd.f32 %v7425, %v7457
    %v7503 = vadd.f32 %v7216, %v7449
    %v7504 = vadd.f32 %v7218, %v7453
    %v7505 = vadd.f32 %v7430, %v7457
    %v7506 = vadd.f32 %v7220, %v7449
    %v7507 = vadd.f32 %v7222, %v7453
    %v7508 = vadd.f32 %v7433, %v7457
    %v7509 = vadd.f32 %v7226, %v7449
    %v7510 = vadd.f32 %v7228, %v7453
    %v7511 = vadd.f32 %v7438, %v7457
    %v7512 = vadd.f32 %v7230, %v7449
    %v7513 = vadd.f32 %v7232, %v7453
    %v7514 = vadd.f32 %v7441, %v7457
    %v7515 = vmax.f32 %v7461, 0.0
    %v7516 = vmax.f32 %v7462, 0.0
    %v7517 = vmax.f32 %v7463, 0.0
    %v7518 = vmax.f32 %v7464, 0.0
    %v7519 = vmax.f32 %v7465, 0.0
    %v7520 = vmax.f32 %v7466, 0.0
    %v7521 = vmax.f32 %v7467, 0.0
    %v7522 = vmax.f32 %v7468, 0.0
    %v7523 = vmax.f32 %v7469, 0.0
    %v7524 = vmax.f32 %v7470, 0.0
    %v7525 = vmax.f32 %v7471, 0.0
    %v7526 = vmax.f32 %v7472, 0.0
    %v7527 = vmax.f32 %v7473, 0.0
    %v7528 = vmax.f32 %v7474, 0.0
    %v7529 = vmax.f32 %v7475, 0.0
    %v7530 = vmax.f32 %v7476, 0.0
    %v7531 = vmax.f32 %v7477, 0.0
    %v7532 = vmax.f32 %v7478, 0.0
    %v7533 = vmax.f32 %v7479, 0.0
    %v7534 = vmax.f32 %v7480, 0.0
    %v7535 = vmax.f32 %v7481, 0.0
    %v7536 = vmax.f32 %v7482, 0.0
    %v7537 = vmax.f32 %v7483, 0.0
    %v7538 = vmax.f32 %v7484, 0.0
    %v7539 = vmax.f32 %v7485, 0.0
    %v7540 = vmax.f32 %v7486, 0.0
    %v7541 = vmax.f32 %v7487, 0.0
    %v7542 = vmax.f32 %v7488, 0.0
    %v7543 = vmax.f32 %v7489, 0.0
    %v7544 = vmax.f32 %v7490, 0.0
    %v7545 = vmax.f32 %v7491, 0.0
    %v7546 = vmax.f32 %v7492, 0.0
    %v7547 = vmax.f32 %v7493, 0.0
    %v7548 = vmax.f32 %v7494, 0.0
    %v7549 = vmax.f32 %v7495, 0.0
    %v7550 = vmax.f32 %v7496, 0.0
    %v7551 = vmax.f32 %v7497, 0.0
    %v7552 = vmax.f32 %v7498, 0.0
    %v7553 = vmax.f32 %v7499, 0.0
    %v7554 = vmax.f32 %v7500, 0.0
    %v7555 = vmax.f32 %v7501, 0.0
    %v7556 = vmax.f32 %v7502, 0.0
    %v7557 = vmax.f32 %v7503, 0.0
    %v7558 = vmax.f32 %v7504, 0.0
    %v7559 = vmax.f32 %v7505, 0.0
    %v7560 = vmax.f32 %v7506, 0.0
    %v7561 = vmax.f32 %v7507, 0.0
    %v7562 = vmax.f32 %v7508, 0.0
    %v7563 = vmax.f32 %v7509, 0.0
    %v7564 = vmax.f32 %v7510, 0.0
    %v7565 = vmax.f32 %v7511, 0.0
    %v7566 = vmax.f32 %v7512, 0.0
    %v7567 = vmax.f32 %v7513, 0.0
    %v7568 = vmax.f32 %v7514, 0.0
    %v7569 = vpack.c.bf16 %v7518, %v7515
    %v7570 = vpack.c.bf16 %v7519, %v7516
    %v7571 = vpack.c.bf16 %v7520, %v7517
    %v7572 = vpack.c.bf16 %v7524, %v7521
    %v7573 = vpack.c.bf16 %v7525, %v7522
    %v7574 = vpack.c.bf16 %v7526, %v7523
    %v7575 = vpack.c.bf16 %v7530, %v7527
    %v7576 = vpack.c.bf16 %v7531, %v7528
    %v7577 = vpack.c.bf16 %v7532, %v7529
    %v7578 = vpack.c.bf16 %v7536, %v7533
    %v7579 = vpack.c.bf16 %v7537, %v7534
    %v7580 = vpack.c.bf16 %v7538, %v7535
    %v7581 = vpack.c.bf16 %v7542, %v7539
    %v7582 = vpack.c.bf16 %v7543, %v7540
    %v7583 = vpack.c.bf16 %v7544, %v7541
    %v7584 = vpack.c.bf16 %v7548, %v7545
    %v7585 = vpack.c.bf16 %v7549, %v7546
    %v7586 = vpack.c.bf16 %v7550, %v7547
    %v7587 = vpack.c.bf16 %v7554, %v7551
    %v7588 = vpack.c.bf16 %v7555, %v7552
    %v7589 = vpack.c.bf16 %v7556, %v7553
    %v7590 = vpack.c.bf16 %v7560, %v7557
    %v7591 = vpack.c.bf16 %v7561, %v7558
    %v7592 = vpack.c.bf16 %v7562, %v7559
    %v7593 = vpack.c.bf16 %v7566, %v7563
    %v7594 = vpack.c.bf16 %v7567, %v7564
    %v7595 = vpack.c.bf16 %v7568, %v7565
    %7596 = vst [vmem:[#allocation5] sm:$0xff] %v7569
    %7597 = vst [vmem:[#allocation5 + $0x8] sm:$0xff] %v7570
    %7598 = vst [vmem:[#allocation5 + $0x10] sm:$0xff] %v7571
    %7599 = vst [vmem:[#allocation5 + $0x18] sm:$0xff] %v7572
    %7600 = vst [vmem:[#allocation5 + $0x20] sm:$0xff] %v7573
    %7601 = vst [vmem:[#allocation5 + $0x28] sm:$0xff] %v7574
    %7602 = vst [vmem:[#allocation5 + $0x30] sm:$0xff] %v7575
    %7603 = vst [vmem:[#allocation5 + $0x38] sm:$0xff] %v7576
    %7604 = vst [vmem:[#allocation5 + $0x40] sm:$0xff] %v7577
    %7605 = vst [vmem:[#allocation5 + $0x48] sm:$0xff] %v7578
    %7606 = vst [vmem:[#allocation5 + $0x50] sm:$0xff] %v7579
    %7607 = vst [vmem:[#allocation5 + $0x58] sm:$0xff] %v7580
    %7608 = vst [vmem:[#allocation5 + $0x60] sm:$0xff] %v7581
    %7609 = vst [vmem:[#allocation5 + $0x68] sm:$0xff] %v7582
    %7610 = vst [vmem:[#allocation5 + $0x70] sm:$0xff] %v7583
    %7611 = vst [vmem:[#allocation5 + $0x78] sm:$0xff] %v7584
    %7612 = vst [vmem:[#allocation5 + $0x80] sm:$0xff] %v7585
    %7613 = vst [vmem:[#allocation5 + $0x88] sm:$0xff] %v7586
    %7614 = vst [vmem:[#allocation5 + $0x90] sm:$0xff] %v7587
    %7615 = vst [vmem:[#allocation5 + $0x98] sm:$0xff] %v7588
    %7616 = vst [vmem:[#allocation5 + $0xa0] sm:$0xff] %v7589
    %7617 = vst [vmem:[#allocation5 + $0xa8] sm:$0xff] %v7590
    %7618 = vst [vmem:[#allocation5 + $0xb0] sm:$0xff] %v7591
    %7619 = vst [vmem:[#allocation5 + $0xb8] sm:$0xff] %v7592
    %7620 = vst [vmem:[#allocation5 + $0xc0] sm:$0xff] %v7593
    %7621 = vst [vmem:[#allocation5 + $0xc8] sm:$0xff] %v7594
    %7622 = vst [vmem:[#allocation5 + $0xd0] sm:$0xff] %v7595
    %v7623 = vld [vmem:[#allocation5] sm:$0xff]
    %v7624 = vld [vmem:[#allocation5 + $0x8] sm:$0xff]
    %v7625 = vld [vmem:[#allocation5 + $0x10] sm:$0xff]
    %v7626 = vld [vmem:[#allocation5 + $0x18] sm:$0xff]
    %v7627 = vld [vmem:[#allocation5 + $0x20] sm:$0xff]
    %v7628 = vld [vmem:[#allocation5 + $0x28] sm:$0xff]
    %v7629 = vld [vmem:[#allocation5 + $0x30] sm:$0xff]
    %v7630 = vld [vmem:[#allocation5 + $0x38] sm:$0xff]
    %v7631 = vld [vmem:[#allocation5 + $0x40] sm:$0xff]
    %v7632 = vld [vmem:[#allocation5 + $0x48] sm:$0xff]
    %v7633 = vld [vmem:[#allocation5 + $0x50] sm:$0xff]
    %v7634 = vld [vmem:[#allocation5 + $0x58] sm:$0xff]
    %v7635 = vld [vmem:[#allocation5 + $0x60] sm:$0xff]
    %v7636 = vld [vmem:[#allocation5 + $0x68] sm:$0xff]
    %v7637 = vld [vmem:[#allocation5 + $0x70] sm:$0xff]
    %v7638 = vld [vmem:[#allocation5 + $0x78] sm:$0xff]
    %v7639 = vld [vmem:[#allocation5 + $0x80] sm:$0xff]
    %v7640 = vld [vmem:[#allocation5 + $0x88] sm:$0xff]
    %v7641 = vld [vmem:[#allocation5 + $0x90] sm:$0xff]
    %v7642 = vld [vmem:[#allocation5 + $0x98] sm:$0xff]
    %v7643 = vld [vmem:[#allocation5 + $0xa0] sm:$0xff]
    %v7644 = vld [vmem:[#allocation5 + $0xa8] sm:$0xff]
    %v7645 = vld [vmem:[#allocation5 + $0xb0] sm:$0xff]
    %v7646 = vld [vmem:[#allocation5 + $0xb8] sm:$0xff]
    %v7647 = vld [vmem:[#allocation5 + $0xc0] sm:$0xff]
    %v7648 = vld [vmem:[#allocation5 + $0xc8] sm:$0xff]
    %v7649 = vld [vmem:[#allocation5 + $0xd0] sm:$0xff]
    %v7650 = vld [vmem:[#allocation19] sm:$0xff]
    %v7651 = vld [vmem:[#allocation19 + $0x8] sm:$0xff]
    %v7652 = vld [vmem:[#allocation19 + $0x10] sm:$0xff]
    %v7653 = vld [vmem:[#allocation19 + $0x18] sm:$0xff]
    %v7654 = vld [vmem:[#allocation19 + $0x20] sm:$0xff]
    %v7655 = vld [vmem:[#allocation19 + $0x28] sm:$0xff]
    %v7656 = vld [vmem:[#allocation19 + $0x30] sm:$0xff]
    %v7657 = vld [vmem:[#allocation19 + $0x38] sm:$0xff]
    %v7658 = vld [vmem:[#allocation19 + $0x40] sm:$0xff]
    %v7659 = vld [vmem:[#allocation19 + $0x48] sm:$0xff]
    %v7660 = vld [vmem:[#allocation19 + $0x50] sm:$0xff]
    %v7661 = vld [vmem:[#allocation19 + $0x58] sm:$0xff]
    %v7662 = vld [vmem:[#allocation19 + $0x60] sm:$0xff]
    %v7663 = vld [vmem:[#allocation19 + $0x68] sm:$0xff]
    %v7664 = vld [vmem:[#allocation19 + $0x70] sm:$0xff]
    %v7665 = vld [vmem:[#allocation19 + $0x78] sm:$0xff]
    %v7666 = vld [vmem:[#allocation19 + $0x80] sm:$0xff]
    %v7667 = vld [vmem:[#allocation19 + $0x88] sm:$0xff]
    %v7668 = vld [vmem:[#allocation19 + $0x90] sm:$0xff]
    %v7669 = vld [vmem:[#allocation19 + $0x98] sm:$0xff]
    %v7670 = vld [vmem:[#allocation19 + $0xa0] sm:$0xff]
    %v7671 = vld [vmem:[#allocation19 + $0xa8] sm:$0xff]
    %v7672 = vld [vmem:[#allocation19 + $0xb0] sm:$0xff]
    %v7673 = vld [vmem:[#allocation19 + $0xb8] sm:$0xff]
    %v7674 = vld [vmem:[#allocation19 + $0xc0] sm:$0xff]
    %v7675 = vld [vmem:[#allocation19 + $0xc8] sm:$0xff]
    %v7676 = vld [vmem:[#allocation19 + $0xd0] sm:$0xff]
    %v7677 = vld [vmem:[#allocation19 + $0xd8] sm:$0xff]
    %v7678 = vld [vmem:[#allocation19 + $0xe0] sm:$0xff]
    %v7679 = vld [vmem:[#allocation19 + $0xe8] sm:$0xff]
    %v7680 = vld [vmem:[#allocation19 + $0xf0] sm:$0xff]
    %v7681 = vld [vmem:[#allocation19 + $0xf8] sm:$0xff]
    %v7682 = vld [vmem:[#allocation19 + $0x100] sm:$0xff]
    %v7683 = vld [vmem:[#allocation19 + $0x108] sm:$0xff]
    %v7684 = vld [vmem:[#allocation19 + $0x110] sm:$0xff]
    %v7685 = vld [vmem:[#allocation19 + $0x118] sm:$0xff]
    %v7686 = vld [vmem:[#allocation19 + $0x120] sm:$0xff]
    %v7687 = vld [vmem:[#allocation19 + $0x128] sm:$0xff]
    %v7688 = vld [vmem:[#allocation19 + $0x130] sm:$0xff]
    %v7689 = vld [vmem:[#allocation19 + $0x138] sm:$0xff]
    %v7690 = vld [vmem:[#allocation19 + $0x140] sm:$0xff]
    %v7691 = vld [vmem:[#allocation19 + $0x148] sm:$0xff]
    %v7692 = vld [vmem:[#allocation19 + $0x150] sm:$0xff]
    %v7693 = vld [vmem:[#allocation19 + $0x158] sm:$0xff]
    %v7694 = vld [vmem:[#allocation19 + $0x160] sm:$0xff]
    %v7695 = vld [vmem:[#allocation19 + $0x168] sm:$0xff]
    %v7696 = vld [vmem:[#allocation19 + $0x170] sm:$0xff]
    %v7697 = vld [vmem:[#allocation19 + $0x178] sm:$0xff]
    %v7698 = vld [vmem:[#allocation19 + $0x180] sm:$0xff]
    %v7699 = vld [vmem:[#allocation19 + $0x188] sm:$0xff]
    %v7700 = vld [vmem:[#allocation19 + $0x190] sm:$0xff]
    %v7701 = vld [vmem:[#allocation19 + $0x198] sm:$0xff]
    %v7702 = vld [vmem:[#allocation19 + $0x1a0] sm:$0xff]
    %v7703 = vld [vmem:[#allocation19 + $0x1a8] sm:$0xff]
    %v7704 = vld [vmem:[#allocation19 + $0x1b0] sm:$0xff]
    %v7705 = vld [vmem:[#allocation19 + $0x1b8] sm:$0xff]
    %v7706 = vld [vmem:[#allocation19 + $0x1c0] sm:$0xff]
    %v7707 = vld [vmem:[#allocation19 + $0x1c8] sm:$0xff]
    %v7708 = vld [vmem:[#allocation19 + $0x1d0] sm:$0xff]
    %v7709 = vld [vmem:[#allocation19 + $0x1d8] sm:$0xff]
    %v7710 = vld [vmem:[#allocation19 + $0x1e0] sm:$0xff]
    %v7711 = vld [vmem:[#allocation19 + $0x1e8] sm:$0xff]
    %v7712 = vld [vmem:[#allocation19 + $0x1f0] sm:$0xff]
    %v7713 = vld [vmem:[#allocation19 + $0x1f8] sm:$0xff]
    %v7714 = vld [vmem:[#allocation19 + $0x200] sm:$0xff]
    %v7715 = vld [vmem:[#allocation19 + $0x208] sm:$0xff]
    %v7716 = vld [vmem:[#allocation19 + $0x210] sm:$0xff]
    %v7717 = vld [vmem:[#allocation19 + $0x218] sm:$0xff]
    %v7718 = vld [vmem:[#allocation19 + $0x220] sm:$0xff]
    %v7719 = vld [vmem:[#allocation19 + $0x228] sm:$0xff]
    %v7720 = vld [vmem:[#allocation19 + $0x230] sm:$0xff]
    %v7721 = vld [vmem:[#allocation19 + $0x238] sm:$0xff]
    %v7722 = vld [vmem:[#allocation19 + $0x240] sm:$0xff]
    %v7723 = vld [vmem:[#allocation19 + $0x248] sm:$0xff]
    %v7724 = vld [vmem:[#allocation19 + $0x250] sm:$0xff]
    %v7725 = vld [vmem:[#allocation19 + $0x258] sm:$0xff]
    %v7726 = vld [vmem:[#allocation19 + $0x260] sm:$0xff]
    %v7727 = vld [vmem:[#allocation19 + $0x268] sm:$0xff]
    %v7728 = vld [vmem:[#allocation19 + $0x270] sm:$0xff]
    %v7729 = vld [vmem:[#allocation19 + $0x278] sm:$0xff]
    %v7730 = vld [vmem:[#allocation19 + $0x280] sm:$0xff]
    %v7731 = vld [vmem:[#allocation19 + $0x288] sm:$0xff]
    %v7732 = vld [vmem:[#allocation19 + $0x290] sm:$0xff]
    %v7733 = vld [vmem:[#allocation19 + $0x298] sm:$0xff]
    %v7734 = vld [vmem:[#allocation19 + $0x2a0] sm:$0xff]
    %v7735 = vld [vmem:[#allocation19 + $0x2a8] sm:$0xff]
    %v7736 = vld [vmem:[#allocation19 + $0x2b0] sm:$0xff]
    %v7737 = vld [vmem:[#allocation19 + $0x2b8] sm:$0xff]
    %v7738 = vld [vmem:[#allocation19 + $0x2c0] sm:$0xff]
    %v7739 = vld [vmem:[#allocation19 + $0x2c8] sm:$0xff]
    %v7740 = vld [vmem:[#allocation19 + $0x2d0] sm:$0xff]
    %v7741 = vld [vmem:[#allocation19 + $0x2d8] sm:$0xff]
    %v7742 = vld [vmem:[#allocation19 + $0x2e0] sm:$0xff]
    %v7743 = vld [vmem:[#allocation19 + $0x2e8] sm:$0xff]
    %v7744 = vld [vmem:[#allocation19 + $0x2f0] sm:$0xff]
    %v7745 = vld [vmem:[#allocation19 + $0x2f8] sm:$0xff]
    %v7746 = vld [vmem:[#allocation19 + $0x300] sm:$0xff]
    %v7747 = vld [vmem:[#allocation19 + $0x308] sm:$0xff]
    %v7748 = vld [vmem:[#allocation19 + $0x310] sm:$0xff]
    %v7749 = vld [vmem:[#allocation19 + $0x318] sm:$0xff]
    %v7750 = vld [vmem:[#allocation19 + $0x320] sm:$0xff]
    %v7751 = vld [vmem:[#allocation19 + $0x328] sm:$0xff]
    %v7752 = vld [vmem:[#allocation19 + $0x330] sm:$0xff]
    %v7753 = vld [vmem:[#allocation19 + $0x338] sm:$0xff]
    %v7754 = vld [vmem:[#allocation19 + $0x340] sm:$0xff]
    %v7755 = vld [vmem:[#allocation19 + $0x348] sm:$0xff]
    %v7756 = vld [vmem:[#allocation19 + $0x350] sm:$0xff]
    %v7757 = vld [vmem:[#allocation19 + $0x358] sm:$0xff]
    %v7758 = vld [vmem:[#allocation19 + $0x360] sm:$0xff]
    %v7759 = vld [vmem:[#allocation19 + $0x368] sm:$0xff]
    %v7760 = vld [vmem:[#allocation19 + $0x370] sm:$0xff]
    %v7761 = vld [vmem:[#allocation19 + $0x378] sm:$0xff]
    %v7762 = vld [vmem:[#allocation19 + $0x380] sm:$0xff]
    %v7763 = vld [vmem:[#allocation19 + $0x388] sm:$0xff]
    %v7764 = vld [vmem:[#allocation19 + $0x390] sm:$0xff]
    %v7765 = vld [vmem:[#allocation19 + $0x398] sm:$0xff]
    %v7766 = vld [vmem:[#allocation19 + $0x3a0] sm:$0xff]
    %v7767 = vld [vmem:[#allocation19 + $0x3a8] sm:$0xff]
    %v7768 = vld [vmem:[#allocation19 + $0x3b0] sm:$0xff]
    %v7769 = vld [vmem:[#allocation19 + $0x3b8] sm:$0xff]
    %v7770 = vld [vmem:[#allocation19 + $0x3c0] sm:$0xff]
    %v7771 = vld [vmem:[#allocation19 + $0x3c8] sm:$0xff]
    %v7772 = vld [vmem:[#allocation19 + $0x3d0] sm:$0xff]
    %v7773 = vld [vmem:[#allocation19 + $0x3d8] sm:$0xff]
    %v7774 = vld [vmem:[#allocation19 + $0x3e0] sm:$0xff]
    %v7775 = vld [vmem:[#allocation19 + $0x3e8] sm:$0xff]
    %v7776 = vld [vmem:[#allocation19 + $0x3f0] sm:$0xff]
    %v7777 = vld [vmem:[#allocation19 + $0x3f8] sm:$0xff]
    %v7778 = vld [vmem:[#allocation19 + $0x400] sm:$0xff]
    %v7779 = vld [vmem:[#allocation19 + $0x408] sm:$0xff]
    %v7780 = vld [vmem:[#allocation19 + $0x410] sm:$0xff]
    %v7781 = vld [vmem:[#allocation19 + $0x418] sm:$0xff]
    %v7782 = vld [vmem:[#allocation19 + $0x420] sm:$0xff]
    %v7783 = vld [vmem:[#allocation19 + $0x428] sm:$0xff]
    %v7784 = vld [vmem:[#allocation19 + $0x430] sm:$0xff]
    %v7785 = vld [vmem:[#allocation19 + $0x438] sm:$0xff]
    %v7786 = vld [vmem:[#allocation19 + $0x440] sm:$0xff]
    %v7787 = vld [vmem:[#allocation19 + $0x448] sm:$0xff]
    %v7788 = vld [vmem:[#allocation19 + $0x450] sm:$0xff]
    %v7789 = vld [vmem:[#allocation19 + $0x458] sm:$0xff]
    %v7790 = vld [vmem:[#allocation19 + $0x460] sm:$0xff]
    %v7791 = vld [vmem:[#allocation19 + $0x468] sm:$0xff]
    %v7792 = vld [vmem:[#allocation19 + $0x470] sm:$0xff]
    %v7793 = vld [vmem:[#allocation19 + $0x478] sm:$0xff]
    %v7794 = vld [vmem:[#allocation19 + $0x480] sm:$0xff]
    %v7795 = vld [vmem:[#allocation19 + $0x488] sm:$0xff]
    %v7796 = vld [vmem:[#allocation19 + $0x490] sm:$0xff]
    %v7797 = vld [vmem:[#allocation19 + $0x498] sm:$0xff]
    %v7798 = vld [vmem:[#allocation19 + $0x4a0] sm:$0xff]
    %v7799 = vld [vmem:[#allocation19 + $0x4a8] sm:$0xff]
    %v7800 = vld [vmem:[#allocation19 + $0x4b0] sm:$0xff]
    %v7801 = vld [vmem:[#allocation19 + $0x4b8] sm:$0xff]
    %v7802 = vld [vmem:[#allocation19 + $0x4c0] sm:$0xff]
    %v7803 = vld [vmem:[#allocation19 + $0x4c8] sm:$0xff]
    %v7804 = vld [vmem:[#allocation19 + $0x4d0] sm:$0xff]
    %v7805 = vld [vmem:[#allocation19 + $0x4d8] sm:$0xff]
    %v7806 = vld [vmem:[#allocation19 + $0x4e0] sm:$0xff]
    %v7807 = vld [vmem:[#allocation19 + $0x4e8] sm:$0xff]
    %v7808 = vld [vmem:[#allocation19 + $0x4f0] sm:$0xff]
    %v7809 = vld [vmem:[#allocation19 + $0x4f8] sm:$0xff]
    %v7810 = vld [vmem:[#allocation19 + $0x500] sm:$0xff]
    %v7811 = vld [vmem:[#allocation19 + $0x508] sm:$0xff]
    %v7812 = vld [vmem:[#allocation19 + $0x510] sm:$0xff]
    %v7813 = vld [vmem:[#allocation19 + $0x518] sm:$0xff]
    %v7814 = vld [vmem:[#allocation19 + $0x520] sm:$0xff]
    %v7815 = vld [vmem:[#allocation19 + $0x528] sm:$0xff]
    %v7816 = vld [vmem:[#allocation19 + $0x530] sm:$0xff]
    %v7817 = vld [vmem:[#allocation19 + $0x538] sm:$0xff]
    %v7818 = vld [vmem:[#allocation19 + $0x540] sm:$0xff]
    %v7819 = vld [vmem:[#allocation19 + $0x548] sm:$0xff]
    %v7820 = vld [vmem:[#allocation19 + $0x550] sm:$0xff]
    %v7821 = vld [vmem:[#allocation19 + $0x558] sm:$0xff]
    %v7822 = vld [vmem:[#allocation19 + $0x560] sm:$0xff]
    %v7823 = vld [vmem:[#allocation19 + $0x568] sm:$0xff]
    %v7824 = vld [vmem:[#allocation19 + $0x570] sm:$0xff]
    %v7825 = vld [vmem:[#allocation19 + $0x578] sm:$0xff]
    %v7826 = vld [vmem:[#allocation19 + $0x580] sm:$0xff]
    %v7827 = vld [vmem:[#allocation19 + $0x588] sm:$0xff]
    %v7828 = vld [vmem:[#allocation19 + $0x590] sm:$0xff]
    %v7829 = vld [vmem:[#allocation19 + $0x598] sm:$0xff]
    %v7830 = vld [vmem:[#allocation19 + $0x5a0] sm:$0xff]
    %v7831 = vld [vmem:[#allocation19 + $0x5a8] sm:$0xff]
    %v7832 = vld [vmem:[#allocation19 + $0x5b0] sm:$0xff]
    %v7833 = vld [vmem:[#allocation19 + $0x5b8] sm:$0xff]
    %v7834 = vld [vmem:[#allocation19 + $0x5c0] sm:$0xff]
    %v7835 = vld [vmem:[#allocation19 + $0x5c8] sm:$0xff]
    %v7836 = vld [vmem:[#allocation19 + $0x5d0] sm:$0xff]
    %v7837 = vld [vmem:[#allocation19 + $0x5d8] sm:$0xff]
    %v7838 = vld [vmem:[#allocation19 + $0x5e0] sm:$0xff]
    %v7839 = vld [vmem:[#allocation19 + $0x5e8] sm:$0xff]
    %v7840 = vld [vmem:[#allocation19 + $0x5f0] sm:$0xff]
    %v7841 = vld [vmem:[#allocation19 + $0x5f8] sm:$0xff]
    %v7842 = vld [vmem:[#allocation19 + $0x600] sm:$0xff]
    %v7843 = vld [vmem:[#allocation19 + $0x608] sm:$0xff]
    %v7844 = vld [vmem:[#allocation19 + $0x610] sm:$0xff]
    %v7845 = vld [vmem:[#allocation19 + $0x618] sm:$0xff]
    %v7846 = vld [vmem:[#allocation19 + $0x620] sm:$0xff]
    %v7847 = vld [vmem:[#allocation19 + $0x628] sm:$0xff]
    %v7848 = vld [vmem:[#allocation19 + $0x630] sm:$0xff]
    %v7849 = vld [vmem:[#allocation19 + $0x638] sm:$0xff]
    %v7850 = vld [vmem:[#allocation19 + $0x640] sm:$0xff]
    %v7851 = vld [vmem:[#allocation19 + $0x648] sm:$0xff]
    %v7852 = vld [vmem:[#allocation19 + $0x650] sm:$0xff]
    %v7853 = vld [vmem:[#allocation19 + $0x658] sm:$0xff]
    %v7854 = vld [vmem:[#allocation19 + $0x660] sm:$0xff]
    %v7855 = vld [vmem:[#allocation19 + $0x668] sm:$0xff]
    %v7856 = vld [vmem:[#allocation19 + $0x670] sm:$0xff]
    %v7857 = vld [vmem:[#allocation19 + $0x678] sm:$0xff]
    %v7858 = vld [vmem:[#allocation19 + $0x680] sm:$0xff]
    %v7859 = vld [vmem:[#allocation19 + $0x688] sm:$0xff]
    %v7860 = vld [vmem:[#allocation19 + $0x690] sm:$0xff]
    %v7861 = vld [vmem:[#allocation19 + $0x698] sm:$0xff]
    %v7862 = vld [vmem:[#allocation19 + $0x6a0] sm:$0xff]
    %v7863 = vld [vmem:[#allocation19 + $0x6a8] sm:$0xff]
    %v7864 = vld [vmem:[#allocation19 + $0x6b0] sm:$0xff]
    %v7865 = vld [vmem:[#allocation19 + $0x6b8] sm:$0xff]
    %v7866 = vld [vmem:[#allocation19 + $0x6c0] sm:$0xff]
    %v7867 = vld [vmem:[#allocation19 + $0x6c8] sm:$0xff]
    %v7868 = vld [vmem:[#allocation19 + $0x6d0] sm:$0xff]
    %v7869 = vld [vmem:[#allocation19 + $0x6d8] sm:$0xff]
    %v7870 = vld [vmem:[#allocation19 + $0x6e0] sm:$0xff]
    %v7871 = vld [vmem:[#allocation19 + $0x6e8] sm:$0xff]
    %v7872 = vld [vmem:[#allocation19 + $0x6f0] sm:$0xff]
    %v7873 = vld [vmem:[#allocation19 + $0x6f8] sm:$0xff]
    %v7874 = vld [vmem:[#allocation19 + $0x700] sm:$0xff]
    %v7875 = vld [vmem:[#allocation19 + $0x708] sm:$0xff]
    %v7876 = vld [vmem:[#allocation19 + $0x710] sm:$0xff]
    %v7877 = vld [vmem:[#allocation19 + $0x718] sm:$0xff]
    %v7878 = vld [vmem:[#allocation19 + $0x720] sm:$0xff]
    %v7879 = vld [vmem:[#allocation19 + $0x728] sm:$0xff]
    %v7880 = vld [vmem:[#allocation19 + $0x730] sm:$0xff]
    %v7881 = vld [vmem:[#allocation19 + $0x738] sm:$0xff]
    %v7882 = vld [vmem:[#allocation19 + $0x740] sm:$0xff]
    %v7883 = vld [vmem:[#allocation19 + $0x748] sm:$0xff]
    %v7884 = vld [vmem:[#allocation19 + $0x750] sm:$0xff]
    %v7885 = vld [vmem:[#allocation19 + $0x758] sm:$0xff]
    %v7886 = vld [vmem:[#allocation19 + $0x760] sm:$0xff]
    %v7887 = vld [vmem:[#allocation19 + $0x768] sm:$0xff]
    %v7888 = vld [vmem:[#allocation19 + $0x770] sm:$0xff]
    %v7889 = vld [vmem:[#allocation19 + $0x778] sm:$0xff]
    %v7890 = vld [vmem:[#allocation19 + $0x780] sm:$0xff]
    %v7891 = vld [vmem:[#allocation19 + $0x788] sm:$0xff]
    %v7892 = vld [vmem:[#allocation19 + $0x790] sm:$0xff]
    %v7893 = vld [vmem:[#allocation19 + $0x798] sm:$0xff]
    %v7894 = vld [vmem:[#allocation19 + $0x7a0] sm:$0xff]
    %v7895 = vld [vmem:[#allocation19 + $0x7a8] sm:$0xff]
    %v7896 = vld [vmem:[#allocation19 + $0x7b0] sm:$0xff]
    %v7897 = vld [vmem:[#allocation19 + $0x7b8] sm:$0xff]
    %v7898 = vld [vmem:[#allocation19 + $0x7c0] sm:$0xff]
    %v7899 = vld [vmem:[#allocation19 + $0x7c8] sm:$0xff]
    %v7900 = vld [vmem:[#allocation19 + $0x7d0] sm:$0xff]
    %v7901 = vld [vmem:[#allocation19 + $0x7d8] sm:$0xff]
    %v7902 = vld [vmem:[#allocation19 + $0x7e0] sm:$0xff]
    %v7903 = vld [vmem:[#allocation19 + $0x7e8] sm:$0xff]
    %v7904 = vld [vmem:[#allocation19 + $0x7f0] sm:$0xff]
    %v7905 = vld [vmem:[#allocation19 + $0x7f8] sm:$0xff]
    %v7906 = vld [vmem:[#allocation19 + $0x800] sm:$0xff]
    %v7907 = vld [vmem:[#allocation19 + $0x808] sm:$0xff]
    %v7908 = vld [vmem:[#allocation19 + $0x810] sm:$0xff]
    %v7909 = vld [vmem:[#allocation19 + $0x818] sm:$0xff]
    %v7910 = vld [vmem:[#allocation19 + $0x820] sm:$0xff]
    %v7911 = vld [vmem:[#allocation19 + $0x828] sm:$0xff]
    %v7912 = vld [vmem:[#allocation19 + $0x830] sm:$0xff]
    %v7913 = vld [vmem:[#allocation19 + $0x838] sm:$0xff]
    %v7914 = vld [vmem:[#allocation19 + $0x840] sm:$0xff]
    %v7915 = vld [vmem:[#allocation19 + $0x848] sm:$0xff]
    %v7916 = vld [vmem:[#allocation19 + $0x850] sm:$0xff]
    %v7917 = vld [vmem:[#allocation19 + $0x858] sm:$0xff]
    %v7918 = vld [vmem:[#allocation19 + $0x860] sm:$0xff]
    %v7919 = vld [vmem:[#allocation19 + $0x868] sm:$0xff]
    %v7920 = vld [vmem:[#allocation19 + $0x870] sm:$0xff]
    %v7921 = vld [vmem:[#allocation19 + $0x878] sm:$0xff]
    %v7922 = vld [vmem:[#allocation19 + $0x880] sm:$0xff]
    %v7923 = vld [vmem:[#allocation19 + $0x888] sm:$0xff]
    %v7924 = vld [vmem:[#allocation19 + $0x890] sm:$0xff]
    %v7925 = vld [vmem:[#allocation19 + $0x898] sm:$0xff]
    %v7926 = vld [vmem:[#allocation19 + $0x8a0] sm:$0xff]
    %v7927 = vld [vmem:[#allocation19 + $0x8a8] sm:$0xff]
    %v7928 = vld [vmem:[#allocation19 + $0x8b0] sm:$0xff]
    %v7929 = vld [vmem:[#allocation19 + $0x8b8] sm:$0xff]
    %v7930 = vld [vmem:[#allocation19 + $0x8c0] sm:$0xff]
    %v7931 = vld [vmem:[#allocation19 + $0x8c8] sm:$0xff]
    %v7932 = vld [vmem:[#allocation19 + $0x8d0] sm:$0xff]
    %v7933 = vld [vmem:[#allocation19 + $0x8d8] sm:$0xff]
    %v7934 = vld [vmem:[#allocation19 + $0x8e0] sm:$0xff]
    %v7935 = vld [vmem:[#allocation19 + $0x8e8] sm:$0xff]
    %v7936 = vld [vmem:[#allocation19 + $0x8f0] sm:$0xff]
    %v7937 = vld [vmem:[#allocation19 + $0x8f8] sm:$0xff]
    %v7938 = vld [vmem:[#allocation19 + $0x900] sm:$0xff]
    %v7939 = vld [vmem:[#allocation19 + $0x908] sm:$0xff]
    %v7940 = vld [vmem:[#allocation19 + $0x910] sm:$0xff]
    %v7941 = vld [vmem:[#allocation19 + $0x918] sm:$0xff]
    %v7942 = vld [vmem:[#allocation19 + $0x920] sm:$0xff]
    %v7943 = vld [vmem:[#allocation19 + $0x928] sm:$0xff]
    %v7944 = vld [vmem:[#allocation19 + $0x930] sm:$0xff]
    %v7945 = vld [vmem:[#allocation19 + $0x938] sm:$0xff]
    %v7946 = vld [vmem:[#allocation19 + $0x940] sm:$0xff]
    %v7947 = vld [vmem:[#allocation19 + $0x948] sm:$0xff]
    %v7948 = vld [vmem:[#allocation19 + $0x950] sm:$0xff]
    %v7949 = vld [vmem:[#allocation19 + $0x958] sm:$0xff]
    %v7950 = vld [vmem:[#allocation19 + $0x960] sm:$0xff]
    %v7951 = vld [vmem:[#allocation19 + $0x968] sm:$0xff]
    %v7952 = vld [vmem:[#allocation19 + $0x970] sm:$0xff]
    %v7953 = vld [vmem:[#allocation19 + $0x978] sm:$0xff]
    %v7954 = vld [vmem:[#allocation19 + $0x980] sm:$0xff]
    %v7955 = vld [vmem:[#allocation19 + $0x988] sm:$0xff]
    %v7956 = vld [vmem:[#allocation19 + $0x990] sm:$0xff]
    %v7957 = vld [vmem:[#allocation19 + $0x998] sm:$0xff]
    %v7958 = vld [vmem:[#allocation19 + $0x9a0] sm:$0xff]
    %v7959 = vld [vmem:[#allocation19 + $0x9a8] sm:$0xff]
    %v7960 = vld [vmem:[#allocation19 + $0x9b0] sm:$0xff]
    %v7961 = vld [vmem:[#allocation19 + $0x9b8] sm:$0xff]
    %v7962 = vld [vmem:[#allocation19 + $0x9c0] sm:$0xff]
    %v7963 = vld [vmem:[#allocation19 + $0x9c8] sm:$0xff]
    %v7964 = vld [vmem:[#allocation19 + $0x9d0] sm:$0xff]
    %v7965 = vld [vmem:[#allocation19 + $0x9d8] sm:$0xff]
    %v7966 = vld [vmem:[#allocation19 + $0x9e0] sm:$0xff]
    %v7967 = vld [vmem:[#allocation19 + $0x9e8] sm:$0xff]
    %v7968 = vld [vmem:[#allocation19 + $0x9f0] sm:$0xff]
    %v7969 = vld [vmem:[#allocation19 + $0x9f8] sm:$0xff]
    %v7970 = vld [vmem:[#allocation19 + $0xa00] sm:$0xff]
    %v7971 = vld [vmem:[#allocation19 + $0xa08] sm:$0xff]
    %v7972 = vld [vmem:[#allocation19 + $0xa10] sm:$0xff]
    %v7973 = vld [vmem:[#allocation19 + $0xa18] sm:$0xff]
    %v7974 = vld [vmem:[#allocation19 + $0xa20] sm:$0xff]
    %v7975 = vld [vmem:[#allocation19 + $0xa28] sm:$0xff]
    %v7976 = vld [vmem:[#allocation19 + $0xa30] sm:$0xff]
    %v7977 = vld [vmem:[#allocation19 + $0xa38] sm:$0xff]
    %v7978 = vld [vmem:[#allocation19 + $0xa40] sm:$0xff]
    %v7979 = vld [vmem:[#allocation19 + $0xa48] sm:$0xff]
    %v7980 = vld [vmem:[#allocation19 + $0xa50] sm:$0xff]
    %v7981 = vld [vmem:[#allocation19 + $0xa58] sm:$0xff]
    %v7982 = vld [vmem:[#allocation19 + $0xa60] sm:$0xff]
    %v7983 = vld [vmem:[#allocation19 + $0xa68] sm:$0xff]
    %v7984 = vld [vmem:[#allocation19 + $0xa70] sm:$0xff]
    %v7985 = vld [vmem:[#allocation19 + $0xa78] sm:$0xff]
    %v7986 = vld [vmem:[#allocation19 + $0xa80] sm:$0xff]
    %v7987 = vld [vmem:[#allocation19 + $0xa88] sm:$0xff]
    %v7988 = vld [vmem:[#allocation19 + $0xa90] sm:$0xff]
    %v7989 = vld [vmem:[#allocation19 + $0xa98] sm:$0xff]
    %v7990 = vld [vmem:[#allocation19 + $0xaa0] sm:$0xff]
    %v7991 = vld [vmem:[#allocation19 + $0xaa8] sm:$0xff]
    %v7992 = vld [vmem:[#allocation19 + $0xab0] sm:$0xff]
    %v7993 = vld [vmem:[#allocation19 + $0xab8] sm:$0xff]
    %v7994 = vld [vmem:[#allocation19 + $0xac0] sm:$0xff]
    %v7995 = vld [vmem:[#allocation19 + $0xac8] sm:$0xff]
    %v7996 = vld [vmem:[#allocation19 + $0xad0] sm:$0xff]
    %v7997 = vld [vmem:[#allocation19 + $0xad8] sm:$0xff]
    %v7998 = vld [vmem:[#allocation19 + $0xae0] sm:$0xff]
    %v7999 = vld [vmem:[#allocation19 + $0xae8] sm:$0xff]
    %v8000 = vld [vmem:[#allocation19 + $0xaf0] sm:$0xff]
    %v8001 = vld [vmem:[#allocation19 + $0xaf8] sm:$0xff]
    %v8002 = vld [vmem:[#allocation19 + $0xb00] sm:$0xff]
    %v8003 = vld [vmem:[#allocation19 + $0xb08] sm:$0xff]
    %v8004 = vld [vmem:[#allocation19 + $0xb10] sm:$0xff]
    %v8005 = vld [vmem:[#allocation19 + $0xb18] sm:$0xff]
    %v8006 = vld [vmem:[#allocation19 + $0xb20] sm:$0xff]
    %v8007 = vld [vmem:[#allocation19 + $0xb28] sm:$0xff]
    %v8008 = vld [vmem:[#allocation19 + $0xb30] sm:$0xff]
    %v8009 = vld [vmem:[#allocation19 + $0xb38] sm:$0xff]
    %v8010 = vld [vmem:[#allocation19 + $0xb40] sm:$0xff]
    %v8011 = vld [vmem:[#allocation19 + $0xb48] sm:$0xff]
    %v8012 = vld [vmem:[#allocation19 + $0xb50] sm:$0xff]
    %v8013 = vld [vmem:[#allocation19 + $0xb58] sm:$0xff]
    %v8014 = vld [vmem:[#allocation19 + $0xb60] sm:$0xff]
    %v8015 = vld [vmem:[#allocation19 + $0xb68] sm:$0xff]
    %v8016 = vld [vmem:[#allocation19 + $0xb70] sm:$0xff]
    %v8017 = vld [vmem:[#allocation19 + $0xb78] sm:$0xff]
    %v8018 = vld [vmem:[#allocation19 + $0xb80] sm:$0xff]
    %v8019 = vld [vmem:[#allocation19 + $0xb88] sm:$0xff]
    %v8020 = vld [vmem:[#allocation19 + $0xb90] sm:$0xff]
    %v8021 = vld [vmem:[#allocation19 + $0xb98] sm:$0xff]
    %v8022 = vld [vmem:[#allocation19 + $0xba0] sm:$0xff]
    %v8023 = vld [vmem:[#allocation19 + $0xba8] sm:$0xff]
    %v8024 = vld [vmem:[#allocation19 + $0xbb0] sm:$0xff]
    %v8025 = vld [vmem:[#allocation19 + $0xbb8] sm:$0xff]
    %v8026 = vld [vmem:[#allocation19 + $0xbc0] sm:$0xff]
    %v8027 = vld [vmem:[#allocation19 + $0xbc8] sm:$0xff]
    %v8028 = vld [vmem:[#allocation19 + $0xbd0] sm:$0xff]
    %v8029 = vld [vmem:[#allocation19 + $0xbd8] sm:$0xff]
    %v8030 = vld [vmem:[#allocation19 + $0xbe0] sm:$0xff]
    %v8031 = vld [vmem:[#allocation19 + $0xbe8] sm:$0xff]
    %v8032 = vld [vmem:[#allocation19 + $0xbf0] sm:$0xff]
    %v8033 = vld [vmem:[#allocation19 + $0xbf8] sm:$0xff]
    %v8034 = vld [vmem:[#allocation19 + $0xc00] sm:$0xff]
    %v8035 = vld [vmem:[#allocation19 + $0xc08] sm:$0xff]
    %v8036 = vld [vmem:[#allocation19 + $0xc10] sm:$0xff]
    %v8037 = vld [vmem:[#allocation19 + $0xc18] sm:$0xff]
    %v8038 = vld [vmem:[#allocation19 + $0xc20] sm:$0xff]
    %v8039 = vld [vmem:[#allocation19 + $0xc28] sm:$0xff]
    %v8040 = vld [vmem:[#allocation19 + $0xc30] sm:$0xff]
    %v8041 = vld [vmem:[#allocation19 + $0xc38] sm:$0xff]
    %v8042 = vld [vmem:[#allocation19 + $0xc40] sm:$0xff]
    %v8043 = vld [vmem:[#allocation19 + $0xc48] sm:$0xff]
    %v8044 = vld [vmem:[#allocation19 + $0xc50] sm:$0xff]
    %v8045 = vld [vmem:[#allocation19 + $0xc58] sm:$0xff]
    %v8046 = vld [vmem:[#allocation19 + $0xc60] sm:$0xff]
    %v8047 = vld [vmem:[#allocation19 + $0xc68] sm:$0xff]
    %v8048 = vld [vmem:[#allocation19 + $0xc70] sm:$0xff]
    %v8049 = vld [vmem:[#allocation19 + $0xc78] sm:$0xff]
    %v8050 = vld [vmem:[#allocation19 + $0xc80] sm:$0xff]
    %v8051 = vld [vmem:[#allocation19 + $0xc88] sm:$0xff]
    %v8052 = vld [vmem:[#allocation19 + $0xc90] sm:$0xff]
    %v8053 = vld [vmem:[#allocation19 + $0xc98] sm:$0xff]
    %v8054 = vld [vmem:[#allocation19 + $0xca0] sm:$0xff]
    %v8055 = vld [vmem:[#allocation19 + $0xca8] sm:$0xff]
    %v8056 = vld [vmem:[#allocation19 + $0xcb0] sm:$0xff]
    %v8057 = vld [vmem:[#allocation19 + $0xcb8] sm:$0xff]
    %v8058 = vld [vmem:[#allocation19 + $0xcc0] sm:$0xff]
    %v8059 = vld [vmem:[#allocation19 + $0xcc8] sm:$0xff]
    %v8060 = vld [vmem:[#allocation19 + $0xcd0] sm:$0xff]
    %v8061 = vld [vmem:[#allocation19 + $0xcd8] sm:$0xff]
    %v8062 = vld [vmem:[#allocation19 + $0xce0] sm:$0xff]
    %v8063 = vld [vmem:[#allocation19 + $0xce8] sm:$0xff]
    %v8064 = vld [vmem:[#allocation19 + $0xcf0] sm:$0xff]
    %v8065 = vld [vmem:[#allocation19 + $0xcf8] sm:$0xff]
    %v8066 = vld [vmem:[#allocation19 + $0xd00] sm:$0xff]
    %v8067 = vld [vmem:[#allocation19 + $0xd08] sm:$0xff]
    %v8068 = vld [vmem:[#allocation19 + $0xd10] sm:$0xff]
    %v8069 = vld [vmem:[#allocation19 + $0xd18] sm:$0xff]
    %v8070 = vld [vmem:[#allocation19 + $0xd20] sm:$0xff]
    %v8071 = vld [vmem:[#allocation19 + $0xd28] sm:$0xff]
    %v8072 = vld [vmem:[#allocation19 + $0xd30] sm:$0xff]
    %v8073 = vld [vmem:[#allocation19 + $0xd38] sm:$0xff]
    %v8074 = vld [vmem:[#allocation19 + $0xd40] sm:$0xff]
    %v8075 = vld [vmem:[#allocation19 + $0xd48] sm:$0xff]
    %v8076 = vld [vmem:[#allocation19 + $0xd50] sm:$0xff]
    %v8077 = vld [vmem:[#allocation19 + $0xd58] sm:$0xff]
    %v8078 = vld [vmem:[#allocation19 + $0xd60] sm:$0xff]
    %v8079 = vld [vmem:[#allocation19 + $0xd68] sm:$0xff]
    %v8080 = vld [vmem:[#allocation19 + $0xd70] sm:$0xff]
    %v8081 = vld [vmem:[#allocation19 + $0xd78] sm:$0xff]
    %v8082 = vld [vmem:[#allocation20] sm:$0x3]
    %v8084 = vlaneseq
    %v8085 = vshrl.u32 %v8084, 7
    %v8086 = vsub.s32 0, %v8085
    %v8087 = vrot.slane %v8082, %v8086
    %v8088 = vlaneseq
    %v8089 = vshrl.u32 %v8088, 7
    %v8090 = vsub.s32 1, %v8089
    %v8091 = vrot.slane %v8082, %v8090
    %v8526 = vunpack.c.l.b16 %v7650
    %v8527 = vunpack.c.h.b16 %v7650
    %v8528 = vunpack.c.l.b16 %v7651
    %v8529 = vunpack.c.h.b16 %v7651
    %v8530 = vunpack.c.l.b16 %v7652
    %v8531 = vunpack.c.h.b16 %v7652
    %v8532 = vunpack.c.l.b16 %v7653
    %v8533 = vunpack.c.h.b16 %v7653
    %v8534 = vunpack.c.l.b16 %v7654
    %v8535 = vunpack.c.h.b16 %v7654
    %v8536 = vunpack.c.l.b16 %v7655
    %v8537 = vunpack.c.h.b16 %v7655
    %v8538 = vunpack.c.l.b16 %v7656
    %v8539 = vunpack.c.h.b16 %v7656
    %v8540 = vunpack.c.l.b16 %v7657
    %v8541 = vunpack.c.h.b16 %v7657
    %v8542 = vunpack.c.l.b16 %v7658
    %v8543 = vunpack.c.h.b16 %v7658
    %v8544 = vunpack.c.l.b16 %v7659
    %v8545 = vunpack.c.h.b16 %v7659
    %v8546 = vunpack.c.l.b16 %v7660
    %v8547 = vunpack.c.h.b16 %v7660
    %v8548 = vunpack.c.l.b16 %v7661
    %v8549 = vunpack.c.h.b16 %v7661
    %v8550 = vunpack.c.l.b16 %v7662
    %v8551 = vunpack.c.h.b16 %v7662
    %v8552 = vunpack.c.l.b16 %v7663
    %v8553 = vunpack.c.h.b16 %v7663
    %v8554 = vunpack.c.l.b16 %v7664
    %v8555 = vunpack.c.h.b16 %v7664
    %v8556 = vunpack.c.l.b16 %v7665
    %v8557 = vunpack.c.h.b16 %v7665
    %v8558 = vunpack.c.l.b16 %v7666
    %v8559 = vunpack.c.h.b16 %v7666
    %v8560 = vunpack.c.l.b16 %v7667
    %v8561 = vunpack.c.h.b16 %v7667
    %v8562 = vunpack.c.l.b16 %v7668
    %v8563 = vunpack.c.h.b16 %v7668
    %v8564 = vunpack.c.l.b16 %v7669
    %v8565 = vunpack.c.h.b16 %v7669
    %v8566 = vunpack.c.l.b16 %v7670
    %v8567 = vunpack.c.h.b16 %v7670
    %v8568 = vunpack.c.l.b16 %v7671
    %v8569 = vunpack.c.h.b16 %v7671
    %v8570 = vunpack.c.l.b16 %v7672
    %v8571 = vunpack.c.h.b16 %v7672
    %v8572 = vunpack.c.l.b16 %v7673
    %v8573 = vunpack.c.h.b16 %v7673
    %v8574 = vunpack.c.l.b16 %v7674
    %v8575 = vunpack.c.h.b16 %v7674
    %v8576 = vunpack.c.l.b16 %v7675
    %v8577 = vunpack.c.h.b16 %v7675
    %v8578 = vunpack.c.l.b16 %v7676
    %v8579 = vunpack.c.h.b16 %v7676
    %v8580 = vunpack.c.l.b16 %v7677
    %v8581 = vunpack.c.h.b16 %v7677
    %v8582 = vunpack.c.l.b16 %v7678
    %v8583 = vunpack.c.h.b16 %v7678
    %v8584 = vunpack.c.l.b16 %v7679
    %v8585 = vunpack.c.h.b16 %v7679
    %v8586 = vunpack.c.l.b16 %v7680
    %v8587 = vunpack.c.h.b16 %v7680
    %v8588 = vunpack.c.l.b16 %v7681
    %v8589 = vunpack.c.h.b16 %v7681
    %v8590 = vunpack.c.l.b16 %v7682
    %v8591 = vunpack.c.h.b16 %v7682
    %v8592 = vunpack.c.l.b16 %v7683
    %v8593 = vunpack.c.h.b16 %v7683
    %v8594 = vunpack.c.l.b16 %v7684
    %v8595 = vunpack.c.h.b16 %v7684
    %v8596 = vunpack.c.l.b16 %v7685
    %v8597 = vunpack.c.h.b16 %v7685
    %v8598 = vunpack.c.l.b16 %v7686
    %v8599 = vunpack.c.h.b16 %v7686
    %v8600 = vunpack.c.l.b16 %v7687
    %v8601 = vunpack.c.h.b16 %v7687
    %v8602 = vunpack.c.l.b16 %v7688
    %v8603 = vunpack.c.h.b16 %v7688
    %v8604 = vunpack.c.l.b16 %v7689
    %v8605 = vunpack.c.h.b16 %v7689
    %v8606 = vunpack.c.l.b16 %v7690
    %v8607 = vunpack.c.h.b16 %v7690
    %v8608 = vunpack.c.l.b16 %v7691
    %v8609 = vunpack.c.h.b16 %v7691
    %v8610 = vunpack.c.l.b16 %v7692
    %v8611 = vunpack.c.h.b16 %v7692
    %v8612 = vunpack.c.l.b16 %v7693
    %v8613 = vunpack.c.h.b16 %v7693
    %v8614 = vunpack.c.l.b16 %v7694
    %v8615 = vunpack.c.h.b16 %v7694
    %v8616 = vunpack.c.l.b16 %v7695
    %v8617 = vunpack.c.h.b16 %v7695
    %v8618 = vunpack.c.l.b16 %v7696
    %v8619 = vunpack.c.h.b16 %v7696
    %v8620 = vunpack.c.l.b16 %v7697
    %v8621 = vunpack.c.h.b16 %v7697
    %v8622 = vunpack.c.l.b16 %v7698
    %v8623 = vunpack.c.h.b16 %v7698
    %v8624 = vunpack.c.l.b16 %v7699
    %v8625 = vunpack.c.h.b16 %v7699
    %v8626 = vunpack.c.l.b16 %v7700
    %v8627 = vunpack.c.h.b16 %v7700
    %v8628 = vunpack.c.l.b16 %v7701
    %v8629 = vunpack.c.h.b16 %v7701
    %v8630 = vunpack.c.l.b16 %v7702
    %v8631 = vunpack.c.h.b16 %v7702
    %v8632 = vunpack.c.l.b16 %v7703
    %v8633 = vunpack.c.h.b16 %v7703
    %v8634 = vunpack.c.l.b16 %v7704
    %v8635 = vunpack.c.h.b16 %v7704
    %v8636 = vunpack.c.l.b16 %v7705
    %v8637 = vunpack.c.h.b16 %v7705
    %v8638 = vunpack.c.l.b16 %v7706
    %v8639 = vunpack.c.h.b16 %v7706
    %v8640 = vunpack.c.l.b16 %v7707
    %v8641 = vunpack.c.h.b16 %v7707
    %v8642 = vunpack.c.l.b16 %v7708
    %v8643 = vunpack.c.h.b16 %v7708
    %v8644 = vunpack.c.l.b16 %v7709
    %v8645 = vunpack.c.h.b16 %v7709
    %v8646 = vunpack.c.l.b16 %v7710
    %v8647 = vunpack.c.h.b16 %v7710
    %v8648 = vunpack.c.l.b16 %v7711
    %v8649 = vunpack.c.h.b16 %v7711
    %v8650 = vunpack.c.l.b16 %v7712
    %v8651 = vunpack.c.h.b16 %v7712
    %v8652 = vunpack.c.l.b16 %v7713
    %v8653 = vunpack.c.h.b16 %v7713
    %v8654 = vunpack.c.l.b16 %v7714
    %v8655 = vunpack.c.h.b16 %v7714
    %v8656 = vunpack.c.l.b16 %v7715
    %v8657 = vunpack.c.h.b16 %v7715
    %v8658 = vunpack.c.l.b16 %v7716
    %v8659 = vunpack.c.h.b16 %v7716
    %v8660 = vunpack.c.l.b16 %v7717
    %v8661 = vunpack.c.h.b16 %v7717
    %v8662 = vunpack.c.l.b16 %v7718
    %v8663 = vunpack.c.h.b16 %v7718
    %v8664 = vunpack.c.l.b16 %v7719
    %v8665 = vunpack.c.h.b16 %v7719
    %v8666 = vunpack.c.l.b16 %v7720
    %v8667 = vunpack.c.h.b16 %v7720
    %v8668 = vunpack.c.l.b16 %v7721
    %v8669 = vunpack.c.h.b16 %v7721
    %v8670 = vunpack.c.l.b16 %v7722
    %v8671 = vunpack.c.h.b16 %v7722
    %v8672 = vunpack.c.l.b16 %v7723
    %v8673 = vunpack.c.h.b16 %v7723
    %v8674 = vunpack.c.l.b16 %v7724
    %v8675 = vunpack.c.h.b16 %v7724
    %v8676 = vunpack.c.l.b16 %v7725
    %v8677 = vunpack.c.h.b16 %v7725
    %v8678 = vunpack.c.l.b16 %v7726
    %v8679 = vunpack.c.h.b16 %v7726
    %v8680 = vunpack.c.l.b16 %v7727
    %v8681 = vunpack.c.h.b16 %v7727
    %v8682 = vunpack.c.l.b16 %v7728
    %v8683 = vunpack.c.h.b16 %v7728
    %v8684 = vunpack.c.l.b16 %v7729
    %v8685 = vunpack.c.h.b16 %v7729
    %v8686 = vunpack.c.l.b16 %v7730
    %v8687 = vunpack.c.h.b16 %v7730
    %v8688 = vunpack.c.l.b16 %v7731
    %v8689 = vunpack.c.h.b16 %v7731
    %v8690 = vunpack.c.l.b16 %v7732
    %v8691 = vunpack.c.h.b16 %v7732
    %v8692 = vunpack.c.l.b16 %v7733
    %v8693 = vunpack.c.h.b16 %v7733
    %v8694 = vunpack.c.l.b16 %v7734
    %v8695 = vunpack.c.h.b16 %v7734
    %v8696 = vunpack.c.l.b16 %v7735
    %v8697 = vunpack.c.h.b16 %v7735
    %v8698 = vunpack.c.l.b16 %v7736
    %v8699 = vunpack.c.h.b16 %v7736
    %v8700 = vunpack.c.l.b16 %v7737
    %v8701 = vunpack.c.h.b16 %v7737
    %v8702 = vunpack.c.l.b16 %v7738
    %v8703 = vunpack.c.h.b16 %v7738
    %v8704 = vunpack.c.l.b16 %v7739
    %v8705 = vunpack.c.h.b16 %v7739
    %v8706 = vunpack.c.l.b16 %v7740
    %v8707 = vunpack.c.h.b16 %v7740
    %v8708 = vunpack.c.l.b16 %v7741
    %v8709 = vunpack.c.h.b16 %v7741
    %v8710 = vunpack.c.l.b16 %v7742
    %v8711 = vunpack.c.h.b16 %v7742
    %v8712 = vunpack.c.l.b16 %v7743
    %v8713 = vunpack.c.h.b16 %v7743
    %v8714 = vunpack.c.l.b16 %v7744
    %v8715 = vunpack.c.h.b16 %v7744
    %v8716 = vunpack.c.l.b16 %v7745
    %v8717 = vunpack.c.h.b16 %v7745
    %v8718 = vunpack.c.l.b16 %v7746
    %v8719 = vunpack.c.h.b16 %v7746
    %v8720 = vunpack.c.l.b16 %v7747
    %v8721 = vunpack.c.h.b16 %v7747
    %v8722 = vunpack.c.l.b16 %v7748
    %v8723 = vunpack.c.h.b16 %v7748
    %v8724 = vunpack.c.l.b16 %v7749
    %v8725 = vunpack.c.h.b16 %v7749
    %v8726 = vunpack.c.l.b16 %v7750
    %v8727 = vunpack.c.h.b16 %v7750
    %v8728 = vunpack.c.l.b16 %v7751
    %v8729 = vunpack.c.h.b16 %v7751
    %v8730 = vunpack.c.l.b16 %v7752
    %v8731 = vunpack.c.h.b16 %v7752
    %v8732 = vunpack.c.l.b16 %v7753
    %v8733 = vunpack.c.h.b16 %v7753
    %v8734 = vunpack.c.l.b16 %v7754
    %v8735 = vunpack.c.h.b16 %v7754
    %v8736 = vunpack.c.l.b16 %v7755
    %v8737 = vunpack.c.h.b16 %v7755
    %v8738 = vunpack.c.l.b16 %v7756
    %v8739 = vunpack.c.h.b16 %v7756
    %v8740 = vunpack.c.l.b16 %v7757
    %v8741 = vunpack.c.h.b16 %v7757
    %v8742 = vunpack.c.l.b16 %v7758
    %v8743 = vunpack.c.h.b16 %v7758
    %v8744 = vunpack.c.l.b16 %v7759
    %v8745 = vunpack.c.h.b16 %v7759
    %v8746 = vunpack.c.l.b16 %v7760
    %v8747 = vunpack.c.h.b16 %v7760
    %v8748 = vunpack.c.l.b16 %v7761
    %v8749 = vunpack.c.h.b16 %v7761
    %v8750 = vunpack.c.l.b16 %v7762
    %v8751 = vunpack.c.h.b16 %v7762
    %v8752 = vunpack.c.l.b16 %v7763
    %v8753 = vunpack.c.h.b16 %v7763
    %v8754 = vunpack.c.l.b16 %v7764
    %v8755 = vunpack.c.h.b16 %v7764
    %v8756 = vunpack.c.l.b16 %v7765
    %v8757 = vunpack.c.h.b16 %v7765
    %v8758 = vunpack.c.l.b16 %v7766
    %v8759 = vunpack.c.h.b16 %v7766
    %v8760 = vunpack.c.l.b16 %v7767
    %v8761 = vunpack.c.h.b16 %v7767
    %v8762 = vunpack.c.l.b16 %v7768
    %v8763 = vunpack.c.h.b16 %v7768
    %v8764 = vunpack.c.l.b16 %v7769
    %v8765 = vunpack.c.h.b16 %v7769
    %v8766 = vunpack.c.l.b16 %v7770
    %v8767 = vunpack.c.h.b16 %v7770
    %v8768 = vunpack.c.l.b16 %v7771
    %v8769 = vunpack.c.h.b16 %v7771
    %v8770 = vunpack.c.l.b16 %v7772
    %v8771 = vunpack.c.h.b16 %v7772
    %v8772 = vunpack.c.l.b16 %v7773
    %v8773 = vunpack.c.h.b16 %v7773
    %v8774 = vunpack.c.l.b16 %v7774
    %v8775 = vunpack.c.h.b16 %v7774
    %v8776 = vunpack.c.l.b16 %v7775
    %v8777 = vunpack.c.h.b16 %v7775
    %v8778 = vunpack.c.l.b16 %v7776
    %v8779 = vunpack.c.h.b16 %v7776
    %v8780 = vunpack.c.l.b16 %v7777
    %v8781 = vunpack.c.h.b16 %v7777
    %v8782 = vunpack.c.l.b16 %v7778
    %v8783 = vunpack.c.h.b16 %v7778
    %v8784 = vunpack.c.l.b16 %v7779
    %v8785 = vunpack.c.h.b16 %v7779
    %v8786 = vunpack.c.l.b16 %v7780
    %v8787 = vunpack.c.h.b16 %v7780
    %v8788 = vunpack.c.l.b16 %v7781
    %v8789 = vunpack.c.h.b16 %v7781
    %v8790 = vunpack.c.l.b16 %v7782
    %v8791 = vunpack.c.h.b16 %v7782
    %v8792 = vunpack.c.l.b16 %v7783
    %v8793 = vunpack.c.h.b16 %v7783
    %v8794 = vunpack.c.l.b16 %v7784
    %v8795 = vunpack.c.h.b16 %v7784
    %v8796 = vunpack.c.l.b16 %v7785
    %v8797 = vunpack.c.h.b16 %v7785
    %v8798 = vunpack.c.l.b16 %v7786
    %v8799 = vunpack.c.h.b16 %v7786
    %v8800 = vunpack.c.l.b16 %v7787
    %v8801 = vunpack.c.h.b16 %v7787
    %v8802 = vunpack.c.l.b16 %v7788
    %v8803 = vunpack.c.h.b16 %v7788
    %v8804 = vunpack.c.l.b16 %v7789
    %v8805 = vunpack.c.h.b16 %v7789
    %v8806 = vunpack.c.l.b16 %v7790
    %v8807 = vunpack.c.h.b16 %v7790
    %v8808 = vunpack.c.l.b16 %v7791
    %v8809 = vunpack.c.h.b16 %v7791
    %v8810 = vunpack.c.l.b16 %v7792
    %v8811 = vunpack.c.h.b16 %v7792
    %v8812 = vunpack.c.l.b16 %v7793
    %v8813 = vunpack.c.h.b16 %v7793
    %v8814 = vunpack.c.l.b16 %v7794
    %v8815 = vunpack.c.h.b16 %v7794
    %v8816 = vunpack.c.l.b16 %v7795
    %v8817 = vunpack.c.h.b16 %v7795
    %v8818 = vunpack.c.l.b16 %v7796
    %v8819 = vunpack.c.h.b16 %v7796
    %v8820 = vunpack.c.l.b16 %v7797
    %v8821 = vunpack.c.h.b16 %v7797
    %v8822 = vunpack.c.l.b16 %v7798
    %v8823 = vunpack.c.h.b16 %v7798
    %v8824 = vunpack.c.l.b16 %v7799
    %v8825 = vunpack.c.h.b16 %v7799
    %v8826 = vunpack.c.l.b16 %v7800
    %v8827 = vunpack.c.h.b16 %v7800
    %v8828 = vunpack.c.l.b16 %v7801
    %v8829 = vunpack.c.h.b16 %v7801
    %v8830 = vunpack.c.l.b16 %v7802
    %v8831 = vunpack.c.h.b16 %v7802
    %v8832 = vunpack.c.l.b16 %v7803
    %v8833 = vunpack.c.h.b16 %v7803
    %v8834 = vunpack.c.l.b16 %v7804
    %v8835 = vunpack.c.h.b16 %v7804
    %v8836 = vunpack.c.l.b16 %v7805
    %v8837 = vunpack.c.h.b16 %v7805
    %v8838 = vunpack.c.l.b16 %v7806
    %v8839 = vunpack.c.h.b16 %v7806
    %v8840 = vunpack.c.l.b16 %v7807
    %v8841 = vunpack.c.h.b16 %v7807
    %v8842 = vunpack.c.l.b16 %v7808
    %v8843 = vunpack.c.h.b16 %v7808
    %v8844 = vunpack.c.l.b16 %v7809
    %v8845 = vunpack.c.h.b16 %v7809
    %v8846 = vunpack.c.l.b16 %v7810
    %v8847 = vunpack.c.h.b16 %v7810
    %v8848 = vunpack.c.l.b16 %v7811
    %v8849 = vunpack.c.h.b16 %v7811
    %v8850 = vunpack.c.l.b16 %v7812
    %v8851 = vunpack.c.h.b16 %v7812
    %v8852 = vunpack.c.l.b16 %v7813
    %v8853 = vunpack.c.h.b16 %v7813
    %v8854 = vunpack.c.l.b16 %v7814
    %v8855 = vunpack.c.h.b16 %v7814
    %v8856 = vunpack.c.l.b16 %v7815
    %v8857 = vunpack.c.h.b16 %v7815
    %v8858 = vunpack.c.l.b16 %v7816
    %v8859 = vunpack.c.h.b16 %v7816
    %v8860 = vunpack.c.l.b16 %v7817
    %v8861 = vunpack.c.h.b16 %v7817
    %v8862 = vunpack.c.l.b16 %v7818
    %v8863 = vunpack.c.h.b16 %v7818
    %v8864 = vunpack.c.l.b16 %v7819
    %v8865 = vunpack.c.h.b16 %v7819
    %v8866 = vunpack.c.l.b16 %v7820
    %v8867 = vunpack.c.h.b16 %v7820
    %v8868 = vunpack.c.l.b16 %v7821
    %v8869 = vunpack.c.h.b16 %v7821
    %v8870 = vunpack.c.l.b16 %v7822
    %v8871 = vunpack.c.h.b16 %v7822
    %v8872 = vunpack.c.l.b16 %v7823
    %v8873 = vunpack.c.h.b16 %v7823
    %v8874 = vunpack.c.l.b16 %v7824
    %v8875 = vunpack.c.h.b16 %v7824
    %v8876 = vunpack.c.l.b16 %v7825
    %v8877 = vunpack.c.h.b16 %v7825
    %v8878 = vunpack.c.l.b16 %v7826
    %v8879 = vunpack.c.h.b16 %v7826
    %v8880 = vunpack.c.l.b16 %v7827
    %v8881 = vunpack.c.h.b16 %v7827
    %v8882 = vunpack.c.l.b16 %v7828
    %v8883 = vunpack.c.h.b16 %v7828
    %v8884 = vunpack.c.l.b16 %v7829
    %v8885 = vunpack.c.h.b16 %v7829
    %v8886 = vunpack.c.l.b16 %v7830
    %v8887 = vunpack.c.h.b16 %v7830
    %v8888 = vunpack.c.l.b16 %v7831
    %v8889 = vunpack.c.h.b16 %v7831
    %v8890 = vunpack.c.l.b16 %v7832
    %v8891 = vunpack.c.h.b16 %v7832
    %v8892 = vunpack.c.l.b16 %v7833
    %v8893 = vunpack.c.h.b16 %v7833
    %v8894 = vunpack.c.l.b16 %v7834
    %v8895 = vunpack.c.h.b16 %v7834
    %v8896 = vunpack.c.l.b16 %v7835
    %v8897 = vunpack.c.h.b16 %v7835
    %v8898 = vunpack.c.l.b16 %v7836
    %v8899 = vunpack.c.h.b16 %v7836
    %v8900 = vunpack.c.l.b16 %v7837
    %v8901 = vunpack.c.h.b16 %v7837
    %v8902 = vunpack.c.l.b16 %v7838
    %v8903 = vunpack.c.h.b16 %v7838
    %v8904 = vunpack.c.l.b16 %v7839
    %v8905 = vunpack.c.h.b16 %v7839
    %v8906 = vunpack.c.l.b16 %v7840
    %v8907 = vunpack.c.h.b16 %v7840
    %v8908 = vunpack.c.l.b16 %v7841
    %v8909 = vunpack.c.h.b16 %v7841
    %v8910 = vunpack.c.l.b16 %v7842
    %v8911 = vunpack.c.h.b16 %v7842
    %v8912 = vunpack.c.l.b16 %v7843
    %v8913 = vunpack.c.h.b16 %v7843
    %v8914 = vunpack.c.l.b16 %v7844
    %v8915 = vunpack.c.h.b16 %v7844
    %v8916 = vunpack.c.l.b16 %v7845
    %v8917 = vunpack.c.h.b16 %v7845
    %v8918 = vunpack.c.l.b16 %v7846
    %v8919 = vunpack.c.h.b16 %v7846
    %v8920 = vunpack.c.l.b16 %v7847
    %v8921 = vunpack.c.h.b16 %v7847
    %v8922 = vunpack.c.l.b16 %v7848
    %v8923 = vunpack.c.h.b16 %v7848
    %v8924 = vunpack.c.l.b16 %v7849
    %v8925 = vunpack.c.h.b16 %v7849
    %v8926 = vunpack.c.l.b16 %v7850
    %v8927 = vunpack.c.h.b16 %v7850
    %v8928 = vunpack.c.l.b16 %v7851
    %v8929 = vunpack.c.h.b16 %v7851
    %v8930 = vunpack.c.l.b16 %v7852
    %v8931 = vunpack.c.h.b16 %v7852
    %v8932 = vunpack.c.l.b16 %v7853
    %v8933 = vunpack.c.h.b16 %v7853
    %v8934 = vunpack.c.l.b16 %v7854
    %v8935 = vunpack.c.h.b16 %v7854
    %v8936 = vunpack.c.l.b16 %v7855
    %v8937 = vunpack.c.h.b16 %v7855
    %v8938 = vunpack.c.l.b16 %v7856
    %v8939 = vunpack.c.h.b16 %v7856
    %v8940 = vunpack.c.l.b16 %v7857
    %v8941 = vunpack.c.h.b16 %v7857
    %v8942 = vunpack.c.l.b16 %v7858
    %v8943 = vunpack.c.h.b16 %v7858
    %v8944 = vunpack.c.l.b16 %v7859
    %v8945 = vunpack.c.h.b16 %v7859
    %v8946 = vunpack.c.l.b16 %v7860
    %v8947 = vunpack.c.h.b16 %v7860
    %v8948 = vunpack.c.l.b16 %v7861
    %v8949 = vunpack.c.h.b16 %v7861
    %v8950 = vunpack.c.l.b16 %v7862
    %v8951 = vunpack.c.h.b16 %v7862
    %v8952 = vunpack.c.l.b16 %v7863
    %v8953 = vunpack.c.h.b16 %v7863
    %v8954 = vunpack.c.l.b16 %v7864
    %v8955 = vunpack.c.h.b16 %v7864
    %v8956 = vunpack.c.l.b16 %v7865
    %v8957 = vunpack.c.h.b16 %v7865
    %v8958 = vunpack.c.l.b16 %v7866
    %v8959 = vunpack.c.h.b16 %v7866
    %v8960 = vunpack.c.l.b16 %v7867
    %v8961 = vunpack.c.h.b16 %v7867
    %v8962 = vunpack.c.l.b16 %v7868
    %v8963 = vunpack.c.h.b16 %v7868
    %v8964 = vunpack.c.l.b16 %v7869
    %v8965 = vunpack.c.h.b16 %v7869
    %v8966 = vunpack.c.l.b16 %v7870
    %v8967 = vunpack.c.h.b16 %v7870
    %v8968 = vunpack.c.l.b16 %v7871
    %v8969 = vunpack.c.h.b16 %v7871
    %v8970 = vunpack.c.l.b16 %v7872
    %v8971 = vunpack.c.h.b16 %v7872
    %v8972 = vunpack.c.l.b16 %v7873
    %v8973 = vunpack.c.h.b16 %v7873
    %v8974 = vunpack.c.l.b16 %v7874
    %v8975 = vunpack.c.h.b16 %v7874
    %v8976 = vunpack.c.l.b16 %v7875
    %v8977 = vunpack.c.h.b16 %v7875
    %v8978 = vunpack.c.l.b16 %v7876
    %v8979 = vunpack.c.h.b16 %v7876
    %v8980 = vunpack.c.l.b16 %v7877
    %v8981 = vunpack.c.h.b16 %v7877
    %v8982 = vunpack.c.l.b16 %v7878
    %v8983 = vunpack.c.h.b16 %v7878
    %v8984 = vunpack.c.l.b16 %v7879
    %v8985 = vunpack.c.h.b16 %v7879
    %v8986 = vunpack.c.l.b16 %v7880
    %v8987 = vunpack.c.h.b16 %v7880
    %v8988 = vunpack.c.l.b16 %v7881
    %v8989 = vunpack.c.h.b16 %v7881
    %v8990 = vunpack.c.l.b16 %v7882
    %v8991 = vunpack.c.h.b16 %v7882
    %v8992 = vunpack.c.l.b16 %v7883
    %v8993 = vunpack.c.h.b16 %v7883
    %v8994 = vunpack.c.l.b16 %v7884
    %v8995 = vunpack.c.h.b16 %v7884
    %v8996 = vunpack.c.l.b16 %v7885
    %v8997 = vunpack.c.h.b16 %v7885
    %v8998 = vunpack.c.l.b16 %v7886
    %v8999 = vunpack.c.h.b16 %v7886
    %v9000 = vunpack.c.l.b16 %v7887
    %v9001 = vunpack.c.h.b16 %v7887
    %v9002 = vunpack.c.l.b16 %v7888
    %v9003 = vunpack.c.h.b16 %v7888
    %v9004 = vunpack.c.l.b16 %v7889
    %v9005 = vunpack.c.h.b16 %v7889
    %v9006 = vunpack.c.l.b16 %v7890
    %v9007 = vunpack.c.h.b16 %v7890
    %v9008 = vunpack.c.l.b16 %v7891
    %v9009 = vunpack.c.h.b16 %v7891
    %v9010 = vunpack.c.l.b16 %v7892
    %v9011 = vunpack.c.h.b16 %v7892
    %v9012 = vunpack.c.l.b16 %v7893
    %v9013 = vunpack.c.h.b16 %v7893
    %v9014 = vunpack.c.l.b16 %v7894
    %v9015 = vunpack.c.h.b16 %v7894
    %v9016 = vunpack.c.l.b16 %v7895
    %v9017 = vunpack.c.h.b16 %v7895
    %v9018 = vunpack.c.l.b16 %v7896
    %v9019 = vunpack.c.h.b16 %v7896
    %v9020 = vunpack.c.l.b16 %v7897
    %v9021 = vunpack.c.h.b16 %v7897
    %v9022 = vunpack.c.l.b16 %v7898
    %v9023 = vunpack.c.h.b16 %v7898
    %v9024 = vunpack.c.l.b16 %v7899
    %v9025 = vunpack.c.h.b16 %v7899
    %v9026 = vunpack.c.l.b16 %v7900
    %v9027 = vunpack.c.h.b16 %v7900
    %v9028 = vunpack.c.l.b16 %v7901
    %v9029 = vunpack.c.h.b16 %v7901
    %v9030 = vunpack.c.l.b16 %v7902
    %v9031 = vunpack.c.h.b16 %v7902
    %v9032 = vunpack.c.l.b16 %v7903
    %v9033 = vunpack.c.h.b16 %v7903
    %v9034 = vunpack.c.l.b16 %v7904
    %v9035 = vunpack.c.h.b16 %v7904
    %v9036 = vunpack.c.l.b16 %v7905
    %v9037 = vunpack.c.h.b16 %v7905
    %v9038 = vunpack.c.l.b16 %v7906
    %v9039 = vunpack.c.h.b16 %v7906
    %v9040 = vunpack.c.l.b16 %v7907
    %v9041 = vunpack.c.h.b16 %v7907
    %v9042 = vunpack.c.l.b16 %v7908
    %v9043 = vunpack.c.h.b16 %v7908
    %v9044 = vunpack.c.l.b16 %v7909
    %v9045 = vunpack.c.h.b16 %v7909
    %v9046 = vunpack.c.l.b16 %v7910
    %v9047 = vunpack.c.h.b16 %v7910
    %v9048 = vunpack.c.l.b16 %v7911
    %v9049 = vunpack.c.h.b16 %v7911
    %v9050 = vunpack.c.l.b16 %v7912
    %v9051 = vunpack.c.h.b16 %v7912
    %v9052 = vunpack.c.l.b16 %v7913
    %v9053 = vunpack.c.h.b16 %v7913
    %v9054 = vunpack.c.l.b16 %v7914
    %v9055 = vunpack.c.h.b16 %v7914
    %v9056 = vunpack.c.l.b16 %v7915
    %v9057 = vunpack.c.h.b16 %v7915
    %v9058 = vunpack.c.l.b16 %v7916
    %v9059 = vunpack.c.h.b16 %v7916
    %v9060 = vunpack.c.l.b16 %v7917
    %v9061 = vunpack.c.h.b16 %v7917
    %v9062 = vunpack.c.l.b16 %v7918
    %v9063 = vunpack.c.h.b16 %v7918
    %v9064 = vunpack.c.l.b16 %v7919
    %v9065 = vunpack.c.h.b16 %v7919
    %v9066 = vunpack.c.l.b16 %v7920
    %v9067 = vunpack.c.h.b16 %v7920
    %v9068 = vunpack.c.l.b16 %v7921
    %v9069 = vunpack.c.h.b16 %v7921
    %v9070 = vunpack.c.l.b16 %v7922
    %v9071 = vunpack.c.h.b16 %v7922
    %v9072 = vunpack.c.l.b16 %v7923
    %v9073 = vunpack.c.h.b16 %v7923
    %v9074 = vunpack.c.l.b16 %v7924
    %v9075 = vunpack.c.h.b16 %v7924
    %v9076 = vunpack.c.l.b16 %v7925
    %v9077 = vunpack.c.h.b16 %v7925
    %v9078 = vunpack.c.l.b16 %v7926
    %v9079 = vunpack.c.h.b16 %v7926
    %v9080 = vunpack.c.l.b16 %v7927
    %v9081 = vunpack.c.h.b16 %v7927
    %v9082 = vunpack.c.l.b16 %v7928
    %v9083 = vunpack.c.h.b16 %v7928
    %v9084 = vunpack.c.l.b16 %v7929
    %v9085 = vunpack.c.h.b16 %v7929
    %v9086 = vunpack.c.l.b16 %v7930
    %v9087 = vunpack.c.h.b16 %v7930
    %v9088 = vunpack.c.l.b16 %v7931
    %v9089 = vunpack.c.h.b16 %v7931
    %v9090 = vunpack.c.l.b16 %v7932
    %v9091 = vunpack.c.h.b16 %v7932
    %v9092 = vunpack.c.l.b16 %v7933
    %v9093 = vunpack.c.h.b16 %v7933
    %v9094 = vunpack.c.l.b16 %v7934
    %v9095 = vunpack.c.h.b16 %v7934
    %v9096 = vunpack.c.l.b16 %v7935
    %v9097 = vunpack.c.h.b16 %v7935
    %v9098 = vunpack.c.l.b16 %v7936
    %v9099 = vunpack.c.h.b16 %v7936
    %v9100 = vunpack.c.l.b16 %v7937
    %v9101 = vunpack.c.h.b16 %v7937
    %v9102 = vunpack.c.l.b16 %v7938
    %v9103 = vunpack.c.h.b16 %v7938
    %v9104 = vunpack.c.l.b16 %v7939
    %v9105 = vunpack.c.h.b16 %v7939
    %v9106 = vunpack.c.l.b16 %v7940
    %v9107 = vunpack.c.h.b16 %v7940
    %v9108 = vunpack.c.l.b16 %v7941
    %v9109 = vunpack.c.h.b16 %v7941
    %v9110 = vunpack.c.l.b16 %v7942
    %v9111 = vunpack.c.h.b16 %v7942
    %v9112 = vunpack.c.l.b16 %v7943
    %v9113 = vunpack.c.h.b16 %v7943
    %v9114 = vunpack.c.l.b16 %v7944
    %v9115 = vunpack.c.h.b16 %v7944
    %v9116 = vunpack.c.l.b16 %v7945
    %v9117 = vunpack.c.h.b16 %v7945
    %v9118 = vunpack.c.l.b16 %v7946
    %v9119 = vunpack.c.h.b16 %v7946
    %v9120 = vunpack.c.l.b16 %v7947
    %v9121 = vunpack.c.h.b16 %v7947
    %v9122 = vunpack.c.l.b16 %v7948
    %v9123 = vunpack.c.h.b16 %v7948
    %v9124 = vunpack.c.l.b16 %v7949
    %v9125 = vunpack.c.h.b16 %v7949
    %v9126 = vunpack.c.l.b16 %v7950
    %v9127 = vunpack.c.h.b16 %v7950
    %v9128 = vunpack.c.l.b16 %v7951
    %v9129 = vunpack.c.h.b16 %v7951
    %v9130 = vunpack.c.l.b16 %v7952
    %v9131 = vunpack.c.h.b16 %v7952
    %v9132 = vunpack.c.l.b16 %v7953
    %v9133 = vunpack.c.h.b16 %v7953
    %v9134 = vunpack.c.l.b16 %v7954
    %v9135 = vunpack.c.h.b16 %v7954
    %v9136 = vunpack.c.l.b16 %v7955
    %v9137 = vunpack.c.h.b16 %v7955
    %v9138 = vunpack.c.l.b16 %v7956
    %v9139 = vunpack.c.h.b16 %v7956
    %v9140 = vunpack.c.l.b16 %v7957
    %v9141 = vunpack.c.h.b16 %v7957
    %v9142 = vunpack.c.l.b16 %v7958
    %v9143 = vunpack.c.h.b16 %v7958
    %v9144 = vunpack.c.l.b16 %v7959
    %v9145 = vunpack.c.h.b16 %v7959
    %v9146 = vunpack.c.l.b16 %v7960
    %v9147 = vunpack.c.h.b16 %v7960
    %v9148 = vunpack.c.l.b16 %v7961
    %v9149 = vunpack.c.h.b16 %v7961
    %v9150 = vunpack.c.l.b16 %v7962
    %v9151 = vunpack.c.h.b16 %v7962
    %v9152 = vunpack.c.l.b16 %v7963
    %v9153 = vunpack.c.h.b16 %v7963
    %v9154 = vunpack.c.l.b16 %v7964
    %v9155 = vunpack.c.h.b16 %v7964
    %v9156 = vunpack.c.l.b16 %v7965
    %v9157 = vunpack.c.h.b16 %v7965
    %v9158 = vunpack.c.l.b16 %v7966
    %v9159 = vunpack.c.h.b16 %v7966
    %v9160 = vunpack.c.l.b16 %v7967
    %v9161 = vunpack.c.h.b16 %v7967
    %v9162 = vunpack.c.l.b16 %v7968
    %v9163 = vunpack.c.h.b16 %v7968
    %v9164 = vunpack.c.l.b16 %v7969
    %v9165 = vunpack.c.h.b16 %v7969
    %v9166 = vunpack.c.l.b16 %v7970
    %v9167 = vunpack.c.h.b16 %v7970
    %v9168 = vunpack.c.l.b16 %v7971
    %v9169 = vunpack.c.h.b16 %v7971
    %v9170 = vunpack.c.l.b16 %v7972
    %v9171 = vunpack.c.h.b16 %v7972
    %v9172 = vunpack.c.l.b16 %v7973
    %v9173 = vunpack.c.h.b16 %v7973
    %v9174 = vunpack.c.l.b16 %v7974
    %v9175 = vunpack.c.h.b16 %v7974
    %v9176 = vunpack.c.l.b16 %v7975
    %v9177 = vunpack.c.h.b16 %v7975
    %v9178 = vunpack.c.l.b16 %v7976
    %v9179 = vunpack.c.h.b16 %v7976
    %v9180 = vunpack.c.l.b16 %v7977
    %v9181 = vunpack.c.h.b16 %v7977
    %v9182 = vunpack.c.l.b16 %v7978
    %v9183 = vunpack.c.h.b16 %v7978
    %v9184 = vunpack.c.l.b16 %v7979
    %v9185 = vunpack.c.h.b16 %v7979
    %v9186 = vunpack.c.l.b16 %v7980
    %v9187 = vunpack.c.h.b16 %v7980
    %v9188 = vunpack.c.l.b16 %v7981
    %v9189 = vunpack.c.h.b16 %v7981
    %v9190 = vunpack.c.l.b16 %v7982
    %v9191 = vunpack.c.h.b16 %v7982
    %v9192 = vunpack.c.l.b16 %v7983
    %v9193 = vunpack.c.h.b16 %v7983
    %v9194 = vunpack.c.l.b16 %v7984
    %v9195 = vunpack.c.h.b16 %v7984
    %v9196 = vunpack.c.l.b16 %v7985
    %v9197 = vunpack.c.h.b16 %v7985
    %v9198 = vunpack.c.l.b16 %v7986
    %v9199 = vunpack.c.h.b16 %v7986
    %v9200 = vunpack.c.l.b16 %v7987
    %v9201 = vunpack.c.h.b16 %v7987
    %v9202 = vunpack.c.l.b16 %v7988
    %v9203 = vunpack.c.h.b16 %v7988
    %v9204 = vunpack.c.l.b16 %v7989
    %v9205 = vunpack.c.h.b16 %v7989
    %v9206 = vunpack.c.l.b16 %v7990
    %v9207 = vunpack.c.h.b16 %v7990
    %v9208 = vunpack.c.l.b16 %v7991
    %v9209 = vunpack.c.h.b16 %v7991
    %v9210 = vunpack.c.l.b16 %v7992
    %v9211 = vunpack.c.h.b16 %v7992
    %v9212 = vunpack.c.l.b16 %v7993
    %v9213 = vunpack.c.h.b16 %v7993
    %v9214 = vunpack.c.l.b16 %v7994
    %v9215 = vunpack.c.h.b16 %v7994
    %v9216 = vunpack.c.l.b16 %v7995
    %v9217 = vunpack.c.h.b16 %v7995
    %v9218 = vunpack.c.l.b16 %v7996
    %v9219 = vunpack.c.h.b16 %v7996
    %v9220 = vunpack.c.l.b16 %v7997
    %v9221 = vunpack.c.h.b16 %v7997
    %v9222 = vunpack.c.l.b16 %v7998
    %v9223 = vunpack.c.h.b16 %v7998
    %v9224 = vunpack.c.l.b16 %v7999
    %v9225 = vunpack.c.h.b16 %v7999
    %v9226 = vunpack.c.l.b16 %v8000
    %v9227 = vunpack.c.h.b16 %v8000
    %v9228 = vunpack.c.l.b16 %v8001
    %v9229 = vunpack.c.h.b16 %v8001
    %v9230 = vunpack.c.l.b16 %v8002
    %v9231 = vunpack.c.h.b16 %v8002
    %v9232 = vunpack.c.l.b16 %v8003
    %v9233 = vunpack.c.h.b16 %v8003
    %v9234 = vunpack.c.l.b16 %v8004
    %v9235 = vunpack.c.h.b16 %v8004
    %v9236 = vunpack.c.l.b16 %v8005
    %v9237 = vunpack.c.h.b16 %v8005
    %v9238 = vunpack.c.l.b16 %v8006
    %v9239 = vunpack.c.h.b16 %v8006
    %v9240 = vunpack.c.l.b16 %v8007
    %v9241 = vunpack.c.h.b16 %v8007
    %v9242 = vunpack.c.l.b16 %v8008
    %v9243 = vunpack.c.h.b16 %v8008
    %v9244 = vunpack.c.l.b16 %v8009
    %v9245 = vunpack.c.h.b16 %v8009
    %v9246 = vunpack.c.l.b16 %v8010
    %v9247 = vunpack.c.h.b16 %v8010
    %v9248 = vunpack.c.l.b16 %v8011
    %v9249 = vunpack.c.h.b16 %v8011
    %v9250 = vunpack.c.l.b16 %v8012
    %v9251 = vunpack.c.h.b16 %v8012
    %v9252 = vunpack.c.l.b16 %v8013
    %v9253 = vunpack.c.h.b16 %v8013
    %v9254 = vunpack.c.l.b16 %v8014
    %v9255 = vunpack.c.h.b16 %v8014
    %v9256 = vunpack.c.l.b16 %v8015
    %v9257 = vunpack.c.h.b16 %v8015
    %v9258 = vunpack.c.l.b16 %v8016
    %v9259 = vunpack.c.h.b16 %v8016
    %v9260 = vunpack.c.l.b16 %v8017
    %v9261 = vunpack.c.h.b16 %v8017
    %v9262 = vunpack.c.l.b16 %v8018
    %v9263 = vunpack.c.h.b16 %v8018
    %v9264 = vunpack.c.l.b16 %v8019
    %v9265 = vunpack.c.h.b16 %v8019
    %v9266 = vunpack.c.l.b16 %v8020
    %v9267 = vunpack.c.h.b16 %v8020
    %v9268 = vunpack.c.l.b16 %v8021
    %v9269 = vunpack.c.h.b16 %v8021
    %v9270 = vunpack.c.l.b16 %v8022
    %v9271 = vunpack.c.h.b16 %v8022
    %v9272 = vunpack.c.l.b16 %v8023
    %v9273 = vunpack.c.h.b16 %v8023
    %v9274 = vunpack.c.l.b16 %v8024
    %v9275 = vunpack.c.h.b16 %v8024
    %v9276 = vunpack.c.l.b16 %v8025
    %v9277 = vunpack.c.h.b16 %v8025
    %v9278 = vunpack.c.l.b16 %v8026
    %v9279 = vunpack.c.h.b16 %v8026
    %v9280 = vunpack.c.l.b16 %v8027
    %v9281 = vunpack.c.h.b16 %v8027
    %v9282 = vunpack.c.l.b16 %v8028
    %v9283 = vunpack.c.h.b16 %v8028
    %v9284 = vunpack.c.l.b16 %v8029
    %v9285 = vunpack.c.h.b16 %v8029
    %v9286 = vunpack.c.l.b16 %v8030
    %v9287 = vunpack.c.h.b16 %v8030
    %v9288 = vunpack.c.l.b16 %v8031
    %v9289 = vunpack.c.h.b16 %v8031
    %v9290 = vunpack.c.l.b16 %v8032
    %v9291 = vunpack.c.h.b16 %v8032
    %v9292 = vunpack.c.l.b16 %v8033
    %v9293 = vunpack.c.h.b16 %v8033
    %v9294 = vunpack.c.l.b16 %v8034
    %v9295 = vunpack.c.h.b16 %v8034
    %v9296 = vunpack.c.l.b16 %v8035
    %v9297 = vunpack.c.h.b16 %v8035
    %v9298 = vunpack.c.l.b16 %v8036
    %v9299 = vunpack.c.h.b16 %v8036
    %v9300 = vunpack.c.l.b16 %v8037
    %v9301 = vunpack.c.h.b16 %v8037
    %v9302 = vunpack.c.l.b16 %v8038
    %v9303 = vunpack.c.h.b16 %v8038
    %v9304 = vunpack.c.l.b16 %v8039
    %v9305 = vunpack.c.h.b16 %v8039
    %v9306 = vunpack.c.l.b16 %v8040
    %v9307 = vunpack.c.h.b16 %v8040
    %v9308 = vunpack.c.l.b16 %v8041
    %v9309 = vunpack.c.h.b16 %v8041
    %v9310 = vunpack.c.l.b16 %v8042
    %v9311 = vunpack.c.h.b16 %v8042
    %v9312 = vunpack.c.l.b16 %v8043
    %v9313 = vunpack.c.h.b16 %v8043
    %v9314 = vunpack.c.l.b16 %v8044
    %v9315 = vunpack.c.h.b16 %v8044
    %v9316 = vunpack.c.l.b16 %v8045
    %v9317 = vunpack.c.h.b16 %v8045
    %v9318 = vunpack.c.l.b16 %v8046
    %v9319 = vunpack.c.h.b16 %v8046
    %v9320 = vunpack.c.l.b16 %v8047
    %v9321 = vunpack.c.h.b16 %v8047
    %v9322 = vunpack.c.l.b16 %v8048
    %v9323 = vunpack.c.h.b16 %v8048
    %v9324 = vunpack.c.l.b16 %v8049
    %v9325 = vunpack.c.h.b16 %v8049
    %v9326 = vunpack.c.l.b16 %v8050
    %v9327 = vunpack.c.h.b16 %v8050
    %v9328 = vunpack.c.l.b16 %v8051
    %v9329 = vunpack.c.h.b16 %v8051
    %v9330 = vunpack.c.l.b16 %v8052
    %v9331 = vunpack.c.h.b16 %v8052
    %v9332 = vunpack.c.l.b16 %v8053
    %v9333 = vunpack.c.h.b16 %v8053
    %v9334 = vunpack.c.l.b16 %v8054
    %v9335 = vunpack.c.h.b16 %v8054
    %v9336 = vunpack.c.l.b16 %v8055
    %v9337 = vunpack.c.h.b16 %v8055
    %v9338 = vunpack.c.l.b16 %v8056
    %v9339 = vunpack.c.h.b16 %v8056
    %v9340 = vunpack.c.l.b16 %v8057
    %v9341 = vunpack.c.h.b16 %v8057
    %v9342 = vunpack.c.l.b16 %v8058
    %v9343 = vunpack.c.h.b16 %v8058
    %v9344 = vunpack.c.l.b16 %v8059
    %v9345 = vunpack.c.h.b16 %v8059
    %v9346 = vunpack.c.l.b16 %v8060
    %v9347 = vunpack.c.h.b16 %v8060
    %v9348 = vunpack.c.l.b16 %v8061
    %v9349 = vunpack.c.h.b16 %v8061
    %v9350 = vunpack.c.l.b16 %v8062
    %v9351 = vunpack.c.h.b16 %v8062
    %v9352 = vunpack.c.l.b16 %v8063
    %v9353 = vunpack.c.h.b16 %v8063
    %v9354 = vunpack.c.l.b16 %v8064
    %v9355 = vunpack.c.h.b16 %v8064
    %v9356 = vunpack.c.l.b16 %v8065
    %v9357 = vunpack.c.h.b16 %v8065
    %v9358 = vunpack.c.l.b16 %v8066
    %v9359 = vunpack.c.h.b16 %v8066
    %v9360 = vunpack.c.l.b16 %v8067
    %v9361 = vunpack.c.h.b16 %v8067
    %v9362 = vunpack.c.l.b16 %v8068
    %v9363 = vunpack.c.h.b16 %v8068
    %v9364 = vunpack.c.l.b16 %v8069
    %v9365 = vunpack.c.h.b16 %v8069
    %v9366 = vunpack.c.l.b16 %v8070
    %v9367 = vunpack.c.h.b16 %v8070
    %v9368 = vunpack.c.l.b16 %v8071
    %v9369 = vunpack.c.h.b16 %v8071
    %v9370 = vunpack.c.l.b16 %v8072
    %v9371 = vunpack.c.h.b16 %v8072
    %v9372 = vunpack.c.l.b16 %v8073
    %v9373 = vunpack.c.h.b16 %v8073
    %v9374 = vunpack.c.l.b16 %v8074
    %v9375 = vunpack.c.h.b16 %v8074
    %v9376 = vunpack.c.l.b16 %v8075
    %v9377 = vunpack.c.h.b16 %v8075
    %v9378 = vunpack.c.l.b16 %v8076
    %v9379 = vunpack.c.h.b16 %v8076
    %v9380 = vunpack.c.l.b16 %v8077
    %v9381 = vunpack.c.h.b16 %v8077
    %v9382 = vunpack.c.l.b16 %v8078
    %v9383 = vunpack.c.h.b16 %v8078
    %v9384 = vunpack.c.l.b16 %v8079
    %v9385 = vunpack.c.h.b16 %v8079
    %v9386 = vunpack.c.l.b16 %v8080
    %v9387 = vunpack.c.h.b16 %v8080
    %v9388 = vunpack.c.l.b16 %v8081
    %v9389 = vunpack.c.h.b16 %v8081
    %v9390 = vpack.c.b16 %v8528, %v8526
    %v9391 = vpack.c.b16 %v8529, %v8527
    %v9392 = vpack.c.b16 %v8532, %v8530
    %v9393 = vpack.c.b16 %v8533, %v8531
    %v9394 = vpack.c.b16 %v8536, %v8534
    %v9395 = vpack.c.b16 %v8537, %v8535
    %v9396 = vpack.c.b16 %v8540, %v8538
    %v9397 = vpack.c.b16 %v8541, %v8539
    %v9398 = vpack.c.b16 %v8544, %v8542
    %v9399 = vpack.c.b16 %v8545, %v8543
    %v9400 = vpack.c.b16 %v8548, %v8546
    %v9401 = vpack.c.b16 %v8549, %v8547
    %v9402 = vpack.c.b16 %v8552, %v8550
    %v9403 = vpack.c.b16 %v8553, %v8551
    %v9404 = vpack.c.b16 %v8556, %v8554
    %v9405 = vpack.c.b16 %v8557, %v8555
    %v9406 = vpack.c.b16 %v8560, %v8558
    %v9407 = vpack.c.b16 %v8561, %v8559
    %v9408 = vpack.c.b16 %v8564, %v8562
    %v9409 = vpack.c.b16 %v8565, %v8563
    %v9410 = vpack.c.b16 %v8568, %v8566
    %v9411 = vpack.c.b16 %v8569, %v8567
    %v9412 = vpack.c.b16 %v8572, %v8570
    %v9413 = vpack.c.b16 %v8573, %v8571
    %v9414 = vpack.c.b16 %v8576, %v8574
    %v9415 = vpack.c.b16 %v8577, %v8575
    %v9416 = vpack.c.b16 %v8580, %v8578
    %v9417 = vpack.c.b16 %v8581, %v8579
    %v9418 = vpack.c.b16 %v8584, %v8582
    %v9419 = vpack.c.b16 %v8585, %v8583
    %v9420 = vpack.c.b16 %v8588, %v8586
    %v9421 = vpack.c.b16 %v8589, %v8587
    %v9422 = vpack.c.b16 %v8592, %v8590
    %v9423 = vpack.c.b16 %v8593, %v8591
    %v9424 = vpack.c.b16 %v8596, %v8594
    %v9425 = vpack.c.b16 %v8597, %v8595
    %v9426 = vpack.c.b16 %v8600, %v8598
    %v9427 = vpack.c.b16 %v8601, %v8599
    %v9428 = vpack.c.b16 %v8604, %v8602
    %v9429 = vpack.c.b16 %v8605, %v8603
    %v9430 = vpack.c.b16 %v8608, %v8606
    %v9431 = vpack.c.b16 %v8609, %v8607
    %v9432 = vpack.c.b16 %v8612, %v8610
    %v9433 = vpack.c.b16 %v8613, %v8611
    %v9434 = vpack.c.b16 %v8616, %v8614
    %v9435 = vpack.c.b16 %v8617, %v8615
    %v9436 = vpack.c.b16 %v8620, %v8618
    %v9437 = vpack.c.b16 %v8621, %v8619
    %v9438 = vpack.c.b16 %v8624, %v8622
    %v9439 = vpack.c.b16 %v8625, %v8623
    %v9440 = vpack.c.b16 %v8628, %v8626
    %v9441 = vpack.c.b16 %v8629, %v8627
    %v9442 = vpack.c.b16 %v8632, %v8630
    %v9443 = vpack.c.b16 %v8633, %v8631
    %v9444 = vpack.c.b16 %v8636, %v8634
    %v9445 = vpack.c.b16 %v8637, %v8635
    %v9446 = vpack.c.b16 %v8640, %v8638
    %v9447 = vpack.c.b16 %v8641, %v8639
    %v9448 = vpack.c.b16 %v8644, %v8642
    %v9449 = vpack.c.b16 %v8645, %v8643
    %v9450 = vpack.c.b16 %v8648, %v8646
    %v9451 = vpack.c.b16 %v8649, %v8647
    %v9452 = vpack.c.b16 %v8652, %v8650
    %v9453 = vpack.c.b16 %v8653, %v8651
    %v9454 = vpack.c.b16 %v8656, %v8654
    %v9455 = vpack.c.b16 %v8657, %v8655
    %v9456 = vpack.c.b16 %v8660, %v8658
    %v9457 = vpack.c.b16 %v8661, %v8659
    %v9458 = vpack.c.b16 %v8664, %v8662
    %v9459 = vpack.c.b16 %v8665, %v8663
    %v9460 = vpack.c.b16 %v8668, %v8666
    %v9461 = vpack.c.b16 %v8669, %v8667
    %v9462 = vpack.c.b16 %v8672, %v8670
    %v9463 = vpack.c.b16 %v8673, %v8671
    %v9464 = vpack.c.b16 %v8676, %v8674
    %v9465 = vpack.c.b16 %v8677, %v8675
    %v9466 = vpack.c.b16 %v8680, %v8678
    %v9467 = vpack.c.b16 %v8681, %v8679
    %v9468 = vpack.c.b16 %v8684, %v8682
    %v9469 = vpack.c.b16 %v8685, %v8683
    %v9470 = vpack.c.b16 %v8688, %v8686
    %v9471 = vpack.c.b16 %v8689, %v8687
    %v9472 = vpack.c.b16 %v8692, %v8690
    %v9473 = vpack.c.b16 %v8693, %v8691
    %v9474 = vpack.c.b16 %v8696, %v8694
    %v9475 = vpack.c.b16 %v8697, %v8695
    %v9476 = vpack.c.b16 %v8700, %v8698
    %v9477 = vpack.c.b16 %v8701, %v8699
    %v9478 = vpack.c.b16 %v8704, %v8702
    %v9479 = vpack.c.b16 %v8705, %v8703
    %v9480 = vpack.c.b16 %v8708, %v8706
    %v9481 = vpack.c.b16 %v8709, %v8707
    %v9482 = vpack.c.b16 %v8712, %v8710
    %v9483 = vpack.c.b16 %v8713, %v8711
    %v9484 = vpack.c.b16 %v8716, %v8714
    %v9485 = vpack.c.b16 %v8717, %v8715
    %v9486 = vpack.c.b16 %v8720, %v8718
    %v9487 = vpack.c.b16 %v8721, %v8719
    %v9488 = vpack.c.b16 %v8724, %v8722
    %v9489 = vpack.c.b16 %v8725, %v8723
    %v9490 = vpack.c.b16 %v8728, %v8726
    %v9491 = vpack.c.b16 %v8729, %v8727
    %v9492 = vpack.c.b16 %v8732, %v8730
    %v9493 = vpack.c.b16 %v8733, %v8731
    %v9494 = vpack.c.b16 %v8736, %v8734
    %v9495 = vpack.c.b16 %v8737, %v8735
    %v9496 = vpack.c.b16 %v8740, %v8738
    %v9497 = vpack.c.b16 %v8741, %v8739
    %v9498 = vpack.c.b16 %v8744, %v8742
    %v9499 = vpack.c.b16 %v8745, %v8743
    %v9500 = vpack.c.b16 %v8748, %v8746
    %v9501 = vpack.c.b16 %v8749, %v8747
    %v9502 = vpack.c.b16 %v8752, %v8750
    %v9503 = vpack.c.b16 %v8753, %v8751
    %v9504 = vpack.c.b16 %v8756, %v8754
    %v9505 = vpack.c.b16 %v8757, %v8755
    %v9506 = vpack.c.b16 %v8760, %v8758
    %v9507 = vpack.c.b16 %v8761, %v8759
    %v9508 = vpack.c.b16 %v8764, %v8762
    %v9509 = vpack.c.b16 %v8765, %v8763
    %v9510 = vpack.c.b16 %v8768, %v8766
    %v9511 = vpack.c.b16 %v8769, %v8767
    %v9512 = vpack.c.b16 %v8772, %v8770
    %v9513 = vpack.c.b16 %v8773, %v8771
    %v9514 = vpack.c.b16 %v8776, %v8774
    %v9515 = vpack.c.b16 %v8777, %v8775
    %v9516 = vpack.c.b16 %v8780, %v8778
    %v9517 = vpack.c.b16 %v8781, %v8779
    %v9518 = vpack.c.b16 %v8784, %v8782
    %v9519 = vpack.c.b16 %v8785, %v8783
    %v9520 = vpack.c.b16 %v8788, %v8786
    %v9521 = vpack.c.b16 %v8789, %v8787
    %v9522 = vpack.c.b16 %v8792, %v8790
    %v9523 = vpack.c.b16 %v8793, %v8791
    %v9524 = vpack.c.b16 %v8796, %v8794
    %v9525 = vpack.c.b16 %v8797, %v8795
    %v9526 = vpack.c.b16 %v8800, %v8798
    %v9527 = vpack.c.b16 %v8801, %v8799
    %v9528 = vpack.c.b16 %v8804, %v8802
    %v9529 = vpack.c.b16 %v8805, %v8803
    %v9530 = vpack.c.b16 %v8808, %v8806
    %v9531 = vpack.c.b16 %v8809, %v8807
    %v9532 = vpack.c.b16 %v8812, %v8810
    %v9533 = vpack.c.b16 %v8813, %v8811
    %v9534 = vpack.c.b16 %v8816, %v8814
    %v9535 = vpack.c.b16 %v8817, %v8815
    %v9536 = vpack.c.b16 %v8820, %v8818
    %v9537 = vpack.c.b16 %v8821, %v8819
    %v9538 = vpack.c.b16 %v8824, %v8822
    %v9539 = vpack.c.b16 %v8825, %v8823
    %v9540 = vpack.c.b16 %v8828, %v8826
    %v9541 = vpack.c.b16 %v8829, %v8827
    %v9542 = vpack.c.b16 %v8832, %v8830
    %v9543 = vpack.c.b16 %v8833, %v8831
    %v9544 = vpack.c.b16 %v8836, %v8834
    %v9545 = vpack.c.b16 %v8837, %v8835
    %v9546 = vpack.c.b16 %v8840, %v8838
    %v9547 = vpack.c.b16 %v8841, %v8839
    %v9548 = vpack.c.b16 %v8844, %v8842
    %v9549 = vpack.c.b16 %v8845, %v8843
    %v9550 = vpack.c.b16 %v8848, %v8846
    %v9551 = vpack.c.b16 %v8849, %v8847
    %v9552 = vpack.c.b16 %v8852, %v8850
    %v9553 = vpack.c.b16 %v8853, %v8851
    %v9554 = vpack.c.b16 %v8856, %v8854
    %v9555 = vpack.c.b16 %v8857, %v8855
    %v9556 = vpack.c.b16 %v8860, %v8858
    %v9557 = vpack.c.b16 %v8861, %v8859
    %v9558 = vpack.c.b16 %v8864, %v8862
    %v9559 = vpack.c.b16 %v8865, %v8863
    %v9560 = vpack.c.b16 %v8868, %v8866
    %v9561 = vpack.c.b16 %v8869, %v8867
    %v9562 = vpack.c.b16 %v8872, %v8870
    %v9563 = vpack.c.b16 %v8873, %v8871
    %v9564 = vpack.c.b16 %v8876, %v8874
    %v9565 = vpack.c.b16 %v8877, %v8875
    %v9566 = vpack.c.b16 %v8880, %v8878
    %v9567 = vpack.c.b16 %v8881, %v8879
    %v9568 = vpack.c.b16 %v8884, %v8882
    %v9569 = vpack.c.b16 %v8885, %v8883
    %v9570 = vpack.c.b16 %v8888, %v8886
    %v9571 = vpack.c.b16 %v8889, %v8887
    %v9572 = vpack.c.b16 %v8892, %v8890
    %v9573 = vpack.c.b16 %v8893, %v8891
    %v9574 = vpack.c.b16 %v8896, %v8894
    %v9575 = vpack.c.b16 %v8897, %v8895
    %v9576 = vpack.c.b16 %v8900, %v8898
    %v9577 = vpack.c.b16 %v8901, %v8899
    %v9578 = vpack.c.b16 %v8904, %v8902
    %v9579 = vpack.c.b16 %v8905, %v8903
    %v9580 = vpack.c.b16 %v8908, %v8906
    %v9581 = vpack.c.b16 %v8909, %v8907
    %v9582 = vpack.c.b16 %v8912, %v8910
    %v9583 = vpack.c.b16 %v8913, %v8911
    %v9584 = vpack.c.b16 %v8916, %v8914
    %v9585 = vpack.c.b16 %v8917, %v8915
    %v9586 = vpack.c.b16 %v8920, %v8918
    %v9587 = vpack.c.b16 %v8921, %v8919
    %v9588 = vpack.c.b16 %v8924, %v8922
    %v9589 = vpack.c.b16 %v8925, %v8923
    %v9590 = vpack.c.b16 %v8928, %v8926
    %v9591 = vpack.c.b16 %v8929, %v8927
    %v9592 = vpack.c.b16 %v8932, %v8930
    %v9593 = vpack.c.b16 %v8933, %v8931
    %v9594 = vpack.c.b16 %v8936, %v8934
    %v9595 = vpack.c.b16 %v8937, %v8935
    %v9596 = vpack.c.b16 %v8940, %v8938
    %v9597 = vpack.c.b16 %v8941, %v8939
    %v9598 = vpack.c.b16 %v8944, %v8942
    %v9599 = vpack.c.b16 %v8945, %v8943
    %v9600 = vpack.c.b16 %v8948, %v8946
    %v9601 = vpack.c.b16 %v8949, %v8947
    %v9602 = vpack.c.b16 %v8952, %v8950
    %v9603 = vpack.c.b16 %v8953, %v8951
    %v9604 = vpack.c.b16 %v8956, %v8954
    %v9605 = vpack.c.b16 %v8957, %v8955
    %v9606 = vpack.c.b16 %v8960, %v8958
    %v9607 = vpack.c.b16 %v8961, %v8959
    %v9608 = vpack.c.b16 %v8964, %v8962
    %v9609 = vpack.c.b16 %v8965, %v8963
    %v9610 = vpack.c.b16 %v8968, %v8966
    %v9611 = vpack.c.b16 %v8969, %v8967
    %v9612 = vpack.c.b16 %v8972, %v8970
    %v9613 = vpack.c.b16 %v8973, %v8971
    %v9614 = vpack.c.b16 %v8976, %v8974
    %v9615 = vpack.c.b16 %v8977, %v8975
    %v9616 = vpack.c.b16 %v8980, %v8978
    %v9617 = vpack.c.b16 %v8981, %v8979
    %v9618 = vpack.c.b16 %v8984, %v8982
    %v9619 = vpack.c.b16 %v8985, %v8983
    %v9620 = vpack.c.b16 %v8988, %v8986
    %v9621 = vpack.c.b16 %v8989, %v8987
    %v9622 = vpack.c.b16 %v8992, %v8990
    %v9623 = vpack.c.b16 %v8993, %v8991
    %v9624 = vpack.c.b16 %v8996, %v8994
    %v9625 = vpack.c.b16 %v8997, %v8995
    %v9626 = vpack.c.b16 %v9000, %v8998
    %v9627 = vpack.c.b16 %v9001, %v8999
    %v9628 = vpack.c.b16 %v9004, %v9002
    %v9629 = vpack.c.b16 %v9005, %v9003
    %v9630 = vpack.c.b16 %v9008, %v9006
    %v9631 = vpack.c.b16 %v9009, %v9007
    %v9632 = vpack.c.b16 %v9012, %v9010
    %v9633 = vpack.c.b16 %v9013, %v9011
    %v9634 = vpack.c.b16 %v9016, %v9014
    %v9635 = vpack.c.b16 %v9017, %v9015
    %v9636 = vpack.c.b16 %v9020, %v9018
    %v9637 = vpack.c.b16 %v9021, %v9019
    %v9638 = vpack.c.b16 %v9024, %v9022
    %v9639 = vpack.c.b16 %v9025, %v9023
    %v9640 = vpack.c.b16 %v9028, %v9026
    %v9641 = vpack.c.b16 %v9029, %v9027
    %v9642 = vpack.c.b16 %v9032, %v9030
    %v9643 = vpack.c.b16 %v9033, %v9031
    %v9644 = vpack.c.b16 %v9036, %v9034
    %v9645 = vpack.c.b16 %v9037, %v9035
    %v9646 = vpack.c.b16 %v9040, %v9038
    %v9647 = vpack.c.b16 %v9041, %v9039
    %v9648 = vpack.c.b16 %v9044, %v9042
    %v9649 = vpack.c.b16 %v9045, %v9043
    %v9650 = vpack.c.b16 %v9048, %v9046
    %v9651 = vpack.c.b16 %v9049, %v9047
    %v9652 = vpack.c.b16 %v9052, %v9050
    %v9653 = vpack.c.b16 %v9053, %v9051
    %v9654 = vpack.c.b16 %v9056, %v9054
    %v9655 = vpack.c.b16 %v9057, %v9055
    %v9656 = vpack.c.b16 %v9060, %v9058
    %v9657 = vpack.c.b16 %v9061, %v9059
    %v9658 = vpack.c.b16 %v9064, %v9062
    %v9659 = vpack.c.b16 %v9065, %v9063
    %v9660 = vpack.c.b16 %v9068, %v9066
    %v9661 = vpack.c.b16 %v9069, %v9067
    %v9662 = vpack.c.b16 %v9072, %v9070
    %v9663 = vpack.c.b16 %v9073, %v9071
    %v9664 = vpack.c.b16 %v9076, %v9074
    %v9665 = vpack.c.b16 %v9077, %v9075
    %v9666 = vpack.c.b16 %v9080, %v9078
    %v9667 = vpack.c.b16 %v9081, %v9079
    %v9668 = vpack.c.b16 %v9084, %v9082
    %v9669 = vpack.c.b16 %v9085, %v9083
    %v9670 = vpack.c.b16 %v9088, %v9086
    %v9671 = vpack.c.b16 %v9089, %v9087
    %v9672 = vpack.c.b16 %v9092, %v9090
    %v9673 = vpack.c.b16 %v9093, %v9091
    %v9674 = vpack.c.b16 %v9096, %v9094
    %v9675 = vpack.c.b16 %v9097, %v9095
    %v9676 = vpack.c.b16 %v9100, %v9098
    %v9677 = vpack.c.b16 %v9101, %v9099
    %v9678 = vpack.c.b16 %v9104, %v9102
    %v9679 = vpack.c.b16 %v9105, %v9103
    %v9680 = vpack.c.b16 %v9108, %v9106
    %v9681 = vpack.c.b16 %v9109, %v9107
    %v9682 = vpack.c.b16 %v9112, %v9110
    %v9683 = vpack.c.b16 %v9113, %v9111
    %v9684 = vpack.c.b16 %v9116, %v9114
    %v9685 = vpack.c.b16 %v9117, %v9115
    %v9686 = vpack.c.b16 %v9120, %v9118
    %v9687 = vpack.c.b16 %v9121, %v9119
    %v9688 = vpack.c.b16 %v9124, %v9122
    %v9689 = vpack.c.b16 %v9125, %v9123
    %v9690 = vpack.c.b16 %v9128, %v9126
    %v9691 = vpack.c.b16 %v9129, %v9127
    %v9692 = vpack.c.b16 %v9132, %v9130
    %v9693 = vpack.c.b16 %v9133, %v9131
    %v9694 = vpack.c.b16 %v9136, %v9134
    %v9695 = vpack.c.b16 %v9137, %v9135
    %v9696 = vpack.c.b16 %v9140, %v9138
    %v9697 = vpack.c.b16 %v9141, %v9139
    %v9698 = vpack.c.b16 %v9144, %v9142
    %v9699 = vpack.c.b16 %v9145, %v9143
    %v9700 = vpack.c.b16 %v9148, %v9146
    %v9701 = vpack.c.b16 %v9149, %v9147
    %v9702 = vpack.c.b16 %v9152, %v9150
    %v9703 = vpack.c.b16 %v9153, %v9151
    %v9704 = vpack.c.b16 %v9156, %v9154
    %v9705 = vpack.c.b16 %v9157, %v9155
    %v9706 = vpack.c.b16 %v9160, %v9158
    %v9707 = vpack.c.b16 %v9161, %v9159
    %v9708 = vpack.c.b16 %v9164, %v9162
    %v9709 = vpack.c.b16 %v9165, %v9163
    %v9710 = vpack.c.b16 %v9168, %v9166
    %v9711 = vpack.c.b16 %v9169, %v9167
    %v9712 = vpack.c.b16 %v9172, %v9170
    %v9713 = vpack.c.b16 %v9173, %v9171
    %v9714 = vpack.c.b16 %v9176, %v9174
    %v9715 = vpack.c.b16 %v9177, %v9175
    %v9716 = vpack.c.b16 %v9180, %v9178
    %v9717 = vpack.c.b16 %v9181, %v9179
    %v9718 = vpack.c.b16 %v9184, %v9182
    %v9719 = vpack.c.b16 %v9185, %v9183
    %v9720 = vpack.c.b16 %v9188, %v9186
    %v9721 = vpack.c.b16 %v9189, %v9187
    %v9722 = vpack.c.b16 %v9192, %v9190
    %v9723 = vpack.c.b16 %v9193, %v9191
    %v9724 = vpack.c.b16 %v9196, %v9194
    %v9725 = vpack.c.b16 %v9197, %v9195
    %v9726 = vpack.c.b16 %v9200, %v9198
    %v9727 = vpack.c.b16 %v9201, %v9199
    %v9728 = vpack.c.b16 %v9204, %v9202
    %v9729 = vpack.c.b16 %v9205, %v9203
    %v9730 = vpack.c.b16 %v9208, %v9206
    %v9731 = vpack.c.b16 %v9209, %v9207
    %v9732 = vpack.c.b16 %v9212, %v9210
    %v9733 = vpack.c.b16 %v9213, %v9211
    %v9734 = vpack.c.b16 %v9216, %v9214
    %v9735 = vpack.c.b16 %v9217, %v9215
    %v9736 = vpack.c.b16 %v9220, %v9218
    %v9737 = vpack.c.b16 %v9221, %v9219
    %v9738 = vpack.c.b16 %v9224, %v9222
    %v9739 = vpack.c.b16 %v9225, %v9223
    %v9740 = vpack.c.b16 %v9228, %v9226
    %v9741 = vpack.c.b16 %v9229, %v9227
    %v9742 = vpack.c.b16 %v9232, %v9230
    %v9743 = vpack.c.b16 %v9233, %v9231
    %v9744 = vpack.c.b16 %v9236, %v9234
    %v9745 = vpack.c.b16 %v9237, %v9235
    %v9746 = vpack.c.b16 %v9240, %v9238
    %v9747 = vpack.c.b16 %v9241, %v9239
    %v9748 = vpack.c.b16 %v9244, %v9242
    %v9749 = vpack.c.b16 %v9245, %v9243
    %v9750 = vpack.c.b16 %v9248, %v9246
    %v9751 = vpack.c.b16 %v9249, %v9247
    %v9752 = vpack.c.b16 %v9252, %v9250
    %v9753 = vpack.c.b16 %v9253, %v9251
    %v9754 = vpack.c.b16 %v9256, %v9254
    %v9755 = vpack.c.b16 %v9257, %v9255
    %v9756 = vpack.c.b16 %v9260, %v9258
    %v9757 = vpack.c.b16 %v9261, %v9259
    %v9758 = vpack.c.b16 %v9264, %v9262
    %v9759 = vpack.c.b16 %v9265, %v9263
    %v9760 = vpack.c.b16 %v9268, %v9266
    %v9761 = vpack.c.b16 %v9269, %v9267
    %v9762 = vpack.c.b16 %v9272, %v9270
    %v9763 = vpack.c.b16 %v9273, %v9271
    %v9764 = vpack.c.b16 %v9276, %v9274
    %v9765 = vpack.c.b16 %v9277, %v9275
    %v9766 = vpack.c.b16 %v9280, %v9278
    %v9767 = vpack.c.b16 %v9281, %v9279
    %v9768 = vpack.c.b16 %v9284, %v9282
    %v9769 = vpack.c.b16 %v9285, %v9283
    %v9770 = vpack.c.b16 %v9288, %v9286
    %v9771 = vpack.c.b16 %v9289, %v9287
    %v9772 = vpack.c.b16 %v9292, %v9290
    %v9773 = vpack.c.b16 %v9293, %v9291
    %v9774 = vpack.c.b16 %v9296, %v9294
    %v9775 = vpack.c.b16 %v9297, %v9295
    %v9776 = vpack.c.b16 %v9300, %v9298
    %v9777 = vpack.c.b16 %v9301, %v9299
    %v9778 = vpack.c.b16 %v9304, %v9302
    %v9779 = vpack.c.b16 %v9305, %v9303
    %v9780 = vpack.c.b16 %v9308, %v9306
    %v9781 = vpack.c.b16 %v9309, %v9307
    %v9782 = vpack.c.b16 %v9312, %v9310
    %v9783 = vpack.c.b16 %v9313, %v9311
    %v9784 = vpack.c.b16 %v9316, %v9314
    %v9785 = vpack.c.b16 %v9317, %v9315
    %v9786 = vpack.c.b16 %v9320, %v9318
    %v9787 = vpack.c.b16 %v9321, %v9319
    %v9788 = vpack.c.b16 %v9324, %v9322
    %v9789 = vpack.c.b16 %v9325, %v9323
    %v9790 = vpack.c.b16 %v9328, %v9326
    %v9791 = vpack.c.b16 %v9329, %v9327
    %v9792 = vpack.c.b16 %v9332, %v9330
    %v9793 = vpack.c.b16 %v9333, %v9331
    %v9794 = vpack.c.b16 %v9336, %v9334
    %v9795 = vpack.c.b16 %v9337, %v9335
    %v9796 = vpack.c.b16 %v9340, %v9338
    %v9797 = vpack.c.b16 %v9341, %v9339
    %v9798 = vpack.c.b16 %v9344, %v9342
    %v9799 = vpack.c.b16 %v9345, %v9343
    %v9800 = vpack.c.b16 %v9348, %v9346
    %v9801 = vpack.c.b16 %v9349, %v9347
    %v9802 = vpack.c.b16 %v9352, %v9350
    %v9803 = vpack.c.b16 %v9353, %v9351
    %v9804 = vpack.c.b16 %v9356, %v9354
    %v9805 = vpack.c.b16 %v9357, %v9355
    %v9806 = vpack.c.b16 %v9360, %v9358
    %v9807 = vpack.c.b16 %v9361, %v9359
    %v9808 = vpack.c.b16 %v9364, %v9362
    %v9809 = vpack.c.b16 %v9365, %v9363
    %v9810 = vpack.c.b16 %v9368, %v9366
    %v9811 = vpack.c.b16 %v9369, %v9367
    %v9812 = vpack.c.b16 %v9372, %v9370
    %v9813 = vpack.c.b16 %v9373, %v9371
    %v9814 = vpack.c.b16 %v9376, %v9374
    %v9815 = vpack.c.b16 %v9377, %v9375
    %v9816 = vpack.c.b16 %v9380, %v9378
    %v9817 = vpack.c.b16 %v9381, %v9379
    %v9818 = vpack.c.b16 %v9384, %v9382
    %v9819 = vpack.c.b16 %v9385, %v9383
    %v9820 = vpack.c.b16 %v9388, %v9386
    %v9821 = vpack.c.b16 %v9389, %v9387
    %10254 = vmatprep.subr.bf16.mxu0 %v9391
    %10255 = vmatpush1.bf16.msra.mxu0 %v9390
    %10256 = vmatprep.subr.bf16.mxu0 %v9393
    %10257 = vmatpush1.bf16.msra.mxu0 %v9392
    %10258 = vmatprep.subr.bf16.mxu0 %v9395
    %10259 = vmatpush1.bf16.msra.mxu0 %v9394
    %10260 = vmatprep.subr.bf16.mxu0 %v9397
    %10261 = vmatpush1.bf16.msra.mxu0 %v9396
    %10262 = vmatprep.subr.bf16.mxu0 %v9399
    %10263 = vmatpush1.bf16.msra.mxu0 %v9398
    %10264 = vmatprep.subr.bf16.mxu0 %v9401
    %10265 = vmatpush1.bf16.msra.mxu0 %v9400
    %10266 = vmatprep.subr.bf16.mxu0 %v9403
    %10267 = vmatpush1.bf16.msra.mxu0 %v9402
    %10268 = vmatprep.subr.bf16.mxu0 %v9405
    %10269 = vmatpush1.bf16.msra.mxu0 %v9404
    %10270 = vmatprep.subr.bf16.mxu0 %v9407
    %10271 = vmatpush1.bf16.msra.mxu0 %v9406
    %10272 = vmatprep.subr.bf16.mxu0 %v9409
    %10273 = vmatpush1.bf16.msra.mxu0 %v9408
    %10274 = vmatprep.subr.bf16.mxu0 %v9411
    %10275 = vmatpush1.bf16.msra.mxu0 %v9410
    %10276 = vmatprep.subr.bf16.mxu0 %v9413
    %10277 = vmatpush1.bf16.msra.mxu0 %v9412
    %10278 = vmatprep.subr.bf16.mxu0 %v9415
    %10279 = vmatpush1.bf16.msra.mxu0 %v9414
    %10280 = vmatprep.subr.bf16.mxu0 %v9417
    %10281 = vmatpush1.bf16.msra.mxu0 %v9416
    %10282 = vmatprep.subr.bf16.mxu0 %v9419
    %10283 = vmatpush1.bf16.msra.mxu0 %v9418
    %10284 = vmatprep.subr.bf16.mxu0 %v9421
    %10285 = vmatpush1.bf16.msra.mxu0 %v9420
    %10286 = vmatprep.mubr.bf16.mxu0 %v7624
    %10287 = vmatmul.mubr.bf16.gmra.mrb[0].mxu0 %v7623
    %v10288 = vpop.f32.mrb[0].mxu0
    %v10289 = vadd.f32 %v8087, %v10288
    %v10290 = vpop.f32.mrb[0].mxu0
    %v10291 = vadd.f32 %v8091, %v10290
    %v10292 = vpop.f32.mrb[0].mxu0
    %v10293 = vadd.f32 %v8087, %v10292
    %v10294 = vpop.f32.mrb[0].mxu0
    %v10295 = vadd.f32 %v8091, %v10294
    %10296 = vdwg.mxu0
    %10297 = vmatprep.subr.bf16.mxu0 %v9423
    %10298 = vmatpush1.bf16.msra.mxu0 %v9422
    %10299 = vmatprep.subr.bf16.mxu0 %v9425
    %10300 = vmatpush1.bf16.msra.mxu0 %v9424
    %10301 = vmatprep.subr.bf16.mxu0 %v9427
    %10302 = vmatpush1.bf16.msra.mxu0 %v9426
    %10303 = vmatprep.subr.bf16.mxu0 %v9429
    %10304 = vmatpush1.bf16.msra.mxu0 %v9428
    %10305 = vmatprep.subr.bf16.mxu0 %v9431
    %10306 = vmatpush1.bf16.msra.mxu0 %v9430
    %10307 = vmatprep.subr.bf16.mxu0 %v9433
    %10308 = vmatpush1.bf16.msra.mxu0 %v9432
    %10309 = vmatprep.subr.bf16.mxu0 %v9435
    %10310 = vmatpush1.bf16.msra.mxu0 %v9434
    %10311 = vmatprep.subr.bf16.mxu0 %v9437
    %10312 = vmatpush1.bf16.msra.mxu0 %v9436
    %10313 = vmatprep.subr.bf16.mxu0 %v9439
    %10314 = vmatpush1.bf16.msra.mxu0 %v9438
    %10315 = vmatprep.subr.bf16.mxu0 %v9441
    %10316 = vmatpush1.bf16.msra.mxu0 %v9440
    %10317 = vmatprep.subr.bf16.mxu0 %v9443
    %10318 = vmatpush1.bf16.msra.mxu0 %v9442
    %10319 = vmatprep.subr.bf16.mxu0 %v9445
    %10320 = vmatpush1.bf16.msra.mxu0 %v9444
    %10321 = vmatprep.subr.bf16.mxu0 %v9447
    %10322 = vmatpush1.bf16.msra.mxu0 %v9446
    %10323 = vmatprep.subr.bf16.mxu0 %v9449
    %10324 = vmatpush1.bf16.msra.mxu0 %v9448
    %10325 = vmatprep.subr.bf16.mxu0 %v9451
    %10326 = vmatpush1.bf16.msra.mxu0 %v9450
    %10327 = vmatprep.subr.bf16.mxu0 %v9453
    %10328 = vmatpush1.bf16.msra.mxu0 %v9452
    %10329 = vmatprep.mubr.bf16.mxu0 %v7626
    %10330 = vmatmul.mubr.bf16.gmra.mrb[0].mxu0 %v7625
    %v10331 = vpop.f32.mrb[0].mxu0
    %v10332 = vadd.f32 %v10289, %v10331
    %v10333 = vpop.f32.mrb[0].mxu0
    %v10334 = vadd.f32 %v10291, %v10333
    %v10335 = vpop.f32.mrb[0].mxu0
    %v10336 = vadd.f32 %v10293, %v10335
    %v10337 = vpop.f32.mrb[0].mxu0
    %v10338 = vadd.f32 %v10295, %v10337
    %10339 = vdwg.mxu0
    %10340 = vmatprep.subr.bf16.mxu0 %v9455
    %10341 = vmatpush1.bf16.msra.mxu0 %v9454
    %10342 = vmatprep.subr.bf16.mxu0 %v9457
    %10343 = vmatpush1.bf16.msra.mxu0 %v9456
    %10344 = vmatprep.subr.bf16.mxu0 %v9459
    %10345 = vmatpush1.bf16.msra.mxu0 %v9458
    %10346 = vmatprep.subr.bf16.mxu0 %v9461
    %10347 = vmatpush1.bf16.msra.mxu0 %v9460
    %10348 = vmatprep.subr.bf16.mxu0 %v9463
    %10349 = vmatpush1.bf16.msra.mxu0 %v9462
    %10350 = vmatprep.subr.bf16.mxu0 %v9465
    %10351 = vmatpush1.bf16.msra.mxu0 %v9464
    %10352 = vmatprep.subr.bf16.mxu0 %v9467
    %10353 = vmatpush1.bf16.msra.mxu0 %v9466
    %10354 = vmatprep.subr.bf16.mxu0 %v9469
    %10355 = vmatpush1.bf16.msra.mxu0 %v9468
    %10356 = vmatprep.subr.bf16.mxu0 %v9471
    %10357 = vmatpush1.bf16.msra.mxu0 %v9470
    %10358 = vmatprep.subr.bf16.mxu0 %v9473
    %10359 = vmatpush1.bf16.msra.mxu0 %v9472
    %10360 = vmatprep.subr.bf16.mxu0 %v9475
    %10361 = vmatpush1.bf16.msra.mxu0 %v9474
    %10362 = vmatprep.subr.bf16.mxu0 %v9477
    %10363 = vmatpush1.bf16.msra.mxu0 %v9476
    %10364 = vmatprep.subr.bf16.mxu0 %v9479
    %10365 = vmatpush1.bf16.msra.mxu0 %v9478
    %10366 = vmatprep.subr.bf16.mxu0 %v9481
    %10367 = vmatpush1.bf16.msra.mxu0 %v9480
    %10368 = vmatprep.subr.bf16.mxu0 %v9483
    %10369 = vmatpush1.bf16.msra.mxu0 %v9482
    %10370 = vmatprep.subr.bf16.mxu0 %v9485
    %10371 = vmatpush1.bf16.msra.mxu0 %v9484
    %10372 = vmatprep.mubr.bf16.mxu0 %v7628
    %10373 = vmatmul.mubr.bf16.gmra.mrb[0].mxu0 %v7627
    %v10374 = vpop.f32.mrb[0].mxu0
    %v10375 = vadd.f32 %v10332, %v10374
    %v10376 = vpop.f32.mrb[0].mxu0
    %v10377 = vadd.f32 %v10334, %v10376
    %v10378 = vpop.f32.mrb[0].mxu0
    %v10379 = vadd.f32 %v10336, %v10378
    %v10380 = vpop.f32.mrb[0].mxu0
    %v10381 = vadd.f32 %v10338, %v10380
    %10382 = vdwg.mxu0
    %10383 = vmatprep.subr.bf16.mxu0 %v9487
    %10384 = vmatpush1.bf16.msra.mxu0 %v9486
    %10385 = vmatprep.subr.bf16.mxu0 %v9489
    %10386 = vmatpush1.bf16.msra.mxu0 %v9488
    %10387 = vmatprep.subr.bf16.mxu0 %v9491
    %10388 = vmatpush1.bf16.msra.mxu0 %v9490
    %10389 = vmatprep.subr.bf16.mxu0 %v9493
    %10390 = vmatpush1.bf16.msra.mxu0 %v9492
    %10391 = vmatprep.subr.bf16.mxu0 %v9495
    %10392 = vmatpush1.bf16.msra.mxu0 %v9494
    %10393 = vmatprep.subr.bf16.mxu0 %v9497
    %10394 = vmatpush1.bf16.msra.mxu0 %v9496
    %10395 = vmatprep.subr.bf16.mxu0 %v9499
    %10396 = vmatpush1.bf16.msra.mxu0 %v9498
    %10397 = vmatprep.subr.bf16.mxu0 %v9501
    %10398 = vmatpush1.bf16.msra.mxu0 %v9500
    %10399 = vmatprep.subr.bf16.mxu0 %v9503
    %10400 = vmatpush1.bf16.msra.mxu0 %v9502
    %10401 = vmatprep.subr.bf16.mxu0 %v9505
    %10402 = vmatpush1.bf16.msra.mxu0 %v9504
    %10403 = vmatprep.subr.bf16.mxu0 %v9507
    %10404 = vmatpush1.bf16.msra.mxu0 %v9506
    %10405 = vmatprep.subr.bf16.mxu0 %v9509
    %10406 = vmatpush1.bf16.msra.mxu0 %v9508
    %10407 = vmatprep.subr.bf16.mxu0 %v9511
    %10408 = vmatpush1.bf16.msra.mxu0 %v9510
    %10409 = vmatprep.subr.bf16.mxu0 %v9513
    %10410 = vmatpush1.bf16.msra.mxu0 %v9512
    %10411 = vmatprep.subr.bf16.mxu0 %v9515
    %10412 = vmatpush1.bf16.msra.mxu0 %v9514
    %10413 = vmatprep.subr.bf16.mxu0 %v9517
    %10414 = vmatpush1.bf16.msra.mxu0 %v9516
    %10415 = vmatprep.mubr.bf16.mxu0 %v7630
    %10416 = vmatmul.mubr.bf16.gmra.mrb[0].mxu0 %v7629
    %v10417 = vpop.f32.mrb[0].mxu0
    %v10418 = vadd.f32 %v10375, %v10417
    %v10419 = vpop.f32.mrb[0].mxu0
    %v10420 = vadd.f32 %v10377, %v10419
    %v10421 = vpop.f32.mrb[0].mxu0
    %v10422 = vadd.f32 %v10379, %v10421
    %v10423 = vpop.f32.mrb[0].mxu0
    %v10424 = vadd.f32 %v10381, %v10423
    %10425 = vdwg.mxu0
    %10426 = vmatprep.subr.bf16.mxu0 %v9519
    %10427 = vmatpush1.bf16.msra.mxu0 %v9518
    %10428 = vmatprep.subr.bf16.mxu0 %v9521
    %10429 = vmatpush1.bf16.msra.mxu0 %v9520
    %10430 = vmatprep.subr.bf16.mxu0 %v9523
    %10431 = vmatpush1.bf16.msra.mxu0 %v9522
    %10432 = vmatprep.subr.bf16.mxu0 %v9525
    %10433 = vmatpush1.bf16.msra.mxu0 %v9524
    %10434 = vmatprep.subr.bf16.mxu0 %v9527
    %10435 = vmatpush1.bf16.msra.mxu0 %v9526
    %10436 = vmatprep.subr.bf16.mxu0 %v9529
    %10437 = vmatpush1.bf16.msra.mxu0 %v9528
    %10438 = vmatprep.subr.bf16.mxu0 %v9531
    %10439 = vmatpush1.bf16.msra.mxu0 %v9530
    %10440 = vmatprep.subr.bf16.mxu0 %v9533
    %10441 = vmatpush1.bf16.msra.mxu0 %v9532
    %10442 = vmatprep.subr.bf16.mxu0 %v9535
    %10443 = vmatpush1.bf16.msra.mxu0 %v9534
    %10444 = vmatprep.subr.bf16.mxu0 %v9537
    %10445 = vmatpush1.bf16.msra.mxu0 %v9536
    %10446 = vmatprep.subr.bf16.mxu0 %v9539
    %10447 = vmatpush1.bf16.msra.mxu0 %v9538
    %10448 = vmatprep.subr.bf16.mxu0 %v9541
    %10449 = vmatpush1.bf16.msra.mxu0 %v9540
    %10450 = vmatprep.subr.bf16.mxu0 %v9543
    %10451 = vmatpush1.bf16.msra.mxu0 %v9542
    %10452 = vmatprep.subr.bf16.mxu0 %v9545
    %10453 = vmatpush1.bf16.msra.mxu0 %v9544
    %10454 = vmatprep.subr.bf16.mxu0 %v9547
    %10455 = vmatpush1.bf16.msra.mxu0 %v9546
    %10456 = vmatprep.subr.bf16.mxu0 %v9549
    %10457 = vmatpush1.bf16.msra.mxu0 %v9548
    %10458 = vmatprep.mubr.bf16.mxu0 %v7632
    %10459 = vmatmul.mubr.bf16.gmra.mrb[0].mxu0 %v7631
    %v10460 = vpop.f32.mrb[0].mxu0
    %v10461 = vadd.f32 %v10418, %v10460
    %v10462 = vpop.f32.mrb[0].mxu0
    %v10463 = vadd.f32 %v10420, %v10462
    %v10464 = vpop.f32.mrb[0].mxu0
    %v10465 = vadd.f32 %v10422, %v10464
    %v10466 = vpop.f32.mrb[0].mxu0
    %v10467 = vadd.f32 %v10424, %v10466
    %10468 = vdwg.mxu0
    %10469 = vmatprep.subr.bf16.mxu0 %v9551
    %10470 = vmatpush1.bf16.msra.mxu0 %v9550
    %10471 = vmatprep.subr.bf16.mxu0 %v9553
    %10472 = vmatpush1.bf16.msra.mxu0 %v9552
    %10473 = vmatprep.subr.bf16.mxu0 %v9555
    %10474 = vmatpush1.bf16.msra.mxu0 %v9554
    %10475 = vmatprep.subr.bf16.mxu0 %v9557
    %10476 = vmatpush1.bf16.msra.mxu0 %v9556
    %10477 = vmatprep.subr.bf16.mxu0 %v9559
    %10478 = vmatpush1.bf16.msra.mxu0 %v9558
    %10479 = vmatprep.subr.bf16.mxu0 %v9561
    %10480 = vmatpush1.bf16.msra.mxu0 %v9560
    %10481 = vmatprep.subr.bf16.mxu0 %v9563
    %10482 = vmatpush1.bf16.msra.mxu0 %v9562
    %10483 = vmatprep.subr.bf16.mxu0 %v9565
    %10484 = vmatpush1.bf16.msra.mxu0 %v9564
    %10485 = vmatprep.subr.bf16.mxu0 %v9567
    %10486 = vmatpush1.bf16.msra.mxu0 %v9566
    %10487 = vmatprep.subr.bf16.mxu0 %v9569
    %10488 = vmatpush1.bf16.msra.mxu0 %v9568
    %10489 = vmatprep.subr.bf16.mxu0 %v9571
    %10490 = vmatpush1.bf16.msra.mxu0 %v9570
    %10491 = vmatprep.subr.bf16.mxu0 %v9573
    %10492 = vmatpush1.bf16.msra.mxu0 %v9572
    %10493 = vmatprep.subr.bf16.mxu0 %v9575
    %10494 = vmatpush1.bf16.msra.mxu0 %v9574
    %10495 = vmatprep.subr.bf16.mxu0 %v9577
    %10496 = vmatpush1.bf16.msra.mxu0 %v9576
    %10497 = vmatprep.subr.bf16.mxu0 %v9579
    %10498 = vmatpush1.bf16.msra.mxu0 %v9578
    %10499 = vmatprep.subr.bf16.mxu0 %v9581
    %10500 = vmatpush1.bf16.msra.mxu0 %v9580
    %10501 = vmatprep.mubr.bf16.mxu0 %v7634
    %10502 = vmatmul.mubr.bf16.gmra.mrb[0].mxu0 %v7633
    %v10503 = vpop.f32.mrb[0].mxu0
    %v10504 = vadd.f32 %v10461, %v10503
    %v10505 = vpop.f32.mrb[0].mxu0
    %v10506 = vadd.f32 %v10463, %v10505
    %v10507 = vpop.f32.mrb[0].mxu0
    %v10508 = vadd.f32 %v10465, %v10507
    %v10509 = vpop.f32.mrb[0].mxu0
    %v10510 = vadd.f32 %v10467, %v10509
    %10511 = vdwg.mxu0
    %10512 = vmatprep.subr.bf16.mxu0 %v9583
    %10513 = vmatpush1.bf16.msra.mxu0 %v9582
    %10514 = vmatprep.subr.bf16.mxu0 %v9585
    %10515 = vmatpush1.bf16.msra.mxu0 %v9584
    %10516 = vmatprep.subr.bf16.mxu0 %v9587
    %10517 = vmatpush1.bf16.msra.mxu0 %v9586
    %10518 = vmatprep.subr.bf16.mxu0 %v9589
    %10519 = vmatpush1.bf16.msra.mxu0 %v9588
    %10520 = vmatprep.subr.bf16.mxu0 %v9591
    %10521 = vmatpush1.bf16.msra.mxu0 %v9590
    %10522 = vmatprep.subr.bf16.mxu0 %v9593
    %10523 = vmatpush1.bf16.msra.mxu0 %v9592
    %10524 = vmatprep.subr.bf16.mxu0 %v9595
    %10525 = vmatpush1.bf16.msra.mxu0 %v9594
    %10526 = vmatprep.subr.bf16.mxu0 %v9597
    %10527 = vmatpush1.bf16.msra.mxu0 %v9596
    %10528 = vmatprep.subr.bf16.mxu0 %v9599
    %10529 = vmatpush1.bf16.msra.mxu0 %v9598
    %10530 = vmatprep.subr.bf16.mxu0 %v9601
    %10531 = vmatpush1.bf16.msra.mxu0 %v9600
    %10532 = vmatprep.subr.bf16.mxu0 %v9603
    %10533 = vmatpush1.bf16.msra.mxu0 %v9602
    %10534 = vmatprep.subr.bf16.mxu0 %v9605
    %10535 = vmatpush1.bf16.msra.mxu0 %v9604
    %10536 = vmatprep.subr.bf16.mxu0 %v9607
    %10537 = vmatpush1.bf16.msra.mxu0 %v9606
    %10538 = vmatprep.subr.bf16.mxu0 %v9609
    %10539 = vmatpush1.bf16.msra.mxu0 %v9608
    %10540 = vmatprep.subr.bf16.mxu0 %v9611
    %10541 = vmatpush1.bf16.msra.mxu0 %v9610
    %10542 = vmatprep.subr.bf16.mxu0 %v9613
    %10543 = vmatpush1.bf16.msra.mxu0 %v9612
    %10544 = vmatprep.mubr.bf16.mxu0 %v7636
    %10545 = vmatmul.mubr.bf16.gmra.mrb[0].mxu0 %v7635
    %v10546 = vpop.f32.mrb[0].mxu0
    %v10547 = vadd.f32 %v10504, %v10546
    %v10548 = vpop.f32.mrb[0].mxu0
    %v10549 = vadd.f32 %v10506, %v10548
    %v10550 = vpop.f32.mrb[0].mxu0
    %v10551 = vadd.f32 %v10508, %v10550
    %v10552 = vpop.f32.mrb[0].mxu0
    %v10553 = vadd.f32 %v10510, %v10552
    %10554 = vdwg.mxu0
    %10555 = vmatprep.subr.bf16.mxu0 %v9615
    %10556 = vmatpush1.bf16.msra.mxu0 %v9614
    %10557 = vmatprep.subr.bf16.mxu0 %v9617
    %10558 = vmatpush1.bf16.msra.mxu0 %v9616
    %10559 = vmatprep.subr.bf16.mxu0 %v9619
    %10560 = vmatpush1.bf16.msra.mxu0 %v9618
    %10561 = vmatprep.subr.bf16.mxu0 %v9621
    %10562 = vmatpush1.bf16.msra.mxu0 %v9620
    %10563 = vmatprep.subr.bf16.mxu0 %v9623
    %10564 = vmatpush1.bf16.msra.mxu0 %v9622
    %10565 = vmatprep.subr.bf16.mxu0 %v9625
    %10566 = vmatpush1.bf16.msra.mxu0 %v9624
    %10567 = vmatprep.subr.bf16.mxu0 %v9627
    %10568 = vmatpush1.bf16.msra.mxu0 %v9626
    %10569 = vmatprep.subr.bf16.mxu0 %v9629
    %10570 = vmatpush1.bf16.msra.mxu0 %v9628
    %10571 = vmatprep.subr.bf16.mxu0 %v9631
    %10572 = vmatpush1.bf16.msra.mxu0 %v9630
    %10573 = vmatprep.subr.bf16.mxu0 %v9633
    %10574 = vmatpush1.bf16.msra.mxu0 %v9632
    %10575 = vmatprep.subr.bf16.mxu0 %v9635
    %10576 = vmatpush1.bf16.msra.mxu0 %v9634
    %10577 = vmatprep.subr.bf16.mxu0 %v9637
    %10578 = vmatpush1.bf16.msra.mxu0 %v9636
    %10579 = vmatprep.subr.bf16.mxu0 %v9639
    %10580 = vmatpush1.bf16.msra.mxu0 %v9638
    %10581 = vmatprep.subr.bf16.mxu0 %v9641
    %10582 = vmatpush1.bf16.msra.mxu0 %v9640
    %10583 = vmatprep.subr.bf16.mxu0 %v9643
    %10584 = vmatpush1.bf16.msra.mxu0 %v9642
    %10585 = vmatprep.subr.bf16.mxu0 %v9645
    %10586 = vmatpush1.bf16.msra.mxu0 %v9644
    %10587 = vmatprep.mubr.bf16.mxu0 %v7638
    %10588 = vmatmul.mubr.bf16.gmra.mrb[0].mxu0 %v7637
    %v10589 = vpop.f32.mrb[0].mxu0
    %v10590 = vadd.f32 %v10547, %v10589
    %v10591 = vpop.f32.mrb[0].mxu0
    %v10592 = vadd.f32 %v10549, %v10591
    %v10593 = vpop.f32.mrb[0].mxu0
    %v10594 = vadd.f32 %v10551, %v10593
    %v10595 = vpop.f32.mrb[0].mxu0
    %v10596 = vadd.f32 %v10553, %v10595
    %10597 = vdwg.mxu0
    %10598 = vmatprep.subr.bf16.mxu0 %v9647
    %10599 = vmatpush1.bf16.msra.mxu0 %v9646
    %10600 = vmatprep.subr.bf16.mxu0 %v9649
    %10601 = vmatpush1.bf16.msra.mxu0 %v9648
    %10602 = vmatprep.subr.bf16.mxu0 %v9651
    %10603 = vmatpush1.bf16.msra.mxu0 %v9650
    %10604 = vmatprep.subr.bf16.mxu0 %v9653
    %10605 = vmatpush1.bf16.msra.mxu0 %v9652
    %10606 = vmatprep.subr.bf16.mxu0 %v9655
    %10607 = vmatpush1.bf16.msra.mxu0 %v9654
    %10608 = vmatprep.subr.bf16.mxu0 %v9657
    %10609 = vmatpush1.bf16.msra.mxu0 %v9656
    %10610 = vmatprep.subr.bf16.mxu0 %v9659
    %10611 = vmatpush1.bf16.msra.mxu0 %v9658
    %10612 = vmatprep.subr.bf16.mxu0 %v9661
    %10613 = vmatpush1.bf16.msra.mxu0 %v9660
    %10614 = vmatprep.subr.bf16.mxu0 %v9663
    %10615 = vmatpush1.bf16.msra.mxu0 %v9662
    %10616 = vmatprep.subr.bf16.mxu0 %v9665
    %10617 = vmatpush1.bf16.msra.mxu0 %v9664
    %10618 = vmatprep.subr.bf16.mxu0 %v9667
    %10619 = vmatpush1.bf16.msra.mxu0 %v9666
    %10620 = vmatprep.subr.bf16.mxu0 %v9669
    %10621 = vmatpush1.bf16.msra.mxu0 %v9668
    %10622 = vmatprep.subr.bf16.mxu0 %v9671
    %10623 = vmatpush1.bf16.msra.mxu0 %v9670
    %10624 = vmatprep.subr.bf16.mxu0 %v9673
    %10625 = vmatpush1.bf16.msra.mxu0 %v9672
    %10626 = vmatprep.subr.bf16.mxu0 %v9675
    %10627 = vmatpush1.bf16.msra.mxu0 %v9674
    %10628 = vmatprep.subr.bf16.mxu0 %v9677
    %10629 = vmatpush1.bf16.msra.mxu0 %v9676
    %10630 = vmatprep.mubr.bf16.mxu0 %v7640
    %10631 = vmatmul.mubr.bf16.gmra.mrb[0].mxu0 %v7639
    %v10632 = vpop.f32.mrb[0].mxu0
    %v10633 = vadd.f32 %v10590, %v10632
    %v10634 = vpop.f32.mrb[0].mxu0
    %v10635 = vadd.f32 %v10592, %v10634
    %v10636 = vpop.f32.mrb[0].mxu0
    %v10637 = vadd.f32 %v10594, %v10636
    %v10638 = vpop.f32.mrb[0].mxu0
    %v10639 = vadd.f32 %v10596, %v10638
    %10640 = vdwg.mxu0
    %10641 = vmatprep.subr.bf16.mxu0 %v9679
    %10642 = vmatpush1.bf16.msra.mxu0 %v9678
    %10643 = vmatprep.subr.bf16.mxu0 %v9681
    %10644 = vmatpush1.bf16.msra.mxu0 %v9680
    %10645 = vmatprep.subr.bf16.mxu0 %v9683
    %10646 = vmatpush1.bf16.msra.mxu0 %v9682
    %10647 = vmatprep.subr.bf16.mxu0 %v9685
    %10648 = vmatpush1.bf16.msra.mxu0 %v9684
    %10649 = vmatprep.subr.bf16.mxu0 %v9687
    %10650 = vmatpush1.bf16.msra.mxu0 %v9686
    %10651 = vmatprep.subr.bf16.mxu0 %v9689
    %10652 = vmatpush1.bf16.msra.mxu0 %v9688
    %10653 = vmatprep.subr.bf16.mxu0 %v9691
    %10654 = vmatpush1.bf16.msra.mxu0 %v9690
    %10655 = vmatprep.subr.bf16.mxu0 %v9693
    %10656 = vmatpush1.bf16.msra.mxu0 %v9692
    %10657 = vmatprep.subr.bf16.mxu0 %v9695
    %10658 = vmatpush1.bf16.msra.mxu0 %v9694
    %10659 = vmatprep.subr.bf16.mxu0 %v9697
    %10660 = vmatpush1.bf16.msra.mxu0 %v9696
    %10661 = vmatprep.subr.bf16.mxu0 %v9699
    %10662 = vmatpush1.bf16.msra.mxu0 %v9698
    %10663 = vmatprep.subr.bf16.mxu0 %v9701
    %10664 = vmatpush1.bf16.msra.mxu0 %v9700
    %10665 = vmatprep.subr.bf16.mxu0 %v9703
    %10666 = vmatpush1.bf16.msra.mxu0 %v9702
    %10667 = vmatprep.subr.bf16.mxu0 %v9705
    %10668 = vmatpush1.bf16.msra.mxu0 %v9704
    %10669 = vmatprep.subr.bf16.mxu0 %v9707
    %10670 = vmatpush1.bf16.msra.mxu0 %v9706
    %10671 = vmatprep.subr.bf16.mxu0 %v9709
    %10672 = vmatpush1.bf16.msra.mxu0 %v9708
    %10673 = vmatprep.mubr.bf16.mxu0 %v7642
    %10674 = vmatmul.mubr.bf16.gmra.mrb[0].mxu0 %v7641
    %v10675 = vpop.f32.mrb[0].mxu0
    %v10676 = vadd.f32 %v10633, %v10675
    %v10677 = vpop.f32.mrb[0].mxu0
    %v10678 = vadd.f32 %v10635, %v10677
    %v10679 = vpop.f32.mrb[0].mxu0
    %v10680 = vadd.f32 %v10637, %v10679
    %v10681 = vpop.f32.mrb[0].mxu0
    %v10682 = vadd.f32 %v10639, %v10681
    %10683 = vdwg.mxu0
    %10684 = vmatprep.subr.bf16.mxu0 %v9711
    %10685 = vmatpush1.bf16.msra.mxu0 %v9710
    %10686 = vmatprep.subr.bf16.mxu0 %v9713
    %10687 = vmatpush1.bf16.msra.mxu0 %v9712
    %10688 = vmatprep.subr.bf16.mxu0 %v9715
    %10689 = vmatpush1.bf16.msra.mxu0 %v9714
    %10690 = vmatprep.subr.bf16.mxu0 %v9717
    %10691 = vmatpush1.bf16.msra.mxu0 %v9716
    %10692 = vmatprep.subr.bf16.mxu0 %v9719
    %10693 = vmatpush1.bf16.msra.mxu0 %v9718
    %10694 = vmatprep.subr.bf16.mxu0 %v9721
    %10695 = vmatpush1.bf16.msra.mxu0 %v9720
    %10696 = vmatprep.subr.bf16.mxu0 %v9723
    %10697 = vmatpush1.bf16.msra.mxu0 %v9722
    %10698 = vmatprep.subr.bf16.mxu0 %v9725
    %10699 = vmatpush1.bf16.msra.mxu0 %v9724
    %10700 = vmatprep.subr.bf16.mxu0 %v9727
    %10701 = vmatpush1.bf16.msra.mxu0 %v9726
    %10702 = vmatprep.subr.bf16.mxu0 %v9729
    %10703 = vmatpush1.bf16.msra.mxu0 %v9728
    %10704 = vmatprep.subr.bf16.mxu0 %v9731
    %10705 = vmatpush1.bf16.msra.mxu0 %v9730
    %10706 = vmatprep.subr.bf16.mxu0 %v9733
    %10707 = vmatpush1.bf16.msra.mxu0 %v9732
    %10708 = vmatprep.subr.bf16.mxu0 %v9735
    %10709 = vmatpush1.bf16.msra.mxu0 %v9734
    %10710 = vmatprep.subr.bf16.mxu0 %v9737
    %10711 = vmatpush1.bf16.msra.mxu0 %v9736
    %10712 = vmatprep.subr.bf16.mxu0 %v9739
    %10713 = vmatpush1.bf16.msra.mxu0 %v9738
    %10714 = vmatprep.subr.bf16.mxu0 %v9741
    %10715 = vmatpush1.bf16.msra.mxu0 %v9740
    %10716 = vmatprep.mubr.bf16.mxu0 %v7644
    %10717 = vmatmul.mubr.bf16.gmra.mrb[0].mxu0 %v7643
    %v10718 = vpop.f32.mrb[0].mxu0
    %v10719 = vadd.f32 %v10676, %v10718
    %v10720 = vpop.f32.mrb[0].mxu0
    %v10721 = vadd.f32 %v10678, %v10720
    %v10722 = vpop.f32.mrb[0].mxu0
    %v10723 = vadd.f32 %v10680, %v10722
    %v10724 = vpop.f32.mrb[0].mxu0
    %v10725 = vadd.f32 %v10682, %v10724
    %10726 = vdwg.mxu0
    %10727 = vmatprep.subr.bf16.mxu0 %v9743
    %10728 = vmatpush1.bf16.msra.mxu0 %v9742
    %10729 = vmatprep.subr.bf16.mxu0 %v9745
    %10730 = vmatpush1.bf16.msra.mxu0 %v9744
    %10731 = vmatprep.subr.bf16.mxu0 %v9747
    %10732 = vmatpush1.bf16.msra.mxu0 %v9746
    %10733 = vmatprep.subr.bf16.mxu0 %v9749
    %10734 = vmatpush1.bf16.msra.mxu0 %v9748
    %10735 = vmatprep.subr.bf16.mxu0 %v9751
    %10736 = vmatpush1.bf16.msra.mxu0 %v9750
    %10737 = vmatprep.subr.bf16.mxu0 %v9753
    %10738 = vmatpush1.bf16.msra.mxu0 %v9752
    %10739 = vmatprep.subr.bf16.mxu0 %v9755
    %10740 = vmatpush1.bf16.msra.mxu0 %v9754
    %10741 = vmatprep.subr.bf16.mxu0 %v9757
    %10742 = vmatpush1.bf16.msra.mxu0 %v9756
    %10743 = vmatprep.subr.bf16.mxu0 %v9759
    %10744 = vmatpush1.bf16.msra.mxu0 %v9758
    %10745 = vmatprep.subr.bf16.mxu0 %v9761
    %10746 = vmatpush1.bf16.msra.mxu0 %v9760
    %10747 = vmatprep.subr.bf16.mxu0 %v9763
    %10748 = vmatpush1.bf16.msra.mxu0 %v9762
    %10749 = vmatprep.subr.bf16.mxu0 %v9765
    %10750 = vmatpush1.bf16.msra.mxu0 %v9764
    %10751 = vmatprep.subr.bf16.mxu0 %v9767
    %10752 = vmatpush1.bf16.msra.mxu0 %v9766
    %10753 = vmatprep.subr.bf16.mxu0 %v9769
    %10754 = vmatpush1.bf16.msra.mxu0 %v9768
    %10755 = vmatprep.subr.bf16.mxu0 %v9771
    %10756 = vmatpush1.bf16.msra.mxu0 %v9770
    %10757 = vmatprep.subr.bf16.mxu0 %v9773
    %10758 = vmatpush1.bf16.msra.mxu0 %v9772
    %10759 = vmatprep.mubr.bf16.mxu0 %v7646
    %10760 = vmatmul.mubr.bf16.gmra.mrb[0].mxu0 %v7645
    %v10761 = vpop.f32.mrb[0].mxu0
    %v10762 = vadd.f32 %v10719, %v10761
    %v10763 = vpop.f32.mrb[0].mxu0
    %v10764 = vadd.f32 %v10721, %v10763
    %v10765 = vpop.f32.mrb[0].mxu0
    %v10766 = vadd.f32 %v10723, %v10765
    %v10767 = vpop.f32.mrb[0].mxu0
    %v10768 = vadd.f32 %v10725, %v10767
    %10769 = vdwg.mxu0
    %10770 = vmatprep.subr.bf16.mxu0 %v9775
    %10771 = vmatpush1.bf16.msra.mxu0 %v9774
    %10772 = vmatprep.subr.bf16.mxu0 %v9777
    %10773 = vmatpush1.bf16.msra.mxu0 %v9776
    %10774 = vmatprep.subr.bf16.mxu0 %v9779
    %10775 = vmatpush1.bf16.msra.mxu0 %v9778
    %10776 = vmatprep.subr.bf16.mxu0 %v9781
    %10777 = vmatpush1.bf16.msra.mxu0 %v9780
    %10778 = vmatprep.subr.bf16.mxu0 %v9783
    %10779 = vmatpush1.bf16.msra.mxu0 %v9782
    %10780 = vmatprep.subr.bf16.mxu0 %v9785
    %10781 = vmatpush1.bf16.msra.mxu0 %v9784
    %10782 = vmatprep.subr.bf16.mxu0 %v9787
    %10783 = vmatpush1.bf16.msra.mxu0 %v9786
    %10784 = vmatprep.subr.bf16.mxu0 %v9789
    %10785 = vmatpush1.bf16.msra.mxu0 %v9788
    %10786 = vmatprep.subr.bf16.mxu0 %v9791
    %10787 = vmatpush1.bf16.msra.mxu0 %v9790
    %10788 = vmatprep.subr.bf16.mxu0 %v9793
    %10789 = vmatpush1.bf16.msra.mxu0 %v9792
    %10790 = vmatprep.subr.bf16.mxu0 %v9795
    %10791 = vmatpush1.bf16.msra.mxu0 %v9794
    %10792 = vmatprep.subr.bf16.mxu0 %v9797
    %10793 = vmatpush1.bf16.msra.mxu0 %v9796
    %10794 = vmatprep.subr.bf16.mxu0 %v9799
    %10795 = vmatpush1.bf16.msra.mxu0 %v9798
    %10796 = vmatprep.subr.bf16.mxu0 %v9801
    %10797 = vmatpush1.bf16.msra.mxu0 %v9800
    %10798 = vmatprep.subr.bf16.mxu0 %v9803
    %10799 = vmatpush1.bf16.msra.mxu0 %v9802
    %10800 = vmatprep.subr.bf16.mxu0 %v9805
    %10801 = vmatpush1.bf16.msra.mxu0 %v9804
    %10802 = vmatprep.mubr.bf16.mxu0 %v7648
    %10803 = vmatmul.mubr.bf16.gmra.mrb[0].mxu0 %v7647
    %v10804 = vpop.f32.mrb[0].mxu0
    %v10805 = vadd.f32 %v10762, %v10804
    %v10806 = vpop.f32.mrb[0].mxu0
    %v10807 = vadd.f32 %v10764, %v10806
    %v10808 = vpop.f32.mrb[0].mxu0
    %v10809 = vadd.f32 %v10766, %v10808
    %v10810 = vpop.f32.mrb[0].mxu0
    %v10811 = vadd.f32 %v10768, %v10810
    %10812 = vdwg.mxu0
    %10813 = vmatprep.subr.bf16.mxu0 %v9807
    %10814 = vmatpush1.bf16.msra.mxu0 %v9806
    %10815 = vmatprep.subr.bf16.mxu0 %v9809
    %10816 = vmatpush1.bf16.msra.mxu0 %v9808
    %10817 = vmatprep.subr.bf16.mxu0 %v9811
    %10818 = vmatpush1.bf16.msra.mxu0 %v9810
    %10819 = vmatprep.subr.bf16.mxu0 %v9813
    %10820 = vmatpush1.bf16.msra.mxu0 %v9812
    %10821 = vmatprep.subr.bf16.mxu0 %v9815
    %10822 = vmatpush1.bf16.msra.mxu0 %v9814
    %10823 = vmatprep.subr.bf16.mxu0 %v9817
    %10824 = vmatpush1.bf16.msra.mxu0 %v9816
    %10825 = vmatprep.subr.bf16.mxu0 %v9819
    %10826 = vmatpush1.bf16.msra.mxu0 %v9818
    %10827 = vmatprep.subr.bf16.mxu0 %v9821
    %10828 = vmatpush1.bf16.msra.mxu0 %v9820
    %10829 = vmatprep.subr.bf16.mxu0 0
    %10830 = vmatpush1.bf16.msra.mxu0 0
    %10831 = vmatprep.subr.bf16.mxu0 0
    %10832 = vmatpush1.bf16.msra.mxu0 0
    %10833 = vmatprep.subr.bf16.mxu0 0
    %10834 = vmatpush1.bf16.msra.mxu0 0
    %10835 = vmatprep.subr.bf16.mxu0 0
    %10836 = vmatpush1.bf16.msra.mxu0 0
    %10837 = vmatprep.subr.bf16.mxu0 0
    %10838 = vmatpush1.bf16.msra.mxu0 0
    %10839 = vmatprep.subr.bf16.mxu0 0
    %10840 = vmatpush1.bf16.msra.mxu0 0
    %10841 = vmatprep.subr.bf16.mxu0 0
    %10842 = vmatpush1.bf16.msra.mxu0 0
    %10843 = vmatprep.subr.bf16.mxu0 0
    %10844 = vmatpush1.bf16.msra.mxu0 0
    %10845 = vmatprep.mubr.bf16.mxu0 0
    %10846 = vmatmul.mubr.bf16.gmra.mrb[0].mxu0 %v7649
    %v10847 = vpop.f32.mrb[0].mxu0
    %v10848 = vadd.f32 %v10805, %v10847
    %v10849 = vpop.f32.mrb[0].mxu0
    %v10850 = vadd.f32 %v10807, %v10849
    %v10851 = vpop.f32.mrb[0].mxu0
    %v10852 = vadd.f32 %v10809, %v10851
    %v10853 = vpop.f32.mrb[0].mxu0
    %v10854 = vadd.f32 %v10811, %v10853
    %10855 = vdwg.mxu0
    %10856 = vst [vmem:[%s11] sm:$0xff] %v10848
    %10857 = vst [vmem:[%s11 + $0x8] sm:$0xff] %v10850
    %10858 = vst [vmem:[%s11 + $0x10] sm:$0xff] %v10852
    %10859 = vst [vmem:[%s11 + $0x18] sm:$0xff] %v10854
    // Predicated region
    $region86: #{encoder_forward.1} parent=1 // pred_check
      _
    $region87: #{encoder_forward.1} parent=1 // pred_check_branch
      %10861 = sbr.rel (0) target = $region89
    $region88: #{encoder_forward.1} parent=1 // pred_region
      _
    $region89: #{encoder_forward.1} parent=1 // pred_fallthru
      _
    // Predicated region
    $region90: #{encoder_forward.1} parent=1 // pred_check
      _
    $region91: #{encoder_forward.1} parent=1 // pred_check_branch
      %10863 = sbr.rel (0) target = $region93
    $region92: #{encoder_forward.1} parent=1 // pred_region
      _
    $region93: #{encoder_forward.1} parent=1 // pred_fallthru
      _
    %10864 = vsyncpa [#allocation7], 1
    %10865 = vsyncpa [#allocation9], 1
    %10866 = vsyncpa [#allocation12], 1
    %10867 = vsyncpa [#allocation15], 1
    %10868 = vsyncpa [#allocation18], 1
    %10869 = vsyncpa [#allocation21], 1

</llo_original>
